<compile_context>
chip_gen: v5e
topology: v5e:2x2
jax: 0.10.0
libtpu: 0.0.40
codegen_flags: <defaults>
</compile_context>

<pallas_src>
import jax
import jax.numpy as jnp
import numpy as np
from jax.experimental import pallas as pl
from jax.experimental.pallas import tpu as pltpu

EPS = 1e-5


def bottleneck_kernel(x_ref, w1_ref, g1_ref, b1_ref,
                      w2_ref, g2_ref, b2_ref,
                      w3_ref, g3_ref, b3_ref,
                      o_ref, pad_ref, col_ref):
    N, H, W, Cin = x_ref.shape
    P = w1_ref.shape[1]           # planes
    P4 = w3_ref.shape[1]          # planes * expansion
    M = N * H * W
    inv_m = 1.0 / M

    def bn_relu(h, g_ref, b_ref, relu=True):
        # Training-mode BatchNorm2d (batch stats over N*H*W, biased variance),
        # single-pass stats + folded into one FMA per element.
        s1 = jnp.sum(h, axis=0, keepdims=True)
        s2 = jnp.sum(h * h, axis=0, keepdims=True)
        mean = s1 * inv_m
        var = jnp.maximum(s2 * inv_m - mean * mean, 0.0)
        scale = g_ref[...] * jax.lax.rsqrt(var + EPS)
        shift = b_ref[...] - mean * scale
        hn = h * scale + shift
        return jnp.maximum(hn, 0.0) if relu else hn

    # f32 copy of the input, kept live for the identity residual.
    x2d = x_ref[...].reshape(M, Cin)

    # ---- conv1 (1x1) + bn1 + relu : bf16 MXU operands, f32 accumulation ----
    h1 = jnp.dot(x2d.astype(jnp.bfloat16), w1_ref[...],
                 preferred_element_type=jnp.float32)
    h1 = bn_relu(h1, g1_ref, b1_ref)

    # ---- conv2 (3x3, stride=1, pad=1) + bn2 + relu ----
    # Halo-only zero of the padded buffer (2 boundary rows + 2 boundary cols),
    # then a single interior store of h1.
    zr = jnp.zeros((N, 1, W + 2, P), jnp.float32)
    zc = jnp.zeros((N, H + 2, 1, P), jnp.float32)
    pad_ref[:, 0:1, :, :] = zr
    pad_ref[:, H + 1:H + 2, :, :] = zr
    pad_ref[:, :, 0:1, :] = zc
    pad_ref[:, :, W + 1:W + 2, :] = zc
    pad_ref[:, 1:H + 1, 1:W + 1, :] = h1.reshape(N, H, W, P)

    # Build the im2col slab once: tap t = kh*3 + kw occupies lanes
    # [t*P, (t+1)*P) of col_ref, cast to bf16 for the MXU.
    for kh in range(3):
        for kw in range(3):
            t = kh * 3 + kw
            col_ref[:, :, :, t * P:(t + 1) * P] = (
                pad_ref[:, kh:kh + H, kw:kw + W, :].astype(jnp.bfloat16))

    # One K = 9*P matmul instead of nine K = P matmuls.
    h2 = jnp.dot(col_ref[...].reshape(M, 9 * P), w2_ref[...],
                 preferred_element_type=jnp.float32)
    h2 = bn_relu(h2, g2_ref, b2_ref)

    # ---- conv3 (1x1) + bn3 (no relu) ----
    h3 = jnp.dot(h2.astype(jnp.bfloat16), w3_ref[...],
                 preferred_element_type=jnp.float32)
    h3 = bn_relu(h3, g3_ref, b3_ref, relu=False)

    # ---- residual add (downsample=None -> identity = x, f32) + final relu ----
    out = jnp.maximum(h3 + x2d, 0.0)
    o_ref[...] = out.reshape(N, H, W, P4).astype(o_ref.dtype)


def bottleneck_forward(x_nchw, params):
    """params: (w1 (Cin,P), g1, b1, w2 (3,3,P,P) HWIO, g2, b2, w3 (P,P4), g3, b3)."""
    w1, g1, b1, w2, g2, b2, w3, g3, b3 = params
    N, Cin, H, W = x_nchw.shape
    P = w1.shape[1]
    P4 = w3.shape[1]
    # downsample=None identity residual requires inplanes == planes*4, stride=1.
    assert P4 == 4 * P and Cin == P4, "identity residual needs inplanes == planes*4"

    x = jnp.transpose(x_nchw, (0, 2, 3, 1))   # NCHW -> NHWC (channels on lanes)

    # bf16 weights for the MXU; conv2 reshaped to the im2col (9*P, P) layout
    # with row index (kh*3 + kw)*P + cin, matching the kernel's tap order.
    w1b = w1.astype(jnp.bfloat16)
    w2b = w2.reshape(9 * P, P).astype(jnp.bfloat16)
    w3b = w3.astype(jnp.bfloat16)

    vm = pl.BlockSpec(memory_space=pltpu.MemorySpace.VMEM)
    out_nhwc = pl.pallas_call(
        bottleneck_kernel,
        out_shape=jax.ShapeDtypeStruct((N, H, W, P4), jnp.float32),
        in_specs=[vm] * 10,
        out_specs=vm,
        scratch_shapes=[
            pltpu.VMEM((N, H + 2, W + 2, P), jnp.float32),   # padded h1
            pltpu.VMEM((N, H, W, 9 * P), jnp.bfloat16),      # im2col slab
        ],
    )(x, w1b, g1, b1, w2b, g2, b2, w3b, g3, b3)
    return jnp.transpose(out_nhwc, (0, 3, 1, 2))  # NHWC -> NCHW


def bottleneck_ref(x_nchw, params):
    """Pure-JAX f32 reference (same training-mode BN semantics)."""
    w1, g1, b1, w2, g2, b2, w3, g3, b3 = params
    x = jnp.transpose(x_nchw, (0, 2, 3, 1))

    def bn(h, g, b, relu=True):
        mean = jnp.mean(h, axis=(0, 1, 2), keepdims=True)
        var = jnp.mean((h - mean) ** 2, axis=(0, 1, 2), keepdims=True)
        hn = (h - mean) / jnp.sqrt(var + EPS)
        hn = hn * g.reshape(1, 1, 1, -1) + b.reshape(1, 1, 1, -1)
        return jnp.maximum(hn, 0.0) if relu else hn

    dn = ('NHWC', 'HWIO', 'NHWC')
    h = jax.lax.conv_general_dilated(x, w1.reshape(1, 1, *w1.shape), (1, 1),
                                     'VALID', dimension_numbers=dn)
    h = bn(h, g1, b1)
    h = jax.lax.conv_general_dilated(h, w2, (1, 1), 'SAME',
                                     dimension_numbers=dn)
    h = bn(h, g2, b2)
    h = jax.lax.conv_general_dilated(h, w3.reshape(1, 1, *w3.shape), (1, 1),
                                     'VALID', dimension_numbers=dn)
    h = bn(h, g3, b3, relu=False)
    out = jnp.maximum(h + x, 0.0)
    return jnp.transpose(out, (0, 3, 1, 2))


if __name__ == "__main__":
    # Bottleneck(inplanes=128, planes=32, stride=1, downsample=None)
    # (lane-dense channels: inplanes = planes*expansion = 128 on the lane axis)
    inplanes, planes, expansion = 128, 32, 4
    P4 = planes * expansion          # == inplanes, required by identity residual
    N, H, W = 2, 16, 16

    key = jax.random.PRNGKey(0)
    ks = jax.random.split(key, 10)
    # conv weights in matmul-friendly layouts:
    #   torch conv1.weight (P,Cin,1,1)  -> (Cin,P)
    #   torch conv2.weight (P,P,3,3)    -> (3,3,P,P)  (HWIO)
    #   torch conv3.weight (P4,P,1,1)   -> (P,P4)
    w1 = 0.2 * jax.random.normal(ks[0], (inplanes, planes), jnp.float32)
    g1 = 1.0 + 0.1 * jax.random.normal(ks[1], (1, planes), jnp.float32)
    b1 = 0.1 * jax.random.normal(ks[2], (1, planes), jnp.float32)
    w2 = 0.2 * jax.random.normal(ks[3], (3, 3, planes, planes), jnp.float32)
    g2 = 1.0 + 0.1 * jax.random.normal(ks[4], (1, planes), jnp.float32)
    b2 = 0.1 * jax.random.normal(ks[5], (1, planes), jnp.float32)
    w3 = 0.2 * jax.random.normal(ks[6], (planes, P4), jnp.float32)
    g3 = 1.0 + 0.1 * jax.random.normal(ks[7], (1, P4), jnp.float32)
    b3 = 0.1 * jax.random.normal(ks[8], (1, P4), jnp.float32)
    params = (w1, g1, b1, w2, g2, b2, w3, g3, b3)

    x = jax.random.normal(ks[9], (N, inplanes, H, W), jnp.float32)  # NCHW

    out = bottleneck_forward(x, params)
    out = jax.block_until_ready(out)

    ref = jax.block_until_ready(bottleneck_ref(x, params))
    # Tolerance accounts for bf16 MXU operands in the kernel vs. the pure-f32
    # reference (BN/residual are still computed in f32).
    np.testing.assert_allclose(np.asarray(out), np.asarray(ref),
                               rtol=5e-2, atol=5e-2)
    print("KERNEL_OK")
</pallas_src>

<mosaic_0001>
module attributes {stable_mosaic.version = 11 : i64} {
  func.func @bottleneck_kernel(%arg0: memref<2x16x16x128xf32, #tpu.memory_space<vmem>>, %arg1: memref<128x32xbf16, #tpu.memory_space<vmem>>, %arg2: memref<1x32xf32, #tpu.memory_space<vmem>>, %arg3: memref<1x32xf32, #tpu.memory_space<vmem>>, %arg4: memref<288x32xbf16, #tpu.memory_space<vmem>>, %arg5: memref<1x32xf32, #tpu.memory_space<vmem>>, %arg6: memref<1x32xf32, #tpu.memory_space<vmem>>, %arg7: memref<32x128xbf16, #tpu.memory_space<vmem>>, %arg8: memref<1x128xf32, #tpu.memory_space<vmem>>, %arg9: memref<1x128xf32, #tpu.memory_space<vmem>>, %arg10: memref<2x16x16x128xf32, #tpu.memory_space<vmem>>, %arg11: memref<2x18x18x32xf32, #tpu.memory_space<vmem>>, %arg12: memref<2x16x16x288xbf16, #tpu.memory_space<vmem>>) attributes {dimension_semantics = [], scalar_prefetch = 0 : i64, scratch_operands = 2 : i64, tpu.core_type = #tpu.core_type<tc>} {
    %c0 = arith.constant 0 : index
    %c0_0 = arith.constant 0 : index
    %c0_1 = arith.constant 0 : index
    %c0_2 = arith.constant 0 : index
    %0 = vector.load %arg0[%c0, %c0_0, %c0_1, %c0_2] : memref<2x16x16x128xf32, #tpu.memory_space<vmem>>, vector<2x16x16x128xf32>
    %1 = vector.shape_cast %0 : vector<2x16x16x128xf32> to vector<512x128xf32>
    %2 = arith.truncf %1 : vector<512x128xf32> to vector<512x128xbf16>
    %c0_3 = arith.constant 0 : index
    %c0_4 = arith.constant 0 : index
    %3 = vector.load %arg1[%c0_3, %c0_4] : memref<128x32xbf16, #tpu.memory_space<vmem>>, vector<128x32xbf16>
    %cst = arith.constant dense<0.000000e+00> : vector<512x32xf32>
    %4 = tpu.matmul %2, %3, %cst {dimension_numbers = #tpu.dot_dimension_numbers<[1], [0], [0], [1], [0, 0, 1, 1], [], []>} : vector<512x128xbf16>, vector<128x32xbf16>, vector<512x32xf32> -> vector<512x32xf32>
    %cst_5 = arith.constant dense<0.000000e+00> : vector<32xf32>
    %5 = vector.multi_reduction <add>, %4, %cst_5 [0] : vector<512x32xf32> to vector<32xf32>
    %6 = vector.shape_cast %5 : vector<32xf32> to vector<1x32xf32>
    %7 = arith.mulf %4, %4 : vector<512x32xf32>
    %cst_6 = arith.constant dense<0.000000e+00> : vector<32xf32>
    %8 = vector.multi_reduction <add>, %7, %cst_6 [0] : vector<512x32xf32> to vector<32xf32>
    %9 = vector.shape_cast %8 : vector<32xf32> to vector<1x32xf32>
    %cst_7 = arith.constant 0.001953125 : f32
    %10 = vector.broadcast %cst_7 : f32 to vector<1x32xf32>
    %11 = arith.mulf %6, %10 : vector<1x32xf32>
    %cst_8 = arith.constant 0.001953125 : f32
    %12 = vector.broadcast %cst_8 : f32 to vector<1x32xf32>
    %13 = arith.mulf %9, %12 : vector<1x32xf32>
    %14 = arith.mulf %11, %11 : vector<1x32xf32>
    %15 = arith.subf %13, %14 : vector<1x32xf32>
    %cst_9 = arith.constant 0.000000e+00 : f32
    %16 = vector.broadcast %cst_9 : f32 to vector<1x32xf32>
    %17 = arith.maximumf %15, %16 : vector<1x32xf32>
    %c0_10 = arith.constant 0 : index
    %c0_11 = arith.constant 0 : index
    %18 = vector.load %arg2[%c0_10, %c0_11] : memref<1x32xf32, #tpu.memory_space<vmem>>, vector<1x32xf32>
    %cst_12 = arith.constant 9.99999974E-6 : f32
    %19 = vector.broadcast %cst_12 : f32 to vector<1x32xf32>
    %20 = arith.addf %17, %19 : vector<1x32xf32>
    %21 = math.rsqrt %20 : vector<1x32xf32>
    %22 = arith.mulf %18, %21 : vector<1x32xf32>
    %c0_13 = arith.constant 0 : index
    %c0_14 = arith.constant 0 : index
    %23 = vector.load %arg3[%c0_13, %c0_14] : memref<1x32xf32, #tpu.memory_space<vmem>>, vector<1x32xf32>
    %24 = arith.mulf %11, %22 : vector<1x32xf32>
    %25 = arith.subf %23, %24 : vector<1x32xf32>
    %26 = vector.broadcast %22 : vector<1x32xf32> to vector<512x32xf32>
    %27 = arith.mulf %4, %26 : vector<512x32xf32>
    %28 = vector.broadcast %25 : vector<1x32xf32> to vector<512x32xf32>
    %29 = arith.addf %27, %28 : vector<512x32xf32>
    %cst_15 = arith.constant 0.000000e+00 : f32
    %30 = vector.broadcast %cst_15 : f32 to vector<512x32xf32>
    %31 = arith.maximumf %29, %30 : vector<512x32xf32>
    %cst_16 = arith.constant 0.000000e+00 : f32
    %32 = vector.broadcast %cst_16 : f32 to vector<2x1x18x32xf32>
    %cst_17 = arith.constant 0.000000e+00 : f32
    %33 = vector.broadcast %cst_17 : f32 to vector<2x18x1x32xf32>
    %c0_18 = arith.constant 0 : index
    %c0_19 = arith.constant 0 : index
    %c0_20 = arith.constant 0 : index
    %c0_21 = arith.constant 0 : index
    %34 = vector.load %arg11[%c0_18, %c0_19, %c0_20, %c0_21] : memref<2x18x18x32xf32, #tpu.memory_space<vmem>>, vector<2x1x18x32xf32>
    tpu.vector_store %arg11[%c0_18, %c0_19, %c0_20, %c0_21], %32 {strides = array<i32>} : memref<2x18x18x32xf32, #tpu.memory_space<vmem>>, vector<2x1x18x32xf32>,
    %c0_22 = arith.constant 0 : index
    %c17 = arith.constant 17 : index
    %c0_23 = arith.constant 0 : index
    %c0_24 = arith.constant 0 : index
    %35 = vector.load %arg11[%c0_22, %c17, %c0_23, %c0_24] : memref<2x18x18x32xf32, #tpu.memory_space<vmem>>, vector<2x1x18x32xf32>
    tpu.vector_store %arg11[%c0_22, %c17, %c0_23, %c0_24], %32 {strides = array<i32>} : memref<2x18x18x32xf32, #tpu.memory_space<vmem>>, vector<2x1x18x32xf32>,
    %c0_25 = arith.constant 0 : index
    %c0_26 = arith.constant 0 : index
    %c0_27 = arith.constant 0 : index
    %c0_28 = arith.constant 0 : index
    %36 = vector.load %arg11[%c0_25, %c0_26, %c0_27, %c0_28] : memref<2x18x18x32xf32, #tpu.memory_space<vmem>>, vector<2x18x1x32xf32>
    tpu.vector_store %arg11[%c0_25, %c0_26, %c0_27, %c0_28], %33 {strides = array<i32>} : memref<2x18x18x32xf32, #tpu.memory_space<vmem>>, vector<2x18x1x32xf32>,
    %c0_29 = arith.constant 0 : index
    %c0_30 = arith.constant 0 : index
    %c17_31 = arith.constant 17 : index
    %c0_32 = arith.constant 0 : index
    %37 = vector.load %arg11[%c0_29, %c0_30, %c17_31, %c0_32] : memref<2x18x18x32xf32, #tpu.memory_space<vmem>>, vector<2x18x1x32xf32>
    tpu.vector_store %arg11[%c0_29, %c0_30, %c17_31, %c0_32], %33 {strides = array<i32>} : memref<2x18x18x32xf32, #tpu.memory_space<vmem>>, vector<2x18x1x32xf32>,
    %38 = vector.shape_cast %31 : vector<512x32xf32> to vector<2x16x16x32xf32>
    %c0_33 = arith.constant 0 : index
    %c1 = arith.constant 1 : index
    %c1_34 = arith.constant 1 : index
    %c0_35 = arith.constant 0 : index
    %39 = vector.load %arg11[%c0_33, %c1, %c1_34, %c0_35] : memref<2x18x18x32xf32, #tpu.memory_space<vmem>>, vector<2x16x16x32xf32>
    tpu.vector_store %arg11[%c0_33, %c1, %c1_34, %c0_35], %38 {strides = array<i32>} : memref<2x18x18x32xf32, #tpu.memory_space<vmem>>, vector<2x16x16x32xf32>,
    %c0_36 = arith.constant 0 : index
    %c0_37 = arith.constant 0 : index
    %c0_38 = arith.constant 0 : index
    %c0_39 = arith.constant 0 : index
    %40 = vector.load %arg11[%c0_36, %c0_37, %c0_38, %c0_39] : memref<2x18x18x32xf32, #tpu.memory_space<vmem>>, vector<2x16x16x32xf32>
    %41 = arith.truncf %40 : vector<2x16x16x32xf32> to vector<2x16x16x32xbf16>
    %c0_40 = arith.constant 0 : index
    %c0_41 = arith.constant 0 : index
    %c0_42 = arith.constant 0 : index
    %c0_43 = arith.constant 0 : index
    %42 = vector.load %arg12[%c0_40, %c0_41, %c0_42, %c0_43] : memref<2x16x16x288xbf16, #tpu.memory_space<vmem>>, vector<2x16x16x32xbf16>
    tpu.vector_store %arg12[%c0_40, %c0_41, %c0_42, %c0_43], %41 {strides = array<i32>} : memref<2x16x16x288xbf16, #tpu.memory_space<vmem>>, vector<2x16x16x32xbf16>,
    %c0_44 = arith.constant 0 : index
    %c0_45 = arith.constant 0 : index
    %c1_46 = arith.constant 1 : index
    %c0_47 = arith.constant 0 : index
    %43 = vector.load %arg11[%c0_44, %c0_45, %c1_46, %c0_47] : memref<2x18x18x32xf32, #tpu.memory_space<vmem>>, vector<2x16x16x32xf32>
    %44 = arith.truncf %43 : vector<2x16x16x32xf32> to vector<2x16x16x32xbf16>
    %c0_48 = arith.constant 0 : index
    %c0_49 = arith.constant 0 : index
    %c0_50 = arith.constant 0 : index
    %c32 = arith.constant 32 : index
    %45 = vector.load %arg12[%c0_48, %c0_49, %c0_50, %c32] : memref<2x16x16x288xbf16, #tpu.memory_space<vmem>>, vector<2x16x16x32xbf16>
    tpu.vector_store %arg12[%c0_48, %c0_49, %c0_50, %c32], %44 {strides = array<i32>} : memref<2x16x16x288xbf16, #tpu.memory_space<vmem>>, vector<2x16x16x32xbf16>,
    %c0_51 = arith.constant 0 : index
    %c0_52 = arith.constant 0 : index
    %c2 = arith.constant 2 : index
    %c0_53 = arith.constant 0 : index
    %46 = vector.load %arg11[%c0_51, %c0_52, %c2, %c0_53] : memref<2x18x18x32xf32, #tpu.memory_space<vmem>>, vector<2x16x16x32xf32>
    %47 = arith.truncf %46 : vector<2x16x16x32xf32> to vector<2x16x16x32xbf16>
    %c0_54 = arith.constant 0 : index
    %c0_55 = arith.constant 0 : index
    %c0_56 = arith.constant 0 : index
    %c64 = arith.constant 64 : index
    %48 = vector.load %arg12[%c0_54, %c0_55, %c0_56, %c64] : memref<2x16x16x288xbf16, #tpu.memory_space<vmem>>, vector<2x16x16x32xbf16>
    tpu.vector_store %arg12[%c0_54, %c0_55, %c0_56, %c64], %47 {strides = array<i32>} : memref<2x16x16x288xbf16, #tpu.memory_space<vmem>>, vector<2x16x16x32xbf16>,
    %c0_57 = arith.constant 0 : index
    %c1_58 = arith.constant 1 : index
    %c0_59 = arith.constant 0 : index
    %c0_60 = arith.constant 0 : index
    %49 = vector.load %arg11[%c0_57, %c1_58, %c0_59, %c0_60] : memref<2x18x18x32xf32, #tpu.memory_space<vmem>>, vector<2x16x16x32xf32>
    %50 = arith.truncf %49 : vector<2x16x16x32xf32> to vector<2x16x16x32xbf16>
    %c0_61 = arith.constant 0 : index
    %c0_62 = arith.constant 0 : index
    %c0_63 = arith.constant 0 : index
    %c96 = arith.constant 96 : index
    %51 = vector.load %arg12[%c0_61, %c0_62, %c0_63, %c96] : memref<2x16x16x288xbf16, #tpu.memory_space<vmem>>, vector<2x16x16x32xbf16>
    tpu.vector_store %arg12[%c0_61, %c0_62, %c0_63, %c96], %50 {strides = array<i32>} : memref<2x16x16x288xbf16, #tpu.memory_space<vmem>>, vector<2x16x16x32xbf16>,
    %c0_64 = arith.constant 0 : index
    %c1_65 = arith.constant 1 : index
    %c1_66 = arith.constant 1 : index
    %c0_67 = arith.constant 0 : index
    %52 = vector.load %arg11[%c0_64, %c1_65, %c1_66, %c0_67] : memref<2x18x18x32xf32, #tpu.memory_space<vmem>>, vector<2x16x16x32xf32>
    %53 = arith.truncf %52 : vector<2x16x16x32xf32> to vector<2x16x16x32xbf16>
    %c0_68 = arith.constant 0 : index
    %c0_69 = arith.constant 0 : index
    %c0_70 = arith.constant 0 : index
    %c128 = arith.constant 128 : index
    %54 = vector.load %arg12[%c0_68, %c0_69, %c0_70, %c128] : memref<2x16x16x288xbf16, #tpu.memory_space<vmem>>, vector<2x16x16x32xbf16>
    tpu.vector_store %arg12[%c0_68, %c0_69, %c0_70, %c128], %53 {strides = array<i32>} : memref<2x16x16x288xbf16, #tpu.memory_space<vmem>>, vector<2x16x16x32xbf16>,
    %c0_71 = arith.constant 0 : index
    %c1_72 = arith.constant 1 : index
    %c2_73 = arith.constant 2 : index
    %c0_74 = arith.constant 0 : index
    %55 = vector.load %arg11[%c0_71, %c1_72, %c2_73, %c0_74] : memref<2x18x18x32xf32, #tpu.memory_space<vmem>>, vector<2x16x16x32xf32>
    %56 = arith.truncf %55 : vector<2x16x16x32xf32> to vector<2x16x16x32xbf16>
    %c0_75 = arith.constant 0 : index
    %c0_76 = arith.constant 0 : index
    %c0_77 = arith.constant 0 : index
    %c160 = arith.constant 160 : index
    %57 = vector.load %arg12[%c0_75, %c0_76, %c0_77, %c160] : memref<2x16x16x288xbf16, #tpu.memory_space<vmem>>, vector<2x16x16x32xbf16>
    tpu.vector_store %arg12[%c0_75, %c0_76, %c0_77, %c160], %56 {strides = array<i32>} : memref<2x16x16x288xbf16, #tpu.memory_space<vmem>>, vector<2x16x16x32xbf16>,
    %c0_78 = arith.constant 0 : index
    %c2_79 = arith.constant 2 : index
    %c0_80 = arith.constant 0 : index
    %c0_81 = arith.constant 0 : index
    %58 = vector.load %arg11[%c0_78, %c2_79, %c0_80, %c0_81] : memref<2x18x18x32xf32, #tpu.memory_space<vmem>>, vector<2x16x16x32xf32>
    %59 = arith.truncf %58 : vector<2x16x16x32xf32> to vector<2x16x16x32xbf16>
    %c0_82 = arith.constant 0 : index
    %c0_83 = arith.constant 0 : index
    %c0_84 = arith.constant 0 : index
    %c192 = arith.constant 192 : index
    %60 = vector.load %arg12[%c0_82, %c0_83, %c0_84, %c192] : memref<2x16x16x288xbf16, #tpu.memory_space<vmem>>, vector<2x16x16x32xbf16>
    tpu.vector_store %arg12[%c0_82, %c0_83, %c0_84, %c192], %59 {strides = array<i32>} : memref<2x16x16x288xbf16, #tpu.memory_space<vmem>>, vector<2x16x16x32xbf16>,
    %c0_85 = arith.constant 0 : index
    %c2_86 = arith.constant 2 : index
    %c1_87 = arith.constant 1 : index
    %c0_88 = arith.constant 0 : index
    %61 = vector.load %arg11[%c0_85, %c2_86, %c1_87, %c0_88] : memref<2x18x18x32xf32, #tpu.memory_space<vmem>>, vector<2x16x16x32xf32>
    %62 = arith.truncf %61 : vector<2x16x16x32xf32> to vector<2x16x16x32xbf16>
    %c0_89 = arith.constant 0 : index
    %c0_90 = arith.constant 0 : index
    %c0_91 = arith.constant 0 : index
    %c224 = arith.constant 224 : index
    %63 = vector.load %arg12[%c0_89, %c0_90, %c0_91, %c224] : memref<2x16x16x288xbf16, #tpu.memory_space<vmem>>, vector<2x16x16x32xbf16>
    tpu.vector_store %arg12[%c0_89, %c0_90, %c0_91, %c224], %62 {strides = array<i32>} : memref<2x16x16x288xbf16, #tpu.memory_space<vmem>>, vector<2x16x16x32xbf16>,
    %c0_92 = arith.constant 0 : index
    %c2_93 = arith.constant 2 : index
    %c2_94 = arith.constant 2 : index
    %c0_95 = arith.constant 0 : index
    %64 = vector.load %arg11[%c0_92, %c2_93, %c2_94, %c0_95] : memref<2x18x18x32xf32, #tpu.memory_space<vmem>>, vector<2x16x16x32xf32>
    %65 = arith.truncf %64 : vector<2x16x16x32xf32> to vector<2x16x16x32xbf16>
    %c0_96 = arith.constant 0 : index
    %c0_97 = arith.constant 0 : index
    %c0_98 = arith.constant 0 : index
    %c256 = arith.constant 256 : index
    %66 = vector.load %arg12[%c0_96, %c0_97, %c0_98, %c256] : memref<2x16x16x288xbf16, #tpu.memory_space<vmem>>, vector<2x16x16x32xbf16>
    tpu.vector_store %arg12[%c0_96, %c0_97, %c0_98, %c256], %65 {strides = array<i32>} : memref<2x16x16x288xbf16, #tpu.memory_space<vmem>>, vector<2x16x16x32xbf16>,
    %c0_99 = arith.constant 0 : index
    %c0_100 = arith.constant 0 : index
    %c0_101 = arith.constant 0 : index
    %c0_102 = arith.constant 0 : index
    %67 = vector.load %arg12[%c0_99, %c0_100, %c0_101, %c0_102] : memref<2x16x16x288xbf16, #tpu.memory_space<vmem>>, vector<2x16x16x288xbf16>
    %68 = vector.shape_cast %67 : vector<2x16x16x288xbf16> to vector<512x288xbf16>
    %c0_103 = arith.constant 0 : index
    %c0_104 = arith.constant 0 : index
    %69 = vector.load %arg4[%c0_103, %c0_104] : memref<288x32xbf16, #tpu.memory_space<vmem>>, vector<288x32xbf16>
    %cst_105 = arith.constant dense<0.000000e+00> : vector<512x32xf32>
    %70 = tpu.matmul %68, %69, %cst_105 {dimension_numbers = #tpu.dot_dimension_numbers<[1], [0], [0], [1], [0, 0, 1, 1], [], []>} : vector<512x288xbf16>, vector<288x32xbf16>, vector<512x32xf32> -> vector<512x32xf32>
    %cst_106 = arith.constant dense<0.000000e+00> : vector<32xf32>
    %71 = vector.multi_reduction <add>, %70, %cst_106 [0] : vector<512x32xf32> to vector<32xf32>
    %72 = vector.shape_cast %71 : vector<32xf32> to vector<1x32xf32>
    %73 = arith.mulf %70, %70 : vector<512x32xf32>
    %cst_107 = arith.constant dense<0.000000e+00> : vector<32xf32>
    %74 = vector.multi_reduction <add>, %73, %cst_107 [0] : vector<512x32xf32> to vector<32xf32>
    %75 = vector.shape_cast %74 : vector<32xf32> to vector<1x32xf32>
    %cst_108 = arith.constant 0.001953125 : f32
    %76 = vector.broadcast %cst_108 : f32 to vector<1x32xf32>
    %77 = arith.mulf %72, %76 : vector<1x32xf32>
    %cst_109 = arith.constant 0.001953125 : f32
    %78 = vector.broadcast %cst_109 : f32 to vector<1x32xf32>
    %79 = arith.mulf %75, %78 : vector<1x32xf32>
    %80 = arith.mulf %77, %77 : vector<1x32xf32>
    %81 = arith.subf %79, %80 : vector<1x32xf32>
    %cst_110 = arith.constant 0.000000e+00 : f32
    %82 = vector.broadcast %cst_110 : f32 to vector<1x32xf32>
    %83 = arith.maximumf %81, %82 : vector<1x32xf32>
    %c0_111 = arith.constant 0 : index
    %c0_112 = arith.constant 0 : index
    %84 = vector.load %arg5[%c0_111, %c0_112] : memref<1x32xf32, #tpu.memory_space<vmem>>, vector<1x32xf32>
    %cst_113 = arith.constant 9.99999974E-6 : f32
    %85 = vector.broadcast %cst_113 : f32 to vector<1x32xf32>
    %86 = arith.addf %83, %85 : vector<1x32xf32>
    %87 = math.rsqrt %86 : vector<1x32xf32>
    %88 = arith.mulf %84, %87 : vector<1x32xf32>
    %c0_114 = arith.constant 0 : index
    %c0_115 = arith.constant 0 : index
    %89 = vector.load %arg6[%c0_114, %c0_115] : memref<1x32xf32, #tpu.memory_space<vmem>>, vector<1x32xf32>
    %90 = arith.mulf %77, %88 : vector<1x32xf32>
    %91 = arith.subf %89, %90 : vector<1x32xf32>
    %92 = vector.broadcast %88 : vector<1x32xf32> to vector<512x32xf32>
    %93 = arith.mulf %70, %92 : vector<512x32xf32>
    %94 = vector.broadcast %91 : vector<1x32xf32> to vector<512x32xf32>
    %95 = arith.addf %93, %94 : vector<512x32xf32>
    %cst_116 = arith.constant 0.000000e+00 : f32
    %96 = vector.broadcast %cst_116 : f32 to vector<512x32xf32>
    %97 = arith.maximumf %95, %96 : vector<512x32xf32>
    %98 = arith.truncf %97 : vector<512x32xf32> to vector<512x32xbf16>
    %c0_117 = arith.constant 0 : index
    %c0_118 = arith.constant 0 : index
    %99 = vector.load %arg7[%c0_117, %c0_118] : memref<32x128xbf16, #tpu.memory_space<vmem>>, vector<32x128xbf16>
    %cst_119 = arith.constant dense<0.000000e+00> : vector<512x128xf32>
    %100 = tpu.matmul %98, %99, %cst_119 {dimension_numbers = #tpu.dot_dimension_numbers<[1], [0], [0], [1], [0, 0, 1, 1], [], []>} : vector<512x32xbf16>, vector<32x128xbf16>, vector<512x128xf32> -> vector<512x128xf32>
    %cst_120 = arith.constant dense<0.000000e+00> : vector<128xf32>
    %101 = vector.multi_reduction <add>, %100, %cst_120 [0] : vector<512x128xf32> to vector<128xf32>
    %102 = vector.shape_cast %101 : vector<128xf32> to vector<1x128xf32>
    %103 = arith.mulf %100, %100 : vector<512x128xf32>
    %cst_121 = arith.constant dense<0.000000e+00> : vector<128xf32>
    %104 = vector.multi_reduction <add>, %103, %cst_121 [0] : vector<512x128xf32> to vector<128xf32>
    %105 = vector.shape_cast %104 : vector<128xf32> to vector<1x128xf32>
    %cst_122 = arith.constant 0.001953125 : f32
    %106 = vector.broadcast %cst_122 : f32 to vector<1x128xf32>
    %107 = arith.mulf %102, %106 : vector<1x128xf32>
    %cst_123 = arith.constant 0.001953125 : f32
    %108 = vector.broadcast %cst_123 : f32 to vector<1x128xf32>
    %109 = arith.mulf %105, %108 : vector<1x128xf32>
    %110 = arith.mulf %107, %107 : vector<1x128xf32>
    %111 = arith.subf %109, %110 : vector<1x128xf32>
    %cst_124 = arith.constant 0.000000e+00 : f32
    %112 = vector.broadcast %cst_124 : f32 to vector<1x128xf32>
    %113 = arith.maximumf %111, %112 : vector<1x128xf32>
    %c0_125 = arith.constant 0 : index
    %c0_126 = arith.constant 0 : index
    %114 = vector.load %arg8[%c0_125, %c0_126] : memref<1x128xf32, #tpu.memory_space<vmem>>, vector<1x128xf32>
    %cst_127 = arith.constant 9.99999974E-6 : f32
    %115 = vector.broadcast %cst_127 : f32 to vector<1x128xf32>
    %116 = arith.addf %113, %115 : vector<1x128xf32>
    %117 = math.rsqrt %116 : vector<1x128xf32>
    %118 = arith.mulf %114, %117 : vector<1x128xf32>
    %c0_128 = arith.constant 0 : index
    %c0_129 = arith.constant 0 : index
    %119 = vector.load %arg9[%c0_128, %c0_129] : memref<1x128xf32, #tpu.memory_space<vmem>>, vector<1x128xf32>
    %120 = arith.mulf %107, %118 : vector<1x128xf32>
    %121 = arith.subf %119, %120 : vector<1x128xf32>
    %122 = vector.broadcast %118 : vector<1x128xf32> to vector<512x128xf32>
    %123 = arith.mulf %100, %122 : vector<512x128xf32>
    %124 = vector.broadcast %121 : vector<1x128xf32> to vector<512x128xf32>
    %125 = arith.addf %123, %124 : vector<512x128xf32>
    %126 = arith.addf %125, %1 : vector<512x128xf32>
    %cst_130 = arith.constant 0.000000e+00 : f32
    %127 = vector.broadcast %cst_130 : f32 to vector<512x128xf32>
    %128 = arith.maximumf %126, %127 : vector<512x128xf32>
    %129 = vector.shape_cast %128 : vector<512x128xf32> to vector<2x16x16x128xf32>
    %c0_131 = arith.constant 0 : index
    %c0_132 = arith.constant 0 : index
    %c0_133 = arith.constant 0 : index
    %c0_134 = arith.constant 0 : index
    %130 = vector.load %arg10[%c0_131, %c0_132, %c0_133, %c0_134] : memref<2x16x16x128xf32, #tpu.memory_space<vmem>>, vector<2x16x16x128xf32>
    tpu.vector_store %arg10[%c0_131, %c0_132, %c0_133, %c0_134], %129 {strides = array<i32>} : memref<2x16x16x128xf32, #tpu.memory_space<vmem>>, vector<2x16x16x128xf32>,
    return
  }
}

</mosaic_0001>

<llo_original>
// kernel: tpu_custom_call.1
$region0: #{tpu_custom_call.1}
  #allocation0 [shape = 'u32[]', space=smem, size = 0x4, offset = 0x4, fixed_abs, tag = 'smem constant byte address 0x4 - core index']
  #allocation1 [shape = 'u32[72,128]{1,0:T(1,128)}', space=vmem, size = 0x9000, scoped, tag = 'internal scratch']
  #allocation2 [shape = 'f32[2,18,18,32]{3,2,1,0:T(8,128)}', space=vmem, size = 0x6c000, scoped, tag = 'scratch operand']
  #allocation3 [shape = 'bf16[2,16,16,288]{3,2,1,0:T(8,128)(2,1)}', space=vmem, size = 0x60000, scoped, tag = 'scratch operand']
  %s0 = inlined_call_operand.hbm [shape: f32[2,16,16,128], index: 0, kind: input, shape index: {}]
  %s1 = inlined_call_operand.vmem [shape: bf16[128,32], index: 1, kind: input, shape index: {}]
  %s2 = inlined_call_operand.vmem [shape: f32[1,32], index: 2, kind: input, shape index: {}]
  %s3 = inlined_call_operand.vmem [shape: f32[1,32], index: 3, kind: input, shape index: {}]
  %s4 = inlined_call_operand.vmem [shape: bf16[288,32], index: 4, kind: input, shape index: {}]
  %s5 = inlined_call_operand.vmem [shape: f32[1,32], index: 5, kind: input, shape index: {}]
  %s6 = inlined_call_operand.vmem [shape: f32[1,32], index: 6, kind: input, shape index: {}]
  %s7 = inlined_call_operand.vmem [shape: bf16[32,128], index: 7, kind: input, shape index: {}]
  %s8 = inlined_call_operand.vmem [shape: f32[1,128], index: 8, kind: input, shape index: {}]
  %s9 = inlined_call_operand.vmem [shape: f32[1,128], index: 9, kind: input, shape index: {}]
  %s10 = inlined_call_operand.hbm [shape: f32[2,16,16,128], index: 10, kind: output, shape index: {}]
  %s11 = sld [smem:[#allocation0]]
  $region54: #{tpu_custom_call.1} parent=0
    _
  %s13 = ssub.s32 1, %s11
  %s14 = scalar_select 0, %s13, %s11
  $region1: #{tpu_custom_call.1} parent=0
    #allocation4 [shape = 'u8[262144]{0}', space=vmem, size = 0x40000, scoped, tag = 'input window, operand 0, single buffered']
    #allocation5 [shape = 's32[1]{0}', space=sflag, size = 0x4, scoped, tag = 'scoped memory for tpu_custom_call.1']
    #allocation6 [shape = 's32[1]{0}', space=sflag, size = 0x4, scoped, tag = 'scoped memory for tpu_custom_call.1']
    #allocation7 [shape = 'u8[262144]{0}', space=vmem, size = 0x40000, scoped, tag = 'output window, operand 0, single buffered']
    %15 = vsyncpa [#allocation5], 0
    %16 = vsyncpa [#allocation6], 0
    // Predicated region
    $region2: #{tpu_custom_call.1} parent=1 // pred_check
      _
    $region3: #{tpu_custom_call.1} parent=1 // pred_check_branch
      %18 = sbr.rel (0) target = $region5
    $region4: #{tpu_custom_call.1} parent=1 // pred_region
      %20 = vsyncadd [#allocation5], 0
      %s21 = sshll.u32 %s0, 4
      %s22 = int_to_ptr.hbm [resolvable:$true] %s21
      %s23 = sshll.u32 [#allocation4], 4
      %s24 = int_to_ptr.vmem [resolvable:$true] %s23
      %29 = dma.hbm_to_vmem [thread:$0]  %s22, 8192, %s24, [#allocation5], 128, 128, 8
    $region5: #{tpu_custom_call.1} parent=1 // pred_fallthru
      _
    // Predicated region
    $region6: #{tpu_custom_call.1} parent=1 // pred_check
      _
    $region7: #{tpu_custom_call.1} parent=1 // pred_check_branch
      %31 = sbr.rel (0) target = $region9
    $region8: #{tpu_custom_call.1} parent=1 // pred_region
      _
    $region9: #{tpu_custom_call.1} parent=1 // pred_fallthru
      _
    // Predicated region
    $region10: #{tpu_custom_call.1} parent=1 // pred_check
      _
    $region11: #{tpu_custom_call.1} parent=1 // pred_check_branch
      %33 = sbr.rel (0) target = $region13
    $region12: #{tpu_custom_call.1} parent=1 // pred_region
      _
    $region13: #{tpu_custom_call.1} parent=1 // pred_fallthru
      _
    // Predicated region
    $region14: #{tpu_custom_call.1} parent=1 // pred_check
      _
    $region15: #{tpu_custom_call.1} parent=1 // pred_check_branch
      %35 = sbr.rel (0) target = $region17
    $region16: #{tpu_custom_call.1} parent=1 // pred_region
      _
    $region17: #{tpu_custom_call.1} parent=1 // pred_fallthru
      _
    // Predicated region
    $region18: #{tpu_custom_call.1} parent=1 // pred_check
      _
    $region19: #{tpu_custom_call.1} parent=1 // pred_check_branch
      %37 = sbr.rel (0) target = $region21
    $region20: #{tpu_custom_call.1} parent=1 // pred_region
      _
    $region21: #{tpu_custom_call.1} parent=1 // pred_fallthru
      _
    // Predicated region
    $region22: #{tpu_custom_call.1} parent=1 // pred_check
      _
    $region23: #{tpu_custom_call.1} parent=1 // pred_check_branch
      %39 = sbr.rel (0) target = $region25
    $region24: #{tpu_custom_call.1} parent=1 // pred_region
      _
    $region25: #{tpu_custom_call.1} parent=1 // pred_fallthru
      _
    // Predicated region
    $region26: #{tpu_custom_call.1} parent=1 // pred_check
      _
    $region27: #{tpu_custom_call.1} parent=1 // pred_check_branch
      %41 = sbr.rel (0) target = $region29
    $region28: #{tpu_custom_call.1} parent=1 // pred_region
      _
    $region29: #{tpu_custom_call.1} parent=1 // pred_fallthru
      _
    // Predicated region
    $region30: #{tpu_custom_call.1} parent=1 // pred_check
      _
    $region31: #{tpu_custom_call.1} parent=1 // pred_check_branch
      %43 = sbr.rel (0) target = $region33
    $region32: #{tpu_custom_call.1} parent=1 // pred_region
      _
    $region33: #{tpu_custom_call.1} parent=1 // pred_fallthru
      _
    // Predicated region
    $region34: #{tpu_custom_call.1} parent=1 // pred_check
      _
    $region35: #{tpu_custom_call.1} parent=1 // pred_check_branch
      %45 = sbr.rel (0) target = $region37
    $region36: #{tpu_custom_call.1} parent=1 // pred_region
      _
    $region37: #{tpu_custom_call.1} parent=1 // pred_fallthru
      _
    // Predicated region
    $region38: #{tpu_custom_call.1} parent=1 // pred_check
      _
    $region39: #{tpu_custom_call.1} parent=1 // pred_check_branch
      %47 = sbr.rel (0) target = $region41
    $region40: #{tpu_custom_call.1} parent=1 // pred_region
      _
    $region41: #{tpu_custom_call.1} parent=1 // pred_fallthru
      _
    // Predicated region
    $region42: #{tpu_custom_call.1} parent=1 // pred_check
      _
    $region43: #{tpu_custom_call.1} parent=1 // pred_check_branch
      %49 = sbr.rel (0) target = $region45
    $region44: #{tpu_custom_call.1} parent=1 // pred_region
      %51 = dma.done [#allocation5], 8192
    $region45: #{tpu_custom_call.1} parent=1 // pred_fallthru
      _
    %v53 = vld [vmem:[#allocation4] sm:$0xff]
    %v54 = vld [vmem:[#allocation4 + $0x8] sm:$0xff]
    %v55 = vld [vmem:[#allocation4 + $0x10] sm:$0xff]
    %v56 = vld [vmem:[#allocation4 + $0x18] sm:$0xff]
    %v57 = vld [vmem:[#allocation4 + $0x20] sm:$0xff]
    %v58 = vld [vmem:[#allocation4 + $0x28] sm:$0xff]
    %v59 = vld [vmem:[#allocation4 + $0x30] sm:$0xff]
    %v60 = vld [vmem:[#allocation4 + $0x38] sm:$0xff]
    %v61 = vld [vmem:[#allocation4 + $0x40] sm:$0xff]
    %v62 = vld [vmem:[#allocation4 + $0x48] sm:$0xff]
    %v63 = vld [vmem:[#allocation4 + $0x50] sm:$0xff]
    %v64 = vld [vmem:[#allocation4 + $0x58] sm:$0xff]
    %v65 = vld [vmem:[#allocation4 + $0x60] sm:$0xff]
    %v66 = vld [vmem:[#allocation4 + $0x68] sm:$0xff]
    %v67 = vld [vmem:[#allocation4 + $0x70] sm:$0xff]
    %v68 = vld [vmem:[#allocation4 + $0x78] sm:$0xff]
    %v69 = vld [vmem:[#allocation4 + $0x80] sm:$0xff]
    %v70 = vld [vmem:[#allocation4 + $0x88] sm:$0xff]
    %v71 = vld [vmem:[#allocation4 + $0x90] sm:$0xff]
    %v72 = vld [vmem:[#allocation4 + $0x98] sm:$0xff]
    %v73 = vld [vmem:[#allocation4 + $0xa0] sm:$0xff]
    %v74 = vld [vmem:[#allocation4 + $0xa8] sm:$0xff]
    %v75 = vld [vmem:[#allocation4 + $0xb0] sm:$0xff]
    %v76 = vld [vmem:[#allocation4 + $0xb8] sm:$0xff]
    %v77 = vld [vmem:[#allocation4 + $0xc0] sm:$0xff]
    %v78 = vld [vmem:[#allocation4 + $0xc8] sm:$0xff]
    %v79 = vld [vmem:[#allocation4 + $0xd0] sm:$0xff]
    %v80 = vld [vmem:[#allocation4 + $0xd8] sm:$0xff]
    %v81 = vld [vmem:[#allocation4 + $0xe0] sm:$0xff]
    %v82 = vld [vmem:[#allocation4 + $0xe8] sm:$0xff]
    %v83 = vld [vmem:[#allocation4 + $0xf0] sm:$0xff]
    %v84 = vld [vmem:[#allocation4 + $0xf8] sm:$0xff]
    %v85 = vld [vmem:[#allocation4 + $0x100] sm:$0xff]
    %v86 = vld [vmem:[#allocation4 + $0x108] sm:$0xff]
    %v87 = vld [vmem:[#allocation4 + $0x110] sm:$0xff]
    %v88 = vld [vmem:[#allocation4 + $0x118] sm:$0xff]
    %v89 = vld [vmem:[#allocation4 + $0x120] sm:$0xff]
    %v90 = vld [vmem:[#allocation4 + $0x128] sm:$0xff]
    %v91 = vld [vmem:[#allocation4 + $0x130] sm:$0xff]
    %v92 = vld [vmem:[#allocation4 + $0x138] sm:$0xff]
    %v93 = vld [vmem:[#allocation4 + $0x140] sm:$0xff]
    %v94 = vld [vmem:[#allocation4 + $0x148] sm:$0xff]
    %v95 = vld [vmem:[#allocation4 + $0x150] sm:$0xff]
    %v96 = vld [vmem:[#allocation4 + $0x158] sm:$0xff]
    %v97 = vld [vmem:[#allocation4 + $0x160] sm:$0xff]
    %v98 = vld [vmem:[#allocation4 + $0x168] sm:$0xff]
    %v99 = vld [vmem:[#allocation4 + $0x170] sm:$0xff]
    %v100 = vld [vmem:[#allocation4 + $0x178] sm:$0xff]
    %v101 = vld [vmem:[#allocation4 + $0x180] sm:$0xff]
    %v102 = vld [vmem:[#allocation4 + $0x188] sm:$0xff]
    %v103 = vld [vmem:[#allocation4 + $0x190] sm:$0xff]
    %v104 = vld [vmem:[#allocation4 + $0x198] sm:$0xff]
    %v105 = vld [vmem:[#allocation4 + $0x1a0] sm:$0xff]
    %v106 = vld [vmem:[#allocation4 + $0x1a8] sm:$0xff]
    %v107 = vld [vmem:[#allocation4 + $0x1b0] sm:$0xff]
    %v108 = vld [vmem:[#allocation4 + $0x1b8] sm:$0xff]
    %v109 = vld [vmem:[#allocation4 + $0x1c0] sm:$0xff]
    %v110 = vld [vmem:[#allocation4 + $0x1c8] sm:$0xff]
    %v111 = vld [vmem:[#allocation4 + $0x1d0] sm:$0xff]
    %v112 = vld [vmem:[#allocation4 + $0x1d8] sm:$0xff]
    %v113 = vld [vmem:[#allocation4 + $0x1e0] sm:$0xff]
    %v114 = vld [vmem:[#allocation4 + $0x1e8] sm:$0xff]
    %v115 = vld [vmem:[#allocation4 + $0x1f0] sm:$0xff]
    %v116 = vld [vmem:[#allocation4 + $0x1f8] sm:$0xff]
    %v117 = vpack.c.bf16 %v54, %v53
    %v118 = vpack.c.bf16 %v56, %v55
    %v119 = vpack.c.bf16 %v58, %v57
    %v120 = vpack.c.bf16 %v60, %v59
    %v121 = vpack.c.bf16 %v62, %v61
    %v122 = vpack.c.bf16 %v64, %v63
    %v123 = vpack.c.bf16 %v66, %v65
    %v124 = vpack.c.bf16 %v68, %v67
    %v125 = vpack.c.bf16 %v70, %v69
    %v126 = vpack.c.bf16 %v72, %v71
    %v127 = vpack.c.bf16 %v74, %v73
    %v128 = vpack.c.bf16 %v76, %v75
    %v129 = vpack.c.bf16 %v78, %v77
    %v130 = vpack.c.bf16 %v80, %v79
    %v131 = vpack.c.bf16 %v82, %v81
    %v132 = vpack.c.bf16 %v84, %v83
    %v133 = vpack.c.bf16 %v86, %v85
    %v134 = vpack.c.bf16 %v88, %v87
    %v135 = vpack.c.bf16 %v90, %v89
    %v136 = vpack.c.bf16 %v92, %v91
    %v137 = vpack.c.bf16 %v94, %v93
    %v138 = vpack.c.bf16 %v96, %v95
    %v139 = vpack.c.bf16 %v98, %v97
    %v140 = vpack.c.bf16 %v100, %v99
    %v141 = vpack.c.bf16 %v102, %v101
    %v142 = vpack.c.bf16 %v104, %v103
    %v143 = vpack.c.bf16 %v106, %v105
    %v144 = vpack.c.bf16 %v108, %v107
    %v145 = vpack.c.bf16 %v110, %v109
    %v146 = vpack.c.bf16 %v112, %v111
    %v147 = vpack.c.bf16 %v114, %v113
    %v148 = vpack.c.bf16 %v116, %v115
    %v149 = vld [vmem:[%s1] sm:$0xf]
    %v150 = vld [vmem:[%s1 + $0x4] sm:$0xf]
    %v151 = vld [vmem:[%s1 + $0x8] sm:$0xf]
    %v152 = vld [vmem:[%s1 + $0xc] sm:$0xf]
    %v153 = vld [vmem:[%s1 + $0x10] sm:$0xf]
    %v154 = vld [vmem:[%s1 + $0x14] sm:$0xf]
    %v155 = vld [vmem:[%s1 + $0x18] sm:$0xf]
    %v156 = vld [vmem:[%s1 + $0x1c] sm:$0xf]
    %v157 = vld [vmem:[%s1 + $0x20] sm:$0xf]
    %v158 = vld [vmem:[%s1 + $0x24] sm:$0xf]
    %v159 = vld [vmem:[%s1 + $0x28] sm:$0xf]
    %v160 = vld [vmem:[%s1 + $0x2c] sm:$0xf]
    %v161 = vld [vmem:[%s1 + $0x30] sm:$0xf]
    %v162 = vld [vmem:[%s1 + $0x34] sm:$0xf]
    %v163 = vld [vmem:[%s1 + $0x38] sm:$0xf]
    %v164 = vld [vmem:[%s1 + $0x3c] sm:$0xf]
    %v181 = vunpack.c.l.b16 %v149
    %v182 = vunpack.c.l.b16 %v150
    %v183 = vunpack.c.l.b16 %v151
    %v184 = vunpack.c.l.b16 %v152
    %v185 = vunpack.c.l.b16 %v153
    %v186 = vunpack.c.l.b16 %v154
    %v187 = vunpack.c.l.b16 %v155
    %v188 = vunpack.c.l.b16 %v156
    %v189 = vunpack.c.l.b16 %v157
    %v190 = vunpack.c.l.b16 %v158
    %v191 = vunpack.c.l.b16 %v159
    %v192 = vunpack.c.l.b16 %v160
    %v193 = vunpack.c.l.b16 %v161
    %v194 = vunpack.c.l.b16 %v162
    %v195 = vunpack.c.l.b16 %v163
    %v196 = vunpack.c.l.b16 %v164
    %v197 = vpack.c.b16 %v182, %v181
    %v198 = vpack.c.b16 %v184, %v183
    %v199 = vpack.c.b16 %v186, %v185
    %v200 = vpack.c.b16 %v188, %v187
    %v201 = vpack.c.b16 %v190, %v189
    %v202 = vpack.c.b16 %v192, %v191
    %v203 = vpack.c.b16 %v194, %v193
    %v204 = vpack.c.b16 %v196, %v195
    %213 = vmatpush.bf16.msra.mxu0 %v204
    %214 = vmatpush.bf16.msra.mxu0 %v203
    %215 = vmatpush.bf16.msra.mxu0 %v202
    %216 = vmatpush.bf16.msra.mxu0 %v201
    %217 = vmatpush.bf16.msra.mxu0 %v200
    %218 = vmatpush.bf16.msra.mxu0 %v199
    %219 = vmatpush.bf16.msra.mxu0 %v198
    %220 = vmatpush.bf16.msra.mxu0 %v197
    %221 = vmatmul.bf16.gmra.mxu0 %v117
    %v222 = vpop.f32.mrf.mxu0
    %v223 = vadd.f32 0.0, %v222
    %v224 = vpop.f32.mrf.mxu0
    %v225 = vadd.f32 0.0, %v224
    %226 = vmatmul.bf16.gmra.mxu0 %v118
    %v227 = vpop.f32.mrf.mxu0
    %v228 = vadd.f32 0.0, %v227
    %v229 = vpop.f32.mrf.mxu0
    %v230 = vadd.f32 0.0, %v229
    %231 = vmatmul.bf16.gmra.mxu0 %v119
    %v232 = vpop.f32.mrf.mxu0
    %v233 = vadd.f32 0.0, %v232
    %v234 = vpop.f32.mrf.mxu0
    %v235 = vadd.f32 0.0, %v234
    %236 = vmatmul.bf16.gmra.mxu0 %v120
    %v237 = vpop.f32.mrf.mxu0
    %v238 = vadd.f32 0.0, %v237
    %v239 = vpop.f32.mrf.mxu0
    %v240 = vadd.f32 0.0, %v239
    %241 = vmatmul.bf16.gmra.mxu0 %v121
    %v242 = vpop.f32.mrf.mxu0
    %v243 = vadd.f32 0.0, %v242
    %v244 = vpop.f32.mrf.mxu0
    %v245 = vadd.f32 0.0, %v244
    %246 = vmatmul.bf16.gmra.mxu0 %v122
    %v247 = vpop.f32.mrf.mxu0
    %v248 = vadd.f32 0.0, %v247
    %v249 = vpop.f32.mrf.mxu0
    %v250 = vadd.f32 0.0, %v249
    %251 = vmatmul.bf16.gmra.mxu0 %v123
    %v252 = vpop.f32.mrf.mxu0
    %v253 = vadd.f32 0.0, %v252
    %v254 = vpop.f32.mrf.mxu0
    %v255 = vadd.f32 0.0, %v254
    %256 = vmatmul.bf16.gmra.mxu0 %v124
    %v257 = vpop.f32.mrf.mxu0
    %v258 = vadd.f32 0.0, %v257
    %v259 = vpop.f32.mrf.mxu0
    %v260 = vadd.f32 0.0, %v259
    %261 = vmatmul.bf16.gmra.mxu0 %v125
    %v262 = vpop.f32.mrf.mxu0
    %v263 = vadd.f32 0.0, %v262
    %v264 = vpop.f32.mrf.mxu0
    %v265 = vadd.f32 0.0, %v264
    %266 = vmatmul.bf16.gmra.mxu0 %v126
    %v267 = vpop.f32.mrf.mxu0
    %v268 = vadd.f32 0.0, %v267
    %v269 = vpop.f32.mrf.mxu0
    %v270 = vadd.f32 0.0, %v269
    %271 = vmatmul.bf16.gmra.mxu0 %v127
    %v272 = vpop.f32.mrf.mxu0
    %v273 = vadd.f32 0.0, %v272
    %v274 = vpop.f32.mrf.mxu0
    %v275 = vadd.f32 0.0, %v274
    %276 = vmatmul.bf16.gmra.mxu0 %v128
    %v277 = vpop.f32.mrf.mxu0
    %v278 = vadd.f32 0.0, %v277
    %v279 = vpop.f32.mrf.mxu0
    %v280 = vadd.f32 0.0, %v279
    %281 = vmatmul.bf16.gmra.mxu0 %v129
    %v282 = vpop.f32.mrf.mxu0
    %v283 = vadd.f32 0.0, %v282
    %v284 = vpop.f32.mrf.mxu0
    %v285 = vadd.f32 0.0, %v284
    %286 = vmatmul.bf16.gmra.mxu0 %v130
    %v287 = vpop.f32.mrf.mxu0
    %v288 = vadd.f32 0.0, %v287
    %v289 = vpop.f32.mrf.mxu0
    %v290 = vadd.f32 0.0, %v289
    %291 = vmatmul.bf16.gmra.mxu0 %v131
    %v292 = vpop.f32.mrf.mxu0
    %v293 = vadd.f32 0.0, %v292
    %v294 = vpop.f32.mrf.mxu0
    %v295 = vadd.f32 0.0, %v294
    %296 = vmatmul.bf16.gmra.mxu0 %v132
    %v297 = vpop.f32.mrf.mxu0
    %v298 = vadd.f32 0.0, %v297
    %v299 = vpop.f32.mrf.mxu0
    %v300 = vadd.f32 0.0, %v299
    %301 = vmatmul.bf16.gmra.mxu0 %v133
    %v302 = vpop.f32.mrf.mxu0
    %v303 = vadd.f32 0.0, %v302
    %v304 = vpop.f32.mrf.mxu0
    %v305 = vadd.f32 0.0, %v304
    %306 = vmatmul.bf16.gmra.mxu0 %v134
    %v307 = vpop.f32.mrf.mxu0
    %v308 = vadd.f32 0.0, %v307
    %v309 = vpop.f32.mrf.mxu0
    %v310 = vadd.f32 0.0, %v309
    %311 = vmatmul.bf16.gmra.mxu0 %v135
    %v312 = vpop.f32.mrf.mxu0
    %v313 = vadd.f32 0.0, %v312
    %v314 = vpop.f32.mrf.mxu0
    %v315 = vadd.f32 0.0, %v314
    %316 = vmatmul.bf16.gmra.mxu0 %v136
    %v317 = vpop.f32.mrf.mxu0
    %v318 = vadd.f32 0.0, %v317
    %v319 = vpop.f32.mrf.mxu0
    %v320 = vadd.f32 0.0, %v319
    %321 = vmatmul.bf16.gmra.mxu0 %v137
    %v322 = vpop.f32.mrf.mxu0
    %v323 = vadd.f32 0.0, %v322
    %v324 = vpop.f32.mrf.mxu0
    %v325 = vadd.f32 0.0, %v324
    %326 = vmatmul.bf16.gmra.mxu0 %v138
    %v327 = vpop.f32.mrf.mxu0
    %v328 = vadd.f32 0.0, %v327
    %v329 = vpop.f32.mrf.mxu0
    %v330 = vadd.f32 0.0, %v329
    %331 = vmatmul.bf16.gmra.mxu0 %v139
    %v332 = vpop.f32.mrf.mxu0
    %v333 = vadd.f32 0.0, %v332
    %v334 = vpop.f32.mrf.mxu0
    %v335 = vadd.f32 0.0, %v334
    %336 = vmatmul.bf16.gmra.mxu0 %v140
    %v337 = vpop.f32.mrf.mxu0
    %v338 = vadd.f32 0.0, %v337
    %v339 = vpop.f32.mrf.mxu0
    %v340 = vadd.f32 0.0, %v339
    %341 = vmatmul.bf16.gmra.mxu0 %v141
    %v342 = vpop.f32.mrf.mxu0
    %v343 = vadd.f32 0.0, %v342
    %v344 = vpop.f32.mrf.mxu0
    %v345 = vadd.f32 0.0, %v344
    %346 = vmatmul.bf16.gmra.mxu0 %v142
    %v347 = vpop.f32.mrf.mxu0
    %v348 = vadd.f32 0.0, %v347
    %v349 = vpop.f32.mrf.mxu0
    %v350 = vadd.f32 0.0, %v349
    %351 = vmatmul.bf16.gmra.mxu0 %v143
    %v352 = vpop.f32.mrf.mxu0
    %v353 = vadd.f32 0.0, %v352
    %v354 = vpop.f32.mrf.mxu0
    %v355 = vadd.f32 0.0, %v354
    %356 = vmatmul.bf16.gmra.mxu0 %v144
    %v357 = vpop.f32.mrf.mxu0
    %v358 = vadd.f32 0.0, %v357
    %v359 = vpop.f32.mrf.mxu0
    %v360 = vadd.f32 0.0, %v359
    %361 = vmatmul.bf16.gmra.mxu0 %v145
    %v362 = vpop.f32.mrf.mxu0
    %v363 = vadd.f32 0.0, %v362
    %v364 = vpop.f32.mrf.mxu0
    %v365 = vadd.f32 0.0, %v364
    %366 = vmatmul.bf16.gmra.mxu0 %v146
    %v367 = vpop.f32.mrf.mxu0
    %v368 = vadd.f32 0.0, %v367
    %v369 = vpop.f32.mrf.mxu0
    %v370 = vadd.f32 0.0, %v369
    %371 = vmatmul.bf16.gmra.mxu0 %v147
    %v372 = vpop.f32.mrf.mxu0
    %v373 = vadd.f32 0.0, %v372
    %v374 = vpop.f32.mrf.mxu0
    %v375 = vadd.f32 0.0, %v374
    %376 = vmatmul.bf16.gmra.mxu0 %v148
    %v377 = vpop.f32.mrf.mxu0
    %v378 = vadd.f32 0.0, %v377
    %v379 = vpop.f32.mrf.mxu0
    %v380 = vadd.f32 0.0, %v379
    %381 = vdwg.mxu0
    %vm382 = vcmask 261120
    %v383 = vsel %vm382, %v223, 0.0
    %v384 = vsel %vm382, %v225, 0.0
    %v385 = vadd.f32 %v383, %v384
    %v386 = vsel %vm382, %v228, 0.0
    %v387 = vadd.f32 %v385, %v386
    %v388 = vsel %vm382, %v230, 0.0
    %v389 = vadd.f32 %v387, %v388
    %v390 = vsel %vm382, %v233, 0.0
    %v391 = vadd.f32 %v389, %v390
    %v392 = vsel %vm382, %v235, 0.0
    %v393 = vadd.f32 %v391, %v392
    %v394 = vsel %vm382, %v238, 0.0
    %v395 = vadd.f32 %v393, %v394
    %v396 = vsel %vm382, %v240, 0.0
    %v397 = vadd.f32 %v395, %v396
    %v398 = vsel %vm382, %v243, 0.0
    %v399 = vadd.f32 %v397, %v398
    %v400 = vsel %vm382, %v245, 0.0
    %v401 = vadd.f32 %v399, %v400
    %v402 = vsel %vm382, %v248, 0.0
    %v403 = vadd.f32 %v401, %v402
    %v404 = vsel %vm382, %v250, 0.0
    %v405 = vadd.f32 %v403, %v404
    %v406 = vsel %vm382, %v253, 0.0
    %v407 = vadd.f32 %v405, %v406
    %v408 = vsel %vm382, %v255, 0.0
    %v409 = vadd.f32 %v407, %v408
    %v410 = vsel %vm382, %v258, 0.0
    %v411 = vadd.f32 %v409, %v410
    %v412 = vsel %vm382, %v260, 0.0
    %v413 = vadd.f32 %v411, %v412
    %v414 = vsel %vm382, %v263, 0.0
    %v415 = vadd.f32 %v413, %v414
    %v416 = vsel %vm382, %v265, 0.0
    %v417 = vadd.f32 %v415, %v416
    %v418 = vsel %vm382, %v268, 0.0
    %v419 = vadd.f32 %v417, %v418
    %v420 = vsel %vm382, %v270, 0.0
    %v421 = vadd.f32 %v419, %v420
    %v422 = vsel %vm382, %v273, 0.0
    %v423 = vadd.f32 %v421, %v422
    %v424 = vsel %vm382, %v275, 0.0
    %v425 = vadd.f32 %v423, %v424
    %v426 = vsel %vm382, %v278, 0.0
    %v427 = vadd.f32 %v425, %v426
    %v428 = vsel %vm382, %v280, 0.0
    %v429 = vadd.f32 %v427, %v428
    %v430 = vsel %vm382, %v283, 0.0
    %v431 = vadd.f32 %v429, %v430
    %v432 = vsel %vm382, %v285, 0.0
    %v433 = vadd.f32 %v431, %v432
    %v434 = vsel %vm382, %v288, 0.0
    %v435 = vadd.f32 %v433, %v434
    %v436 = vsel %vm382, %v290, 0.0
    %v437 = vadd.f32 %v435, %v436
    %v438 = vsel %vm382, %v293, 0.0
    %v439 = vadd.f32 %v437, %v438
    %v440 = vsel %vm382, %v295, 0.0
    %v441 = vadd.f32 %v439, %v440
    %v442 = vsel %vm382, %v298, 0.0
    %v443 = vadd.f32 %v441, %v442
    %v444 = vsel %vm382, %v300, 0.0
    %v445 = vadd.f32 %v443, %v444
    %v446 = vsel %vm382, %v303, 0.0
    %v447 = vadd.f32 %v445, %v446
    %v448 = vsel %vm382, %v305, 0.0
    %v449 = vadd.f32 %v447, %v448
    %v450 = vsel %vm382, %v308, 0.0
    %v451 = vadd.f32 %v449, %v450
    %v452 = vsel %vm382, %v310, 0.0
    %v453 = vadd.f32 %v451, %v452
    %v454 = vsel %vm382, %v313, 0.0
    %v455 = vadd.f32 %v453, %v454
    %v456 = vsel %vm382, %v315, 0.0
    %v457 = vadd.f32 %v455, %v456
    %v458 = vsel %vm382, %v318, 0.0
    %v459 = vadd.f32 %v457, %v458
    %v460 = vsel %vm382, %v320, 0.0
    %v461 = vadd.f32 %v459, %v460
    %v462 = vsel %vm382, %v323, 0.0
    %v463 = vadd.f32 %v461, %v462
    %v464 = vsel %vm382, %v325, 0.0
    %v465 = vadd.f32 %v463, %v464
    %v466 = vsel %vm382, %v328, 0.0
    %v467 = vadd.f32 %v465, %v466
    %v468 = vsel %vm382, %v330, 0.0
    %v469 = vadd.f32 %v467, %v468
    %v470 = vsel %vm382, %v333, 0.0
    %v471 = vadd.f32 %v469, %v470
    %v472 = vsel %vm382, %v335, 0.0
    %v473 = vadd.f32 %v471, %v472
    %v474 = vsel %vm382, %v338, 0.0
    %v475 = vadd.f32 %v473, %v474
    %v476 = vsel %vm382, %v340, 0.0
    %v477 = vadd.f32 %v475, %v476
    %v478 = vsel %vm382, %v343, 0.0
    %v479 = vadd.f32 %v477, %v478
    %v480 = vsel %vm382, %v345, 0.0
    %v481 = vadd.f32 %v479, %v480
    %v482 = vsel %vm382, %v348, 0.0
    %v483 = vadd.f32 %v481, %v482
    %v484 = vsel %vm382, %v350, 0.0
    %v485 = vadd.f32 %v483, %v484
    %v486 = vsel %vm382, %v353, 0.0
    %v487 = vadd.f32 %v485, %v486
    %v488 = vsel %vm382, %v355, 0.0
    %v489 = vadd.f32 %v487, %v488
    %v490 = vsel %vm382, %v358, 0.0
    %v491 = vadd.f32 %v489, %v490
    %v492 = vsel %vm382, %v360, 0.0
    %v493 = vadd.f32 %v491, %v492
    %v494 = vsel %vm382, %v363, 0.0
    %v495 = vadd.f32 %v493, %v494
    %v496 = vsel %vm382, %v365, 0.0
    %v497 = vadd.f32 %v495, %v496
    %v498 = vsel %vm382, %v368, 0.0
    %v499 = vadd.f32 %v497, %v498
    %v500 = vsel %vm382, %v370, 0.0
    %v501 = vadd.f32 %v499, %v500
    %v502 = vsel %vm382, %v373, 0.0
    %v503 = vadd.f32 %v501, %v502
    %v504 = vsel %vm382, %v375, 0.0
    %v505 = vadd.f32 %v503, %v504
    %v506 = vsel %vm382, %v378, 0.0
    %v507 = vadd.f32 %v505, %v506
    %v508 = vsel %vm382, %v380, 0.0
    %v509 = vadd.f32 %v507, %v508
    %v510 = vrot.slane %v509, 4
    %v511 = vadd.f32 %v509, %v510
    %v512 = vrot.slane %v511, 2
    %v513 = vadd.f32 %v511, %v512
    %v514 = vrot.slane %v513, 1
    %v515 = vadd.f32 %v513, %v514
    %v516 = vmul.f32 %v223, %v223
    %v517 = vmul.f32 %v225, %v225
    %v518 = vmul.f32 %v228, %v228
    %v519 = vmul.f32 %v230, %v230
    %v520 = vmul.f32 %v233, %v233
    %v521 = vmul.f32 %v235, %v235
    %v522 = vmul.f32 %v238, %v238
    %v523 = vmul.f32 %v240, %v240
    %v524 = vmul.f32 %v243, %v243
    %v525 = vmul.f32 %v245, %v245
    %v526 = vmul.f32 %v248, %v248
    %v527 = vmul.f32 %v250, %v250
    %v528 = vmul.f32 %v253, %v253
    %v529 = vmul.f32 %v255, %v255
    %v530 = vmul.f32 %v258, %v258
    %v531 = vmul.f32 %v260, %v260
    %v532 = vmul.f32 %v263, %v263
    %v533 = vmul.f32 %v265, %v265
    %v534 = vmul.f32 %v268, %v268
    %v535 = vmul.f32 %v270, %v270
    %v536 = vmul.f32 %v273, %v273
    %v537 = vmul.f32 %v275, %v275
    %v538 = vmul.f32 %v278, %v278
    %v539 = vmul.f32 %v280, %v280
    %v540 = vmul.f32 %v283, %v283
    %v541 = vmul.f32 %v285, %v285
    %v542 = vmul.f32 %v288, %v288
    %v543 = vmul.f32 %v290, %v290
    %v544 = vmul.f32 %v293, %v293
    %v545 = vmul.f32 %v295, %v295
    %v546 = vmul.f32 %v298, %v298
    %v547 = vmul.f32 %v300, %v300
    %v548 = vmul.f32 %v303, %v303
    %v549 = vmul.f32 %v305, %v305
    %v550 = vmul.f32 %v308, %v308
    %v551 = vmul.f32 %v310, %v310
    %v552 = vmul.f32 %v313, %v313
    %v553 = vmul.f32 %v315, %v315
    %v554 = vmul.f32 %v318, %v318
    %v555 = vmul.f32 %v320, %v320
    %v556 = vmul.f32 %v323, %v323
    %v557 = vmul.f32 %v325, %v325
    %v558 = vmul.f32 %v328, %v328
    %v559 = vmul.f32 %v330, %v330
    %v560 = vmul.f32 %v333, %v333
    %v561 = vmul.f32 %v335, %v335
    %v562 = vmul.f32 %v338, %v338
    %v563 = vmul.f32 %v340, %v340
    %v564 = vmul.f32 %v343, %v343
    %v565 = vmul.f32 %v345, %v345
    %v566 = vmul.f32 %v348, %v348
    %v567 = vmul.f32 %v350, %v350
    %v568 = vmul.f32 %v353, %v353
    %v569 = vmul.f32 %v355, %v355
    %v570 = vmul.f32 %v358, %v358
    %v571 = vmul.f32 %v360, %v360
    %v572 = vmul.f32 %v363, %v363
    %v573 = vmul.f32 %v365, %v365
    %v574 = vmul.f32 %v368, %v368
    %v575 = vmul.f32 %v370, %v370
    %v576 = vmul.f32 %v373, %v373
    %v577 = vmul.f32 %v375, %v375
    %v578 = vmul.f32 %v378, %v378
    %v579 = vmul.f32 %v380, %v380
    %v580 = vsel %vm382, %v516, 0.0
    %v581 = vsel %vm382, %v517, 0.0
    %v582 = vadd.f32 %v580, %v581
    %v583 = vsel %vm382, %v518, 0.0
    %v584 = vadd.f32 %v582, %v583
    %v585 = vsel %vm382, %v519, 0.0
    %v586 = vadd.f32 %v584, %v585
    %v587 = vsel %vm382, %v520, 0.0
    %v588 = vadd.f32 %v586, %v587
    %v589 = vsel %vm382, %v521, 0.0
    %v590 = vadd.f32 %v588, %v589
    %v591 = vsel %vm382, %v522, 0.0
    %v592 = vadd.f32 %v590, %v591
    %v593 = vsel %vm382, %v523, 0.0
    %v594 = vadd.f32 %v592, %v593
    %v595 = vsel %vm382, %v524, 0.0
    %v596 = vadd.f32 %v594, %v595
    %v597 = vsel %vm382, %v525, 0.0
    %v598 = vadd.f32 %v596, %v597
    %v599 = vsel %vm382, %v526, 0.0
    %v600 = vadd.f32 %v598, %v599
    %v601 = vsel %vm382, %v527, 0.0
    %v602 = vadd.f32 %v600, %v601
    %v603 = vsel %vm382, %v528, 0.0
    %v604 = vadd.f32 %v602, %v603
    %v605 = vsel %vm382, %v529, 0.0
    %v606 = vadd.f32 %v604, %v605
    %v607 = vsel %vm382, %v530, 0.0
    %v608 = vadd.f32 %v606, %v607
    %v609 = vsel %vm382, %v531, 0.0
    %v610 = vadd.f32 %v608, %v609
    %v611 = vsel %vm382, %v532, 0.0
    %v612 = vadd.f32 %v610, %v611
    %v613 = vsel %vm382, %v533, 0.0
    %v614 = vadd.f32 %v612, %v613
    %v615 = vsel %vm382, %v534, 0.0
    %v616 = vadd.f32 %v614, %v615
    %v617 = vsel %vm382, %v535, 0.0
    %v618 = vadd.f32 %v616, %v617
    %v619 = vsel %vm382, %v536, 0.0
    %v620 = vadd.f32 %v618, %v619
    %v621 = vsel %vm382, %v537, 0.0
    %v622 = vadd.f32 %v620, %v621
    %v623 = vsel %vm382, %v538, 0.0
    %v624 = vadd.f32 %v622, %v623
    %v625 = vsel %vm382, %v539, 0.0
    %v626 = vadd.f32 %v624, %v625
    %v627 = vsel %vm382, %v540, 0.0
    %v628 = vadd.f32 %v626, %v627
    %v629 = vsel %vm382, %v541, 0.0
    %v630 = vadd.f32 %v628, %v629
    %v631 = vsel %vm382, %v542, 0.0
    %v632 = vadd.f32 %v630, %v631
    %v633 = vsel %vm382, %v543, 0.0
    %v634 = vadd.f32 %v632, %v633
    %v635 = vsel %vm382, %v544, 0.0
    %v636 = vadd.f32 %v634, %v635
    %v637 = vsel %vm382, %v545, 0.0
    %v638 = vadd.f32 %v636, %v637
    %v639 = vsel %vm382, %v546, 0.0
    %v640 = vadd.f32 %v638, %v639
    %v641 = vsel %vm382, %v547, 0.0
    %v642 = vadd.f32 %v640, %v641
    %v643 = vsel %vm382, %v548, 0.0
    %v644 = vadd.f32 %v642, %v643
    %v645 = vsel %vm382, %v549, 0.0
    %v646 = vadd.f32 %v644, %v645
    %v647 = vsel %vm382, %v550, 0.0
    %v648 = vadd.f32 %v646, %v647
    %v649 = vsel %vm382, %v551, 0.0
    %v650 = vadd.f32 %v648, %v649
    %v651 = vsel %vm382, %v552, 0.0
    %v652 = vadd.f32 %v650, %v651
    %v653 = vsel %vm382, %v553, 0.0
    %v654 = vadd.f32 %v652, %v653
    %v655 = vsel %vm382, %v554, 0.0
    %v656 = vadd.f32 %v654, %v655
    %v657 = vsel %vm382, %v555, 0.0
    %v658 = vadd.f32 %v656, %v657
    %v659 = vsel %vm382, %v556, 0.0
    %v660 = vadd.f32 %v658, %v659
    %v661 = vsel %vm382, %v557, 0.0
    %v662 = vadd.f32 %v660, %v661
    %v663 = vsel %vm382, %v558, 0.0
    %v664 = vadd.f32 %v662, %v663
    %v665 = vsel %vm382, %v559, 0.0
    %v666 = vadd.f32 %v664, %v665
    %v667 = vsel %vm382, %v560, 0.0
    %v668 = vadd.f32 %v666, %v667
    %v669 = vsel %vm382, %v561, 0.0
    %v670 = vadd.f32 %v668, %v669
    %v671 = vsel %vm382, %v562, 0.0
    %v672 = vadd.f32 %v670, %v671
    %v673 = vsel %vm382, %v563, 0.0
    %v674 = vadd.f32 %v672, %v673
    %v675 = vsel %vm382, %v564, 0.0
    %v676 = vadd.f32 %v674, %v675
    %v677 = vsel %vm382, %v565, 0.0
    %v678 = vadd.f32 %v676, %v677
    %v679 = vsel %vm382, %v566, 0.0
    %v680 = vadd.f32 %v678, %v679
    %v681 = vsel %vm382, %v567, 0.0
    %v682 = vadd.f32 %v680, %v681
    %v683 = vsel %vm382, %v568, 0.0
    %v684 = vadd.f32 %v682, %v683
    %v685 = vsel %vm382, %v569, 0.0
    %v686 = vadd.f32 %v684, %v685
    %v687 = vsel %vm382, %v570, 0.0
    %v688 = vadd.f32 %v686, %v687
    %v689 = vsel %vm382, %v571, 0.0
    %v690 = vadd.f32 %v688, %v689
    %v691 = vsel %vm382, %v572, 0.0
    %v692 = vadd.f32 %v690, %v691
    %v693 = vsel %vm382, %v573, 0.0
    %v694 = vadd.f32 %v692, %v693
    %v695 = vsel %vm382, %v574, 0.0
    %v696 = vadd.f32 %v694, %v695
    %v697 = vsel %vm382, %v575, 0.0
    %v698 = vadd.f32 %v696, %v697
    %v699 = vsel %vm382, %v576, 0.0
    %v700 = vadd.f32 %v698, %v699
    %v701 = vsel %vm382, %v577, 0.0
    %v702 = vadd.f32 %v700, %v701
    %v703 = vsel %vm382, %v578, 0.0
    %v704 = vadd.f32 %v702, %v703
    %v705 = vsel %vm382, %v579, 0.0
    %v706 = vadd.f32 %v704, %v705
    %v707 = vrot.slane %v706, 4
    %v708 = vadd.f32 %v706, %v707
    %v709 = vrot.slane %v708, 2
    %v710 = vadd.f32 %v708, %v709
    %v711 = vrot.slane %v710, 1
    %v712 = vadd.f32 %v710, %v711
    %v713 = vmul.f32 %v515, 0.001953125
    %v714 = vmul.f32 %v712, 0.001953125
    %v715 = vmul.f32 %v713, %v713
    %v716 = vsub.f32 %v714, %v715
    %v717 = vmax.f32 %v716, 0.0
    %v718 = vld [vmem:[%s2] sm:$0x1]
    %v719 = vadd.f32 %v717, 1e-05
    %v720 = vrsqrt.pop %v719
    %v721 = vmul.f32 %v720, %v719
    %v722 = vmul.f32 %v721, %v720
    %v723 = vmul.f32 0.5, %v722
    %v724 = vsub.f32 1.5, %v723
    %v725 = vmul.f32 %v720, %v724
    %vm726 = vweird.f32 %v719
    %vm727 = vweird.f32 %v720
    %vm728 = vmor %vm726, %vm727
    %v729 = vsel %vm728, %v720, %v725
    %v730 = vmul.f32 %v718, %v729
    %v731 = vld [vmem:[%s3] sm:$0x1]
    %v732 = vmul.f32 %v713, %v730
    %v733 = vsub.f32 %v731, %v732
    %v735 = vperm.slane %v730, 0
    %v737 = vmul.f32 %v223, %v735
    %v738 = vmul.f32 %v225, %v735
    %v739 = vmul.f32 %v228, %v735
    %v740 = vmul.f32 %v230, %v735
    %v741 = vmul.f32 %v233, %v735
    %v742 = vmul.f32 %v235, %v735
    %v743 = vmul.f32 %v238, %v735
    %v744 = vmul.f32 %v240, %v735
    %v745 = vmul.f32 %v243, %v735
    %v746 = vmul.f32 %v245, %v735
    %v747 = vmul.f32 %v248, %v735
    %v748 = vmul.f32 %v250, %v735
    %v749 = vmul.f32 %v253, %v735
    %v750 = vmul.f32 %v255, %v735
    %v751 = vmul.f32 %v258, %v735
    %v752 = vmul.f32 %v260, %v735
    %v753 = vmul.f32 %v263, %v735
    %v754 = vmul.f32 %v265, %v735
    %v755 = vmul.f32 %v268, %v735
    %v756 = vmul.f32 %v270, %v735
    %v757 = vmul.f32 %v273, %v735
    %v758 = vmul.f32 %v275, %v735
    %v759 = vmul.f32 %v278, %v735
    %v760 = vmul.f32 %v280, %v735
    %v761 = vmul.f32 %v283, %v735
    %v762 = vmul.f32 %v285, %v735
    %v763 = vmul.f32 %v288, %v735
    %v764 = vmul.f32 %v290, %v735
    %v765 = vmul.f32 %v293, %v735
    %v766 = vmul.f32 %v295, %v735
    %v767 = vmul.f32 %v298, %v735
    %v768 = vmul.f32 %v300, %v735
    %v769 = vmul.f32 %v303, %v735
    %v770 = vmul.f32 %v305, %v735
    %v771 = vmul.f32 %v308, %v735
    %v772 = vmul.f32 %v310, %v735
    %v773 = vmul.f32 %v313, %v735
    %v774 = vmul.f32 %v315, %v735
    %v775 = vmul.f32 %v318, %v735
    %v776 = vmul.f32 %v320, %v735
    %v777 = vmul.f32 %v323, %v735
    %v778 = vmul.f32 %v325, %v735
    %v779 = vmul.f32 %v328, %v735
    %v780 = vmul.f32 %v330, %v735
    %v781 = vmul.f32 %v333, %v735
    %v782 = vmul.f32 %v335, %v735
    %v783 = vmul.f32 %v338, %v735
    %v784 = vmul.f32 %v340, %v735
    %v785 = vmul.f32 %v343, %v735
    %v786 = vmul.f32 %v345, %v735
    %v787 = vmul.f32 %v348, %v735
    %v788 = vmul.f32 %v350, %v735
    %v789 = vmul.f32 %v353, %v735
    %v790 = vmul.f32 %v355, %v735
    %v791 = vmul.f32 %v358, %v735
    %v792 = vmul.f32 %v360, %v735
    %v793 = vmul.f32 %v363, %v735
    %v794 = vmul.f32 %v365, %v735
    %v795 = vmul.f32 %v368, %v735
    %v796 = vmul.f32 %v370, %v735
    %v797 = vmul.f32 %v373, %v735
    %v798 = vmul.f32 %v375, %v735
    %v799 = vmul.f32 %v378, %v735
    %v800 = vmul.f32 %v380, %v735
    %v802 = vperm.slane %v733, 0
    %v804 = vadd.f32 %v737, %v802
    %v805 = vadd.f32 %v738, %v802
    %v806 = vadd.f32 %v739, %v802
    %v807 = vadd.f32 %v740, %v802
    %v808 = vadd.f32 %v741, %v802
    %v809 = vadd.f32 %v742, %v802
    %v810 = vadd.f32 %v743, %v802
    %v811 = vadd.f32 %v744, %v802
    %v812 = vadd.f32 %v745, %v802
    %v813 = vadd.f32 %v746, %v802
    %v814 = vadd.f32 %v747, %v802
    %v815 = vadd.f32 %v748, %v802
    %v816 = vadd.f32 %v749, %v802
    %v817 = vadd.f32 %v750, %v802
    %v818 = vadd.f32 %v751, %v802
    %v819 = vadd.f32 %v752, %v802
    %v820 = vadd.f32 %v753, %v802
    %v821 = vadd.f32 %v754, %v802
    %v822 = vadd.f32 %v755, %v802
    %v823 = vadd.f32 %v756, %v802
    %v824 = vadd.f32 %v757, %v802
    %v825 = vadd.f32 %v758, %v802
    %v826 = vadd.f32 %v759, %v802
    %v827 = vadd.f32 %v760, %v802
    %v828 = vadd.f32 %v761, %v802
    %v829 = vadd.f32 %v762, %v802
    %v830 = vadd.f32 %v763, %v802
    %v831 = vadd.f32 %v764, %v802
    %v832 = vadd.f32 %v765, %v802
    %v833 = vadd.f32 %v766, %v802
    %v834 = vadd.f32 %v767, %v802
    %v835 = vadd.f32 %v768, %v802
    %v836 = vadd.f32 %v769, %v802
    %v837 = vadd.f32 %v770, %v802
    %v838 = vadd.f32 %v771, %v802
    %v839 = vadd.f32 %v772, %v802
    %v840 = vadd.f32 %v773, %v802
    %v841 = vadd.f32 %v774, %v802
    %v842 = vadd.f32 %v775, %v802
    %v843 = vadd.f32 %v776, %v802
    %v844 = vadd.f32 %v777, %v802
    %v845 = vadd.f32 %v778, %v802
    %v846 = vadd.f32 %v779, %v802
    %v847 = vadd.f32 %v780, %v802
    %v848 = vadd.f32 %v781, %v802
    %v849 = vadd.f32 %v782, %v802
    %v850 = vadd.f32 %v783, %v802
    %v851 = vadd.f32 %v784, %v802
    %v852 = vadd.f32 %v785, %v802
    %v853 = vadd.f32 %v786, %v802
    %v854 = vadd.f32 %v787, %v802
    %v855 = vadd.f32 %v788, %v802
    %v856 = vadd.f32 %v789, %v802
    %v857 = vadd.f32 %v790, %v802
    %v858 = vadd.f32 %v791, %v802
    %v859 = vadd.f32 %v792, %v802
    %v860 = vadd.f32 %v793, %v802
    %v861 = vadd.f32 %v794, %v802
    %v862 = vadd.f32 %v795, %v802
    %v863 = vadd.f32 %v796, %v802
    %v864 = vadd.f32 %v797, %v802
    %v865 = vadd.f32 %v798, %v802
    %v866 = vadd.f32 %v799, %v802
    %v867 = vadd.f32 %v800, %v802
    %v868 = vmax.f32 %v804, 0.0
    %v869 = vmax.f32 %v805, 0.0
    %v870 = vmax.f32 %v806, 0.0
    %v871 = vmax.f32 %v807, 0.0
    %v872 = vmax.f32 %v808, 0.0
    %v873 = vmax.f32 %v809, 0.0
    %v874 = vmax.f32 %v810, 0.0
    %v875 = vmax.f32 %v811, 0.0
    %v876 = vmax.f32 %v812, 0.0
    %v877 = vmax.f32 %v813, 0.0
    %v878 = vmax.f32 %v814, 0.0
    %v879 = vmax.f32 %v815, 0.0
    %v880 = vmax.f32 %v816, 0.0
    %v881 = vmax.f32 %v817, 0.0
    %v882 = vmax.f32 %v818, 0.0
    %v883 = vmax.f32 %v819, 0.0
    %v884 = vmax.f32 %v820, 0.0
    %v885 = vmax.f32 %v821, 0.0
    %v886 = vmax.f32 %v822, 0.0
    %v887 = vmax.f32 %v823, 0.0
    %v888 = vmax.f32 %v824, 0.0
    %v889 = vmax.f32 %v825, 0.0
    %v890 = vmax.f32 %v826, 0.0
    %v891 = vmax.f32 %v827, 0.0
    %v892 = vmax.f32 %v828, 0.0
    %v893 = vmax.f32 %v829, 0.0
    %v894 = vmax.f32 %v830, 0.0
    %v895 = vmax.f32 %v831, 0.0
    %v896 = vmax.f32 %v832, 0.0
    %v897 = vmax.f32 %v833, 0.0
    %v898 = vmax.f32 %v834, 0.0
    %v899 = vmax.f32 %v835, 0.0
    %v900 = vmax.f32 %v836, 0.0
    %v901 = vmax.f32 %v837, 0.0
    %v902 = vmax.f32 %v838, 0.0
    %v903 = vmax.f32 %v839, 0.0
    %v904 = vmax.f32 %v840, 0.0
    %v905 = vmax.f32 %v841, 0.0
    %v906 = vmax.f32 %v842, 0.0
    %v907 = vmax.f32 %v843, 0.0
    %v908 = vmax.f32 %v844, 0.0
    %v909 = vmax.f32 %v845, 0.0
    %v910 = vmax.f32 %v846, 0.0
    %v911 = vmax.f32 %v847, 0.0
    %v912 = vmax.f32 %v848, 0.0
    %v913 = vmax.f32 %v849, 0.0
    %v914 = vmax.f32 %v850, 0.0
    %v915 = vmax.f32 %v851, 0.0
    %v916 = vmax.f32 %v852, 0.0
    %v917 = vmax.f32 %v853, 0.0
    %v918 = vmax.f32 %v854, 0.0
    %v919 = vmax.f32 %v855, 0.0
    %v920 = vmax.f32 %v856, 0.0
    %v921 = vmax.f32 %v857, 0.0
    %v922 = vmax.f32 %v858, 0.0
    %v923 = vmax.f32 %v859, 0.0
    %v924 = vmax.f32 %v860, 0.0
    %v925 = vmax.f32 %v861, 0.0
    %v926 = vmax.f32 %v862, 0.0
    %v927 = vmax.f32 %v863, 0.0
    %v928 = vmax.f32 %v864, 0.0
    %v929 = vmax.f32 %v865, 0.0
    %v930 = vmax.f32 %v866, 0.0
    %v931 = vmax.f32 %v867, 0.0
    %932 = vst.msk [vmem:[#allocation2] sm:$0xff] %vm382, 0.0
    %933 = vst.msk [vmem:[#allocation2 + $0x8] sm:$0xff] %vm382, 0.0
    %vm934 = vcmask 254976
    %935 = vst.msk [vmem:[#allocation2 + $0x10] sm:$0x3] %vm934, 0.0
    %936 = vst.msk [vmem:[#allocation2 + $0x1b0] sm:$0xff] %vm382, 0.0
    %937 = vst.msk [vmem:[#allocation2 + $0x1b8] sm:$0xff] %vm382, 0.0
    %938 = vst.msk [vmem:[#allocation2 + $0x1c0] sm:$0x3] %vm934, 0.0
    %s939 = scalar_lea.vmem [#allocation2], 408
    %940 = vst.msk [vmem:[%s939] sm:$0xff] %vm382, 0.0
    %941 = vst.msk [vmem:[%s939 + $0x8] sm:$0xff] %vm382, 0.0
    %942 = vst.msk [vmem:[%s939 + $0x10] sm:$0x3] %vm934, 0.0
    %943 = vst.msk [vmem:[%s939 + $0x1b0] sm:$0xff] %vm382, 0.0
    %944 = vst.msk [vmem:[%s939 + $0x1b8] sm:$0xff] %vm382, 0.0
    %945 = vst.msk [vmem:[%s939 + $0x1c0] sm:$0x3] %vm934, 0.0
    %vm946 = vcmask 253952
    %947 = vst.msk [vmem:[#allocation2] sm:$0x1] %vm946, 0.0
    %948 = vst.msk [vmem:[#allocation2 + $0x18] sm:$0x1] %vm946, 0.0
    %949 = vst.msk [vmem:[#allocation2 + $0x30] sm:$0x1] %vm946, 0.0
    %950 = vst.msk [vmem:[#allocation2 + $0x48] sm:$0x1] %vm946, 0.0
    %951 = vst.msk [vmem:[#allocation2 + $0x60] sm:$0x1] %vm946, 0.0
    %952 = vst.msk [vmem:[#allocation2 + $0x78] sm:$0x1] %vm946, 0.0
    %953 = vst.msk [vmem:[#allocation2 + $0x90] sm:$0x1] %vm946, 0.0
    %954 = vst.msk [vmem:[#allocation2 + $0xa8] sm:$0x1] %vm946, 0.0
    %955 = vst.msk [vmem:[#allocation2 + $0xc0] sm:$0x1] %vm946, 0.0
    %956 = vst.msk [vmem:[#allocation2 + $0xd8] sm:$0x1] %vm946, 0.0
    %957 = vst.msk [vmem:[#allocation2 + $0xf0] sm:$0x1] %vm946, 0.0
    %958 = vst.msk [vmem:[#allocation2 + $0x108] sm:$0x1] %vm946, 0.0
    %959 = vst.msk [vmem:[#allocation2 + $0x120] sm:$0x1] %vm946, 0.0
    %960 = vst.msk [vmem:[#allocation2 + $0x138] sm:$0x1] %vm946, 0.0
    %961 = vst.msk [vmem:[#allocation2 + $0x150] sm:$0x1] %vm946, 0.0
    %962 = vst.msk [vmem:[#allocation2 + $0x168] sm:$0x1] %vm946, 0.0
    %963 = vst.msk [vmem:[#allocation2 + $0x180] sm:$0x1] %vm946, 0.0
    %964 = vst.msk [vmem:[#allocation2 + $0x198] sm:$0x1] %vm946, 0.0
    %965 = vst.msk [vmem:[#allocation2 + $0x1b0] sm:$0x1] %vm946, 0.0
    %966 = vst.msk [vmem:[#allocation2 + $0x1c8] sm:$0x1] %vm946, 0.0
    %967 = vst.msk [vmem:[#allocation2 + $0x1e0] sm:$0x1] %vm946, 0.0
    %968 = vst.msk [vmem:[#allocation2 + $0x1f8] sm:$0x1] %vm946, 0.0
    %969 = vst.msk [vmem:[#allocation2 + $0x210] sm:$0x1] %vm946, 0.0
    %970 = vst.msk [vmem:[#allocation2 + $0x228] sm:$0x1] %vm946, 0.0
    %971 = vst.msk [vmem:[#allocation2 + $0x240] sm:$0x1] %vm946, 0.0
    %972 = vst.msk [vmem:[#allocation2 + $0x258] sm:$0x1] %vm946, 0.0
    %973 = vst.msk [vmem:[#allocation2 + $0x270] sm:$0x1] %vm946, 0.0
    %974 = vst.msk [vmem:[#allocation2 + $0x288] sm:$0x1] %vm946, 0.0
    %975 = vst.msk [vmem:[#allocation2 + $0x2a0] sm:$0x1] %vm946, 0.0
    %976 = vst.msk [vmem:[#allocation2 + $0x2b8] sm:$0x1] %vm946, 0.0
    %977 = vst.msk [vmem:[#allocation2 + $0x2d0] sm:$0x1] %vm946, 0.0
    %978 = vst.msk [vmem:[#allocation2 + $0x2e8] sm:$0x1] %vm946, 0.0
    %979 = vst.msk [vmem:[#allocation2 + $0x300] sm:$0x1] %vm946, 0.0
    %980 = vst.msk [vmem:[#allocation2 + $0x318] sm:$0x1] %vm946, 0.0
    %981 = vst.msk [vmem:[#allocation2 + $0x330] sm:$0x1] %vm946, 0.0
    %982 = vst.msk [vmem:[#allocation2 + $0x348] sm:$0x1] %vm946, 0.0
    %983 = vst.msk [vmem:[#allocation2 + $0x11] sm:$0x1] %vm946, 0.0
    %984 = vst.msk [vmem:[#allocation2 + $0x29] sm:$0x1] %vm946, 0.0
    %985 = vst.msk [vmem:[#allocation2 + $0x41] sm:$0x1] %vm946, 0.0
    %986 = vst.msk [vmem:[#allocation2 + $0x59] sm:$0x1] %vm946, 0.0
    %987 = vst.msk [vmem:[#allocation2 + $0x71] sm:$0x1] %vm946, 0.0
    %988 = vst.msk [vmem:[#allocation2 + $0x89] sm:$0x1] %vm946, 0.0
    %989 = vst.msk [vmem:[#allocation2 + $0xa1] sm:$0x1] %vm946, 0.0
    %990 = vst.msk [vmem:[#allocation2 + $0xb9] sm:$0x1] %vm946, 0.0
    %991 = vst.msk [vmem:[#allocation2 + $0xd1] sm:$0x1] %vm946, 0.0
    %992 = vst.msk [vmem:[#allocation2 + $0xe9] sm:$0x1] %vm946, 0.0
    %993 = vst.msk [vmem:[#allocation2 + $0x101] sm:$0x1] %vm946, 0.0
    %994 = vst.msk [vmem:[#allocation2 + $0x119] sm:$0x1] %vm946, 0.0
    %995 = vst.msk [vmem:[#allocation2 + $0x131] sm:$0x1] %vm946, 0.0
    %996 = vst.msk [vmem:[#allocation2 + $0x149] sm:$0x1] %vm946, 0.0
    %997 = vst.msk [vmem:[#allocation2 + $0x161] sm:$0x1] %vm946, 0.0
    %998 = vst.msk [vmem:[#allocation2 + $0x179] sm:$0x1] %vm946, 0.0
    %999 = vst.msk [vmem:[#allocation2 + $0x191] sm:$0x1] %vm946, 0.0
    %1000 = vst.msk [vmem:[#allocation2 + $0x1a9] sm:$0x1] %vm946, 0.0
    %1001 = vst.msk [vmem:[#allocation2 + $0x1c1] sm:$0x1] %vm946, 0.0
    %1002 = vst.msk [vmem:[#allocation2 + $0x1d9] sm:$0x1] %vm946, 0.0
    %1003 = vst.msk [vmem:[#allocation2 + $0x1f1] sm:$0x1] %vm946, 0.0
    %1004 = vst.msk [vmem:[#allocation2 + $0x209] sm:$0x1] %vm946, 0.0
    %1005 = vst.msk [vmem:[#allocation2 + $0x221] sm:$0x1] %vm946, 0.0
    %1006 = vst.msk [vmem:[#allocation2 + $0x239] sm:$0x1] %vm946, 0.0
    %1007 = vst.msk [vmem:[#allocation2 + $0x251] sm:$0x1] %vm946, 0.0
    %1008 = vst.msk [vmem:[#allocation2 + $0x269] sm:$0x1] %vm946, 0.0
    %1009 = vst.msk [vmem:[#allocation2 + $0x281] sm:$0x1] %vm946, 0.0
    %1010 = vst.msk [vmem:[#allocation2 + $0x299] sm:$0x1] %vm946, 0.0
    %1011 = vst.msk [vmem:[#allocation2 + $0x2b1] sm:$0x1] %vm946, 0.0
    %1012 = vst.msk [vmem:[#allocation2 + $0x2c9] sm:$0x1] %vm946, 0.0
    %1013 = vst.msk [vmem:[#allocation2 + $0x2e1] sm:$0x1] %vm946, 0.0
    %1014 = vst.msk [vmem:[#allocation2 + $0x2f9] sm:$0x1] %vm946, 0.0
    %1015 = vst.msk [vmem:[#allocation2 + $0x311] sm:$0x1] %vm946, 0.0
    %1016 = vst.msk [vmem:[#allocation2 + $0x329] sm:$0x1] %vm946, 0.0
    %1017 = vst.msk [vmem:[#allocation2 + $0x341] sm:$0x1] %vm946, 0.0
    %1018 = vst.msk [vmem:[#allocation2 + $0x359] sm:$0x1] %vm946, 0.0
    %s1019 = scalar_lea.vmem [#allocation2], 24
    %1020 = vst.msk [vmem:[%s1019 + $0x1] sm:$0xff] %vm382, %v868
    %1021 = vst.msk [vmem:[%s1019 + $0x9] sm:$0xff] %vm382, %v869
    %1022 = vst.msk [vmem:[%s1019 + $0x19] sm:$0xff] %vm382, %v870
    %1023 = vst.msk [vmem:[%s1019 + $0x21] sm:$0xff] %vm382, %v871
    %1024 = vst.msk [vmem:[%s1019 + $0x31] sm:$0xff] %vm382, %v872
    %1025 = vst.msk [vmem:[%s1019 + $0x39] sm:$0xff] %vm382, %v873
    %1026 = vst.msk [vmem:[%s1019 + $0x49] sm:$0xff] %vm382, %v874
    %1027 = vst.msk [vmem:[%s1019 + $0x51] sm:$0xff] %vm382, %v875
    %1028 = vst.msk [vmem:[%s1019 + $0x61] sm:$0xff] %vm382, %v876
    %1029 = vst.msk [vmem:[%s1019 + $0x69] sm:$0xff] %vm382, %v877
    %1030 = vst.msk [vmem:[%s1019 + $0x79] sm:$0xff] %vm382, %v878
    %1031 = vst.msk [vmem:[%s1019 + $0x81] sm:$0xff] %vm382, %v879
    %1032 = vst.msk [vmem:[%s1019 + $0x91] sm:$0xff] %vm382, %v880
    %1033 = vst.msk [vmem:[%s1019 + $0x99] sm:$0xff] %vm382, %v881
    %1034 = vst.msk [vmem:[%s1019 + $0xa9] sm:$0xff] %vm382, %v882
    %1035 = vst.msk [vmem:[%s1019 + $0xb1] sm:$0xff] %vm382, %v883
    %1036 = vst.msk [vmem:[%s1019 + $0xc1] sm:$0xff] %vm382, %v884
    %1037 = vst.msk [vmem:[%s1019 + $0xc9] sm:$0xff] %vm382, %v885
    %1038 = vst.msk [vmem:[%s1019 + $0xd9] sm:$0xff] %vm382, %v886
    %1039 = vst.msk [vmem:[%s1019 + $0xe1] sm:$0xff] %vm382, %v887
    %1040 = vst.msk [vmem:[%s1019 + $0xf1] sm:$0xff] %vm382, %v888
    %1041 = vst.msk [vmem:[%s1019 + $0xf9] sm:$0xff] %vm382, %v889
    %1042 = vst.msk [vmem:[%s1019 + $0x109] sm:$0xff] %vm382, %v890
    %1043 = vst.msk [vmem:[%s1019 + $0x111] sm:$0xff] %vm382, %v891
    %1044 = vst.msk [vmem:[%s1019 + $0x121] sm:$0xff] %vm382, %v892
    %1045 = vst.msk [vmem:[%s1019 + $0x129] sm:$0xff] %vm382, %v893
    %1046 = vst.msk [vmem:[%s1019 + $0x139] sm:$0xff] %vm382, %v894
    %1047 = vst.msk [vmem:[%s1019 + $0x141] sm:$0xff] %vm382, %v895
    %1048 = vst.msk [vmem:[%s1019 + $0x151] sm:$0xff] %vm382, %v896
    %1049 = vst.msk [vmem:[%s1019 + $0x159] sm:$0xff] %vm382, %v897
    %1050 = vst.msk [vmem:[%s1019 + $0x169] sm:$0xff] %vm382, %v898
    %1051 = vst.msk [vmem:[%s1019 + $0x171] sm:$0xff] %vm382, %v899
    %1052 = vst.msk [vmem:[%s1019 + $0x1b1] sm:$0xff] %vm382, %v900
    %1053 = vst.msk [vmem:[%s1019 + $0x1b9] sm:$0xff] %vm382, %v901
    %1054 = vst.msk [vmem:[%s1019 + $0x1c9] sm:$0xff] %vm382, %v902
    %1055 = vst.msk [vmem:[%s1019 + $0x1d1] sm:$0xff] %vm382, %v903
    %1056 = vst.msk [vmem:[%s1019 + $0x1e1] sm:$0xff] %vm382, %v904
    %1057 = vst.msk [vmem:[%s1019 + $0x1e9] sm:$0xff] %vm382, %v905
    %1058 = vst.msk [vmem:[%s1019 + $0x1f9] sm:$0xff] %vm382, %v906
    %1059 = vst.msk [vmem:[%s1019 + $0x201] sm:$0xff] %vm382, %v907
    %1060 = vst.msk [vmem:[%s1019 + $0x211] sm:$0xff] %vm382, %v908
    %1061 = vst.msk [vmem:[%s1019 + $0x219] sm:$0xff] %vm382, %v909
    %1062 = vst.msk [vmem:[%s1019 + $0x229] sm:$0xff] %vm382, %v910
    %1063 = vst.msk [vmem:[%s1019 + $0x231] sm:$0xff] %vm382, %v911
    %1064 = vst.msk [vmem:[%s1019 + $0x241] sm:$0xff] %vm382, %v912
    %1065 = vst.msk [vmem:[%s1019 + $0x249] sm:$0xff] %vm382, %v913
    %1066 = vst.msk [vmem:[%s1019 + $0x259] sm:$0xff] %vm382, %v914
    %1067 = vst.msk [vmem:[%s1019 + $0x261] sm:$0xff] %vm382, %v915
    %1068 = vst.msk [vmem:[%s1019 + $0x271] sm:$0xff] %vm382, %v916
    %1069 = vst.msk [vmem:[%s1019 + $0x279] sm:$0xff] %vm382, %v917
    %1070 = vst.msk [vmem:[%s1019 + $0x289] sm:$0xff] %vm382, %v918
    %1071 = vst.msk [vmem:[%s1019 + $0x291] sm:$0xff] %vm382, %v919
    %1072 = vst.msk [vmem:[%s1019 + $0x2a1] sm:$0xff] %vm382, %v920
    %1073 = vst.msk [vmem:[%s1019 + $0x2a9] sm:$0xff] %vm382, %v921
    %1074 = vst.msk [vmem:[%s1019 + $0x2b9] sm:$0xff] %vm382, %v922
    %1075 = vst.msk [vmem:[%s1019 + $0x2c1] sm:$0xff] %vm382, %v923
    %1076 = vst.msk [vmem:[%s1019 + $0x2d1] sm:$0xff] %vm382, %v924
    %1077 = vst.msk [vmem:[%s1019 + $0x2d9] sm:$0xff] %vm382, %v925
    %1078 = vst.msk [vmem:[%s1019 + $0x2e9] sm:$0xff] %vm382, %v926
    %1079 = vst.msk [vmem:[%s1019 + $0x2f1] sm:$0xff] %vm382, %v927
    %1080 = vst.msk [vmem:[%s1019 + $0x301] sm:$0xff] %vm382, %v928
    %1081 = vst.msk [vmem:[%s1019 + $0x309] sm:$0xff] %vm382, %v929
    %1082 = vst.msk [vmem:[%s1019 + $0x319] sm:$0xff] %vm382, %v930
    %1083 = vst.msk [vmem:[%s1019 + $0x321] sm:$0xff] %vm382, %v931
    %v1084 = vld [vmem:[#allocation2] sm:$0xff]
    %v1085 = vld [vmem:[#allocation2 + $0x8] sm:$0xff]
    %v1086 = vld [vmem:[#allocation2 + $0x18] sm:$0xff]
    %v1087 = vld [vmem:[#allocation2 + $0x20] sm:$0xff]
    %v1088 = vld [vmem:[#allocation2 + $0x30] sm:$0xff]
    %v1089 = vld [vmem:[#allocation2 + $0x38] sm:$0xff]
    %v1090 = vld [vmem:[#allocation2 + $0x48] sm:$0xff]
    %v1091 = vld [vmem:[#allocation2 + $0x50] sm:$0xff]
    %v1092 = vld [vmem:[#allocation2 + $0x60] sm:$0xff]
    %v1093 = vld [vmem:[#allocation2 + $0x68] sm:$0xff]
    %v1094 = vld [vmem:[#allocation2 + $0x78] sm:$0xff]
    %v1095 = vld [vmem:[#allocation2 + $0x80] sm:$0xff]
    %v1096 = vld [vmem:[#allocation2 + $0x90] sm:$0xff]
    %v1097 = vld [vmem:[#allocation2 + $0x98] sm:$0xff]
    %v1098 = vld [vmem:[#allocation2 + $0xa8] sm:$0xff]
    %v1099 = vld [vmem:[#allocation2 + $0xb0] sm:$0xff]
    %v1100 = vld [vmem:[#allocation2 + $0xc0] sm:$0xff]
    %v1101 = vld [vmem:[#allocation2 + $0xc8] sm:$0xff]
    %v1102 = vld [vmem:[#allocation2 + $0xd8] sm:$0xff]
    %v1103 = vld [vmem:[#allocation2 + $0xe0] sm:$0xff]
    %v1104 = vld [vmem:[#allocation2 + $0xf0] sm:$0xff]
    %v1105 = vld [vmem:[#allocation2 + $0xf8] sm:$0xff]
    %v1106 = vld [vmem:[#allocation2 + $0x108] sm:$0xff]
    %v1107 = vld [vmem:[#allocation2 + $0x110] sm:$0xff]
    %v1108 = vld [vmem:[#allocation2 + $0x120] sm:$0xff]
    %v1109 = vld [vmem:[#allocation2 + $0x128] sm:$0xff]
    %v1110 = vld [vmem:[#allocation2 + $0x138] sm:$0xff]
    %v1111 = vld [vmem:[#allocation2 + $0x140] sm:$0xff]
    %v1112 = vld [vmem:[#allocation2 + $0x150] sm:$0xff]
    %v1113 = vld [vmem:[#allocation2 + $0x158] sm:$0xff]
    %v1114 = vld [vmem:[#allocation2 + $0x168] sm:$0xff]
    %v1115 = vld [vmem:[#allocation2 + $0x170] sm:$0xff]
    %v1116 = vld [vmem:[#allocation2 + $0x1b0] sm:$0xff]
    %v1117 = vld [vmem:[#allocation2 + $0x1b8] sm:$0xff]
    %v1118 = vld [vmem:[#allocation2 + $0x1c8] sm:$0xff]
    %v1119 = vld [vmem:[#allocation2 + $0x1d0] sm:$0xff]
    %v1120 = vld [vmem:[#allocation2 + $0x1e0] sm:$0xff]
    %v1121 = vld [vmem:[#allocation2 + $0x1e8] sm:$0xff]
    %v1122 = vld [vmem:[#allocation2 + $0x1f8] sm:$0xff]
    %v1123 = vld [vmem:[#allocation2 + $0x200] sm:$0xff]
    %v1124 = vld [vmem:[#allocation2 + $0x210] sm:$0xff]
    %v1125 = vld [vmem:[#allocation2 + $0x218] sm:$0xff]
    %v1126 = vld [vmem:[#allocation2 + $0x228] sm:$0xff]
    %v1127 = vld [vmem:[#allocation2 + $0x230] sm:$0xff]
    %v1128 = vld [vmem:[#allocation2 + $0x240] sm:$0xff]
    %v1129 = vld [vmem:[#allocation2 + $0x248] sm:$0xff]
    %v1130 = vld [vmem:[#allocation2 + $0x258] sm:$0xff]
    %v1131 = vld [vmem:[#allocation2 + $0x260] sm:$0xff]
    %v1132 = vld [vmem:[#allocation2 + $0x270] sm:$0xff]
    %v1133 = vld [vmem:[#allocation2 + $0x278] sm:$0xff]
    %v1134 = vld [vmem:[#allocation2 + $0x288] sm:$0xff]
    %v1135 = vld [vmem:[#allocation2 + $0x290] sm:$0xff]
    %v1136 = vld [vmem:[#allocation2 + $0x2a0] sm:$0xff]
    %v1137 = vld [vmem:[#allocation2 + $0x2a8] sm:$0xff]
    %v1138 = vld [vmem:[#allocation2 + $0x2b8] sm:$0xff]
    %v1139 = vld [vmem:[#allocation2 + $0x2c0] sm:$0xff]
    %v1140 = vld [vmem:[#allocation2 + $0x2d0] sm:$0xff]
    %v1141 = vld [vmem:[#allocation2 + $0x2d8] sm:$0xff]
    %v1142 = vld [vmem:[#allocation2 + $0x2e8] sm:$0xff]
    %v1143 = vld [vmem:[#allocation2 + $0x2f0] sm:$0xff]
    %v1144 = vld [vmem:[#allocation2 + $0x300] sm:$0xff]
    %v1145 = vld [vmem:[#allocation2 + $0x308] sm:$0xff]
    %v1146 = vld [vmem:[#allocation2 + $0x318] sm:$0xff]
    %v1147 = vld [vmem:[#allocation2 + $0x320] sm:$0xff]
    %v1148 = vpack.c.bf16 %v1084, %v1084
    %v1149 = vpack.c.bf16 %v1085, %v1085
    %v1150 = vpack.c.bf16 %v1086, %v1086
    %v1151 = vpack.c.bf16 %v1087, %v1087
    %v1152 = vpack.c.bf16 %v1088, %v1088
    %v1153 = vpack.c.bf16 %v1089, %v1089
    %v1154 = vpack.c.bf16 %v1090, %v1090
    %v1155 = vpack.c.bf16 %v1091, %v1091
    %v1156 = vpack.c.bf16 %v1092, %v1092
    %v1157 = vpack.c.bf16 %v1093, %v1093
    %v1158 = vpack.c.bf16 %v1094, %v1094
    %v1159 = vpack.c.bf16 %v1095, %v1095
    %v1160 = vpack.c.bf16 %v1096, %v1096
    %v1161 = vpack.c.bf16 %v1097, %v1097
    %v1162 = vpack.c.bf16 %v1098, %v1098
    %v1163 = vpack.c.bf16 %v1099, %v1099
    %v1164 = vpack.c.bf16 %v1100, %v1100
    %v1165 = vpack.c.bf16 %v1101, %v1101
    %v1166 = vpack.c.bf16 %v1102, %v1102
    %v1167 = vpack.c.bf16 %v1103, %v1103
    %v1168 = vpack.c.bf16 %v1104, %v1104
    %v1169 = vpack.c.bf16 %v1105, %v1105
    %v1170 = vpack.c.bf16 %v1106, %v1106
    %v1171 = vpack.c.bf16 %v1107, %v1107
    %v1172 = vpack.c.bf16 %v1108, %v1108
    %v1173 = vpack.c.bf16 %v1109, %v1109
    %v1174 = vpack.c.bf16 %v1110, %v1110
    %v1175 = vpack.c.bf16 %v1111, %v1111
    %v1176 = vpack.c.bf16 %v1112, %v1112
    %v1177 = vpack.c.bf16 %v1113, %v1113
    %v1178 = vpack.c.bf16 %v1114, %v1114
    %v1179 = vpack.c.bf16 %v1115, %v1115
    %v1180 = vpack.c.bf16 %v1116, %v1116
    %v1181 = vpack.c.bf16 %v1117, %v1117
    %v1182 = vpack.c.bf16 %v1118, %v1118
    %v1183 = vpack.c.bf16 %v1119, %v1119
    %v1184 = vpack.c.bf16 %v1120, %v1120
    %v1185 = vpack.c.bf16 %v1121, %v1121
    %v1186 = vpack.c.bf16 %v1122, %v1122
    %v1187 = vpack.c.bf16 %v1123, %v1123
    %v1188 = vpack.c.bf16 %v1124, %v1124
    %v1189 = vpack.c.bf16 %v1125, %v1125
    %v1190 = vpack.c.bf16 %v1126, %v1126
    %v1191 = vpack.c.bf16 %v1127, %v1127
    %v1192 = vpack.c.bf16 %v1128, %v1128
    %v1193 = vpack.c.bf16 %v1129, %v1129
    %v1194 = vpack.c.bf16 %v1130, %v1130
    %v1195 = vpack.c.bf16 %v1131, %v1131
    %v1196 = vpack.c.bf16 %v1132, %v1132
    %v1197 = vpack.c.bf16 %v1133, %v1133
    %v1198 = vpack.c.bf16 %v1134, %v1134
    %v1199 = vpack.c.bf16 %v1135, %v1135
    %v1200 = vpack.c.bf16 %v1136, %v1136
    %v1201 = vpack.c.bf16 %v1137, %v1137
    %v1202 = vpack.c.bf16 %v1138, %v1138
    %v1203 = vpack.c.bf16 %v1139, %v1139
    %v1204 = vpack.c.bf16 %v1140, %v1140
    %v1205 = vpack.c.bf16 %v1141, %v1141
    %v1206 = vpack.c.bf16 %v1142, %v1142
    %v1207 = vpack.c.bf16 %v1143, %v1143
    %v1208 = vpack.c.bf16 %v1144, %v1144
    %v1209 = vpack.c.bf16 %v1145, %v1145
    %v1210 = vpack.c.bf16 %v1146, %v1146
    %v1211 = vpack.c.bf16 %v1147, %v1147
    %vm1212 = vcmask 257024
    %1213 = vst.msk [vmem:[#allocation3] sm:$0xf] %vm1212, %v1148
    %1214 = vst.msk [vmem:[#allocation3 + $0xc] sm:$0xf] %vm1212, %v1149
    %1215 = vst.msk [vmem:[#allocation3 + $0x18] sm:$0xf] %vm1212, %v1150
    %1216 = vst.msk [vmem:[#allocation3 + $0x24] sm:$0xf] %vm1212, %v1151
    %1217 = vst.msk [vmem:[#allocation3 + $0x30] sm:$0xf] %vm1212, %v1152
    %1218 = vst.msk [vmem:[#allocation3 + $0x3c] sm:$0xf] %vm1212, %v1153
    %1219 = vst.msk [vmem:[#allocation3 + $0x48] sm:$0xf] %vm1212, %v1154
    %1220 = vst.msk [vmem:[#allocation3 + $0x54] sm:$0xf] %vm1212, %v1155
    %1221 = vst.msk [vmem:[#allocation3 + $0x60] sm:$0xf] %vm1212, %v1156
    %1222 = vst.msk [vmem:[#allocation3 + $0x6c] sm:$0xf] %vm1212, %v1157
    %1223 = vst.msk [vmem:[#allocation3 + $0x78] sm:$0xf] %vm1212, %v1158
    %1224 = vst.msk [vmem:[#allocation3 + $0x84] sm:$0xf] %vm1212, %v1159
    %1225 = vst.msk [vmem:[#allocation3 + $0x90] sm:$0xf] %vm1212, %v1160
    %1226 = vst.msk [vmem:[#allocation3 + $0x9c] sm:$0xf] %vm1212, %v1161
    %1227 = vst.msk [vmem:[#allocation3 + $0xa8] sm:$0xf] %vm1212, %v1162
    %1228 = vst.msk [vmem:[#allocation3 + $0xb4] sm:$0xf] %vm1212, %v1163
    %1229 = vst.msk [vmem:[#allocation3 + $0xc0] sm:$0xf] %vm1212, %v1164
    %1230 = vst.msk [vmem:[#allocation3 + $0xcc] sm:$0xf] %vm1212, %v1165
    %1231 = vst.msk [vmem:[#allocation3 + $0xd8] sm:$0xf] %vm1212, %v1166
    %1232 = vst.msk [vmem:[#allocation3 + $0xe4] sm:$0xf] %vm1212, %v1167
    %1233 = vst.msk [vmem:[#allocation3 + $0xf0] sm:$0xf] %vm1212, %v1168
    %1234 = vst.msk [vmem:[#allocation3 + $0xfc] sm:$0xf] %vm1212, %v1169
    %1235 = vst.msk [vmem:[#allocation3 + $0x108] sm:$0xf] %vm1212, %v1170
    %1236 = vst.msk [vmem:[#allocation3 + $0x114] sm:$0xf] %vm1212, %v1171
    %1237 = vst.msk [vmem:[#allocation3 + $0x120] sm:$0xf] %vm1212, %v1172
    %1238 = vst.msk [vmem:[#allocation3 + $0x12c] sm:$0xf] %vm1212, %v1173
    %1239 = vst.msk [vmem:[#allocation3 + $0x138] sm:$0xf] %vm1212, %v1174
    %1240 = vst.msk [vmem:[#allocation3 + $0x144] sm:$0xf] %vm1212, %v1175
    %1241 = vst.msk [vmem:[#allocation3 + $0x150] sm:$0xf] %vm1212, %v1176
    %1242 = vst.msk [vmem:[#allocation3 + $0x15c] sm:$0xf] %vm1212, %v1177
    %1243 = vst.msk [vmem:[#allocation3 + $0x168] sm:$0xf] %vm1212, %v1178
    %1244 = vst.msk [vmem:[#allocation3 + $0x174] sm:$0xf] %vm1212, %v1179
    %1245 = vst.msk [vmem:[#allocation3 + $0x180] sm:$0xf] %vm1212, %v1180
    %1246 = vst.msk [vmem:[#allocation3 + $0x18c] sm:$0xf] %vm1212, %v1181
    %1247 = vst.msk [vmem:[#allocation3 + $0x198] sm:$0xf] %vm1212, %v1182
    %1248 = vst.msk [vmem:[#allocation3 + $0x1a4] sm:$0xf] %vm1212, %v1183
    %1249 = vst.msk [vmem:[#allocation3 + $0x1b0] sm:$0xf] %vm1212, %v1184
    %1250 = vst.msk [vmem:[#allocation3 + $0x1bc] sm:$0xf] %vm1212, %v1185
    %1251 = vst.msk [vmem:[#allocation3 + $0x1c8] sm:$0xf] %vm1212, %v1186
    %1252 = vst.msk [vmem:[#allocation3 + $0x1d4] sm:$0xf] %vm1212, %v1187
    %1253 = vst.msk [vmem:[#allocation3 + $0x1e0] sm:$0xf] %vm1212, %v1188
    %1254 = vst.msk [vmem:[#allocation3 + $0x1ec] sm:$0xf] %vm1212, %v1189
    %1255 = vst.msk [vmem:[#allocation3 + $0x1f8] sm:$0xf] %vm1212, %v1190
    %1256 = vst.msk [vmem:[#allocation3 + $0x204] sm:$0xf] %vm1212, %v1191
    %1257 = vst.msk [vmem:[#allocation3 + $0x210] sm:$0xf] %vm1212, %v1192
    %1258 = vst.msk [vmem:[#allocation3 + $0x21c] sm:$0xf] %vm1212, %v1193
    %1259 = vst.msk [vmem:[#allocation3 + $0x228] sm:$0xf] %vm1212, %v1194
    %1260 = vst.msk [vmem:[#allocation3 + $0x234] sm:$0xf] %vm1212, %v1195
    %1261 = vst.msk [vmem:[#allocation3 + $0x240] sm:$0xf] %vm1212, %v1196
    %1262 = vst.msk [vmem:[#allocation3 + $0x24c] sm:$0xf] %vm1212, %v1197
    %1263 = vst.msk [vmem:[#allocation3 + $0x258] sm:$0xf] %vm1212, %v1198
    %1264 = vst.msk [vmem:[#allocation3 + $0x264] sm:$0xf] %vm1212, %v1199
    %1265 = vst.msk [vmem:[#allocation3 + $0x270] sm:$0xf] %vm1212, %v1200
    %1266 = vst.msk [vmem:[#allocation3 + $0x27c] sm:$0xf] %vm1212, %v1201
    %1267 = vst.msk [vmem:[#allocation3 + $0x288] sm:$0xf] %vm1212, %v1202
    %1268 = vst.msk [vmem:[#allocation3 + $0x294] sm:$0xf] %vm1212, %v1203
    %1269 = vst.msk [vmem:[#allocation3 + $0x2a0] sm:$0xf] %vm1212, %v1204
    %1270 = vst.msk [vmem:[#allocation3 + $0x2ac] sm:$0xf] %vm1212, %v1205
    %1271 = vst.msk [vmem:[#allocation3 + $0x2b8] sm:$0xf] %vm1212, %v1206
    %1272 = vst.msk [vmem:[#allocation3 + $0x2c4] sm:$0xf] %vm1212, %v1207
    %1273 = vst.msk [vmem:[#allocation3 + $0x2d0] sm:$0xf] %vm1212, %v1208
    %1274 = vst.msk [vmem:[#allocation3 + $0x2dc] sm:$0xf] %vm1212, %v1209
    %1275 = vst.msk [vmem:[#allocation3 + $0x2e8] sm:$0xf] %vm1212, %v1210
    %1276 = vst.msk [vmem:[#allocation3 + $0x2f4] sm:$0xf] %vm1212, %v1211
    %v1277 = vld [vmem:[#allocation2 + $0x1] sm:$0xff]
    %v1278 = vld [vmem:[#allocation2 + $0x9] sm:$0xff]
    %v1279 = vld [vmem:[#allocation2 + $0x19] sm:$0xff]
    %v1280 = vld [vmem:[#allocation2 + $0x21] sm:$0xff]
    %v1281 = vld [vmem:[#allocation2 + $0x31] sm:$0xff]
    %v1282 = vld [vmem:[#allocation2 + $0x39] sm:$0xff]
    %v1283 = vld [vmem:[#allocation2 + $0x49] sm:$0xff]
    %v1284 = vld [vmem:[#allocation2 + $0x51] sm:$0xff]
    %v1285 = vld [vmem:[#allocation2 + $0x61] sm:$0xff]
    %v1286 = vld [vmem:[#allocation2 + $0x69] sm:$0xff]
    %v1287 = vld [vmem:[#allocation2 + $0x79] sm:$0xff]
    %v1288 = vld [vmem:[#allocation2 + $0x81] sm:$0xff]
    %v1289 = vld [vmem:[#allocation2 + $0x91] sm:$0xff]
    %v1290 = vld [vmem:[#allocation2 + $0x99] sm:$0xff]
    %v1291 = vld [vmem:[#allocation2 + $0xa9] sm:$0xff]
    %v1292 = vld [vmem:[#allocation2 + $0xb1] sm:$0xff]
    %v1293 = vld [vmem:[#allocation2 + $0xc1] sm:$0xff]
    %v1294 = vld [vmem:[#allocation2 + $0xc9] sm:$0xff]
    %v1295 = vld [vmem:[#allocation2 + $0xd9] sm:$0xff]
    %v1296 = vld [vmem:[#allocation2 + $0xe1] sm:$0xff]
    %v1297 = vld [vmem:[#allocation2 + $0xf1] sm:$0xff]
    %v1298 = vld [vmem:[#allocation2 + $0xf9] sm:$0xff]
    %v1299 = vld [vmem:[#allocation2 + $0x109] sm:$0xff]
    %v1300 = vld [vmem:[#allocation2 + $0x111] sm:$0xff]
    %v1301 = vld [vmem:[#allocation2 + $0x121] sm:$0xff]
    %v1302 = vld [vmem:[#allocation2 + $0x129] sm:$0xff]
    %v1303 = vld [vmem:[#allocation2 + $0x139] sm:$0xff]
    %v1304 = vld [vmem:[#allocation2 + $0x141] sm:$0xff]
    %v1305 = vld [vmem:[#allocation2 + $0x151] sm:$0xff]
    %v1306 = vld [vmem:[#allocation2 + $0x159] sm:$0xff]
    %v1307 = vld [vmem:[#allocation2 + $0x169] sm:$0xff]
    %v1308 = vld [vmem:[#allocation2 + $0x171] sm:$0xff]
    %v1309 = vld [vmem:[#allocation2 + $0x1b1] sm:$0xff]
    %v1310 = vld [vmem:[#allocation2 + $0x1b9] sm:$0xff]
    %v1311 = vld [vmem:[#allocation2 + $0x1c9] sm:$0xff]
    %v1312 = vld [vmem:[#allocation2 + $0x1d1] sm:$0xff]
    %v1313 = vld [vmem:[#allocation2 + $0x1e1] sm:$0xff]
    %v1314 = vld [vmem:[#allocation2 + $0x1e9] sm:$0xff]
    %v1315 = vld [vmem:[#allocation2 + $0x1f9] sm:$0xff]
    %v1316 = vld [vmem:[#allocation2 + $0x201] sm:$0xff]
    %v1317 = vld [vmem:[#allocation2 + $0x211] sm:$0xff]
    %v1318 = vld [vmem:[#allocation2 + $0x219] sm:$0xff]
    %v1319 = vld [vmem:[#allocation2 + $0x229] sm:$0xff]
    %v1320 = vld [vmem:[#allocation2 + $0x231] sm:$0xff]
    %v1321 = vld [vmem:[#allocation2 + $0x241] sm:$0xff]
    %v1322 = vld [vmem:[#allocation2 + $0x249] sm:$0xff]
    %v1323 = vld [vmem:[#allocation2 + $0x259] sm:$0xff]
    %v1324 = vld [vmem:[#allocation2 + $0x261] sm:$0xff]
    %v1325 = vld [vmem:[#allocation2 + $0x271] sm:$0xff]
    %v1326 = vld [vmem:[#allocation2 + $0x279] sm:$0xff]
    %v1327 = vld [vmem:[#allocation2 + $0x289] sm:$0xff]
    %v1328 = vld [vmem:[#allocation2 + $0x291] sm:$0xff]
    %v1329 = vld [vmem:[#allocation2 + $0x2a1] sm:$0xff]
    %v1330 = vld [vmem:[#allocation2 + $0x2a9] sm:$0xff]
    %v1331 = vld [vmem:[#allocation2 + $0x2b9] sm:$0xff]
    %v1332 = vld [vmem:[#allocation2 + $0x2c1] sm:$0xff]
    %v1333 = vld [vmem:[#allocation2 + $0x2d1] sm:$0xff]
    %v1334 = vld [vmem:[#allocation2 + $0x2d9] sm:$0xff]
    %v1335 = vld [vmem:[#allocation2 + $0x2e9] sm:$0xff]
    %v1336 = vld [vmem:[#allocation2 + $0x2f1] sm:$0xff]
    %v1337 = vld [vmem:[#allocation2 + $0x301] sm:$0xff]
    %v1338 = vld [vmem:[#allocation2 + $0x309] sm:$0xff]
    %v1339 = vld [vmem:[#allocation2 + $0x319] sm:$0xff]
    %v1340 = vld [vmem:[#allocation2 + $0x321] sm:$0xff]
    %v1341 = vpack.c.bf16 %v1277, %v1277
    %v1342 = vpack.c.bf16 %v1278, %v1278
    %v1343 = vpack.c.bf16 %v1279, %v1279
    %v1344 = vpack.c.bf16 %v1280, %v1280
    %v1345 = vpack.c.bf16 %v1281, %v1281
    %v1346 = vpack.c.bf16 %v1282, %v1282
    %v1347 = vpack.c.bf16 %v1283, %v1283
    %v1348 = vpack.c.bf16 %v1284, %v1284
    %v1349 = vpack.c.bf16 %v1285, %v1285
    %v1350 = vpack.c.bf16 %v1286, %v1286
    %v1351 = vpack.c.bf16 %v1287, %v1287
    %v1352 = vpack.c.bf16 %v1288, %v1288
    %v1353 = vpack.c.bf16 %v1289, %v1289
    %v1354 = vpack.c.bf16 %v1290, %v1290
    %v1355 = vpack.c.bf16 %v1291, %v1291
    %v1356 = vpack.c.bf16 %v1292, %v1292
    %v1357 = vpack.c.bf16 %v1293, %v1293
    %v1358 = vpack.c.bf16 %v1294, %v1294
    %v1359 = vpack.c.bf16 %v1295, %v1295
    %v1360 = vpack.c.bf16 %v1296, %v1296
    %v1361 = vpack.c.bf16 %v1297, %v1297
    %v1362 = vpack.c.bf16 %v1298, %v1298
    %v1363 = vpack.c.bf16 %v1299, %v1299
    %v1364 = vpack.c.bf16 %v1300, %v1300
    %v1365 = vpack.c.bf16 %v1301, %v1301
    %v1366 = vpack.c.bf16 %v1302, %v1302
    %v1367 = vpack.c.bf16 %v1303, %v1303
    %v1368 = vpack.c.bf16 %v1304, %v1304
    %v1369 = vpack.c.bf16 %v1305, %v1305
    %v1370 = vpack.c.bf16 %v1306, %v1306
    %v1371 = vpack.c.bf16 %v1307, %v1307
    %v1372 = vpack.c.bf16 %v1308, %v1308
    %v1373 = vpack.c.bf16 %v1309, %v1309
    %v1374 = vpack.c.bf16 %v1310, %v1310
    %v1375 = vpack.c.bf16 %v1311, %v1311
    %v1376 = vpack.c.bf16 %v1312, %v1312
    %v1377 = vpack.c.bf16 %v1313, %v1313
    %v1378 = vpack.c.bf16 %v1314, %v1314
    %v1379 = vpack.c.bf16 %v1315, %v1315
    %v1380 = vpack.c.bf16 %v1316, %v1316
    %v1381 = vpack.c.bf16 %v1317, %v1317
    %v1382 = vpack.c.bf16 %v1318, %v1318
    %v1383 = vpack.c.bf16 %v1319, %v1319
    %v1384 = vpack.c.bf16 %v1320, %v1320
    %v1385 = vpack.c.bf16 %v1321, %v1321
    %v1386 = vpack.c.bf16 %v1322, %v1322
    %v1387 = vpack.c.bf16 %v1323, %v1323
    %v1388 = vpack.c.bf16 %v1324, %v1324
    %v1389 = vpack.c.bf16 %v1325, %v1325
    %v1390 = vpack.c.bf16 %v1326, %v1326
    %v1391 = vpack.c.bf16 %v1327, %v1327
    %v1392 = vpack.c.bf16 %v1328, %v1328
    %v1393 = vpack.c.bf16 %v1329, %v1329
    %v1394 = vpack.c.bf16 %v1330, %v1330
    %v1395 = vpack.c.bf16 %v1331, %v1331
    %v1396 = vpack.c.bf16 %v1332, %v1332
    %v1397 = vpack.c.bf16 %v1333, %v1333
    %v1398 = vpack.c.bf16 %v1334, %v1334
    %v1399 = vpack.c.bf16 %v1335, %v1335
    %v1400 = vpack.c.bf16 %v1336, %v1336
    %v1401 = vpack.c.bf16 %v1337, %v1337
    %v1402 = vpack.c.bf16 %v1338, %v1338
    %v1403 = vpack.c.bf16 %v1339, %v1339
    %v1404 = vpack.c.bf16 %v1340, %v1340
    %1469 = vrot.lane.b32.xlu0 %v1341, 32
    %v1470 = vpop.permute.xlu0 %1469
    %1471 = vrot.lane.b32.xlu0 %v1342, 32
    %v1472 = vpop.permute.xlu0 %1471
    %1473 = vrot.lane.b32.xlu0 %v1343, 32
    %v1474 = vpop.permute.xlu0 %1473
    %1475 = vrot.lane.b32.xlu0 %v1344, 32
    %v1476 = vpop.permute.xlu0 %1475
    %1477 = vrot.lane.b32.xlu0 %v1345, 32
    %v1478 = vpop.permute.xlu0 %1477
    %1479 = vrot.lane.b32.xlu0 %v1346, 32
    %v1480 = vpop.permute.xlu0 %1479
    %1481 = vrot.lane.b32.xlu0 %v1347, 32
    %v1482 = vpop.permute.xlu0 %1481
    %1483 = vrot.lane.b32.xlu0 %v1348, 32
    %v1484 = vpop.permute.xlu0 %1483
    %1485 = vrot.lane.b32.xlu0 %v1349, 32
    %v1486 = vpop.permute.xlu0 %1485
    %1487 = vrot.lane.b32.xlu0 %v1350, 32
    %v1488 = vpop.permute.xlu0 %1487
    %1489 = vrot.lane.b32.xlu0 %v1351, 32
    %v1490 = vpop.permute.xlu0 %1489
    %1491 = vrot.lane.b32.xlu0 %v1352, 32
    %v1492 = vpop.permute.xlu0 %1491
    %1493 = vrot.lane.b32.xlu0 %v1353, 32
    %v1494 = vpop.permute.xlu0 %1493
    %1495 = vrot.lane.b32.xlu0 %v1354, 32
    %v1496 = vpop.permute.xlu0 %1495
    %1497 = vrot.lane.b32.xlu0 %v1355, 32
    %v1498 = vpop.permute.xlu0 %1497
    %1499 = vrot.lane.b32.xlu0 %v1356, 32
    %v1500 = vpop.permute.xlu0 %1499
    %1501 = vrot.lane.b32.xlu0 %v1357, 32
    %v1502 = vpop.permute.xlu0 %1501
    %1503 = vrot.lane.b32.xlu0 %v1358, 32
    %v1504 = vpop.permute.xlu0 %1503
    %1505 = vrot.lane.b32.xlu0 %v1359, 32
    %v1506 = vpop.permute.xlu0 %1505
    %1507 = vrot.lane.b32.xlu0 %v1360, 32
    %v1508 = vpop.permute.xlu0 %1507
    %1509 = vrot.lane.b32.xlu0 %v1361, 32
    %v1510 = vpop.permute.xlu0 %1509
    %1511 = vrot.lane.b32.xlu0 %v1362, 32
    %v1512 = vpop.permute.xlu0 %1511
    %1513 = vrot.lane.b32.xlu0 %v1363, 32
    %v1514 = vpop.permute.xlu0 %1513
    %1515 = vrot.lane.b32.xlu0 %v1364, 32
    %v1516 = vpop.permute.xlu0 %1515
    %1517 = vrot.lane.b32.xlu0 %v1365, 32
    %v1518 = vpop.permute.xlu0 %1517
    %1519 = vrot.lane.b32.xlu0 %v1366, 32
    %v1520 = vpop.permute.xlu0 %1519
    %1521 = vrot.lane.b32.xlu0 %v1367, 32
    %v1522 = vpop.permute.xlu0 %1521
    %1523 = vrot.lane.b32.xlu0 %v1368, 32
    %v1524 = vpop.permute.xlu0 %1523
    %1525 = vrot.lane.b32.xlu0 %v1369, 32
    %v1526 = vpop.permute.xlu0 %1525
    %1527 = vrot.lane.b32.xlu0 %v1370, 32
    %v1528 = vpop.permute.xlu0 %1527
    %1529 = vrot.lane.b32.xlu0 %v1371, 32
    %v1530 = vpop.permute.xlu0 %1529
    %1531 = vrot.lane.b32.xlu0 %v1372, 32
    %v1532 = vpop.permute.xlu0 %1531
    %1533 = vrot.lane.b32.xlu0 %v1373, 32
    %v1534 = vpop.permute.xlu0 %1533
    %1535 = vrot.lane.b32.xlu0 %v1374, 32
    %v1536 = vpop.permute.xlu0 %1535
    %1537 = vrot.lane.b32.xlu0 %v1375, 32
    %v1538 = vpop.permute.xlu0 %1537
    %1539 = vrot.lane.b32.xlu0 %v1376, 32
    %v1540 = vpop.permute.xlu0 %1539
    %1541 = vrot.lane.b32.xlu0 %v1377, 32
    %v1542 = vpop.permute.xlu0 %1541
    %1543 = vrot.lane.b32.xlu0 %v1378, 32
    %v1544 = vpop.permute.xlu0 %1543
    %1545 = vrot.lane.b32.xlu0 %v1379, 32
    %v1546 = vpop.permute.xlu0 %1545
    %1547 = vrot.lane.b32.xlu0 %v1380, 32
    %v1548 = vpop.permute.xlu0 %1547
    %1549 = vrot.lane.b32.xlu0 %v1381, 32
    %v1550 = vpop.permute.xlu0 %1549
    %1551 = vrot.lane.b32.xlu0 %v1382, 32
    %v1552 = vpop.permute.xlu0 %1551
    %1553 = vrot.lane.b32.xlu0 %v1383, 32
    %v1554 = vpop.permute.xlu0 %1553
    %1555 = vrot.lane.b32.xlu0 %v1384, 32
    %v1556 = vpop.permute.xlu0 %1555
    %1557 = vrot.lane.b32.xlu0 %v1385, 32
    %v1558 = vpop.permute.xlu0 %1557
    %1559 = vrot.lane.b32.xlu0 %v1386, 32
    %v1560 = vpop.permute.xlu0 %1559
    %1561 = vrot.lane.b32.xlu0 %v1387, 32
    %v1562 = vpop.permute.xlu0 %1561
    %1563 = vrot.lane.b32.xlu0 %v1388, 32
    %v1564 = vpop.permute.xlu0 %1563
    %1565 = vrot.lane.b32.xlu0 %v1389, 32
    %v1566 = vpop.permute.xlu0 %1565
    %1567 = vrot.lane.b32.xlu0 %v1390, 32
    %v1568 = vpop.permute.xlu0 %1567
    %1569 = vrot.lane.b32.xlu0 %v1391, 32
    %v1570 = vpop.permute.xlu0 %1569
    %1571 = vrot.lane.b32.xlu0 %v1392, 32
    %v1572 = vpop.permute.xlu0 %1571
    %1573 = vrot.lane.b32.xlu0 %v1393, 32
    %v1574 = vpop.permute.xlu0 %1573
    %1575 = vrot.lane.b32.xlu0 %v1394, 32
    %v1576 = vpop.permute.xlu0 %1575
    %1577 = vrot.lane.b32.xlu0 %v1395, 32
    %v1578 = vpop.permute.xlu0 %1577
    %1579 = vrot.lane.b32.xlu0 %v1396, 32
    %v1580 = vpop.permute.xlu0 %1579
    %1581 = vrot.lane.b32.xlu0 %v1397, 32
    %v1582 = vpop.permute.xlu0 %1581
    %1583 = vrot.lane.b32.xlu0 %v1398, 32
    %v1584 = vpop.permute.xlu0 %1583
    %1585 = vrot.lane.b32.xlu0 %v1399, 32
    %v1586 = vpop.permute.xlu0 %1585
    %1587 = vrot.lane.b32.xlu0 %v1400, 32
    %v1588 = vpop.permute.xlu0 %1587
    %1589 = vrot.lane.b32.xlu0 %v1401, 32
    %v1590 = vpop.permute.xlu0 %1589
    %1591 = vrot.lane.b32.xlu0 %v1402, 32
    %v1592 = vpop.permute.xlu0 %1591
    %1593 = vrot.lane.b32.xlu0 %v1403, 32
    %v1594 = vpop.permute.xlu0 %1593
    %1595 = vrot.lane.b32.xlu0 %v1404, 32
    %v1596 = vpop.permute.xlu0 %1595
    %vm1661 = vcmask 519424
    %1662 = vst.msk [vmem:[#allocation3] sm:$0xf] %vm1661, %v1470
    %1663 = vst.msk [vmem:[#allocation3 + $0xc] sm:$0xf] %vm1661, %v1472
    %1664 = vst.msk [vmem:[#allocation3 + $0x18] sm:$0xf] %vm1661, %v1474
    %1665 = vst.msk [vmem:[#allocation3 + $0x24] sm:$0xf] %vm1661, %v1476
    %1666 = vst.msk [vmem:[#allocation3 + $0x30] sm:$0xf] %vm1661, %v1478
    %1667 = vst.msk [vmem:[#allocation3 + $0x3c] sm:$0xf] %vm1661, %v1480
    %1668 = vst.msk [vmem:[#allocation3 + $0x48] sm:$0xf] %vm1661, %v1482
    %1669 = vst.msk [vmem:[#allocation3 + $0x54] sm:$0xf] %vm1661, %v1484
    %1670 = vst.msk [vmem:[#allocation3 + $0x60] sm:$0xf] %vm1661, %v1486
    %1671 = vst.msk [vmem:[#allocation3 + $0x6c] sm:$0xf] %vm1661, %v1488
    %1672 = vst.msk [vmem:[#allocation3 + $0x78] sm:$0xf] %vm1661, %v1490
    %1673 = vst.msk [vmem:[#allocation3 + $0x84] sm:$0xf] %vm1661, %v1492
    %1674 = vst.msk [vmem:[#allocation3 + $0x90] sm:$0xf] %vm1661, %v1494
    %1675 = vst.msk [vmem:[#allocation3 + $0x9c] sm:$0xf] %vm1661, %v1496
    %1676 = vst.msk [vmem:[#allocation3 + $0xa8] sm:$0xf] %vm1661, %v1498
    %1677 = vst.msk [vmem:[#allocation3 + $0xb4] sm:$0xf] %vm1661, %v1500
    %1678 = vst.msk [vmem:[#allocation3 + $0xc0] sm:$0xf] %vm1661, %v1502
    %1679 = vst.msk [vmem:[#allocation3 + $0xcc] sm:$0xf] %vm1661, %v1504
    %1680 = vst.msk [vmem:[#allocation3 + $0xd8] sm:$0xf] %vm1661, %v1506
    %1681 = vst.msk [vmem:[#allocation3 + $0xe4] sm:$0xf] %vm1661, %v1508
    %1682 = vst.msk [vmem:[#allocation3 + $0xf0] sm:$0xf] %vm1661, %v1510
    %1683 = vst.msk [vmem:[#allocation3 + $0xfc] sm:$0xf] %vm1661, %v1512
    %1684 = vst.msk [vmem:[#allocation3 + $0x108] sm:$0xf] %vm1661, %v1514
    %1685 = vst.msk [vmem:[#allocation3 + $0x114] sm:$0xf] %vm1661, %v1516
    %1686 = vst.msk [vmem:[#allocation3 + $0x120] sm:$0xf] %vm1661, %v1518
    %1687 = vst.msk [vmem:[#allocation3 + $0x12c] sm:$0xf] %vm1661, %v1520
    %1688 = vst.msk [vmem:[#allocation3 + $0x138] sm:$0xf] %vm1661, %v1522
    %1689 = vst.msk [vmem:[#allocation3 + $0x144] sm:$0xf] %vm1661, %v1524
    %1690 = vst.msk [vmem:[#allocation3 + $0x150] sm:$0xf] %vm1661, %v1526
    %1691 = vst.msk [vmem:[#allocation3 + $0x15c] sm:$0xf] %vm1661, %v1528
    %1692 = vst.msk [vmem:[#allocation3 + $0x168] sm:$0xf] %vm1661, %v1530
    %1693 = vst.msk [vmem:[#allocation3 + $0x174] sm:$0xf] %vm1661, %v1532
    %1694 = vst.msk [vmem:[#allocation3 + $0x180] sm:$0xf] %vm1661, %v1534
    %1695 = vst.msk [vmem:[#allocation3 + $0x18c] sm:$0xf] %vm1661, %v1536
    %1696 = vst.msk [vmem:[#allocation3 + $0x198] sm:$0xf] %vm1661, %v1538
    %1697 = vst.msk [vmem:[#allocation3 + $0x1a4] sm:$0xf] %vm1661, %v1540
    %1698 = vst.msk [vmem:[#allocation3 + $0x1b0] sm:$0xf] %vm1661, %v1542
    %1699 = vst.msk [vmem:[#allocation3 + $0x1bc] sm:$0xf] %vm1661, %v1544
    %1700 = vst.msk [vmem:[#allocation3 + $0x1c8] sm:$0xf] %vm1661, %v1546
    %1701 = vst.msk [vmem:[#allocation3 + $0x1d4] sm:$0xf] %vm1661, %v1548
    %1702 = vst.msk [vmem:[#allocation3 + $0x1e0] sm:$0xf] %vm1661, %v1550
    %1703 = vst.msk [vmem:[#allocation3 + $0x1ec] sm:$0xf] %vm1661, %v1552
    %1704 = vst.msk [vmem:[#allocation3 + $0x1f8] sm:$0xf] %vm1661, %v1554
    %1705 = vst.msk [vmem:[#allocation3 + $0x204] sm:$0xf] %vm1661, %v1556
    %1706 = vst.msk [vmem:[#allocation3 + $0x210] sm:$0xf] %vm1661, %v1558
    %1707 = vst.msk [vmem:[#allocation3 + $0x21c] sm:$0xf] %vm1661, %v1560
    %1708 = vst.msk [vmem:[#allocation3 + $0x228] sm:$0xf] %vm1661, %v1562
    %1709 = vst.msk [vmem:[#allocation3 + $0x234] sm:$0xf] %vm1661, %v1564
    %1710 = vst.msk [vmem:[#allocation3 + $0x240] sm:$0xf] %vm1661, %v1566
    %1711 = vst.msk [vmem:[#allocation3 + $0x24c] sm:$0xf] %vm1661, %v1568
    %1712 = vst.msk [vmem:[#allocation3 + $0x258] sm:$0xf] %vm1661, %v1570
    %1713 = vst.msk [vmem:[#allocation3 + $0x264] sm:$0xf] %vm1661, %v1572
    %1714 = vst.msk [vmem:[#allocation3 + $0x270] sm:$0xf] %vm1661, %v1574
    %1715 = vst.msk [vmem:[#allocation3 + $0x27c] sm:$0xf] %vm1661, %v1576
    %1716 = vst.msk [vmem:[#allocation3 + $0x288] sm:$0xf] %vm1661, %v1578
    %1717 = vst.msk [vmem:[#allocation3 + $0x294] sm:$0xf] %vm1661, %v1580
    %1718 = vst.msk [vmem:[#allocation3 + $0x2a0] sm:$0xf] %vm1661, %v1582
    %1719 = vst.msk [vmem:[#allocation3 + $0x2ac] sm:$0xf] %vm1661, %v1584
    %1720 = vst.msk [vmem:[#allocation3 + $0x2b8] sm:$0xf] %vm1661, %v1586
    %1721 = vst.msk [vmem:[#allocation3 + $0x2c4] sm:$0xf] %vm1661, %v1588
    %1722 = vst.msk [vmem:[#allocation3 + $0x2d0] sm:$0xf] %vm1661, %v1590
    %1723 = vst.msk [vmem:[#allocation3 + $0x2dc] sm:$0xf] %vm1661, %v1592
    %1724 = vst.msk [vmem:[#allocation3 + $0x2e8] sm:$0xf] %vm1661, %v1594
    %1725 = vst.msk [vmem:[#allocation3 + $0x2f4] sm:$0xf] %vm1661, %v1596
    %v1726 = vld [vmem:[#allocation2 + $0x2] sm:$0xff]
    %v1727 = vld [vmem:[#allocation2 + $0xa] sm:$0xff]
    %v1728 = vld [vmem:[#allocation2 + $0x1a] sm:$0xff]
    %v1729 = vld [vmem:[#allocation2 + $0x22] sm:$0xff]
    %v1730 = vld [vmem:[#allocation2 + $0x32] sm:$0xff]
    %v1731 = vld [vmem:[#allocation2 + $0x3a] sm:$0xff]
    %v1732 = vld [vmem:[#allocation2 + $0x4a] sm:$0xff]
    %v1733 = vld [vmem:[#allocation2 + $0x52] sm:$0xff]
    %v1734 = vld [vmem:[#allocation2 + $0x62] sm:$0xff]
    %v1735 = vld [vmem:[#allocation2 + $0x6a] sm:$0xff]
    %v1736 = vld [vmem:[#allocation2 + $0x7a] sm:$0xff]
    %v1737 = vld [vmem:[#allocation2 + $0x82] sm:$0xff]
    %v1738 = vld [vmem:[#allocation2 + $0x92] sm:$0xff]
    %v1739 = vld [vmem:[#allocation2 + $0x9a] sm:$0xff]
    %v1740 = vld [vmem:[#allocation2 + $0xaa] sm:$0xff]
    %v1741 = vld [vmem:[#allocation2 + $0xb2] sm:$0xff]
    %v1742 = vld [vmem:[#allocation2 + $0xc2] sm:$0xff]
    %v1743 = vld [vmem:[#allocation2 + $0xca] sm:$0xff]
    %v1744 = vld [vmem:[#allocation2 + $0xda] sm:$0xff]
    %v1745 = vld [vmem:[#allocation2 + $0xe2] sm:$0xff]
    %v1746 = vld [vmem:[#allocation2 + $0xf2] sm:$0xff]
    %v1747 = vld [vmem:[#allocation2 + $0xfa] sm:$0xff]
    %v1748 = vld [vmem:[#allocation2 + $0x10a] sm:$0xff]
    %v1749 = vld [vmem:[#allocation2 + $0x112] sm:$0xff]
    %v1750 = vld [vmem:[#allocation2 + $0x122] sm:$0xff]
    %v1751 = vld [vmem:[#allocation2 + $0x12a] sm:$0xff]
    %v1752 = vld [vmem:[#allocation2 + $0x13a] sm:$0xff]
    %v1753 = vld [vmem:[#allocation2 + $0x142] sm:$0xff]
    %v1754 = vld [vmem:[#allocation2 + $0x152] sm:$0xff]
    %v1755 = vld [vmem:[#allocation2 + $0x15a] sm:$0xff]
    %v1756 = vld [vmem:[#allocation2 + $0x16a] sm:$0xff]
    %v1757 = vld [vmem:[#allocation2 + $0x172] sm:$0xff]
    %v1758 = vld [vmem:[#allocation2 + $0x1b2] sm:$0xff]
    %v1759 = vld [vmem:[#allocation2 + $0x1ba] sm:$0xff]
    %v1760 = vld [vmem:[#allocation2 + $0x1ca] sm:$0xff]
    %v1761 = vld [vmem:[#allocation2 + $0x1d2] sm:$0xff]
    %v1762 = vld [vmem:[#allocation2 + $0x1e2] sm:$0xff]
    %v1763 = vld [vmem:[#allocation2 + $0x1ea] sm:$0xff]
    %v1764 = vld [vmem:[#allocation2 + $0x1fa] sm:$0xff]
    %v1765 = vld [vmem:[#allocation2 + $0x202] sm:$0xff]
    %v1766 = vld [vmem:[#allocation2 + $0x212] sm:$0xff]
    %v1767 = vld [vmem:[#allocation2 + $0x21a] sm:$0xff]
    %v1768 = vld [vmem:[#allocation2 + $0x22a] sm:$0xff]
    %v1769 = vld [vmem:[#allocation2 + $0x232] sm:$0xff]
    %v1770 = vld [vmem:[#allocation2 + $0x242] sm:$0xff]
    %v1771 = vld [vmem:[#allocation2 + $0x24a] sm:$0xff]
    %v1772 = vld [vmem:[#allocation2 + $0x25a] sm:$0xff]
    %v1773 = vld [vmem:[#allocation2 + $0x262] sm:$0xff]
    %v1774 = vld [vmem:[#allocation2 + $0x272] sm:$0xff]
    %v1775 = vld [vmem:[#allocation2 + $0x27a] sm:$0xff]
    %v1776 = vld [vmem:[#allocation2 + $0x28a] sm:$0xff]
    %v1777 = vld [vmem:[#allocation2 + $0x292] sm:$0xff]
    %v1778 = vld [vmem:[#allocation2 + $0x2a2] sm:$0xff]
    %v1779 = vld [vmem:[#allocation2 + $0x2aa] sm:$0xff]
    %v1780 = vld [vmem:[#allocation2 + $0x2ba] sm:$0xff]
    %v1781 = vld [vmem:[#allocation2 + $0x2c2] sm:$0xff]
    %v1782 = vld [vmem:[#allocation2 + $0x2d2] sm:$0xff]
    %v1783 = vld [vmem:[#allocation2 + $0x2da] sm:$0xff]
    %v1784 = vld [vmem:[#allocation2 + $0x2ea] sm:$0xff]
    %v1785 = vld [vmem:[#allocation2 + $0x2f2] sm:$0xff]
    %v1786 = vld [vmem:[#allocation2 + $0x302] sm:$0xff]
    %v1787 = vld [vmem:[#allocation2 + $0x30a] sm:$0xff]
    %v1788 = vld [vmem:[#allocation2 + $0x31a] sm:$0xff]
    %v1789 = vld [vmem:[#allocation2 + $0x322] sm:$0xff]
    %v1790 = vpack.c.bf16 %v1726, %v1726
    %v1791 = vpack.c.bf16 %v1727, %v1727
    %v1792 = vpack.c.bf16 %v1728, %v1728
    %v1793 = vpack.c.bf16 %v1729, %v1729
    %v1794 = vpack.c.bf16 %v1730, %v1730
    %v1795 = vpack.c.bf16 %v1731, %v1731
    %v1796 = vpack.c.bf16 %v1732, %v1732
    %v1797 = vpack.c.bf16 %v1733, %v1733
    %v1798 = vpack.c.bf16 %v1734, %v1734
    %v1799 = vpack.c.bf16 %v1735, %v1735
    %v1800 = vpack.c.bf16 %v1736, %v1736
    %v1801 = vpack.c.bf16 %v1737, %v1737
    %v1802 = vpack.c.bf16 %v1738, %v1738
    %v1803 = vpack.c.bf16 %v1739, %v1739
    %v1804 = vpack.c.bf16 %v1740, %v1740
    %v1805 = vpack.c.bf16 %v1741, %v1741
    %v1806 = vpack.c.bf16 %v1742, %v1742
    %v1807 = vpack.c.bf16 %v1743, %v1743
    %v1808 = vpack.c.bf16 %v1744, %v1744
    %v1809 = vpack.c.bf16 %v1745, %v1745
    %v1810 = vpack.c.bf16 %v1746, %v1746
    %v1811 = vpack.c.bf16 %v1747, %v1747
    %v1812 = vpack.c.bf16 %v1748, %v1748
    %v1813 = vpack.c.bf16 %v1749, %v1749
    %v1814 = vpack.c.bf16 %v1750, %v1750
    %v1815 = vpack.c.bf16 %v1751, %v1751
    %v1816 = vpack.c.bf16 %v1752, %v1752
    %v1817 = vpack.c.bf16 %v1753, %v1753
    %v1818 = vpack.c.bf16 %v1754, %v1754
    %v1819 = vpack.c.bf16 %v1755, %v1755
    %v1820 = vpack.c.bf16 %v1756, %v1756
    %v1821 = vpack.c.bf16 %v1757, %v1757
    %v1822 = vpack.c.bf16 %v1758, %v1758
    %v1823 = vpack.c.bf16 %v1759, %v1759
    %v1824 = vpack.c.bf16 %v1760, %v1760
    %v1825 = vpack.c.bf16 %v1761, %v1761
    %v1826 = vpack.c.bf16 %v1762, %v1762
    %v1827 = vpack.c.bf16 %v1763, %v1763
    %v1828 = vpack.c.bf16 %v1764, %v1764
    %v1829 = vpack.c.bf16 %v1765, %v1765
    %v1830 = vpack.c.bf16 %v1766, %v1766
    %v1831 = vpack.c.bf16 %v1767, %v1767
    %v1832 = vpack.c.bf16 %v1768, %v1768
    %v1833 = vpack.c.bf16 %v1769, %v1769
    %v1834 = vpack.c.bf16 %v1770, %v1770
    %v1835 = vpack.c.bf16 %v1771, %v1771
    %v1836 = vpack.c.bf16 %v1772, %v1772
    %v1837 = vpack.c.bf16 %v1773, %v1773
    %v1838 = vpack.c.bf16 %v1774, %v1774
    %v1839 = vpack.c.bf16 %v1775, %v1775
    %v1840 = vpack.c.bf16 %v1776, %v1776
    %v1841 = vpack.c.bf16 %v1777, %v1777
    %v1842 = vpack.c.bf16 %v1778, %v1778
    %v1843 = vpack.c.bf16 %v1779, %v1779
    %v1844 = vpack.c.bf16 %v1780, %v1780
    %v1845 = vpack.c.bf16 %v1781, %v1781
    %v1846 = vpack.c.bf16 %v1782, %v1782
    %v1847 = vpack.c.bf16 %v1783, %v1783
    %v1848 = vpack.c.bf16 %v1784, %v1784
    %v1849 = vpack.c.bf16 %v1785, %v1785
    %v1850 = vpack.c.bf16 %v1786, %v1786
    %v1851 = vpack.c.bf16 %v1787, %v1787
    %v1852 = vpack.c.bf16 %v1788, %v1788
    %v1853 = vpack.c.bf16 %v1789, %v1789
    %1918 = vrot.lane.b32.xlu0 %v1790, 64
    %v1919 = vpop.permute.xlu0 %1918
    %1920 = vrot.lane.b32.xlu0 %v1791, 64
    %v1921 = vpop.permute.xlu0 %1920
    %1922 = vrot.lane.b32.xlu0 %v1792, 64
    %v1923 = vpop.permute.xlu0 %1922
    %1924 = vrot.lane.b32.xlu0 %v1793, 64
    %v1925 = vpop.permute.xlu0 %1924
    %1926 = vrot.lane.b32.xlu0 %v1794, 64
    %v1927 = vpop.permute.xlu0 %1926
    %1928 = vrot.lane.b32.xlu0 %v1795, 64
    %v1929 = vpop.permute.xlu0 %1928
    %1930 = vrot.lane.b32.xlu0 %v1796, 64
    %v1931 = vpop.permute.xlu0 %1930
    %1932 = vrot.lane.b32.xlu0 %v1797, 64
    %v1933 = vpop.permute.xlu0 %1932
    %1934 = vrot.lane.b32.xlu0 %v1798, 64
    %v1935 = vpop.permute.xlu0 %1934
    %1936 = vrot.lane.b32.xlu0 %v1799, 64
    %v1937 = vpop.permute.xlu0 %1936
    %1938 = vrot.lane.b32.xlu0 %v1800, 64
    %v1939 = vpop.permute.xlu0 %1938
    %1940 = vrot.lane.b32.xlu0 %v1801, 64
    %v1941 = vpop.permute.xlu0 %1940
    %1942 = vrot.lane.b32.xlu0 %v1802, 64
    %v1943 = vpop.permute.xlu0 %1942
    %1944 = vrot.lane.b32.xlu0 %v1803, 64
    %v1945 = vpop.permute.xlu0 %1944
    %1946 = vrot.lane.b32.xlu0 %v1804, 64
    %v1947 = vpop.permute.xlu0 %1946
    %1948 = vrot.lane.b32.xlu0 %v1805, 64
    %v1949 = vpop.permute.xlu0 %1948
    %1950 = vrot.lane.b32.xlu0 %v1806, 64
    %v1951 = vpop.permute.xlu0 %1950
    %1952 = vrot.lane.b32.xlu0 %v1807, 64
    %v1953 = vpop.permute.xlu0 %1952
    %1954 = vrot.lane.b32.xlu0 %v1808, 64
    %v1955 = vpop.permute.xlu0 %1954
    %1956 = vrot.lane.b32.xlu0 %v1809, 64
    %v1957 = vpop.permute.xlu0 %1956
    %1958 = vrot.lane.b32.xlu0 %v1810, 64
    %v1959 = vpop.permute.xlu0 %1958
    %1960 = vrot.lane.b32.xlu0 %v1811, 64
    %v1961 = vpop.permute.xlu0 %1960
    %1962 = vrot.lane.b32.xlu0 %v1812, 64
    %v1963 = vpop.permute.xlu0 %1962
    %1964 = vrot.lane.b32.xlu0 %v1813, 64
    %v1965 = vpop.permute.xlu0 %1964
    %1966 = vrot.lane.b32.xlu0 %v1814, 64
    %v1967 = vpop.permute.xlu0 %1966
    %1968 = vrot.lane.b32.xlu0 %v1815, 64
    %v1969 = vpop.permute.xlu0 %1968
    %1970 = vrot.lane.b32.xlu0 %v1816, 64
    %v1971 = vpop.permute.xlu0 %1970
    %1972 = vrot.lane.b32.xlu0 %v1817, 64
    %v1973 = vpop.permute.xlu0 %1972
    %1974 = vrot.lane.b32.xlu0 %v1818, 64
    %v1975 = vpop.permute.xlu0 %1974
    %1976 = vrot.lane.b32.xlu0 %v1819, 64
    %v1977 = vpop.permute.xlu0 %1976
    %1978 = vrot.lane.b32.xlu0 %v1820, 64
    %v1979 = vpop.permute.xlu0 %1978
    %1980 = vrot.lane.b32.xlu0 %v1821, 64
    %v1981 = vpop.permute.xlu0 %1980
    %1982 = vrot.lane.b32.xlu0 %v1822, 64
    %v1983 = vpop.permute.xlu0 %1982
    %1984 = vrot.lane.b32.xlu0 %v1823, 64
    %v1985 = vpop.permute.xlu0 %1984
    %1986 = vrot.lane.b32.xlu0 %v1824, 64
    %v1987 = vpop.permute.xlu0 %1986
    %1988 = vrot.lane.b32.xlu0 %v1825, 64
    %v1989 = vpop.permute.xlu0 %1988
    %1990 = vrot.lane.b32.xlu0 %v1826, 64
    %v1991 = vpop.permute.xlu0 %1990
    %1992 = vrot.lane.b32.xlu0 %v1827, 64
    %v1993 = vpop.permute.xlu0 %1992
    %1994 = vrot.lane.b32.xlu0 %v1828, 64
    %v1995 = vpop.permute.xlu0 %1994
    %1996 = vrot.lane.b32.xlu0 %v1829, 64
    %v1997 = vpop.permute.xlu0 %1996
    %1998 = vrot.lane.b32.xlu0 %v1830, 64
    %v1999 = vpop.permute.xlu0 %1998
    %2000 = vrot.lane.b32.xlu0 %v1831, 64
    %v2001 = vpop.permute.xlu0 %2000
    %2002 = vrot.lane.b32.xlu0 %v1832, 64
    %v2003 = vpop.permute.xlu0 %2002
    %2004 = vrot.lane.b32.xlu0 %v1833, 64
    %v2005 = vpop.permute.xlu0 %2004
    %2006 = vrot.lane.b32.xlu0 %v1834, 64
    %v2007 = vpop.permute.xlu0 %2006
    %2008 = vrot.lane.b32.xlu0 %v1835, 64
    %v2009 = vpop.permute.xlu0 %2008
    %2010 = vrot.lane.b32.xlu0 %v1836, 64
    %v2011 = vpop.permute.xlu0 %2010
    %2012 = vrot.lane.b32.xlu0 %v1837, 64
    %v2013 = vpop.permute.xlu0 %2012
    %2014 = vrot.lane.b32.xlu0 %v1838, 64
    %v2015 = vpop.permute.xlu0 %2014
    %2016 = vrot.lane.b32.xlu0 %v1839, 64
    %v2017 = vpop.permute.xlu0 %2016
    %2018 = vrot.lane.b32.xlu0 %v1840, 64
    %v2019 = vpop.permute.xlu0 %2018
    %2020 = vrot.lane.b32.xlu0 %v1841, 64
    %v2021 = vpop.permute.xlu0 %2020
    %2022 = vrot.lane.b32.xlu0 %v1842, 64
    %v2023 = vpop.permute.xlu0 %2022
    %2024 = vrot.lane.b32.xlu0 %v1843, 64
    %v2025 = vpop.permute.xlu0 %2024
    %2026 = vrot.lane.b32.xlu0 %v1844, 64
    %v2027 = vpop.permute.xlu0 %2026
    %2028 = vrot.lane.b32.xlu0 %v1845, 64
    %v2029 = vpop.permute.xlu0 %2028
    %2030 = vrot.lane.b32.xlu0 %v1846, 64
    %v2031 = vpop.permute.xlu0 %2030
    %2032 = vrot.lane.b32.xlu0 %v1847, 64
    %v2033 = vpop.permute.xlu0 %2032
    %2034 = vrot.lane.b32.xlu0 %v1848, 64
    %v2035 = vpop.permute.xlu0 %2034
    %2036 = vrot.lane.b32.xlu0 %v1849, 64
    %v2037 = vpop.permute.xlu0 %2036
    %2038 = vrot.lane.b32.xlu0 %v1850, 64
    %v2039 = vpop.permute.xlu0 %2038
    %2040 = vrot.lane.b32.xlu0 %v1851, 64
    %v2041 = vpop.permute.xlu0 %2040
    %2042 = vrot.lane.b32.xlu0 %v1852, 64
    %v2043 = vpop.permute.xlu0 %2042
    %2044 = vrot.lane.b32.xlu0 %v1853, 64
    %v2045 = vpop.permute.xlu0 %2044
    %vm2110 = vcmask 781824
    %2111 = vst.msk [vmem:[#allocation3] sm:$0xf] %vm2110, %v1919
    %2112 = vst.msk [vmem:[#allocation3 + $0xc] sm:$0xf] %vm2110, %v1921
    %2113 = vst.msk [vmem:[#allocation3 + $0x18] sm:$0xf] %vm2110, %v1923
    %2114 = vst.msk [vmem:[#allocation3 + $0x24] sm:$0xf] %vm2110, %v1925
    %2115 = vst.msk [vmem:[#allocation3 + $0x30] sm:$0xf] %vm2110, %v1927
    %2116 = vst.msk [vmem:[#allocation3 + $0x3c] sm:$0xf] %vm2110, %v1929
    %2117 = vst.msk [vmem:[#allocation3 + $0x48] sm:$0xf] %vm2110, %v1931
    %2118 = vst.msk [vmem:[#allocation3 + $0x54] sm:$0xf] %vm2110, %v1933
    %2119 = vst.msk [vmem:[#allocation3 + $0x60] sm:$0xf] %vm2110, %v1935
    %2120 = vst.msk [vmem:[#allocation3 + $0x6c] sm:$0xf] %vm2110, %v1937
    %2121 = vst.msk [vmem:[#allocation3 + $0x78] sm:$0xf] %vm2110, %v1939
    %2122 = vst.msk [vmem:[#allocation3 + $0x84] sm:$0xf] %vm2110, %v1941
    %2123 = vst.msk [vmem:[#allocation3 + $0x90] sm:$0xf] %vm2110, %v1943
    %2124 = vst.msk [vmem:[#allocation3 + $0x9c] sm:$0xf] %vm2110, %v1945
    %2125 = vst.msk [vmem:[#allocation3 + $0xa8] sm:$0xf] %vm2110, %v1947
    %2126 = vst.msk [vmem:[#allocation3 + $0xb4] sm:$0xf] %vm2110, %v1949
    %2127 = vst.msk [vmem:[#allocation3 + $0xc0] sm:$0xf] %vm2110, %v1951
    %2128 = vst.msk [vmem:[#allocation3 + $0xcc] sm:$0xf] %vm2110, %v1953
    %2129 = vst.msk [vmem:[#allocation3 + $0xd8] sm:$0xf] %vm2110, %v1955
    %2130 = vst.msk [vmem:[#allocation3 + $0xe4] sm:$0xf] %vm2110, %v1957
    %2131 = vst.msk [vmem:[#allocation3 + $0xf0] sm:$0xf] %vm2110, %v1959
    %2132 = vst.msk [vmem:[#allocation3 + $0xfc] sm:$0xf] %vm2110, %v1961
    %2133 = vst.msk [vmem:[#allocation3 + $0x108] sm:$0xf] %vm2110, %v1963
    %2134 = vst.msk [vmem:[#allocation3 + $0x114] sm:$0xf] %vm2110, %v1965
    %2135 = vst.msk [vmem:[#allocation3 + $0x120] sm:$0xf] %vm2110, %v1967
    %2136 = vst.msk [vmem:[#allocation3 + $0x12c] sm:$0xf] %vm2110, %v1969
    %2137 = vst.msk [vmem:[#allocation3 + $0x138] sm:$0xf] %vm2110, %v1971
    %2138 = vst.msk [vmem:[#allocation3 + $0x144] sm:$0xf] %vm2110, %v1973
    %2139 = vst.msk [vmem:[#allocation3 + $0x150] sm:$0xf] %vm2110, %v1975
    %2140 = vst.msk [vmem:[#allocation3 + $0x15c] sm:$0xf] %vm2110, %v1977
    %2141 = vst.msk [vmem:[#allocation3 + $0x168] sm:$0xf] %vm2110, %v1979
    %2142 = vst.msk [vmem:[#allocation3 + $0x174] sm:$0xf] %vm2110, %v1981
    %2143 = vst.msk [vmem:[#allocation3 + $0x180] sm:$0xf] %vm2110, %v1983
    %2144 = vst.msk [vmem:[#allocation3 + $0x18c] sm:$0xf] %vm2110, %v1985
    %2145 = vst.msk [vmem:[#allocation3 + $0x198] sm:$0xf] %vm2110, %v1987
    %2146 = vst.msk [vmem:[#allocation3 + $0x1a4] sm:$0xf] %vm2110, %v1989
    %2147 = vst.msk [vmem:[#allocation3 + $0x1b0] sm:$0xf] %vm2110, %v1991
    %2148 = vst.msk [vmem:[#allocation3 + $0x1bc] sm:$0xf] %vm2110, %v1993
    %2149 = vst.msk [vmem:[#allocation3 + $0x1c8] sm:$0xf] %vm2110, %v1995
    %2150 = vst.msk [vmem:[#allocation3 + $0x1d4] sm:$0xf] %vm2110, %v1997
    %2151 = vst.msk [vmem:[#allocation3 + $0x1e0] sm:$0xf] %vm2110, %v1999
    %2152 = vst.msk [vmem:[#allocation3 + $0x1ec] sm:$0xf] %vm2110, %v2001
    %2153 = vst.msk [vmem:[#allocation3 + $0x1f8] sm:$0xf] %vm2110, %v2003
    %2154 = vst.msk [vmem:[#allocation3 + $0x204] sm:$0xf] %vm2110, %v2005
    %2155 = vst.msk [vmem:[#allocation3 + $0x210] sm:$0xf] %vm2110, %v2007
    %2156 = vst.msk [vmem:[#allocation3 + $0x21c] sm:$0xf] %vm2110, %v2009
    %2157 = vst.msk [vmem:[#allocation3 + $0x228] sm:$0xf] %vm2110, %v2011
    %2158 = vst.msk [vmem:[#allocation3 + $0x234] sm:$0xf] %vm2110, %v2013
    %2159 = vst.msk [vmem:[#allocation3 + $0x240] sm:$0xf] %vm2110, %v2015
    %2160 = vst.msk [vmem:[#allocation3 + $0x24c] sm:$0xf] %vm2110, %v2017
    %2161 = vst.msk [vmem:[#allocation3 + $0x258] sm:$0xf] %vm2110, %v2019
    %2162 = vst.msk [vmem:[#allocation3 + $0x264] sm:$0xf] %vm2110, %v2021
    %2163 = vst.msk [vmem:[#allocation3 + $0x270] sm:$0xf] %vm2110, %v2023
    %2164 = vst.msk [vmem:[#allocation3 + $0x27c] sm:$0xf] %vm2110, %v2025
    %2165 = vst.msk [vmem:[#allocation3 + $0x288] sm:$0xf] %vm2110, %v2027
    %2166 = vst.msk [vmem:[#allocation3 + $0x294] sm:$0xf] %vm2110, %v2029
    %2167 = vst.msk [vmem:[#allocation3 + $0x2a0] sm:$0xf] %vm2110, %v2031
    %2168 = vst.msk [vmem:[#allocation3 + $0x2ac] sm:$0xf] %vm2110, %v2033
    %2169 = vst.msk [vmem:[#allocation3 + $0x2b8] sm:$0xf] %vm2110, %v2035
    %2170 = vst.msk [vmem:[#allocation3 + $0x2c4] sm:$0xf] %vm2110, %v2037
    %2171 = vst.msk [vmem:[#allocation3 + $0x2d0] sm:$0xf] %vm2110, %v2039
    %2172 = vst.msk [vmem:[#allocation3 + $0x2dc] sm:$0xf] %vm2110, %v2041
    %2173 = vst.msk [vmem:[#allocation3 + $0x2e8] sm:$0xf] %vm2110, %v2043
    %2174 = vst.msk [vmem:[#allocation3 + $0x2f4] sm:$0xf] %vm2110, %v2045
    %v2175 = vld [vmem:[%s1019] sm:$0xff]
    %v2176 = vld [vmem:[%s1019 + $0x8] sm:$0xff]
    %v2177 = vld [vmem:[%s1019 + $0x18] sm:$0xff]
    %v2178 = vld [vmem:[%s1019 + $0x20] sm:$0xff]
    %v2179 = vld [vmem:[%s1019 + $0x30] sm:$0xff]
    %v2180 = vld [vmem:[%s1019 + $0x38] sm:$0xff]
    %v2181 = vld [vmem:[%s1019 + $0x48] sm:$0xff]
    %v2182 = vld [vmem:[%s1019 + $0x50] sm:$0xff]
    %v2183 = vld [vmem:[%s1019 + $0x60] sm:$0xff]
    %v2184 = vld [vmem:[%s1019 + $0x68] sm:$0xff]
    %v2185 = vld [vmem:[%s1019 + $0x78] sm:$0xff]
    %v2186 = vld [vmem:[%s1019 + $0x80] sm:$0xff]
    %v2187 = vld [vmem:[%s1019 + $0x90] sm:$0xff]
    %v2188 = vld [vmem:[%s1019 + $0x98] sm:$0xff]
    %v2189 = vld [vmem:[%s1019 + $0xa8] sm:$0xff]
    %v2190 = vld [vmem:[%s1019 + $0xb0] sm:$0xff]
    %v2191 = vld [vmem:[%s1019 + $0xc0] sm:$0xff]
    %v2192 = vld [vmem:[%s1019 + $0xc8] sm:$0xff]
    %v2193 = vld [vmem:[%s1019 + $0xd8] sm:$0xff]
    %v2194 = vld [vmem:[%s1019 + $0xe0] sm:$0xff]
    %v2195 = vld [vmem:[%s1019 + $0xf0] sm:$0xff]
    %v2196 = vld [vmem:[%s1019 + $0xf8] sm:$0xff]
    %v2197 = vld [vmem:[%s1019 + $0x108] sm:$0xff]
    %v2198 = vld [vmem:[%s1019 + $0x110] sm:$0xff]
    %v2199 = vld [vmem:[%s1019 + $0x120] sm:$0xff]
    %v2200 = vld [vmem:[%s1019 + $0x128] sm:$0xff]
    %v2201 = vld [vmem:[%s1019 + $0x138] sm:$0xff]
    %v2202 = vld [vmem:[%s1019 + $0x140] sm:$0xff]
    %v2203 = vld [vmem:[%s1019 + $0x150] sm:$0xff]
    %v2204 = vld [vmem:[%s1019 + $0x158] sm:$0xff]
    %v2205 = vld [vmem:[%s1019 + $0x168] sm:$0xff]
    %v2206 = vld [vmem:[%s1019 + $0x170] sm:$0xff]
    %v2207 = vld [vmem:[%s1019 + $0x1b0] sm:$0xff]
    %v2208 = vld [vmem:[%s1019 + $0x1b8] sm:$0xff]
    %v2209 = vld [vmem:[%s1019 + $0x1c8] sm:$0xff]
    %v2210 = vld [vmem:[%s1019 + $0x1d0] sm:$0xff]
    %v2211 = vld [vmem:[%s1019 + $0x1e0] sm:$0xff]
    %v2212 = vld [vmem:[%s1019 + $0x1e8] sm:$0xff]
    %v2213 = vld [vmem:[%s1019 + $0x1f8] sm:$0xff]
    %v2214 = vld [vmem:[%s1019 + $0x200] sm:$0xff]
    %v2215 = vld [vmem:[%s1019 + $0x210] sm:$0xff]
    %v2216 = vld [vmem:[%s1019 + $0x218] sm:$0xff]
    %v2217 = vld [vmem:[%s1019 + $0x228] sm:$0xff]
    %v2218 = vld [vmem:[%s1019 + $0x230] sm:$0xff]
    %v2219 = vld [vmem:[%s1019 + $0x240] sm:$0xff]
    %v2220 = vld [vmem:[%s1019 + $0x248] sm:$0xff]
    %v2221 = vld [vmem:[%s1019 + $0x258] sm:$0xff]
    %v2222 = vld [vmem:[%s1019 + $0x260] sm:$0xff]
    %v2223 = vld [vmem:[%s1019 + $0x270] sm:$0xff]
    %v2224 = vld [vmem:[%s1019 + $0x278] sm:$0xff]
    %v2225 = vld [vmem:[%s1019 + $0x288] sm:$0xff]
    %v2226 = vld [vmem:[%s1019 + $0x290] sm:$0xff]
    %v2227 = vld [vmem:[%s1019 + $0x2a0] sm:$0xff]
    %v2228 = vld [vmem:[%s1019 + $0x2a8] sm:$0xff]
    %v2229 = vld [vmem:[%s1019 + $0x2b8] sm:$0xff]
    %v2230 = vld [vmem:[%s1019 + $0x2c0] sm:$0xff]
    %v2231 = vld [vmem:[%s1019 + $0x2d0] sm:$0xff]
    %v2232 = vld [vmem:[%s1019 + $0x2d8] sm:$0xff]
    %v2233 = vld [vmem:[%s1019 + $0x2e8] sm:$0xff]
    %v2234 = vld [vmem:[%s1019 + $0x2f0] sm:$0xff]
    %v2235 = vld [vmem:[%s1019 + $0x300] sm:$0xff]
    %v2236 = vld [vmem:[%s1019 + $0x308] sm:$0xff]
    %v2237 = vld [vmem:[%s1019 + $0x318] sm:$0xff]
    %v2238 = vld [vmem:[%s1019 + $0x320] sm:$0xff]
    %v2239 = vpack.c.bf16 %v2175, %v2175
    %v2240 = vpack.c.bf16 %v2176, %v2176
    %v2241 = vpack.c.bf16 %v2177, %v2177
    %v2242 = vpack.c.bf16 %v2178, %v2178
    %v2243 = vpack.c.bf16 %v2179, %v2179
    %v2244 = vpack.c.bf16 %v2180, %v2180
    %v2245 = vpack.c.bf16 %v2181, %v2181
    %v2246 = vpack.c.bf16 %v2182, %v2182
    %v2247 = vpack.c.bf16 %v2183, %v2183
    %v2248 = vpack.c.bf16 %v2184, %v2184
    %v2249 = vpack.c.bf16 %v2185, %v2185
    %v2250 = vpack.c.bf16 %v2186, %v2186
    %v2251 = vpack.c.bf16 %v2187, %v2187
    %v2252 = vpack.c.bf16 %v2188, %v2188
    %v2253 = vpack.c.bf16 %v2189, %v2189
    %v2254 = vpack.c.bf16 %v2190, %v2190
    %v2255 = vpack.c.bf16 %v2191, %v2191
    %v2256 = vpack.c.bf16 %v2192, %v2192
    %v2257 = vpack.c.bf16 %v2193, %v2193
    %v2258 = vpack.c.bf16 %v2194, %v2194
    %v2259 = vpack.c.bf16 %v2195, %v2195
    %v2260 = vpack.c.bf16 %v2196, %v2196
    %v2261 = vpack.c.bf16 %v2197, %v2197
    %v2262 = vpack.c.bf16 %v2198, %v2198
    %v2263 = vpack.c.bf16 %v2199, %v2199
    %v2264 = vpack.c.bf16 %v2200, %v2200
    %v2265 = vpack.c.bf16 %v2201, %v2201
    %v2266 = vpack.c.bf16 %v2202, %v2202
    %v2267 = vpack.c.bf16 %v2203, %v2203
    %v2268 = vpack.c.bf16 %v2204, %v2204
    %v2269 = vpack.c.bf16 %v2205, %v2205
    %v2270 = vpack.c.bf16 %v2206, %v2206
    %v2271 = vpack.c.bf16 %v2207, %v2207
    %v2272 = vpack.c.bf16 %v2208, %v2208
    %v2273 = vpack.c.bf16 %v2209, %v2209
    %v2274 = vpack.c.bf16 %v2210, %v2210
    %v2275 = vpack.c.bf16 %v2211, %v2211
    %v2276 = vpack.c.bf16 %v2212, %v2212
    %v2277 = vpack.c.bf16 %v2213, %v2213
    %v2278 = vpack.c.bf16 %v2214, %v2214
    %v2279 = vpack.c.bf16 %v2215, %v2215
    %v2280 = vpack.c.bf16 %v2216, %v2216
    %v2281 = vpack.c.bf16 %v2217, %v2217
    %v2282 = vpack.c.bf16 %v2218, %v2218
    %v2283 = vpack.c.bf16 %v2219, %v2219
    %v2284 = vpack.c.bf16 %v2220, %v2220
    %v2285 = vpack.c.bf16 %v2221, %v2221
    %v2286 = vpack.c.bf16 %v2222, %v2222
    %v2287 = vpack.c.bf16 %v2223, %v2223
    %v2288 = vpack.c.bf16 %v2224, %v2224
    %v2289 = vpack.c.bf16 %v2225, %v2225
    %v2290 = vpack.c.bf16 %v2226, %v2226
    %v2291 = vpack.c.bf16 %v2227, %v2227
    %v2292 = vpack.c.bf16 %v2228, %v2228
    %v2293 = vpack.c.bf16 %v2229, %v2229
    %v2294 = vpack.c.bf16 %v2230, %v2230
    %v2295 = vpack.c.bf16 %v2231, %v2231
    %v2296 = vpack.c.bf16 %v2232, %v2232
    %v2297 = vpack.c.bf16 %v2233, %v2233
    %v2298 = vpack.c.bf16 %v2234, %v2234
    %v2299 = vpack.c.bf16 %v2235, %v2235
    %v2300 = vpack.c.bf16 %v2236, %v2236
    %v2301 = vpack.c.bf16 %v2237, %v2237
    %v2302 = vpack.c.bf16 %v2238, %v2238
    %2367 = vrot.lane.b32.xlu0 %v2239, 96
    %v2368 = vpop.permute.xlu0 %2367
    %2369 = vrot.lane.b32.xlu0 %v2240, 96
    %v2370 = vpop.permute.xlu0 %2369
    %2371 = vrot.lane.b32.xlu0 %v2241, 96
    %v2372 = vpop.permute.xlu0 %2371
    %2373 = vrot.lane.b32.xlu0 %v2242, 96
    %v2374 = vpop.permute.xlu0 %2373
    %2375 = vrot.lane.b32.xlu0 %v2243, 96
    %v2376 = vpop.permute.xlu0 %2375
    %2377 = vrot.lane.b32.xlu0 %v2244, 96
    %v2378 = vpop.permute.xlu0 %2377
    %2379 = vrot.lane.b32.xlu0 %v2245, 96
    %v2380 = vpop.permute.xlu0 %2379
    %2381 = vrot.lane.b32.xlu0 %v2246, 96
    %v2382 = vpop.permute.xlu0 %2381
    %2383 = vrot.lane.b32.xlu0 %v2247, 96
    %v2384 = vpop.permute.xlu0 %2383
    %2385 = vrot.lane.b32.xlu0 %v2248, 96
    %v2386 = vpop.permute.xlu0 %2385
    %2387 = vrot.lane.b32.xlu0 %v2249, 96
    %v2388 = vpop.permute.xlu0 %2387
    %2389 = vrot.lane.b32.xlu0 %v2250, 96
    %v2390 = vpop.permute.xlu0 %2389
    %2391 = vrot.lane.b32.xlu0 %v2251, 96
    %v2392 = vpop.permute.xlu0 %2391
    %2393 = vrot.lane.b32.xlu0 %v2252, 96
    %v2394 = vpop.permute.xlu0 %2393
    %2395 = vrot.lane.b32.xlu0 %v2253, 96
    %v2396 = vpop.permute.xlu0 %2395
    %2397 = vrot.lane.b32.xlu0 %v2254, 96
    %v2398 = vpop.permute.xlu0 %2397
    %2399 = vrot.lane.b32.xlu0 %v2255, 96
    %v2400 = vpop.permute.xlu0 %2399
    %2401 = vrot.lane.b32.xlu0 %v2256, 96
    %v2402 = vpop.permute.xlu0 %2401
    %2403 = vrot.lane.b32.xlu0 %v2257, 96
    %v2404 = vpop.permute.xlu0 %2403
    %2405 = vrot.lane.b32.xlu0 %v2258, 96
    %v2406 = vpop.permute.xlu0 %2405
    %2407 = vrot.lane.b32.xlu0 %v2259, 96
    %v2408 = vpop.permute.xlu0 %2407
    %2409 = vrot.lane.b32.xlu0 %v2260, 96
    %v2410 = vpop.permute.xlu0 %2409
    %2411 = vrot.lane.b32.xlu0 %v2261, 96
    %v2412 = vpop.permute.xlu0 %2411
    %2413 = vrot.lane.b32.xlu0 %v2262, 96
    %v2414 = vpop.permute.xlu0 %2413
    %2415 = vrot.lane.b32.xlu0 %v2263, 96
    %v2416 = vpop.permute.xlu0 %2415
    %2417 = vrot.lane.b32.xlu0 %v2264, 96
    %v2418 = vpop.permute.xlu0 %2417
    %2419 = vrot.lane.b32.xlu0 %v2265, 96
    %v2420 = vpop.permute.xlu0 %2419
    %2421 = vrot.lane.b32.xlu0 %v2266, 96
    %v2422 = vpop.permute.xlu0 %2421
    %2423 = vrot.lane.b32.xlu0 %v2267, 96
    %v2424 = vpop.permute.xlu0 %2423
    %2425 = vrot.lane.b32.xlu0 %v2268, 96
    %v2426 = vpop.permute.xlu0 %2425
    %2427 = vrot.lane.b32.xlu0 %v2269, 96
    %v2428 = vpop.permute.xlu0 %2427
    %2429 = vrot.lane.b32.xlu0 %v2270, 96
    %v2430 = vpop.permute.xlu0 %2429
    %2431 = vrot.lane.b32.xlu0 %v2271, 96
    %v2432 = vpop.permute.xlu0 %2431
    %2433 = vrot.lane.b32.xlu0 %v2272, 96
    %v2434 = vpop.permute.xlu0 %2433
    %2435 = vrot.lane.b32.xlu0 %v2273, 96
    %v2436 = vpop.permute.xlu0 %2435
    %2437 = vrot.lane.b32.xlu0 %v2274, 96
    %v2438 = vpop.permute.xlu0 %2437
    %2439 = vrot.lane.b32.xlu0 %v2275, 96
    %v2440 = vpop.permute.xlu0 %2439
    %2441 = vrot.lane.b32.xlu0 %v2276, 96
    %v2442 = vpop.permute.xlu0 %2441
    %2443 = vrot.lane.b32.xlu0 %v2277, 96
    %v2444 = vpop.permute.xlu0 %2443
    %2445 = vrot.lane.b32.xlu0 %v2278, 96
    %v2446 = vpop.permute.xlu0 %2445
    %2447 = vrot.lane.b32.xlu0 %v2279, 96
    %v2448 = vpop.permute.xlu0 %2447
    %2449 = vrot.lane.b32.xlu0 %v2280, 96
    %v2450 = vpop.permute.xlu0 %2449
    %2451 = vrot.lane.b32.xlu0 %v2281, 96
    %v2452 = vpop.permute.xlu0 %2451
    %2453 = vrot.lane.b32.xlu0 %v2282, 96
    %v2454 = vpop.permute.xlu0 %2453
    %2455 = vrot.lane.b32.xlu0 %v2283, 96
    %v2456 = vpop.permute.xlu0 %2455
    %2457 = vrot.lane.b32.xlu0 %v2284, 96
    %v2458 = vpop.permute.xlu0 %2457
    %2459 = vrot.lane.b32.xlu0 %v2285, 96
    %v2460 = vpop.permute.xlu0 %2459
    %2461 = vrot.lane.b32.xlu0 %v2286, 96
    %v2462 = vpop.permute.xlu0 %2461
    %2463 = vrot.lane.b32.xlu0 %v2287, 96
    %v2464 = vpop.permute.xlu0 %2463
    %2465 = vrot.lane.b32.xlu0 %v2288, 96
    %v2466 = vpop.permute.xlu0 %2465
    %2467 = vrot.lane.b32.xlu0 %v2289, 96
    %v2468 = vpop.permute.xlu0 %2467
    %2469 = vrot.lane.b32.xlu0 %v2290, 96
    %v2470 = vpop.permute.xlu0 %2469
    %2471 = vrot.lane.b32.xlu0 %v2291, 96
    %v2472 = vpop.permute.xlu0 %2471
    %2473 = vrot.lane.b32.xlu0 %v2292, 96
    %v2474 = vpop.permute.xlu0 %2473
    %2475 = vrot.lane.b32.xlu0 %v2293, 96
    %v2476 = vpop.permute.xlu0 %2475
    %2477 = vrot.lane.b32.xlu0 %v2294, 96
    %v2478 = vpop.permute.xlu0 %2477
    %2479 = vrot.lane.b32.xlu0 %v2295, 96
    %v2480 = vpop.permute.xlu0 %2479
    %2481 = vrot.lane.b32.xlu0 %v2296, 96
    %v2482 = vpop.permute.xlu0 %2481
    %2483 = vrot.lane.b32.xlu0 %v2297, 96
    %v2484 = vpop.permute.xlu0 %2483
    %2485 = vrot.lane.b32.xlu0 %v2298, 96
    %v2486 = vpop.permute.xlu0 %2485
    %2487 = vrot.lane.b32.xlu0 %v2299, 96
    %v2488 = vpop.permute.xlu0 %2487
    %2489 = vrot.lane.b32.xlu0 %v2300, 96
    %v2490 = vpop.permute.xlu0 %2489
    %2491 = vrot.lane.b32.xlu0 %v2301, 96
    %v2492 = vpop.permute.xlu0 %2491
    %2493 = vrot.lane.b32.xlu0 %v2302, 96
    %v2494 = vpop.permute.xlu0 %2493
    %vm2559 = vcmask 1044224
    %2560 = vst.msk [vmem:[#allocation3] sm:$0xf] %vm2559, %v2368
    %2561 = vst.msk [vmem:[#allocation3 + $0xc] sm:$0xf] %vm2559, %v2370
    %2562 = vst.msk [vmem:[#allocation3 + $0x18] sm:$0xf] %vm2559, %v2372
    %2563 = vst.msk [vmem:[#allocation3 + $0x24] sm:$0xf] %vm2559, %v2374
    %2564 = vst.msk [vmem:[#allocation3 + $0x30] sm:$0xf] %vm2559, %v2376
    %2565 = vst.msk [vmem:[#allocation3 + $0x3c] sm:$0xf] %vm2559, %v2378
    %2566 = vst.msk [vmem:[#allocation3 + $0x48] sm:$0xf] %vm2559, %v2380
    %2567 = vst.msk [vmem:[#allocation3 + $0x54] sm:$0xf] %vm2559, %v2382
    %2568 = vst.msk [vmem:[#allocation3 + $0x60] sm:$0xf] %vm2559, %v2384
    %2569 = vst.msk [vmem:[#allocation3 + $0x6c] sm:$0xf] %vm2559, %v2386
    %2570 = vst.msk [vmem:[#allocation3 + $0x78] sm:$0xf] %vm2559, %v2388
    %2571 = vst.msk [vmem:[#allocation3 + $0x84] sm:$0xf] %vm2559, %v2390
    %2572 = vst.msk [vmem:[#allocation3 + $0x90] sm:$0xf] %vm2559, %v2392
    %2573 = vst.msk [vmem:[#allocation3 + $0x9c] sm:$0xf] %vm2559, %v2394
    %2574 = vst.msk [vmem:[#allocation3 + $0xa8] sm:$0xf] %vm2559, %v2396
    %2575 = vst.msk [vmem:[#allocation3 + $0xb4] sm:$0xf] %vm2559, %v2398
    %2576 = vst.msk [vmem:[#allocation3 + $0xc0] sm:$0xf] %vm2559, %v2400
    %2577 = vst.msk [vmem:[#allocation3 + $0xcc] sm:$0xf] %vm2559, %v2402
    %2578 = vst.msk [vmem:[#allocation3 + $0xd8] sm:$0xf] %vm2559, %v2404
    %2579 = vst.msk [vmem:[#allocation3 + $0xe4] sm:$0xf] %vm2559, %v2406
    %2580 = vst.msk [vmem:[#allocation3 + $0xf0] sm:$0xf] %vm2559, %v2408
    %2581 = vst.msk [vmem:[#allocation3 + $0xfc] sm:$0xf] %vm2559, %v2410
    %2582 = vst.msk [vmem:[#allocation3 + $0x108] sm:$0xf] %vm2559, %v2412
    %2583 = vst.msk [vmem:[#allocation3 + $0x114] sm:$0xf] %vm2559, %v2414
    %2584 = vst.msk [vmem:[#allocation3 + $0x120] sm:$0xf] %vm2559, %v2416
    %2585 = vst.msk [vmem:[#allocation3 + $0x12c] sm:$0xf] %vm2559, %v2418
    %2586 = vst.msk [vmem:[#allocation3 + $0x138] sm:$0xf] %vm2559, %v2420
    %2587 = vst.msk [vmem:[#allocation3 + $0x144] sm:$0xf] %vm2559, %v2422
    %2588 = vst.msk [vmem:[#allocation3 + $0x150] sm:$0xf] %vm2559, %v2424
    %2589 = vst.msk [vmem:[#allocation3 + $0x15c] sm:$0xf] %vm2559, %v2426
    %2590 = vst.msk [vmem:[#allocation3 + $0x168] sm:$0xf] %vm2559, %v2428
    %2591 = vst.msk [vmem:[#allocation3 + $0x174] sm:$0xf] %vm2559, %v2430
    %2592 = vst.msk [vmem:[#allocation3 + $0x180] sm:$0xf] %vm2559, %v2432
    %2593 = vst.msk [vmem:[#allocation3 + $0x18c] sm:$0xf] %vm2559, %v2434
    %2594 = vst.msk [vmem:[#allocation3 + $0x198] sm:$0xf] %vm2559, %v2436
    %2595 = vst.msk [vmem:[#allocation3 + $0x1a4] sm:$0xf] %vm2559, %v2438
    %2596 = vst.msk [vmem:[#allocation3 + $0x1b0] sm:$0xf] %vm2559, %v2440
    %2597 = vst.msk [vmem:[#allocation3 + $0x1bc] sm:$0xf] %vm2559, %v2442
    %2598 = vst.msk [vmem:[#allocation3 + $0x1c8] sm:$0xf] %vm2559, %v2444
    %2599 = vst.msk [vmem:[#allocation3 + $0x1d4] sm:$0xf] %vm2559, %v2446
    %2600 = vst.msk [vmem:[#allocation3 + $0x1e0] sm:$0xf] %vm2559, %v2448
    %2601 = vst.msk [vmem:[#allocation3 + $0x1ec] sm:$0xf] %vm2559, %v2450
    %2602 = vst.msk [vmem:[#allocation3 + $0x1f8] sm:$0xf] %vm2559, %v2452
    %2603 = vst.msk [vmem:[#allocation3 + $0x204] sm:$0xf] %vm2559, %v2454
    %2604 = vst.msk [vmem:[#allocation3 + $0x210] sm:$0xf] %vm2559, %v2456
    %2605 = vst.msk [vmem:[#allocation3 + $0x21c] sm:$0xf] %vm2559, %v2458
    %2606 = vst.msk [vmem:[#allocation3 + $0x228] sm:$0xf] %vm2559, %v2460
    %2607 = vst.msk [vmem:[#allocation3 + $0x234] sm:$0xf] %vm2559, %v2462
    %2608 = vst.msk [vmem:[#allocation3 + $0x240] sm:$0xf] %vm2559, %v2464
    %2609 = vst.msk [vmem:[#allocation3 + $0x24c] sm:$0xf] %vm2559, %v2466
    %2610 = vst.msk [vmem:[#allocation3 + $0x258] sm:$0xf] %vm2559, %v2468
    %2611 = vst.msk [vmem:[#allocation3 + $0x264] sm:$0xf] %vm2559, %v2470
    %2612 = vst.msk [vmem:[#allocation3 + $0x270] sm:$0xf] %vm2559, %v2472
    %2613 = vst.msk [vmem:[#allocation3 + $0x27c] sm:$0xf] %vm2559, %v2474
    %2614 = vst.msk [vmem:[#allocation3 + $0x288] sm:$0xf] %vm2559, %v2476
    %2615 = vst.msk [vmem:[#allocation3 + $0x294] sm:$0xf] %vm2559, %v2478
    %2616 = vst.msk [vmem:[#allocation3 + $0x2a0] sm:$0xf] %vm2559, %v2480
    %2617 = vst.msk [vmem:[#allocation3 + $0x2ac] sm:$0xf] %vm2559, %v2482
    %2618 = vst.msk [vmem:[#allocation3 + $0x2b8] sm:$0xf] %vm2559, %v2484
    %2619 = vst.msk [vmem:[#allocation3 + $0x2c4] sm:$0xf] %vm2559, %v2486
    %2620 = vst.msk [vmem:[#allocation3 + $0x2d0] sm:$0xf] %vm2559, %v2488
    %2621 = vst.msk [vmem:[#allocation3 + $0x2dc] sm:$0xf] %vm2559, %v2490
    %2622 = vst.msk [vmem:[#allocation3 + $0x2e8] sm:$0xf] %vm2559, %v2492
    %2623 = vst.msk [vmem:[#allocation3 + $0x2f4] sm:$0xf] %vm2559, %v2494
    %v2624 = vld [vmem:[%s1019 + $0x1] sm:$0xff]
    %v2625 = vld [vmem:[%s1019 + $0x9] sm:$0xff]
    %v2626 = vld [vmem:[%s1019 + $0x19] sm:$0xff]
    %v2627 = vld [vmem:[%s1019 + $0x21] sm:$0xff]
    %v2628 = vld [vmem:[%s1019 + $0x31] sm:$0xff]
    %v2629 = vld [vmem:[%s1019 + $0x39] sm:$0xff]
    %v2630 = vld [vmem:[%s1019 + $0x49] sm:$0xff]
    %v2631 = vld [vmem:[%s1019 + $0x51] sm:$0xff]
    %v2632 = vld [vmem:[%s1019 + $0x61] sm:$0xff]
    %v2633 = vld [vmem:[%s1019 + $0x69] sm:$0xff]
    %v2634 = vld [vmem:[%s1019 + $0x79] sm:$0xff]
    %v2635 = vld [vmem:[%s1019 + $0x81] sm:$0xff]
    %v2636 = vld [vmem:[%s1019 + $0x91] sm:$0xff]
    %v2637 = vld [vmem:[%s1019 + $0x99] sm:$0xff]
    %v2638 = vld [vmem:[%s1019 + $0xa9] sm:$0xff]
    %v2639 = vld [vmem:[%s1019 + $0xb1] sm:$0xff]
    %v2640 = vld [vmem:[%s1019 + $0xc1] sm:$0xff]
    %v2641 = vld [vmem:[%s1019 + $0xc9] sm:$0xff]
    %v2642 = vld [vmem:[%s1019 + $0xd9] sm:$0xff]
    %v2643 = vld [vmem:[%s1019 + $0xe1] sm:$0xff]
    %v2644 = vld [vmem:[%s1019 + $0xf1] sm:$0xff]
    %v2645 = vld [vmem:[%s1019 + $0xf9] sm:$0xff]
    %v2646 = vld [vmem:[%s1019 + $0x109] sm:$0xff]
    %v2647 = vld [vmem:[%s1019 + $0x111] sm:$0xff]
    %v2648 = vld [vmem:[%s1019 + $0x121] sm:$0xff]
    %v2649 = vld [vmem:[%s1019 + $0x129] sm:$0xff]
    %v2650 = vld [vmem:[%s1019 + $0x139] sm:$0xff]
    %v2651 = vld [vmem:[%s1019 + $0x141] sm:$0xff]
    %v2652 = vld [vmem:[%s1019 + $0x151] sm:$0xff]
    %v2653 = vld [vmem:[%s1019 + $0x159] sm:$0xff]
    %v2654 = vld [vmem:[%s1019 + $0x169] sm:$0xff]
    %v2655 = vld [vmem:[%s1019 + $0x171] sm:$0xff]
    %v2656 = vld [vmem:[%s1019 + $0x1b1] sm:$0xff]
    %v2657 = vld [vmem:[%s1019 + $0x1b9] sm:$0xff]
    %v2658 = vld [vmem:[%s1019 + $0x1c9] sm:$0xff]
    %v2659 = vld [vmem:[%s1019 + $0x1d1] sm:$0xff]
    %v2660 = vld [vmem:[%s1019 + $0x1e1] sm:$0xff]
    %v2661 = vld [vmem:[%s1019 + $0x1e9] sm:$0xff]
    %v2662 = vld [vmem:[%s1019 + $0x1f9] sm:$0xff]
    %v2663 = vld [vmem:[%s1019 + $0x201] sm:$0xff]
    %v2664 = vld [vmem:[%s1019 + $0x211] sm:$0xff]
    %v2665 = vld [vmem:[%s1019 + $0x219] sm:$0xff]
    %v2666 = vld [vmem:[%s1019 + $0x229] sm:$0xff]
    %v2667 = vld [vmem:[%s1019 + $0x231] sm:$0xff]
    %v2668 = vld [vmem:[%s1019 + $0x241] sm:$0xff]
    %v2669 = vld [vmem:[%s1019 + $0x249] sm:$0xff]
    %v2670 = vld [vmem:[%s1019 + $0x259] sm:$0xff]
    %v2671 = vld [vmem:[%s1019 + $0x261] sm:$0xff]
    %v2672 = vld [vmem:[%s1019 + $0x271] sm:$0xff]
    %v2673 = vld [vmem:[%s1019 + $0x279] sm:$0xff]
    %v2674 = vld [vmem:[%s1019 + $0x289] sm:$0xff]
    %v2675 = vld [vmem:[%s1019 + $0x291] sm:$0xff]
    %v2676 = vld [vmem:[%s1019 + $0x2a1] sm:$0xff]
    %v2677 = vld [vmem:[%s1019 + $0x2a9] sm:$0xff]
    %v2678 = vld [vmem:[%s1019 + $0x2b9] sm:$0xff]
    %v2679 = vld [vmem:[%s1019 + $0x2c1] sm:$0xff]
    %v2680 = vld [vmem:[%s1019 + $0x2d1] sm:$0xff]
    %v2681 = vld [vmem:[%s1019 + $0x2d9] sm:$0xff]
    %v2682 = vld [vmem:[%s1019 + $0x2e9] sm:$0xff]
    %v2683 = vld [vmem:[%s1019 + $0x2f1] sm:$0xff]
    %v2684 = vld [vmem:[%s1019 + $0x301] sm:$0xff]
    %v2685 = vld [vmem:[%s1019 + $0x309] sm:$0xff]
    %v2686 = vld [vmem:[%s1019 + $0x319] sm:$0xff]
    %v2687 = vld [vmem:[%s1019 + $0x321] sm:$0xff]
    %v2688 = vpack.c.bf16 %v2624, %v2624
    %v2689 = vpack.c.bf16 %v2625, %v2625
    %v2690 = vpack.c.bf16 %v2626, %v2626
    %v2691 = vpack.c.bf16 %v2627, %v2627
    %v2692 = vpack.c.bf16 %v2628, %v2628
    %v2693 = vpack.c.bf16 %v2629, %v2629
    %v2694 = vpack.c.bf16 %v2630, %v2630
    %v2695 = vpack.c.bf16 %v2631, %v2631
    %v2696 = vpack.c.bf16 %v2632, %v2632
    %v2697 = vpack.c.bf16 %v2633, %v2633
    %v2698 = vpack.c.bf16 %v2634, %v2634
    %v2699 = vpack.c.bf16 %v2635, %v2635
    %v2700 = vpack.c.bf16 %v2636, %v2636
    %v2701 = vpack.c.bf16 %v2637, %v2637
    %v2702 = vpack.c.bf16 %v2638, %v2638
    %v2703 = vpack.c.bf16 %v2639, %v2639
    %v2704 = vpack.c.bf16 %v2640, %v2640
    %v2705 = vpack.c.bf16 %v2641, %v2641
    %v2706 = vpack.c.bf16 %v2642, %v2642
    %v2707 = vpack.c.bf16 %v2643, %v2643
    %v2708 = vpack.c.bf16 %v2644, %v2644
    %v2709 = vpack.c.bf16 %v2645, %v2645
    %v2710 = vpack.c.bf16 %v2646, %v2646
    %v2711 = vpack.c.bf16 %v2647, %v2647
    %v2712 = vpack.c.bf16 %v2648, %v2648
    %v2713 = vpack.c.bf16 %v2649, %v2649
    %v2714 = vpack.c.bf16 %v2650, %v2650
    %v2715 = vpack.c.bf16 %v2651, %v2651
    %v2716 = vpack.c.bf16 %v2652, %v2652
    %v2717 = vpack.c.bf16 %v2653, %v2653
    %v2718 = vpack.c.bf16 %v2654, %v2654
    %v2719 = vpack.c.bf16 %v2655, %v2655
    %v2720 = vpack.c.bf16 %v2656, %v2656
    %v2721 = vpack.c.bf16 %v2657, %v2657
    %v2722 = vpack.c.bf16 %v2658, %v2658
    %v2723 = vpack.c.bf16 %v2659, %v2659
    %v2724 = vpack.c.bf16 %v2660, %v2660
    %v2725 = vpack.c.bf16 %v2661, %v2661
    %v2726 = vpack.c.bf16 %v2662, %v2662
    %v2727 = vpack.c.bf16 %v2663, %v2663
    %v2728 = vpack.c.bf16 %v2664, %v2664
    %v2729 = vpack.c.bf16 %v2665, %v2665
    %v2730 = vpack.c.bf16 %v2666, %v2666
    %v2731 = vpack.c.bf16 %v2667, %v2667
    %v2732 = vpack.c.bf16 %v2668, %v2668
    %v2733 = vpack.c.bf16 %v2669, %v2669
    %v2734 = vpack.c.bf16 %v2670, %v2670
    %v2735 = vpack.c.bf16 %v2671, %v2671
    %v2736 = vpack.c.bf16 %v2672, %v2672
    %v2737 = vpack.c.bf16 %v2673, %v2673
    %v2738 = vpack.c.bf16 %v2674, %v2674
    %v2739 = vpack.c.bf16 %v2675, %v2675
    %v2740 = vpack.c.bf16 %v2676, %v2676
    %v2741 = vpack.c.bf16 %v2677, %v2677
    %v2742 = vpack.c.bf16 %v2678, %v2678
    %v2743 = vpack.c.bf16 %v2679, %v2679
    %v2744 = vpack.c.bf16 %v2680, %v2680
    %v2745 = vpack.c.bf16 %v2681, %v2681
    %v2746 = vpack.c.bf16 %v2682, %v2682
    %v2747 = vpack.c.bf16 %v2683, %v2683
    %v2748 = vpack.c.bf16 %v2684, %v2684
    %v2749 = vpack.c.bf16 %v2685, %v2685
    %v2750 = vpack.c.bf16 %v2686, %v2686
    %v2751 = vpack.c.bf16 %v2687, %v2687
    %2752 = vst.msk [vmem:[#allocation3 + $0x4] sm:$0xf] %vm1212, %v2688
    %2753 = vst.msk [vmem:[#allocation3 + $0x10] sm:$0xf] %vm1212, %v2689
    %2754 = vst.msk [vmem:[#allocation3 + $0x1c] sm:$0xf] %vm1212, %v2690
    %2755 = vst.msk [vmem:[#allocation3 + $0x28] sm:$0xf] %vm1212, %v2691
    %2756 = vst.msk [vmem:[#allocation3 + $0x34] sm:$0xf] %vm1212, %v2692
    %2757 = vst.msk [vmem:[#allocation3 + $0x40] sm:$0xf] %vm1212, %v2693
    %2758 = vst.msk [vmem:[#allocation3 + $0x4c] sm:$0xf] %vm1212, %v2694
    %2759 = vst.msk [vmem:[#allocation3 + $0x58] sm:$0xf] %vm1212, %v2695
    %2760 = vst.msk [vmem:[#allocation3 + $0x64] sm:$0xf] %vm1212, %v2696
    %2761 = vst.msk [vmem:[#allocation3 + $0x70] sm:$0xf] %vm1212, %v2697
    %2762 = vst.msk [vmem:[#allocation3 + $0x7c] sm:$0xf] %vm1212, %v2698
    %2763 = vst.msk [vmem:[#allocation3 + $0x88] sm:$0xf] %vm1212, %v2699
    %2764 = vst.msk [vmem:[#allocation3 + $0x94] sm:$0xf] %vm1212, %v2700
    %2765 = vst.msk [vmem:[#allocation3 + $0xa0] sm:$0xf] %vm1212, %v2701
    %2766 = vst.msk [vmem:[#allocation3 + $0xac] sm:$0xf] %vm1212, %v2702
    %2767 = vst.msk [vmem:[#allocation3 + $0xb8] sm:$0xf] %vm1212, %v2703
    %2768 = vst.msk [vmem:[#allocation3 + $0xc4] sm:$0xf] %vm1212, %v2704
    %2769 = vst.msk [vmem:[#allocation3 + $0xd0] sm:$0xf] %vm1212, %v2705
    %2770 = vst.msk [vmem:[#allocation3 + $0xdc] sm:$0xf] %vm1212, %v2706
    %2771 = vst.msk [vmem:[#allocation3 + $0xe8] sm:$0xf] %vm1212, %v2707
    %2772 = vst.msk [vmem:[#allocation3 + $0xf4] sm:$0xf] %vm1212, %v2708
    %2773 = vst.msk [vmem:[#allocation3 + $0x100] sm:$0xf] %vm1212, %v2709
    %2774 = vst.msk [vmem:[#allocation3 + $0x10c] sm:$0xf] %vm1212, %v2710
    %2775 = vst.msk [vmem:[#allocation3 + $0x118] sm:$0xf] %vm1212, %v2711
    %2776 = vst.msk [vmem:[#allocation3 + $0x124] sm:$0xf] %vm1212, %v2712
    %2777 = vst.msk [vmem:[#allocation3 + $0x130] sm:$0xf] %vm1212, %v2713
    %2778 = vst.msk [vmem:[#allocation3 + $0x13c] sm:$0xf] %vm1212, %v2714
    %2779 = vst.msk [vmem:[#allocation3 + $0x148] sm:$0xf] %vm1212, %v2715
    %2780 = vst.msk [vmem:[#allocation3 + $0x154] sm:$0xf] %vm1212, %v2716
    %2781 = vst.msk [vmem:[#allocation3 + $0x160] sm:$0xf] %vm1212, %v2717
    %2782 = vst.msk [vmem:[#allocation3 + $0x16c] sm:$0xf] %vm1212, %v2718
    %2783 = vst.msk [vmem:[#allocation3 + $0x178] sm:$0xf] %vm1212, %v2719
    %2784 = vst.msk [vmem:[#allocation3 + $0x184] sm:$0xf] %vm1212, %v2720
    %2785 = vst.msk [vmem:[#allocation3 + $0x190] sm:$0xf] %vm1212, %v2721
    %2786 = vst.msk [vmem:[#allocation3 + $0x19c] sm:$0xf] %vm1212, %v2722
    %2787 = vst.msk [vmem:[#allocation3 + $0x1a8] sm:$0xf] %vm1212, %v2723
    %2788 = vst.msk [vmem:[#allocation3 + $0x1b4] sm:$0xf] %vm1212, %v2724
    %2789 = vst.msk [vmem:[#allocation3 + $0x1c0] sm:$0xf] %vm1212, %v2725
    %2790 = vst.msk [vmem:[#allocation3 + $0x1cc] sm:$0xf] %vm1212, %v2726
    %2791 = vst.msk [vmem:[#allocation3 + $0x1d8] sm:$0xf] %vm1212, %v2727
    %2792 = vst.msk [vmem:[#allocation3 + $0x1e4] sm:$0xf] %vm1212, %v2728
    %2793 = vst.msk [vmem:[#allocation3 + $0x1f0] sm:$0xf] %vm1212, %v2729
    %2794 = vst.msk [vmem:[#allocation3 + $0x1fc] sm:$0xf] %vm1212, %v2730
    %2795 = vst.msk [vmem:[#allocation3 + $0x208] sm:$0xf] %vm1212, %v2731
    %2796 = vst.msk [vmem:[#allocation3 + $0x214] sm:$0xf] %vm1212, %v2732
    %2797 = vst.msk [vmem:[#allocation3 + $0x220] sm:$0xf] %vm1212, %v2733
    %2798 = vst.msk [vmem:[#allocation3 + $0x22c] sm:$0xf] %vm1212, %v2734
    %2799 = vst.msk [vmem:[#allocation3 + $0x238] sm:$0xf] %vm1212, %v2735
    %2800 = vst.msk [vmem:[#allocation3 + $0x244] sm:$0xf] %vm1212, %v2736
    %2801 = vst.msk [vmem:[#allocation3 + $0x250] sm:$0xf] %vm1212, %v2737
    %2802 = vst.msk [vmem:[#allocation3 + $0x25c] sm:$0xf] %vm1212, %v2738
    %2803 = vst.msk [vmem:[#allocation3 + $0x268] sm:$0xf] %vm1212, %v2739
    %2804 = vst.msk [vmem:[#allocation3 + $0x274] sm:$0xf] %vm1212, %v2740
    %2805 = vst.msk [vmem:[#allocation3 + $0x280] sm:$0xf] %vm1212, %v2741
    %2806 = vst.msk [vmem:[#allocation3 + $0x28c] sm:$0xf] %vm1212, %v2742
    %2807 = vst.msk [vmem:[#allocation3 + $0x298] sm:$0xf] %vm1212, %v2743
    %2808 = vst.msk [vmem:[#allocation3 + $0x2a4] sm:$0xf] %vm1212, %v2744
    %2809 = vst.msk [vmem:[#allocation3 + $0x2b0] sm:$0xf] %vm1212, %v2745
    %2810 = vst.msk [vmem:[#allocation3 + $0x2bc] sm:$0xf] %vm1212, %v2746
    %2811 = vst.msk [vmem:[#allocation3 + $0x2c8] sm:$0xf] %vm1212, %v2747
    %2812 = vst.msk [vmem:[#allocation3 + $0x2d4] sm:$0xf] %vm1212, %v2748
    %2813 = vst.msk [vmem:[#allocation3 + $0x2e0] sm:$0xf] %vm1212, %v2749
    %2814 = vst.msk [vmem:[#allocation3 + $0x2ec] sm:$0xf] %vm1212, %v2750
    %2815 = vst.msk [vmem:[#allocation3 + $0x2f8] sm:$0xf] %vm1212, %v2751
    %v2816 = vld [vmem:[%s1019 + $0x2] sm:$0xff]
    %v2817 = vld [vmem:[%s1019 + $0xa] sm:$0xff]
    %v2818 = vld [vmem:[%s1019 + $0x1a] sm:$0xff]
    %v2819 = vld [vmem:[%s1019 + $0x22] sm:$0xff]
    %v2820 = vld [vmem:[%s1019 + $0x32] sm:$0xff]
    %v2821 = vld [vmem:[%s1019 + $0x3a] sm:$0xff]
    %v2822 = vld [vmem:[%s1019 + $0x4a] sm:$0xff]
    %v2823 = vld [vmem:[%s1019 + $0x52] sm:$0xff]
    %v2824 = vld [vmem:[%s1019 + $0x62] sm:$0xff]
    %v2825 = vld [vmem:[%s1019 + $0x6a] sm:$0xff]
    %v2826 = vld [vmem:[%s1019 + $0x7a] sm:$0xff]
    %v2827 = vld [vmem:[%s1019 + $0x82] sm:$0xff]
    %v2828 = vld [vmem:[%s1019 + $0x92] sm:$0xff]
    %v2829 = vld [vmem:[%s1019 + $0x9a] sm:$0xff]
    %v2830 = vld [vmem:[%s1019 + $0xaa] sm:$0xff]
    %v2831 = vld [vmem:[%s1019 + $0xb2] sm:$0xff]
    %v2832 = vld [vmem:[%s1019 + $0xc2] sm:$0xff]
    %v2833 = vld [vmem:[%s1019 + $0xca] sm:$0xff]
    %v2834 = vld [vmem:[%s1019 + $0xda] sm:$0xff]
    %v2835 = vld [vmem:[%s1019 + $0xe2] sm:$0xff]
    %v2836 = vld [vmem:[%s1019 + $0xf2] sm:$0xff]
    %v2837 = vld [vmem:[%s1019 + $0xfa] sm:$0xff]
    %v2838 = vld [vmem:[%s1019 + $0x10a] sm:$0xff]
    %v2839 = vld [vmem:[%s1019 + $0x112] sm:$0xff]
    %v2840 = vld [vmem:[%s1019 + $0x122] sm:$0xff]
    %v2841 = vld [vmem:[%s1019 + $0x12a] sm:$0xff]
    %v2842 = vld [vmem:[%s1019 + $0x13a] sm:$0xff]
    %v2843 = vld [vmem:[%s1019 + $0x142] sm:$0xff]
    %v2844 = vld [vmem:[%s1019 + $0x152] sm:$0xff]
    %v2845 = vld [vmem:[%s1019 + $0x15a] sm:$0xff]
    %v2846 = vld [vmem:[%s1019 + $0x16a] sm:$0xff]
    %v2847 = vld [vmem:[%s1019 + $0x172] sm:$0xff]
    %v2848 = vld [vmem:[%s1019 + $0x1b2] sm:$0xff]
    %v2849 = vld [vmem:[%s1019 + $0x1ba] sm:$0xff]
    %v2850 = vld [vmem:[%s1019 + $0x1ca] sm:$0xff]
    %v2851 = vld [vmem:[%s1019 + $0x1d2] sm:$0xff]
    %v2852 = vld [vmem:[%s1019 + $0x1e2] sm:$0xff]
    %v2853 = vld [vmem:[%s1019 + $0x1ea] sm:$0xff]
    %v2854 = vld [vmem:[%s1019 + $0x1fa] sm:$0xff]
    %v2855 = vld [vmem:[%s1019 + $0x202] sm:$0xff]
    %v2856 = vld [vmem:[%s1019 + $0x212] sm:$0xff]
    %v2857 = vld [vmem:[%s1019 + $0x21a] sm:$0xff]
    %v2858 = vld [vmem:[%s1019 + $0x22a] sm:$0xff]
    %v2859 = vld [vmem:[%s1019 + $0x232] sm:$0xff]
    %v2860 = vld [vmem:[%s1019 + $0x242] sm:$0xff]
    %v2861 = vld [vmem:[%s1019 + $0x24a] sm:$0xff]
    %v2862 = vld [vmem:[%s1019 + $0x25a] sm:$0xff]
    %v2863 = vld [vmem:[%s1019 + $0x262] sm:$0xff]
    %v2864 = vld [vmem:[%s1019 + $0x272] sm:$0xff]
    %v2865 = vld [vmem:[%s1019 + $0x27a] sm:$0xff]
    %v2866 = vld [vmem:[%s1019 + $0x28a] sm:$0xff]
    %v2867 = vld [vmem:[%s1019 + $0x292] sm:$0xff]
    %v2868 = vld [vmem:[%s1019 + $0x2a2] sm:$0xff]
    %v2869 = vld [vmem:[%s1019 + $0x2aa] sm:$0xff]
    %v2870 = vld [vmem:[%s1019 + $0x2ba] sm:$0xff]
    %v2871 = vld [vmem:[%s1019 + $0x2c2] sm:$0xff]
    %v2872 = vld [vmem:[%s1019 + $0x2d2] sm:$0xff]
    %v2873 = vld [vmem:[%s1019 + $0x2da] sm:$0xff]
    %v2874 = vld [vmem:[%s1019 + $0x2ea] sm:$0xff]
    %v2875 = vld [vmem:[%s1019 + $0x2f2] sm:$0xff]
    %v2876 = vld [vmem:[%s1019 + $0x302] sm:$0xff]
    %v2877 = vld [vmem:[%s1019 + $0x30a] sm:$0xff]
    %v2878 = vld [vmem:[%s1019 + $0x31a] sm:$0xff]
    %v2879 = vld [vmem:[%s1019 + $0x322] sm:$0xff]
    %v2880 = vpack.c.bf16 %v2816, %v2816
    %v2881 = vpack.c.bf16 %v2817, %v2817
    %v2882 = vpack.c.bf16 %v2818, %v2818
    %v2883 = vpack.c.bf16 %v2819, %v2819
    %v2884 = vpack.c.bf16 %v2820, %v2820
    %v2885 = vpack.c.bf16 %v2821, %v2821
    %v2886 = vpack.c.bf16 %v2822, %v2822
    %v2887 = vpack.c.bf16 %v2823, %v2823
    %v2888 = vpack.c.bf16 %v2824, %v2824
    %v2889 = vpack.c.bf16 %v2825, %v2825
    %v2890 = vpack.c.bf16 %v2826, %v2826
    %v2891 = vpack.c.bf16 %v2827, %v2827
    %v2892 = vpack.c.bf16 %v2828, %v2828
    %v2893 = vpack.c.bf16 %v2829, %v2829
    %v2894 = vpack.c.bf16 %v2830, %v2830
    %v2895 = vpack.c.bf16 %v2831, %v2831
    %v2896 = vpack.c.bf16 %v2832, %v2832
    %v2897 = vpack.c.bf16 %v2833, %v2833
    %v2898 = vpack.c.bf16 %v2834, %v2834
    %v2899 = vpack.c.bf16 %v2835, %v2835
    %v2900 = vpack.c.bf16 %v2836, %v2836
    %v2901 = vpack.c.bf16 %v2837, %v2837
    %v2902 = vpack.c.bf16 %v2838, %v2838
    %v2903 = vpack.c.bf16 %v2839, %v2839
    %v2904 = vpack.c.bf16 %v2840, %v2840
    %v2905 = vpack.c.bf16 %v2841, %v2841
    %v2906 = vpack.c.bf16 %v2842, %v2842
    %v2907 = vpack.c.bf16 %v2843, %v2843
    %v2908 = vpack.c.bf16 %v2844, %v2844
    %v2909 = vpack.c.bf16 %v2845, %v2845
    %v2910 = vpack.c.bf16 %v2846, %v2846
    %v2911 = vpack.c.bf16 %v2847, %v2847
    %v2912 = vpack.c.bf16 %v2848, %v2848
    %v2913 = vpack.c.bf16 %v2849, %v2849
    %v2914 = vpack.c.bf16 %v2850, %v2850
    %v2915 = vpack.c.bf16 %v2851, %v2851
    %v2916 = vpack.c.bf16 %v2852, %v2852
    %v2917 = vpack.c.bf16 %v2853, %v2853
    %v2918 = vpack.c.bf16 %v2854, %v2854
    %v2919 = vpack.c.bf16 %v2855, %v2855
    %v2920 = vpack.c.bf16 %v2856, %v2856
    %v2921 = vpack.c.bf16 %v2857, %v2857
    %v2922 = vpack.c.bf16 %v2858, %v2858
    %v2923 = vpack.c.bf16 %v2859, %v2859
    %v2924 = vpack.c.bf16 %v2860, %v2860
    %v2925 = vpack.c.bf16 %v2861, %v2861
    %v2926 = vpack.c.bf16 %v2862, %v2862
    %v2927 = vpack.c.bf16 %v2863, %v2863
    %v2928 = vpack.c.bf16 %v2864, %v2864
    %v2929 = vpack.c.bf16 %v2865, %v2865
    %v2930 = vpack.c.bf16 %v2866, %v2866
    %v2931 = vpack.c.bf16 %v2867, %v2867
    %v2932 = vpack.c.bf16 %v2868, %v2868
    %v2933 = vpack.c.bf16 %v2869, %v2869
    %v2934 = vpack.c.bf16 %v2870, %v2870
    %v2935 = vpack.c.bf16 %v2871, %v2871
    %v2936 = vpack.c.bf16 %v2872, %v2872
    %v2937 = vpack.c.bf16 %v2873, %v2873
    %v2938 = vpack.c.bf16 %v2874, %v2874
    %v2939 = vpack.c.bf16 %v2875, %v2875
    %v2940 = vpack.c.bf16 %v2876, %v2876
    %v2941 = vpack.c.bf16 %v2877, %v2877
    %v2942 = vpack.c.bf16 %v2878, %v2878
    %v2943 = vpack.c.bf16 %v2879, %v2879
    %3008 = vrot.lane.b32.xlu0 %v2880, 32
    %v3009 = vpop.permute.xlu0 %3008
    %3010 = vrot.lane.b32.xlu0 %v2881, 32
    %v3011 = vpop.permute.xlu0 %3010
    %3012 = vrot.lane.b32.xlu0 %v2882, 32
    %v3013 = vpop.permute.xlu0 %3012
    %3014 = vrot.lane.b32.xlu0 %v2883, 32
    %v3015 = vpop.permute.xlu0 %3014
    %3016 = vrot.lane.b32.xlu0 %v2884, 32
    %v3017 = vpop.permute.xlu0 %3016
    %3018 = vrot.lane.b32.xlu0 %v2885, 32
    %v3019 = vpop.permute.xlu0 %3018
    %3020 = vrot.lane.b32.xlu0 %v2886, 32
    %v3021 = vpop.permute.xlu0 %3020
    %3022 = vrot.lane.b32.xlu0 %v2887, 32
    %v3023 = vpop.permute.xlu0 %3022
    %3024 = vrot.lane.b32.xlu0 %v2888, 32
    %v3025 = vpop.permute.xlu0 %3024
    %3026 = vrot.lane.b32.xlu0 %v2889, 32
    %v3027 = vpop.permute.xlu0 %3026
    %3028 = vrot.lane.b32.xlu0 %v2890, 32
    %v3029 = vpop.permute.xlu0 %3028
    %3030 = vrot.lane.b32.xlu0 %v2891, 32
    %v3031 = vpop.permute.xlu0 %3030
    %3032 = vrot.lane.b32.xlu0 %v2892, 32
    %v3033 = vpop.permute.xlu0 %3032
    %3034 = vrot.lane.b32.xlu0 %v2893, 32
    %v3035 = vpop.permute.xlu0 %3034
    %3036 = vrot.lane.b32.xlu0 %v2894, 32
    %v3037 = vpop.permute.xlu0 %3036
    %3038 = vrot.lane.b32.xlu0 %v2895, 32
    %v3039 = vpop.permute.xlu0 %3038
    %3040 = vrot.lane.b32.xlu0 %v2896, 32
    %v3041 = vpop.permute.xlu0 %3040
    %3042 = vrot.lane.b32.xlu0 %v2897, 32
    %v3043 = vpop.permute.xlu0 %3042
    %3044 = vrot.lane.b32.xlu0 %v2898, 32
    %v3045 = vpop.permute.xlu0 %3044
    %3046 = vrot.lane.b32.xlu0 %v2899, 32
    %v3047 = vpop.permute.xlu0 %3046
    %3048 = vrot.lane.b32.xlu0 %v2900, 32
    %v3049 = vpop.permute.xlu0 %3048
    %3050 = vrot.lane.b32.xlu0 %v2901, 32
    %v3051 = vpop.permute.xlu0 %3050
    %3052 = vrot.lane.b32.xlu0 %v2902, 32
    %v3053 = vpop.permute.xlu0 %3052
    %3054 = vrot.lane.b32.xlu0 %v2903, 32
    %v3055 = vpop.permute.xlu0 %3054
    %3056 = vrot.lane.b32.xlu0 %v2904, 32
    %v3057 = vpop.permute.xlu0 %3056
    %3058 = vrot.lane.b32.xlu0 %v2905, 32
    %v3059 = vpop.permute.xlu0 %3058
    %3060 = vrot.lane.b32.xlu0 %v2906, 32
    %v3061 = vpop.permute.xlu0 %3060
    %3062 = vrot.lane.b32.xlu0 %v2907, 32
    %v3063 = vpop.permute.xlu0 %3062
    %3064 = vrot.lane.b32.xlu0 %v2908, 32
    %v3065 = vpop.permute.xlu0 %3064
    %3066 = vrot.lane.b32.xlu0 %v2909, 32
    %v3067 = vpop.permute.xlu0 %3066
    %3068 = vrot.lane.b32.xlu0 %v2910, 32
    %v3069 = vpop.permute.xlu0 %3068
    %3070 = vrot.lane.b32.xlu0 %v2911, 32
    %v3071 = vpop.permute.xlu0 %3070
    %3072 = vrot.lane.b32.xlu0 %v2912, 32
    %v3073 = vpop.permute.xlu0 %3072
    %3074 = vrot.lane.b32.xlu0 %v2913, 32
    %v3075 = vpop.permute.xlu0 %3074
    %3076 = vrot.lane.b32.xlu0 %v2914, 32
    %v3077 = vpop.permute.xlu0 %3076
    %3078 = vrot.lane.b32.xlu0 %v2915, 32
    %v3079 = vpop.permute.xlu0 %3078
    %3080 = vrot.lane.b32.xlu0 %v2916, 32
    %v3081 = vpop.permute.xlu0 %3080
    %3082 = vrot.lane.b32.xlu0 %v2917, 32
    %v3083 = vpop.permute.xlu0 %3082
    %3084 = vrot.lane.b32.xlu0 %v2918, 32
    %v3085 = vpop.permute.xlu0 %3084
    %3086 = vrot.lane.b32.xlu0 %v2919, 32
    %v3087 = vpop.permute.xlu0 %3086
    %3088 = vrot.lane.b32.xlu0 %v2920, 32
    %v3089 = vpop.permute.xlu0 %3088
    %3090 = vrot.lane.b32.xlu0 %v2921, 32
    %v3091 = vpop.permute.xlu0 %3090
    %3092 = vrot.lane.b32.xlu0 %v2922, 32
    %v3093 = vpop.permute.xlu0 %3092
    %3094 = vrot.lane.b32.xlu0 %v2923, 32
    %v3095 = vpop.permute.xlu0 %3094
    %3096 = vrot.lane.b32.xlu0 %v2924, 32
    %v3097 = vpop.permute.xlu0 %3096
    %3098 = vrot.lane.b32.xlu0 %v2925, 32
    %v3099 = vpop.permute.xlu0 %3098
    %3100 = vrot.lane.b32.xlu0 %v2926, 32
    %v3101 = vpop.permute.xlu0 %3100
    %3102 = vrot.lane.b32.xlu0 %v2927, 32
    %v3103 = vpop.permute.xlu0 %3102
    %3104 = vrot.lane.b32.xlu0 %v2928, 32
    %v3105 = vpop.permute.xlu0 %3104
    %3106 = vrot.lane.b32.xlu0 %v2929, 32
    %v3107 = vpop.permute.xlu0 %3106
    %3108 = vrot.lane.b32.xlu0 %v2930, 32
    %v3109 = vpop.permute.xlu0 %3108
    %3110 = vrot.lane.b32.xlu0 %v2931, 32
    %v3111 = vpop.permute.xlu0 %3110
    %3112 = vrot.lane.b32.xlu0 %v2932, 32
    %v3113 = vpop.permute.xlu0 %3112
    %3114 = vrot.lane.b32.xlu0 %v2933, 32
    %v3115 = vpop.permute.xlu0 %3114
    %3116 = vrot.lane.b32.xlu0 %v2934, 32
    %v3117 = vpop.permute.xlu0 %3116
    %3118 = vrot.lane.b32.xlu0 %v2935, 32
    %v3119 = vpop.permute.xlu0 %3118
    %3120 = vrot.lane.b32.xlu0 %v2936, 32
    %v3121 = vpop.permute.xlu0 %3120
    %3122 = vrot.lane.b32.xlu0 %v2937, 32
    %v3123 = vpop.permute.xlu0 %3122
    %3124 = vrot.lane.b32.xlu0 %v2938, 32
    %v3125 = vpop.permute.xlu0 %3124
    %3126 = vrot.lane.b32.xlu0 %v2939, 32
    %v3127 = vpop.permute.xlu0 %3126
    %3128 = vrot.lane.b32.xlu0 %v2940, 32
    %v3129 = vpop.permute.xlu0 %3128
    %3130 = vrot.lane.b32.xlu0 %v2941, 32
    %v3131 = vpop.permute.xlu0 %3130
    %3132 = vrot.lane.b32.xlu0 %v2942, 32
    %v3133 = vpop.permute.xlu0 %3132
    %3134 = vrot.lane.b32.xlu0 %v2943, 32
    %v3135 = vpop.permute.xlu0 %3134
    %3200 = vst.msk [vmem:[#allocation3 + $0x4] sm:$0xf] %vm1661, %v3009
    %3201 = vst.msk [vmem:[#allocation3 + $0x10] sm:$0xf] %vm1661, %v3011
    %3202 = vst.msk [vmem:[#allocation3 + $0x1c] sm:$0xf] %vm1661, %v3013
    %3203 = vst.msk [vmem:[#allocation3 + $0x28] sm:$0xf] %vm1661, %v3015
    %3204 = vst.msk [vmem:[#allocation3 + $0x34] sm:$0xf] %vm1661, %v3017
    %3205 = vst.msk [vmem:[#allocation3 + $0x40] sm:$0xf] %vm1661, %v3019
    %3206 = vst.msk [vmem:[#allocation3 + $0x4c] sm:$0xf] %vm1661, %v3021
    %3207 = vst.msk [vmem:[#allocation3 + $0x58] sm:$0xf] %vm1661, %v3023
    %3208 = vst.msk [vmem:[#allocation3 + $0x64] sm:$0xf] %vm1661, %v3025
    %3209 = vst.msk [vmem:[#allocation3 + $0x70] sm:$0xf] %vm1661, %v3027
    %3210 = vst.msk [vmem:[#allocation3 + $0x7c] sm:$0xf] %vm1661, %v3029
    %3211 = vst.msk [vmem:[#allocation3 + $0x88] sm:$0xf] %vm1661, %v3031
    %3212 = vst.msk [vmem:[#allocation3 + $0x94] sm:$0xf] %vm1661, %v3033
    %3213 = vst.msk [vmem:[#allocation3 + $0xa0] sm:$0xf] %vm1661, %v3035
    %3214 = vst.msk [vmem:[#allocation3 + $0xac] sm:$0xf] %vm1661, %v3037
    %3215 = vst.msk [vmem:[#allocation3 + $0xb8] sm:$0xf] %vm1661, %v3039
    %3216 = vst.msk [vmem:[#allocation3 + $0xc4] sm:$0xf] %vm1661, %v3041
    %3217 = vst.msk [vmem:[#allocation3 + $0xd0] sm:$0xf] %vm1661, %v3043
    %3218 = vst.msk [vmem:[#allocation3 + $0xdc] sm:$0xf] %vm1661, %v3045
    %3219 = vst.msk [vmem:[#allocation3 + $0xe8] sm:$0xf] %vm1661, %v3047
    %3220 = vst.msk [vmem:[#allocation3 + $0xf4] sm:$0xf] %vm1661, %v3049
    %3221 = vst.msk [vmem:[#allocation3 + $0x100] sm:$0xf] %vm1661, %v3051
    %3222 = vst.msk [vmem:[#allocation3 + $0x10c] sm:$0xf] %vm1661, %v3053
    %3223 = vst.msk [vmem:[#allocation3 + $0x118] sm:$0xf] %vm1661, %v3055
    %3224 = vst.msk [vmem:[#allocation3 + $0x124] sm:$0xf] %vm1661, %v3057
    %3225 = vst.msk [vmem:[#allocation3 + $0x130] sm:$0xf] %vm1661, %v3059
    %3226 = vst.msk [vmem:[#allocation3 + $0x13c] sm:$0xf] %vm1661, %v3061
    %3227 = vst.msk [vmem:[#allocation3 + $0x148] sm:$0xf] %vm1661, %v3063
    %3228 = vst.msk [vmem:[#allocation3 + $0x154] sm:$0xf] %vm1661, %v3065
    %3229 = vst.msk [vmem:[#allocation3 + $0x160] sm:$0xf] %vm1661, %v3067
    %3230 = vst.msk [vmem:[#allocation3 + $0x16c] sm:$0xf] %vm1661, %v3069
    %3231 = vst.msk [vmem:[#allocation3 + $0x178] sm:$0xf] %vm1661, %v3071
    %3232 = vst.msk [vmem:[#allocation3 + $0x184] sm:$0xf] %vm1661, %v3073
    %3233 = vst.msk [vmem:[#allocation3 + $0x190] sm:$0xf] %vm1661, %v3075
    %3234 = vst.msk [vmem:[#allocation3 + $0x19c] sm:$0xf] %vm1661, %v3077
    %3235 = vst.msk [vmem:[#allocation3 + $0x1a8] sm:$0xf] %vm1661, %v3079
    %3236 = vst.msk [vmem:[#allocation3 + $0x1b4] sm:$0xf] %vm1661, %v3081
    %3237 = vst.msk [vmem:[#allocation3 + $0x1c0] sm:$0xf] %vm1661, %v3083
    %3238 = vst.msk [vmem:[#allocation3 + $0x1cc] sm:$0xf] %vm1661, %v3085
    %3239 = vst.msk [vmem:[#allocation3 + $0x1d8] sm:$0xf] %vm1661, %v3087
    %3240 = vst.msk [vmem:[#allocation3 + $0x1e4] sm:$0xf] %vm1661, %v3089
    %3241 = vst.msk [vmem:[#allocation3 + $0x1f0] sm:$0xf] %vm1661, %v3091
    %3242 = vst.msk [vmem:[#allocation3 + $0x1fc] sm:$0xf] %vm1661, %v3093
    %3243 = vst.msk [vmem:[#allocation3 + $0x208] sm:$0xf] %vm1661, %v3095
    %3244 = vst.msk [vmem:[#allocation3 + $0x214] sm:$0xf] %vm1661, %v3097
    %3245 = vst.msk [vmem:[#allocation3 + $0x220] sm:$0xf] %vm1661, %v3099
    %3246 = vst.msk [vmem:[#allocation3 + $0x22c] sm:$0xf] %vm1661, %v3101
    %3247 = vst.msk [vmem:[#allocation3 + $0x238] sm:$0xf] %vm1661, %v3103
    %3248 = vst.msk [vmem:[#allocation3 + $0x244] sm:$0xf] %vm1661, %v3105
    %3249 = vst.msk [vmem:[#allocation3 + $0x250] sm:$0xf] %vm1661, %v3107
    %3250 = vst.msk [vmem:[#allocation3 + $0x25c] sm:$0xf] %vm1661, %v3109
    %3251 = vst.msk [vmem:[#allocation3 + $0x268] sm:$0xf] %vm1661, %v3111
    %3252 = vst.msk [vmem:[#allocation3 + $0x274] sm:$0xf] %vm1661, %v3113
    %3253 = vst.msk [vmem:[#allocation3 + $0x280] sm:$0xf] %vm1661, %v3115
    %3254 = vst.msk [vmem:[#allocation3 + $0x28c] sm:$0xf] %vm1661, %v3117
    %3255 = vst.msk [vmem:[#allocation3 + $0x298] sm:$0xf] %vm1661, %v3119
    %3256 = vst.msk [vmem:[#allocation3 + $0x2a4] sm:$0xf] %vm1661, %v3121
    %3257 = vst.msk [vmem:[#allocation3 + $0x2b0] sm:$0xf] %vm1661, %v3123
    %3258 = vst.msk [vmem:[#allocation3 + $0x2bc] sm:$0xf] %vm1661, %v3125
    %3259 = vst.msk [vmem:[#allocation3 + $0x2c8] sm:$0xf] %vm1661, %v3127
    %3260 = vst.msk [vmem:[#allocation3 + $0x2d4] sm:$0xf] %vm1661, %v3129
    %3261 = vst.msk [vmem:[#allocation3 + $0x2e0] sm:$0xf] %vm1661, %v3131
    %3262 = vst.msk [vmem:[#allocation3 + $0x2ec] sm:$0xf] %vm1661, %v3133
    %3263 = vst.msk [vmem:[#allocation3 + $0x2f8] sm:$0xf] %vm1661, %v3135
    %s3264 = scalar_lea.vmem [#allocation2], 48
    %v3265 = vld [vmem:[%s3264] sm:$0xff]
    %v3266 = vld [vmem:[%s3264 + $0x8] sm:$0xff]
    %v3267 = vld [vmem:[%s3264 + $0x18] sm:$0xff]
    %v3268 = vld [vmem:[%s3264 + $0x20] sm:$0xff]
    %v3269 = vld [vmem:[%s3264 + $0x30] sm:$0xff]
    %v3270 = vld [vmem:[%s3264 + $0x38] sm:$0xff]
    %v3271 = vld [vmem:[%s3264 + $0x48] sm:$0xff]
    %v3272 = vld [vmem:[%s3264 + $0x50] sm:$0xff]
    %v3273 = vld [vmem:[%s3264 + $0x60] sm:$0xff]
    %v3274 = vld [vmem:[%s3264 + $0x68] sm:$0xff]
    %v3275 = vld [vmem:[%s3264 + $0x78] sm:$0xff]
    %v3276 = vld [vmem:[%s3264 + $0x80] sm:$0xff]
    %v3277 = vld [vmem:[%s3264 + $0x90] sm:$0xff]
    %v3278 = vld [vmem:[%s3264 + $0x98] sm:$0xff]
    %v3279 = vld [vmem:[%s3264 + $0xa8] sm:$0xff]
    %v3280 = vld [vmem:[%s3264 + $0xb0] sm:$0xff]
    %v3281 = vld [vmem:[%s3264 + $0xc0] sm:$0xff]
    %v3282 = vld [vmem:[%s3264 + $0xc8] sm:$0xff]
    %v3283 = vld [vmem:[%s3264 + $0xd8] sm:$0xff]
    %v3284 = vld [vmem:[%s3264 + $0xe0] sm:$0xff]
    %v3285 = vld [vmem:[%s3264 + $0xf0] sm:$0xff]
    %v3286 = vld [vmem:[%s3264 + $0xf8] sm:$0xff]
    %v3287 = vld [vmem:[%s3264 + $0x108] sm:$0xff]
    %v3288 = vld [vmem:[%s3264 + $0x110] sm:$0xff]
    %v3289 = vld [vmem:[%s3264 + $0x120] sm:$0xff]
    %v3290 = vld [vmem:[%s3264 + $0x128] sm:$0xff]
    %v3291 = vld [vmem:[%s3264 + $0x138] sm:$0xff]
    %v3292 = vld [vmem:[%s3264 + $0x140] sm:$0xff]
    %v3293 = vld [vmem:[%s3264 + $0x150] sm:$0xff]
    %v3294 = vld [vmem:[%s3264 + $0x158] sm:$0xff]
    %v3295 = vld [vmem:[%s3264 + $0x168] sm:$0xff]
    %v3296 = vld [vmem:[%s3264 + $0x170] sm:$0xff]
    %v3297 = vld [vmem:[%s3264 + $0x1b0] sm:$0xff]
    %v3298 = vld [vmem:[%s3264 + $0x1b8] sm:$0xff]
    %v3299 = vld [vmem:[%s3264 + $0x1c8] sm:$0xff]
    %v3300 = vld [vmem:[%s3264 + $0x1d0] sm:$0xff]
    %v3301 = vld [vmem:[%s3264 + $0x1e0] sm:$0xff]
    %v3302 = vld [vmem:[%s3264 + $0x1e8] sm:$0xff]
    %v3303 = vld [vmem:[%s3264 + $0x1f8] sm:$0xff]
    %v3304 = vld [vmem:[%s3264 + $0x200] sm:$0xff]
    %v3305 = vld [vmem:[%s3264 + $0x210] sm:$0xff]
    %v3306 = vld [vmem:[%s3264 + $0x218] sm:$0xff]
    %v3307 = vld [vmem:[%s3264 + $0x228] sm:$0xff]
    %v3308 = vld [vmem:[%s3264 + $0x230] sm:$0xff]
    %v3309 = vld [vmem:[%s3264 + $0x240] sm:$0xff]
    %v3310 = vld [vmem:[%s3264 + $0x248] sm:$0xff]
    %v3311 = vld [vmem:[%s3264 + $0x258] sm:$0xff]
    %v3312 = vld [vmem:[%s3264 + $0x260] sm:$0xff]
    %v3313 = vld [vmem:[%s3264 + $0x270] sm:$0xff]
    %v3314 = vld [vmem:[%s3264 + $0x278] sm:$0xff]
    %v3315 = vld [vmem:[%s3264 + $0x288] sm:$0xff]
    %v3316 = vld [vmem:[%s3264 + $0x290] sm:$0xff]
    %v3317 = vld [vmem:[%s3264 + $0x2a0] sm:$0xff]
    %v3318 = vld [vmem:[%s3264 + $0x2a8] sm:$0xff]
    %v3319 = vld [vmem:[%s3264 + $0x2b8] sm:$0xff]
    %v3320 = vld [vmem:[%s3264 + $0x2c0] sm:$0xff]
    %v3321 = vld [vmem:[%s3264 + $0x2d0] sm:$0xff]
    %v3322 = vld [vmem:[%s3264 + $0x2d8] sm:$0xff]
    %v3323 = vld [vmem:[%s3264 + $0x2e8] sm:$0xff]
    %v3324 = vld [vmem:[%s3264 + $0x2f0] sm:$0xff]
    %v3325 = vld [vmem:[%s3264 + $0x300] sm:$0xff]
    %v3326 = vld [vmem:[%s3264 + $0x308] sm:$0xff]
    %v3327 = vld [vmem:[%s3264 + $0x318] sm:$0xff]
    %v3328 = vld [vmem:[%s3264 + $0x320] sm:$0xff]
    %v3329 = vpack.c.bf16 %v3265, %v3265
    %v3330 = vpack.c.bf16 %v3266, %v3266
    %v3331 = vpack.c.bf16 %v3267, %v3267
    %v3332 = vpack.c.bf16 %v3268, %v3268
    %v3333 = vpack.c.bf16 %v3269, %v3269
    %v3334 = vpack.c.bf16 %v3270, %v3270
    %v3335 = vpack.c.bf16 %v3271, %v3271
    %v3336 = vpack.c.bf16 %v3272, %v3272
    %v3337 = vpack.c.bf16 %v3273, %v3273
    %v3338 = vpack.c.bf16 %v3274, %v3274
    %v3339 = vpack.c.bf16 %v3275, %v3275
    %v3340 = vpack.c.bf16 %v3276, %v3276
    %v3341 = vpack.c.bf16 %v3277, %v3277
    %v3342 = vpack.c.bf16 %v3278, %v3278
    %v3343 = vpack.c.bf16 %v3279, %v3279
    %v3344 = vpack.c.bf16 %v3280, %v3280
    %v3345 = vpack.c.bf16 %v3281, %v3281
    %v3346 = vpack.c.bf16 %v3282, %v3282
    %v3347 = vpack.c.bf16 %v3283, %v3283
    %v3348 = vpack.c.bf16 %v3284, %v3284
    %v3349 = vpack.c.bf16 %v3285, %v3285
    %v3350 = vpack.c.bf16 %v3286, %v3286
    %v3351 = vpack.c.bf16 %v3287, %v3287
    %v3352 = vpack.c.bf16 %v3288, %v3288
    %v3353 = vpack.c.bf16 %v3289, %v3289
    %v3354 = vpack.c.bf16 %v3290, %v3290
    %v3355 = vpack.c.bf16 %v3291, %v3291
    %v3356 = vpack.c.bf16 %v3292, %v3292
    %v3357 = vpack.c.bf16 %v3293, %v3293
    %v3358 = vpack.c.bf16 %v3294, %v3294
    %v3359 = vpack.c.bf16 %v3295, %v3295
    %v3360 = vpack.c.bf16 %v3296, %v3296
    %v3361 = vpack.c.bf16 %v3297, %v3297
    %v3362 = vpack.c.bf16 %v3298, %v3298
    %v3363 = vpack.c.bf16 %v3299, %v3299
    %v3364 = vpack.c.bf16 %v3300, %v3300
    %v3365 = vpack.c.bf16 %v3301, %v3301
    %v3366 = vpack.c.bf16 %v3302, %v3302
    %v3367 = vpack.c.bf16 %v3303, %v3303
    %v3368 = vpack.c.bf16 %v3304, %v3304
    %v3369 = vpack.c.bf16 %v3305, %v3305
    %v3370 = vpack.c.bf16 %v3306, %v3306
    %v3371 = vpack.c.bf16 %v3307, %v3307
    %v3372 = vpack.c.bf16 %v3308, %v3308
    %v3373 = vpack.c.bf16 %v3309, %v3309
    %v3374 = vpack.c.bf16 %v3310, %v3310
    %v3375 = vpack.c.bf16 %v3311, %v3311
    %v3376 = vpack.c.bf16 %v3312, %v3312
    %v3377 = vpack.c.bf16 %v3313, %v3313
    %v3378 = vpack.c.bf16 %v3314, %v3314
    %v3379 = vpack.c.bf16 %v3315, %v3315
    %v3380 = vpack.c.bf16 %v3316, %v3316
    %v3381 = vpack.c.bf16 %v3317, %v3317
    %v3382 = vpack.c.bf16 %v3318, %v3318
    %v3383 = vpack.c.bf16 %v3319, %v3319
    %v3384 = vpack.c.bf16 %v3320, %v3320
    %v3385 = vpack.c.bf16 %v3321, %v3321
    %v3386 = vpack.c.bf16 %v3322, %v3322
    %v3387 = vpack.c.bf16 %v3323, %v3323
    %v3388 = vpack.c.bf16 %v3324, %v3324
    %v3389 = vpack.c.bf16 %v3325, %v3325
    %v3390 = vpack.c.bf16 %v3326, %v3326
    %v3391 = vpack.c.bf16 %v3327, %v3327
    %v3392 = vpack.c.bf16 %v3328, %v3328
    %3457 = vrot.lane.b32.xlu0 %v3329, 64
    %v3458 = vpop.permute.xlu0 %3457
    %3459 = vrot.lane.b32.xlu0 %v3330, 64
    %v3460 = vpop.permute.xlu0 %3459
    %3461 = vrot.lane.b32.xlu0 %v3331, 64
    %v3462 = vpop.permute.xlu0 %3461
    %3463 = vrot.lane.b32.xlu0 %v3332, 64
    %v3464 = vpop.permute.xlu0 %3463
    %3465 = vrot.lane.b32.xlu0 %v3333, 64
    %v3466 = vpop.permute.xlu0 %3465
    %3467 = vrot.lane.b32.xlu0 %v3334, 64
    %v3468 = vpop.permute.xlu0 %3467
    %3469 = vrot.lane.b32.xlu0 %v3335, 64
    %v3470 = vpop.permute.xlu0 %3469
    %3471 = vrot.lane.b32.xlu0 %v3336, 64
    %v3472 = vpop.permute.xlu0 %3471
    %3473 = vrot.lane.b32.xlu0 %v3337, 64
    %v3474 = vpop.permute.xlu0 %3473
    %3475 = vrot.lane.b32.xlu0 %v3338, 64
    %v3476 = vpop.permute.xlu0 %3475
    %3477 = vrot.lane.b32.xlu0 %v3339, 64
    %v3478 = vpop.permute.xlu0 %3477
    %3479 = vrot.lane.b32.xlu0 %v3340, 64
    %v3480 = vpop.permute.xlu0 %3479
    %3481 = vrot.lane.b32.xlu0 %v3341, 64
    %v3482 = vpop.permute.xlu0 %3481
    %3483 = vrot.lane.b32.xlu0 %v3342, 64
    %v3484 = vpop.permute.xlu0 %3483
    %3485 = vrot.lane.b32.xlu0 %v3343, 64
    %v3486 = vpop.permute.xlu0 %3485
    %3487 = vrot.lane.b32.xlu0 %v3344, 64
    %v3488 = vpop.permute.xlu0 %3487
    %3489 = vrot.lane.b32.xlu0 %v3345, 64
    %v3490 = vpop.permute.xlu0 %3489
    %3491 = vrot.lane.b32.xlu0 %v3346, 64
    %v3492 = vpop.permute.xlu0 %3491
    %3493 = vrot.lane.b32.xlu0 %v3347, 64
    %v3494 = vpop.permute.xlu0 %3493
    %3495 = vrot.lane.b32.xlu0 %v3348, 64
    %v3496 = vpop.permute.xlu0 %3495
    %3497 = vrot.lane.b32.xlu0 %v3349, 64
    %v3498 = vpop.permute.xlu0 %3497
    %3499 = vrot.lane.b32.xlu0 %v3350, 64
    %v3500 = vpop.permute.xlu0 %3499
    %3501 = vrot.lane.b32.xlu0 %v3351, 64
    %v3502 = vpop.permute.xlu0 %3501
    %3503 = vrot.lane.b32.xlu0 %v3352, 64
    %v3504 = vpop.permute.xlu0 %3503
    %3505 = vrot.lane.b32.xlu0 %v3353, 64
    %v3506 = vpop.permute.xlu0 %3505
    %3507 = vrot.lane.b32.xlu0 %v3354, 64
    %v3508 = vpop.permute.xlu0 %3507
    %3509 = vrot.lane.b32.xlu0 %v3355, 64
    %v3510 = vpop.permute.xlu0 %3509
    %3511 = vrot.lane.b32.xlu0 %v3356, 64
    %v3512 = vpop.permute.xlu0 %3511
    %3513 = vrot.lane.b32.xlu0 %v3357, 64
    %v3514 = vpop.permute.xlu0 %3513
    %3515 = vrot.lane.b32.xlu0 %v3358, 64
    %v3516 = vpop.permute.xlu0 %3515
    %3517 = vrot.lane.b32.xlu0 %v3359, 64
    %v3518 = vpop.permute.xlu0 %3517
    %3519 = vrot.lane.b32.xlu0 %v3360, 64
    %v3520 = vpop.permute.xlu0 %3519
    %3521 = vrot.lane.b32.xlu0 %v3361, 64
    %v3522 = vpop.permute.xlu0 %3521
    %3523 = vrot.lane.b32.xlu0 %v3362, 64
    %v3524 = vpop.permute.xlu0 %3523
    %3525 = vrot.lane.b32.xlu0 %v3363, 64
    %v3526 = vpop.permute.xlu0 %3525
    %3527 = vrot.lane.b32.xlu0 %v3364, 64
    %v3528 = vpop.permute.xlu0 %3527
    %3529 = vrot.lane.b32.xlu0 %v3365, 64
    %v3530 = vpop.permute.xlu0 %3529
    %3531 = vrot.lane.b32.xlu0 %v3366, 64
    %v3532 = vpop.permute.xlu0 %3531
    %3533 = vrot.lane.b32.xlu0 %v3367, 64
    %v3534 = vpop.permute.xlu0 %3533
    %3535 = vrot.lane.b32.xlu0 %v3368, 64
    %v3536 = vpop.permute.xlu0 %3535
    %3537 = vrot.lane.b32.xlu0 %v3369, 64
    %v3538 = vpop.permute.xlu0 %3537
    %3539 = vrot.lane.b32.xlu0 %v3370, 64
    %v3540 = vpop.permute.xlu0 %3539
    %3541 = vrot.lane.b32.xlu0 %v3371, 64
    %v3542 = vpop.permute.xlu0 %3541
    %3543 = vrot.lane.b32.xlu0 %v3372, 64
    %v3544 = vpop.permute.xlu0 %3543
    %3545 = vrot.lane.b32.xlu0 %v3373, 64
    %v3546 = vpop.permute.xlu0 %3545
    %3547 = vrot.lane.b32.xlu0 %v3374, 64
    %v3548 = vpop.permute.xlu0 %3547
    %3549 = vrot.lane.b32.xlu0 %v3375, 64
    %v3550 = vpop.permute.xlu0 %3549
    %3551 = vrot.lane.b32.xlu0 %v3376, 64
    %v3552 = vpop.permute.xlu0 %3551
    %3553 = vrot.lane.b32.xlu0 %v3377, 64
    %v3554 = vpop.permute.xlu0 %3553
    %3555 = vrot.lane.b32.xlu0 %v3378, 64
    %v3556 = vpop.permute.xlu0 %3555
    %3557 = vrot.lane.b32.xlu0 %v3379, 64
    %v3558 = vpop.permute.xlu0 %3557
    %3559 = vrot.lane.b32.xlu0 %v3380, 64
    %v3560 = vpop.permute.xlu0 %3559
    %3561 = vrot.lane.b32.xlu0 %v3381, 64
    %v3562 = vpop.permute.xlu0 %3561
    %3563 = vrot.lane.b32.xlu0 %v3382, 64
    %v3564 = vpop.permute.xlu0 %3563
    %3565 = vrot.lane.b32.xlu0 %v3383, 64
    %v3566 = vpop.permute.xlu0 %3565
    %3567 = vrot.lane.b32.xlu0 %v3384, 64
    %v3568 = vpop.permute.xlu0 %3567
    %3569 = vrot.lane.b32.xlu0 %v3385, 64
    %v3570 = vpop.permute.xlu0 %3569
    %3571 = vrot.lane.b32.xlu0 %v3386, 64
    %v3572 = vpop.permute.xlu0 %3571
    %3573 = vrot.lane.b32.xlu0 %v3387, 64
    %v3574 = vpop.permute.xlu0 %3573
    %3575 = vrot.lane.b32.xlu0 %v3388, 64
    %v3576 = vpop.permute.xlu0 %3575
    %3577 = vrot.lane.b32.xlu0 %v3389, 64
    %v3578 = vpop.permute.xlu0 %3577
    %3579 = vrot.lane.b32.xlu0 %v3390, 64
    %v3580 = vpop.permute.xlu0 %3579
    %3581 = vrot.lane.b32.xlu0 %v3391, 64
    %v3582 = vpop.permute.xlu0 %3581
    %3583 = vrot.lane.b32.xlu0 %v3392, 64
    %v3584 = vpop.permute.xlu0 %3583
    %3649 = vst.msk [vmem:[#allocation3 + $0x4] sm:$0xf] %vm2110, %v3458
    %3650 = vst.msk [vmem:[#allocation3 + $0x10] sm:$0xf] %vm2110, %v3460
    %3651 = vst.msk [vmem:[#allocation3 + $0x1c] sm:$0xf] %vm2110, %v3462
    %3652 = vst.msk [vmem:[#allocation3 + $0x28] sm:$0xf] %vm2110, %v3464
    %3653 = vst.msk [vmem:[#allocation3 + $0x34] sm:$0xf] %vm2110, %v3466
    %3654 = vst.msk [vmem:[#allocation3 + $0x40] sm:$0xf] %vm2110, %v3468
    %3655 = vst.msk [vmem:[#allocation3 + $0x4c] sm:$0xf] %vm2110, %v3470
    %3656 = vst.msk [vmem:[#allocation3 + $0x58] sm:$0xf] %vm2110, %v3472
    %3657 = vst.msk [vmem:[#allocation3 + $0x64] sm:$0xf] %vm2110, %v3474
    %3658 = vst.msk [vmem:[#allocation3 + $0x70] sm:$0xf] %vm2110, %v3476
    %3659 = vst.msk [vmem:[#allocation3 + $0x7c] sm:$0xf] %vm2110, %v3478
    %3660 = vst.msk [vmem:[#allocation3 + $0x88] sm:$0xf] %vm2110, %v3480
    %3661 = vst.msk [vmem:[#allocation3 + $0x94] sm:$0xf] %vm2110, %v3482
    %3662 = vst.msk [vmem:[#allocation3 + $0xa0] sm:$0xf] %vm2110, %v3484
    %3663 = vst.msk [vmem:[#allocation3 + $0xac] sm:$0xf] %vm2110, %v3486
    %3664 = vst.msk [vmem:[#allocation3 + $0xb8] sm:$0xf] %vm2110, %v3488
    %3665 = vst.msk [vmem:[#allocation3 + $0xc4] sm:$0xf] %vm2110, %v3490
    %3666 = vst.msk [vmem:[#allocation3 + $0xd0] sm:$0xf] %vm2110, %v3492
    %3667 = vst.msk [vmem:[#allocation3 + $0xdc] sm:$0xf] %vm2110, %v3494
    %3668 = vst.msk [vmem:[#allocation3 + $0xe8] sm:$0xf] %vm2110, %v3496
    %3669 = vst.msk [vmem:[#allocation3 + $0xf4] sm:$0xf] %vm2110, %v3498
    %3670 = vst.msk [vmem:[#allocation3 + $0x100] sm:$0xf] %vm2110, %v3500
    %3671 = vst.msk [vmem:[#allocation3 + $0x10c] sm:$0xf] %vm2110, %v3502
    %3672 = vst.msk [vmem:[#allocation3 + $0x118] sm:$0xf] %vm2110, %v3504
    %3673 = vst.msk [vmem:[#allocation3 + $0x124] sm:$0xf] %vm2110, %v3506
    %3674 = vst.msk [vmem:[#allocation3 + $0x130] sm:$0xf] %vm2110, %v3508
    %3675 = vst.msk [vmem:[#allocation3 + $0x13c] sm:$0xf] %vm2110, %v3510
    %3676 = vst.msk [vmem:[#allocation3 + $0x148] sm:$0xf] %vm2110, %v3512
    %3677 = vst.msk [vmem:[#allocation3 + $0x154] sm:$0xf] %vm2110, %v3514
    %3678 = vst.msk [vmem:[#allocation3 + $0x160] sm:$0xf] %vm2110, %v3516
    %3679 = vst.msk [vmem:[#allocation3 + $0x16c] sm:$0xf] %vm2110, %v3518
    %3680 = vst.msk [vmem:[#allocation3 + $0x178] sm:$0xf] %vm2110, %v3520
    %3681 = vst.msk [vmem:[#allocation3 + $0x184] sm:$0xf] %vm2110, %v3522
    %3682 = vst.msk [vmem:[#allocation3 + $0x190] sm:$0xf] %vm2110, %v3524
    %3683 = vst.msk [vmem:[#allocation3 + $0x19c] sm:$0xf] %vm2110, %v3526
    %3684 = vst.msk [vmem:[#allocation3 + $0x1a8] sm:$0xf] %vm2110, %v3528
    %3685 = vst.msk [vmem:[#allocation3 + $0x1b4] sm:$0xf] %vm2110, %v3530
    %3686 = vst.msk [vmem:[#allocation3 + $0x1c0] sm:$0xf] %vm2110, %v3532
    %3687 = vst.msk [vmem:[#allocation3 + $0x1cc] sm:$0xf] %vm2110, %v3534
    %3688 = vst.msk [vmem:[#allocation3 + $0x1d8] sm:$0xf] %vm2110, %v3536
    %3689 = vst.msk [vmem:[#allocation3 + $0x1e4] sm:$0xf] %vm2110, %v3538
    %3690 = vst.msk [vmem:[#allocation3 + $0x1f0] sm:$0xf] %vm2110, %v3540
    %3691 = vst.msk [vmem:[#allocation3 + $0x1fc] sm:$0xf] %vm2110, %v3542
    %3692 = vst.msk [vmem:[#allocation3 + $0x208] sm:$0xf] %vm2110, %v3544
    %3693 = vst.msk [vmem:[#allocation3 + $0x214] sm:$0xf] %vm2110, %v3546
    %3694 = vst.msk [vmem:[#allocation3 + $0x220] sm:$0xf] %vm2110, %v3548
    %3695 = vst.msk [vmem:[#allocation3 + $0x22c] sm:$0xf] %vm2110, %v3550
    %3696 = vst.msk [vmem:[#allocation3 + $0x238] sm:$0xf] %vm2110, %v3552
    %3697 = vst.msk [vmem:[#allocation3 + $0x244] sm:$0xf] %vm2110, %v3554
    %3698 = vst.msk [vmem:[#allocation3 + $0x250] sm:$0xf] %vm2110, %v3556
    %3699 = vst.msk [vmem:[#allocation3 + $0x25c] sm:$0xf] %vm2110, %v3558
    %3700 = vst.msk [vmem:[#allocation3 + $0x268] sm:$0xf] %vm2110, %v3560
    %3701 = vst.msk [vmem:[#allocation3 + $0x274] sm:$0xf] %vm2110, %v3562
    %3702 = vst.msk [vmem:[#allocation3 + $0x280] sm:$0xf] %vm2110, %v3564
    %3703 = vst.msk [vmem:[#allocation3 + $0x28c] sm:$0xf] %vm2110, %v3566
    %3704 = vst.msk [vmem:[#allocation3 + $0x298] sm:$0xf] %vm2110, %v3568
    %3705 = vst.msk [vmem:[#allocation3 + $0x2a4] sm:$0xf] %vm2110, %v3570
    %3706 = vst.msk [vmem:[#allocation3 + $0x2b0] sm:$0xf] %vm2110, %v3572
    %3707 = vst.msk [vmem:[#allocation3 + $0x2bc] sm:$0xf] %vm2110, %v3574
    %3708 = vst.msk [vmem:[#allocation3 + $0x2c8] sm:$0xf] %vm2110, %v3576
    %3709 = vst.msk [vmem:[#allocation3 + $0x2d4] sm:$0xf] %vm2110, %v3578
    %3710 = vst.msk [vmem:[#allocation3 + $0x2e0] sm:$0xf] %vm2110, %v3580
    %3711 = vst.msk [vmem:[#allocation3 + $0x2ec] sm:$0xf] %vm2110, %v3582
    %3712 = vst.msk [vmem:[#allocation3 + $0x2f8] sm:$0xf] %vm2110, %v3584
    %v3713 = vld [vmem:[%s3264 + $0x1] sm:$0xff]
    %v3714 = vld [vmem:[%s3264 + $0x9] sm:$0xff]
    %v3715 = vld [vmem:[%s3264 + $0x19] sm:$0xff]
    %v3716 = vld [vmem:[%s3264 + $0x21] sm:$0xff]
    %v3717 = vld [vmem:[%s3264 + $0x31] sm:$0xff]
    %v3718 = vld [vmem:[%s3264 + $0x39] sm:$0xff]
    %v3719 = vld [vmem:[%s3264 + $0x49] sm:$0xff]
    %v3720 = vld [vmem:[%s3264 + $0x51] sm:$0xff]
    %v3721 = vld [vmem:[%s3264 + $0x61] sm:$0xff]
    %v3722 = vld [vmem:[%s3264 + $0x69] sm:$0xff]
    %v3723 = vld [vmem:[%s3264 + $0x79] sm:$0xff]
    %v3724 = vld [vmem:[%s3264 + $0x81] sm:$0xff]
    %v3725 = vld [vmem:[%s3264 + $0x91] sm:$0xff]
    %v3726 = vld [vmem:[%s3264 + $0x99] sm:$0xff]
    %v3727 = vld [vmem:[%s3264 + $0xa9] sm:$0xff]
    %v3728 = vld [vmem:[%s3264 + $0xb1] sm:$0xff]
    %v3729 = vld [vmem:[%s3264 + $0xc1] sm:$0xff]
    %v3730 = vld [vmem:[%s3264 + $0xc9] sm:$0xff]
    %v3731 = vld [vmem:[%s3264 + $0xd9] sm:$0xff]
    %v3732 = vld [vmem:[%s3264 + $0xe1] sm:$0xff]
    %v3733 = vld [vmem:[%s3264 + $0xf1] sm:$0xff]
    %v3734 = vld [vmem:[%s3264 + $0xf9] sm:$0xff]
    %v3735 = vld [vmem:[%s3264 + $0x109] sm:$0xff]
    %v3736 = vld [vmem:[%s3264 + $0x111] sm:$0xff]
    %v3737 = vld [vmem:[%s3264 + $0x121] sm:$0xff]
    %v3738 = vld [vmem:[%s3264 + $0x129] sm:$0xff]
    %v3739 = vld [vmem:[%s3264 + $0x139] sm:$0xff]
    %v3740 = vld [vmem:[%s3264 + $0x141] sm:$0xff]
    %v3741 = vld [vmem:[%s3264 + $0x151] sm:$0xff]
    %v3742 = vld [vmem:[%s3264 + $0x159] sm:$0xff]
    %v3743 = vld [vmem:[%s3264 + $0x169] sm:$0xff]
    %v3744 = vld [vmem:[%s3264 + $0x171] sm:$0xff]
    %v3745 = vld [vmem:[%s3264 + $0x1b1] sm:$0xff]
    %v3746 = vld [vmem:[%s3264 + $0x1b9] sm:$0xff]
    %v3747 = vld [vmem:[%s3264 + $0x1c9] sm:$0xff]
    %v3748 = vld [vmem:[%s3264 + $0x1d1] sm:$0xff]
    %v3749 = vld [vmem:[%s3264 + $0x1e1] sm:$0xff]
    %v3750 = vld [vmem:[%s3264 + $0x1e9] sm:$0xff]
    %v3751 = vld [vmem:[%s3264 + $0x1f9] sm:$0xff]
    %v3752 = vld [vmem:[%s3264 + $0x201] sm:$0xff]
    %v3753 = vld [vmem:[%s3264 + $0x211] sm:$0xff]
    %v3754 = vld [vmem:[%s3264 + $0x219] sm:$0xff]
    %v3755 = vld [vmem:[%s3264 + $0x229] sm:$0xff]
    %v3756 = vld [vmem:[%s3264 + $0x231] sm:$0xff]
    %v3757 = vld [vmem:[%s3264 + $0x241] sm:$0xff]
    %v3758 = vld [vmem:[%s3264 + $0x249] sm:$0xff]
    %v3759 = vld [vmem:[%s3264 + $0x259] sm:$0xff]
    %v3760 = vld [vmem:[%s3264 + $0x261] sm:$0xff]
    %v3761 = vld [vmem:[%s3264 + $0x271] sm:$0xff]
    %v3762 = vld [vmem:[%s3264 + $0x279] sm:$0xff]
    %v3763 = vld [vmem:[%s3264 + $0x289] sm:$0xff]
    %v3764 = vld [vmem:[%s3264 + $0x291] sm:$0xff]
    %v3765 = vld [vmem:[%s3264 + $0x2a1] sm:$0xff]
    %v3766 = vld [vmem:[%s3264 + $0x2a9] sm:$0xff]
    %v3767 = vld [vmem:[%s3264 + $0x2b9] sm:$0xff]
    %v3768 = vld [vmem:[%s3264 + $0x2c1] sm:$0xff]
    %v3769 = vld [vmem:[%s3264 + $0x2d1] sm:$0xff]
    %v3770 = vld [vmem:[%s3264 + $0x2d9] sm:$0xff]
    %v3771 = vld [vmem:[%s3264 + $0x2e9] sm:$0xff]
    %v3772 = vld [vmem:[%s3264 + $0x2f1] sm:$0xff]
    %v3773 = vld [vmem:[%s3264 + $0x301] sm:$0xff]
    %v3774 = vld [vmem:[%s3264 + $0x309] sm:$0xff]
    %v3775 = vld [vmem:[%s3264 + $0x319] sm:$0xff]
    %v3776 = vld [vmem:[%s3264 + $0x321] sm:$0xff]
    %v3777 = vpack.c.bf16 %v3713, %v3713
    %v3778 = vpack.c.bf16 %v3714, %v3714
    %v3779 = vpack.c.bf16 %v3715, %v3715
    %v3780 = vpack.c.bf16 %v3716, %v3716
    %v3781 = vpack.c.bf16 %v3717, %v3717
    %v3782 = vpack.c.bf16 %v3718, %v3718
    %v3783 = vpack.c.bf16 %v3719, %v3719
    %v3784 = vpack.c.bf16 %v3720, %v3720
    %v3785 = vpack.c.bf16 %v3721, %v3721
    %v3786 = vpack.c.bf16 %v3722, %v3722
    %v3787 = vpack.c.bf16 %v3723, %v3723
    %v3788 = vpack.c.bf16 %v3724, %v3724
    %v3789 = vpack.c.bf16 %v3725, %v3725
    %v3790 = vpack.c.bf16 %v3726, %v3726
    %v3791 = vpack.c.bf16 %v3727, %v3727
    %v3792 = vpack.c.bf16 %v3728, %v3728
    %v3793 = vpack.c.bf16 %v3729, %v3729
    %v3794 = vpack.c.bf16 %v3730, %v3730
    %v3795 = vpack.c.bf16 %v3731, %v3731
    %v3796 = vpack.c.bf16 %v3732, %v3732
    %v3797 = vpack.c.bf16 %v3733, %v3733
    %v3798 = vpack.c.bf16 %v3734, %v3734
    %v3799 = vpack.c.bf16 %v3735, %v3735
    %v3800 = vpack.c.bf16 %v3736, %v3736
    %v3801 = vpack.c.bf16 %v3737, %v3737
    %v3802 = vpack.c.bf16 %v3738, %v3738
    %v3803 = vpack.c.bf16 %v3739, %v3739
    %v3804 = vpack.c.bf16 %v3740, %v3740
    %v3805 = vpack.c.bf16 %v3741, %v3741
    %v3806 = vpack.c.bf16 %v3742, %v3742
    %v3807 = vpack.c.bf16 %v3743, %v3743
    %v3808 = vpack.c.bf16 %v3744, %v3744
    %v3809 = vpack.c.bf16 %v3745, %v3745
    %v3810 = vpack.c.bf16 %v3746, %v3746
    %v3811 = vpack.c.bf16 %v3747, %v3747
    %v3812 = vpack.c.bf16 %v3748, %v3748
    %v3813 = vpack.c.bf16 %v3749, %v3749
    %v3814 = vpack.c.bf16 %v3750, %v3750
    %v3815 = vpack.c.bf16 %v3751, %v3751
    %v3816 = vpack.c.bf16 %v3752, %v3752
    %v3817 = vpack.c.bf16 %v3753, %v3753
    %v3818 = vpack.c.bf16 %v3754, %v3754
    %v3819 = vpack.c.bf16 %v3755, %v3755
    %v3820 = vpack.c.bf16 %v3756, %v3756
    %v3821 = vpack.c.bf16 %v3757, %v3757
    %v3822 = vpack.c.bf16 %v3758, %v3758
    %v3823 = vpack.c.bf16 %v3759, %v3759
    %v3824 = vpack.c.bf16 %v3760, %v3760
    %v3825 = vpack.c.bf16 %v3761, %v3761
    %v3826 = vpack.c.bf16 %v3762, %v3762
    %v3827 = vpack.c.bf16 %v3763, %v3763
    %v3828 = vpack.c.bf16 %v3764, %v3764
    %v3829 = vpack.c.bf16 %v3765, %v3765
    %v3830 = vpack.c.bf16 %v3766, %v3766
    %v3831 = vpack.c.bf16 %v3767, %v3767
    %v3832 = vpack.c.bf16 %v3768, %v3768
    %v3833 = vpack.c.bf16 %v3769, %v3769
    %v3834 = vpack.c.bf16 %v3770, %v3770
    %v3835 = vpack.c.bf16 %v3771, %v3771
    %v3836 = vpack.c.bf16 %v3772, %v3772
    %v3837 = vpack.c.bf16 %v3773, %v3773
    %v3838 = vpack.c.bf16 %v3774, %v3774
    %v3839 = vpack.c.bf16 %v3775, %v3775
    %v3840 = vpack.c.bf16 %v3776, %v3776
    %3905 = vrot.lane.b32.xlu0 %v3777, 96
    %v3906 = vpop.permute.xlu0 %3905
    %3907 = vrot.lane.b32.xlu0 %v3778, 96
    %v3908 = vpop.permute.xlu0 %3907
    %3909 = vrot.lane.b32.xlu0 %v3779, 96
    %v3910 = vpop.permute.xlu0 %3909
    %3911 = vrot.lane.b32.xlu0 %v3780, 96
    %v3912 = vpop.permute.xlu0 %3911
    %3913 = vrot.lane.b32.xlu0 %v3781, 96
    %v3914 = vpop.permute.xlu0 %3913
    %3915 = vrot.lane.b32.xlu0 %v3782, 96
    %v3916 = vpop.permute.xlu0 %3915
    %3917 = vrot.lane.b32.xlu0 %v3783, 96
    %v3918 = vpop.permute.xlu0 %3917
    %3919 = vrot.lane.b32.xlu0 %v3784, 96
    %v3920 = vpop.permute.xlu0 %3919
    %3921 = vrot.lane.b32.xlu0 %v3785, 96
    %v3922 = vpop.permute.xlu0 %3921
    %3923 = vrot.lane.b32.xlu0 %v3786, 96
    %v3924 = vpop.permute.xlu0 %3923
    %3925 = vrot.lane.b32.xlu0 %v3787, 96
    %v3926 = vpop.permute.xlu0 %3925
    %3927 = vrot.lane.b32.xlu0 %v3788, 96
    %v3928 = vpop.permute.xlu0 %3927
    %3929 = vrot.lane.b32.xlu0 %v3789, 96
    %v3930 = vpop.permute.xlu0 %3929
    %3931 = vrot.lane.b32.xlu0 %v3790, 96
    %v3932 = vpop.permute.xlu0 %3931
    %3933 = vrot.lane.b32.xlu0 %v3791, 96
    %v3934 = vpop.permute.xlu0 %3933
    %3935 = vrot.lane.b32.xlu0 %v3792, 96
    %v3936 = vpop.permute.xlu0 %3935
    %3937 = vrot.lane.b32.xlu0 %v3793, 96
    %v3938 = vpop.permute.xlu0 %3937
    %3939 = vrot.lane.b32.xlu0 %v3794, 96
    %v3940 = vpop.permute.xlu0 %3939
    %3941 = vrot.lane.b32.xlu0 %v3795, 96
    %v3942 = vpop.permute.xlu0 %3941
    %3943 = vrot.lane.b32.xlu0 %v3796, 96
    %v3944 = vpop.permute.xlu0 %3943
    %3945 = vrot.lane.b32.xlu0 %v3797, 96
    %v3946 = vpop.permute.xlu0 %3945
    %3947 = vrot.lane.b32.xlu0 %v3798, 96
    %v3948 = vpop.permute.xlu0 %3947
    %3949 = vrot.lane.b32.xlu0 %v3799, 96
    %v3950 = vpop.permute.xlu0 %3949
    %3951 = vrot.lane.b32.xlu0 %v3800, 96
    %v3952 = vpop.permute.xlu0 %3951
    %3953 = vrot.lane.b32.xlu0 %v3801, 96
    %v3954 = vpop.permute.xlu0 %3953
    %3955 = vrot.lane.b32.xlu0 %v3802, 96
    %v3956 = vpop.permute.xlu0 %3955
    %3957 = vrot.lane.b32.xlu0 %v3803, 96
    %v3958 = vpop.permute.xlu0 %3957
    %3959 = vrot.lane.b32.xlu0 %v3804, 96
    %v3960 = vpop.permute.xlu0 %3959
    %3961 = vrot.lane.b32.xlu0 %v3805, 96
    %v3962 = vpop.permute.xlu0 %3961
    %3963 = vrot.lane.b32.xlu0 %v3806, 96
    %v3964 = vpop.permute.xlu0 %3963
    %3965 = vrot.lane.b32.xlu0 %v3807, 96
    %v3966 = vpop.permute.xlu0 %3965
    %3967 = vrot.lane.b32.xlu0 %v3808, 96
    %v3968 = vpop.permute.xlu0 %3967
    %3969 = vrot.lane.b32.xlu0 %v3809, 96
    %v3970 = vpop.permute.xlu0 %3969
    %3971 = vrot.lane.b32.xlu0 %v3810, 96
    %v3972 = vpop.permute.xlu0 %3971
    %3973 = vrot.lane.b32.xlu0 %v3811, 96
    %v3974 = vpop.permute.xlu0 %3973
    %3975 = vrot.lane.b32.xlu0 %v3812, 96
    %v3976 = vpop.permute.xlu0 %3975
    %3977 = vrot.lane.b32.xlu0 %v3813, 96
    %v3978 = vpop.permute.xlu0 %3977
    %3979 = vrot.lane.b32.xlu0 %v3814, 96
    %v3980 = vpop.permute.xlu0 %3979
    %3981 = vrot.lane.b32.xlu0 %v3815, 96
    %v3982 = vpop.permute.xlu0 %3981
    %3983 = vrot.lane.b32.xlu0 %v3816, 96
    %v3984 = vpop.permute.xlu0 %3983
    %3985 = vrot.lane.b32.xlu0 %v3817, 96
    %v3986 = vpop.permute.xlu0 %3985
    %3987 = vrot.lane.b32.xlu0 %v3818, 96
    %v3988 = vpop.permute.xlu0 %3987
    %3989 = vrot.lane.b32.xlu0 %v3819, 96
    %v3990 = vpop.permute.xlu0 %3989
    %3991 = vrot.lane.b32.xlu0 %v3820, 96
    %v3992 = vpop.permute.xlu0 %3991
    %3993 = vrot.lane.b32.xlu0 %v3821, 96
    %v3994 = vpop.permute.xlu0 %3993
    %3995 = vrot.lane.b32.xlu0 %v3822, 96
    %v3996 = vpop.permute.xlu0 %3995
    %3997 = vrot.lane.b32.xlu0 %v3823, 96
    %v3998 = vpop.permute.xlu0 %3997
    %3999 = vrot.lane.b32.xlu0 %v3824, 96
    %v4000 = vpop.permute.xlu0 %3999
    %4001 = vrot.lane.b32.xlu0 %v3825, 96
    %v4002 = vpop.permute.xlu0 %4001
    %4003 = vrot.lane.b32.xlu0 %v3826, 96
    %v4004 = vpop.permute.xlu0 %4003
    %4005 = vrot.lane.b32.xlu0 %v3827, 96
    %v4006 = vpop.permute.xlu0 %4005
    %4007 = vrot.lane.b32.xlu0 %v3828, 96
    %v4008 = vpop.permute.xlu0 %4007
    %4009 = vrot.lane.b32.xlu0 %v3829, 96
    %v4010 = vpop.permute.xlu0 %4009
    %4011 = vrot.lane.b32.xlu0 %v3830, 96
    %v4012 = vpop.permute.xlu0 %4011
    %4013 = vrot.lane.b32.xlu0 %v3831, 96
    %v4014 = vpop.permute.xlu0 %4013
    %4015 = vrot.lane.b32.xlu0 %v3832, 96
    %v4016 = vpop.permute.xlu0 %4015
    %4017 = vrot.lane.b32.xlu0 %v3833, 96
    %v4018 = vpop.permute.xlu0 %4017
    %4019 = vrot.lane.b32.xlu0 %v3834, 96
    %v4020 = vpop.permute.xlu0 %4019
    %4021 = vrot.lane.b32.xlu0 %v3835, 96
    %v4022 = vpop.permute.xlu0 %4021
    %4023 = vrot.lane.b32.xlu0 %v3836, 96
    %v4024 = vpop.permute.xlu0 %4023
    %4025 = vrot.lane.b32.xlu0 %v3837, 96
    %v4026 = vpop.permute.xlu0 %4025
    %4027 = vrot.lane.b32.xlu0 %v3838, 96
    %v4028 = vpop.permute.xlu0 %4027
    %4029 = vrot.lane.b32.xlu0 %v3839, 96
    %v4030 = vpop.permute.xlu0 %4029
    %4031 = vrot.lane.b32.xlu0 %v3840, 96
    %v4032 = vpop.permute.xlu0 %4031
    %4097 = vst.msk [vmem:[#allocation3 + $0x4] sm:$0xf] %vm2559, %v3906
    %4098 = vst.msk [vmem:[#allocation3 + $0x10] sm:$0xf] %vm2559, %v3908
    %4099 = vst.msk [vmem:[#allocation3 + $0x1c] sm:$0xf] %vm2559, %v3910
    %4100 = vst.msk [vmem:[#allocation3 + $0x28] sm:$0xf] %vm2559, %v3912
    %4101 = vst.msk [vmem:[#allocation3 + $0x34] sm:$0xf] %vm2559, %v3914
    %4102 = vst.msk [vmem:[#allocation3 + $0x40] sm:$0xf] %vm2559, %v3916
    %4103 = vst.msk [vmem:[#allocation3 + $0x4c] sm:$0xf] %vm2559, %v3918
    %4104 = vst.msk [vmem:[#allocation3 + $0x58] sm:$0xf] %vm2559, %v3920
    %4105 = vst.msk [vmem:[#allocation3 + $0x64] sm:$0xf] %vm2559, %v3922
    %4106 = vst.msk [vmem:[#allocation3 + $0x70] sm:$0xf] %vm2559, %v3924
    %4107 = vst.msk [vmem:[#allocation3 + $0x7c] sm:$0xf] %vm2559, %v3926
    %4108 = vst.msk [vmem:[#allocation3 + $0x88] sm:$0xf] %vm2559, %v3928
    %4109 = vst.msk [vmem:[#allocation3 + $0x94] sm:$0xf] %vm2559, %v3930
    %4110 = vst.msk [vmem:[#allocation3 + $0xa0] sm:$0xf] %vm2559, %v3932
    %4111 = vst.msk [vmem:[#allocation3 + $0xac] sm:$0xf] %vm2559, %v3934
    %4112 = vst.msk [vmem:[#allocation3 + $0xb8] sm:$0xf] %vm2559, %v3936
    %4113 = vst.msk [vmem:[#allocation3 + $0xc4] sm:$0xf] %vm2559, %v3938
    %4114 = vst.msk [vmem:[#allocation3 + $0xd0] sm:$0xf] %vm2559, %v3940
    %4115 = vst.msk [vmem:[#allocation3 + $0xdc] sm:$0xf] %vm2559, %v3942
    %4116 = vst.msk [vmem:[#allocation3 + $0xe8] sm:$0xf] %vm2559, %v3944
    %4117 = vst.msk [vmem:[#allocation3 + $0xf4] sm:$0xf] %vm2559, %v3946
    %4118 = vst.msk [vmem:[#allocation3 + $0x100] sm:$0xf] %vm2559, %v3948
    %4119 = vst.msk [vmem:[#allocation3 + $0x10c] sm:$0xf] %vm2559, %v3950
    %4120 = vst.msk [vmem:[#allocation3 + $0x118] sm:$0xf] %vm2559, %v3952
    %4121 = vst.msk [vmem:[#allocation3 + $0x124] sm:$0xf] %vm2559, %v3954
    %4122 = vst.msk [vmem:[#allocation3 + $0x130] sm:$0xf] %vm2559, %v3956
    %4123 = vst.msk [vmem:[#allocation3 + $0x13c] sm:$0xf] %vm2559, %v3958
    %4124 = vst.msk [vmem:[#allocation3 + $0x148] sm:$0xf] %vm2559, %v3960
    %4125 = vst.msk [vmem:[#allocation3 + $0x154] sm:$0xf] %vm2559, %v3962
    %4126 = vst.msk [vmem:[#allocation3 + $0x160] sm:$0xf] %vm2559, %v3964
    %4127 = vst.msk [vmem:[#allocation3 + $0x16c] sm:$0xf] %vm2559, %v3966
    %4128 = vst.msk [vmem:[#allocation3 + $0x178] sm:$0xf] %vm2559, %v3968
    %4129 = vst.msk [vmem:[#allocation3 + $0x184] sm:$0xf] %vm2559, %v3970
    %4130 = vst.msk [vmem:[#allocation3 + $0x190] sm:$0xf] %vm2559, %v3972
    %4131 = vst.msk [vmem:[#allocation3 + $0x19c] sm:$0xf] %vm2559, %v3974
    %4132 = vst.msk [vmem:[#allocation3 + $0x1a8] sm:$0xf] %vm2559, %v3976
    %4133 = vst.msk [vmem:[#allocation3 + $0x1b4] sm:$0xf] %vm2559, %v3978
    %4134 = vst.msk [vmem:[#allocation3 + $0x1c0] sm:$0xf] %vm2559, %v3980
    %4135 = vst.msk [vmem:[#allocation3 + $0x1cc] sm:$0xf] %vm2559, %v3982
    %4136 = vst.msk [vmem:[#allocation3 + $0x1d8] sm:$0xf] %vm2559, %v3984
    %4137 = vst.msk [vmem:[#allocation3 + $0x1e4] sm:$0xf] %vm2559, %v3986
    %4138 = vst.msk [vmem:[#allocation3 + $0x1f0] sm:$0xf] %vm2559, %v3988
    %4139 = vst.msk [vmem:[#allocation3 + $0x1fc] sm:$0xf] %vm2559, %v3990
    %4140 = vst.msk [vmem:[#allocation3 + $0x208] sm:$0xf] %vm2559, %v3992
    %4141 = vst.msk [vmem:[#allocation3 + $0x214] sm:$0xf] %vm2559, %v3994
    %4142 = vst.msk [vmem:[#allocation3 + $0x220] sm:$0xf] %vm2559, %v3996
    %4143 = vst.msk [vmem:[#allocation3 + $0x22c] sm:$0xf] %vm2559, %v3998
    %4144 = vst.msk [vmem:[#allocation3 + $0x238] sm:$0xf] %vm2559, %v4000
    %4145 = vst.msk [vmem:[#allocation3 + $0x244] sm:$0xf] %vm2559, %v4002
    %4146 = vst.msk [vmem:[#allocation3 + $0x250] sm:$0xf] %vm2559, %v4004
    %4147 = vst.msk [vmem:[#allocation3 + $0x25c] sm:$0xf] %vm2559, %v4006
    %4148 = vst.msk [vmem:[#allocation3 + $0x268] sm:$0xf] %vm2559, %v4008
    %4149 = vst.msk [vmem:[#allocation3 + $0x274] sm:$0xf] %vm2559, %v4010
    %4150 = vst.msk [vmem:[#allocation3 + $0x280] sm:$0xf] %vm2559, %v4012
    %4151 = vst.msk [vmem:[#allocation3 + $0x28c] sm:$0xf] %vm2559, %v4014
    %4152 = vst.msk [vmem:[#allocation3 + $0x298] sm:$0xf] %vm2559, %v4016
    %4153 = vst.msk [vmem:[#allocation3 + $0x2a4] sm:$0xf] %vm2559, %v4018
    %4154 = vst.msk [vmem:[#allocation3 + $0x2b0] sm:$0xf] %vm2559, %v4020
    %4155 = vst.msk [vmem:[#allocation3 + $0x2bc] sm:$0xf] %vm2559, %v4022
    %4156 = vst.msk [vmem:[#allocation3 + $0x2c8] sm:$0xf] %vm2559, %v4024
    %4157 = vst.msk [vmem:[#allocation3 + $0x2d4] sm:$0xf] %vm2559, %v4026
    %4158 = vst.msk [vmem:[#allocation3 + $0x2e0] sm:$0xf] %vm2559, %v4028
    %4159 = vst.msk [vmem:[#allocation3 + $0x2ec] sm:$0xf] %vm2559, %v4030
    %4160 = vst.msk [vmem:[#allocation3 + $0x2f8] sm:$0xf] %vm2559, %v4032
    %v4161 = vld [vmem:[%s3264 + $0x2] sm:$0xff]
    %v4162 = vld [vmem:[%s3264 + $0xa] sm:$0xff]
    %v4163 = vld [vmem:[%s3264 + $0x1a] sm:$0xff]
    %v4164 = vld [vmem:[%s3264 + $0x22] sm:$0xff]
    %v4165 = vld [vmem:[%s3264 + $0x32] sm:$0xff]
    %v4166 = vld [vmem:[%s3264 + $0x3a] sm:$0xff]
    %v4167 = vld [vmem:[%s3264 + $0x4a] sm:$0xff]
    %v4168 = vld [vmem:[%s3264 + $0x52] sm:$0xff]
    %v4169 = vld [vmem:[%s3264 + $0x62] sm:$0xff]
    %v4170 = vld [vmem:[%s3264 + $0x6a] sm:$0xff]
    %v4171 = vld [vmem:[%s3264 + $0x7a] sm:$0xff]
    %v4172 = vld [vmem:[%s3264 + $0x82] sm:$0xff]
    %v4173 = vld [vmem:[%s3264 + $0x92] sm:$0xff]
    %v4174 = vld [vmem:[%s3264 + $0x9a] sm:$0xff]
    %v4175 = vld [vmem:[%s3264 + $0xaa] sm:$0xff]
    %v4176 = vld [vmem:[%s3264 + $0xb2] sm:$0xff]
    %v4177 = vld [vmem:[%s3264 + $0xc2] sm:$0xff]
    %v4178 = vld [vmem:[%s3264 + $0xca] sm:$0xff]
    %v4179 = vld [vmem:[%s3264 + $0xda] sm:$0xff]
    %v4180 = vld [vmem:[%s3264 + $0xe2] sm:$0xff]
    %v4181 = vld [vmem:[%s3264 + $0xf2] sm:$0xff]
    %v4182 = vld [vmem:[%s3264 + $0xfa] sm:$0xff]
    %v4183 = vld [vmem:[%s3264 + $0x10a] sm:$0xff]
    %v4184 = vld [vmem:[%s3264 + $0x112] sm:$0xff]
    %v4185 = vld [vmem:[%s3264 + $0x122] sm:$0xff]
    %v4186 = vld [vmem:[%s3264 + $0x12a] sm:$0xff]
    %v4187 = vld [vmem:[%s3264 + $0x13a] sm:$0xff]
    %v4188 = vld [vmem:[%s3264 + $0x142] sm:$0xff]
    %v4189 = vld [vmem:[%s3264 + $0x152] sm:$0xff]
    %v4190 = vld [vmem:[%s3264 + $0x15a] sm:$0xff]
    %v4191 = vld [vmem:[%s3264 + $0x16a] sm:$0xff]
    %v4192 = vld [vmem:[%s3264 + $0x172] sm:$0xff]
    %v4193 = vld [vmem:[%s3264 + $0x1b2] sm:$0xff]
    %v4194 = vld [vmem:[%s3264 + $0x1ba] sm:$0xff]
    %v4195 = vld [vmem:[%s3264 + $0x1ca] sm:$0xff]
    %v4196 = vld [vmem:[%s3264 + $0x1d2] sm:$0xff]
    %v4197 = vld [vmem:[%s3264 + $0x1e2] sm:$0xff]
    %v4198 = vld [vmem:[%s3264 + $0x1ea] sm:$0xff]
    %v4199 = vld [vmem:[%s3264 + $0x1fa] sm:$0xff]
    %v4200 = vld [vmem:[%s3264 + $0x202] sm:$0xff]
    %v4201 = vld [vmem:[%s3264 + $0x212] sm:$0xff]
    %v4202 = vld [vmem:[%s3264 + $0x21a] sm:$0xff]
    %v4203 = vld [vmem:[%s3264 + $0x22a] sm:$0xff]
    %v4204 = vld [vmem:[%s3264 + $0x232] sm:$0xff]
    %v4205 = vld [vmem:[%s3264 + $0x242] sm:$0xff]
    %v4206 = vld [vmem:[%s3264 + $0x24a] sm:$0xff]
    %v4207 = vld [vmem:[%s3264 + $0x25a] sm:$0xff]
    %v4208 = vld [vmem:[%s3264 + $0x262] sm:$0xff]
    %v4209 = vld [vmem:[%s3264 + $0x272] sm:$0xff]
    %v4210 = vld [vmem:[%s3264 + $0x27a] sm:$0xff]
    %v4211 = vld [vmem:[%s3264 + $0x28a] sm:$0xff]
    %v4212 = vld [vmem:[%s3264 + $0x292] sm:$0xff]
    %v4213 = vld [vmem:[%s3264 + $0x2a2] sm:$0xff]
    %v4214 = vld [vmem:[%s3264 + $0x2aa] sm:$0xff]
    %v4215 = vld [vmem:[%s3264 + $0x2ba] sm:$0xff]
    %v4216 = vld [vmem:[%s3264 + $0x2c2] sm:$0xff]
    %v4217 = vld [vmem:[%s3264 + $0x2d2] sm:$0xff]
    %v4218 = vld [vmem:[%s3264 + $0x2da] sm:$0xff]
    %v4219 = vld [vmem:[%s3264 + $0x2ea] sm:$0xff]
    %v4220 = vld [vmem:[%s3264 + $0x2f2] sm:$0xff]
    %v4221 = vld [vmem:[%s3264 + $0x302] sm:$0xff]
    %v4222 = vld [vmem:[%s3264 + $0x30a] sm:$0xff]
    %v4223 = vld [vmem:[%s3264 + $0x31a] sm:$0xff]
    %v4224 = vld [vmem:[%s3264 + $0x322] sm:$0xff]
    %v4225 = vpack.c.bf16 %v4161, %v4161
    %v4226 = vpack.c.bf16 %v4162, %v4162
    %v4227 = vpack.c.bf16 %v4163, %v4163
    %v4228 = vpack.c.bf16 %v4164, %v4164
    %v4229 = vpack.c.bf16 %v4165, %v4165
    %v4230 = vpack.c.bf16 %v4166, %v4166
    %v4231 = vpack.c.bf16 %v4167, %v4167
    %v4232 = vpack.c.bf16 %v4168, %v4168
    %v4233 = vpack.c.bf16 %v4169, %v4169
    %v4234 = vpack.c.bf16 %v4170, %v4170
    %v4235 = vpack.c.bf16 %v4171, %v4171
    %v4236 = vpack.c.bf16 %v4172, %v4172
    %v4237 = vpack.c.bf16 %v4173, %v4173
    %v4238 = vpack.c.bf16 %v4174, %v4174
    %v4239 = vpack.c.bf16 %v4175, %v4175
    %v4240 = vpack.c.bf16 %v4176, %v4176
    %v4241 = vpack.c.bf16 %v4177, %v4177
    %v4242 = vpack.c.bf16 %v4178, %v4178
    %v4243 = vpack.c.bf16 %v4179, %v4179
    %v4244 = vpack.c.bf16 %v4180, %v4180
    %v4245 = vpack.c.bf16 %v4181, %v4181
    %v4246 = vpack.c.bf16 %v4182, %v4182
    %v4247 = vpack.c.bf16 %v4183, %v4183
    %v4248 = vpack.c.bf16 %v4184, %v4184
    %v4249 = vpack.c.bf16 %v4185, %v4185
    %v4250 = vpack.c.bf16 %v4186, %v4186
    %v4251 = vpack.c.bf16 %v4187, %v4187
    %v4252 = vpack.c.bf16 %v4188, %v4188
    %v4253 = vpack.c.bf16 %v4189, %v4189
    %v4254 = vpack.c.bf16 %v4190, %v4190
    %v4255 = vpack.c.bf16 %v4191, %v4191
    %v4256 = vpack.c.bf16 %v4192, %v4192
    %v4257 = vpack.c.bf16 %v4193, %v4193
    %v4258 = vpack.c.bf16 %v4194, %v4194
    %v4259 = vpack.c.bf16 %v4195, %v4195
    %v4260 = vpack.c.bf16 %v4196, %v4196
    %v4261 = vpack.c.bf16 %v4197, %v4197
    %v4262 = vpack.c.bf16 %v4198, %v4198
    %v4263 = vpack.c.bf16 %v4199, %v4199
    %v4264 = vpack.c.bf16 %v4200, %v4200
    %v4265 = vpack.c.bf16 %v4201, %v4201
    %v4266 = vpack.c.bf16 %v4202, %v4202
    %v4267 = vpack.c.bf16 %v4203, %v4203
    %v4268 = vpack.c.bf16 %v4204, %v4204
    %v4269 = vpack.c.bf16 %v4205, %v4205
    %v4270 = vpack.c.bf16 %v4206, %v4206
    %v4271 = vpack.c.bf16 %v4207, %v4207
    %v4272 = vpack.c.bf16 %v4208, %v4208
    %v4273 = vpack.c.bf16 %v4209, %v4209
    %v4274 = vpack.c.bf16 %v4210, %v4210
    %v4275 = vpack.c.bf16 %v4211, %v4211
    %v4276 = vpack.c.bf16 %v4212, %v4212
    %v4277 = vpack.c.bf16 %v4213, %v4213
    %v4278 = vpack.c.bf16 %v4214, %v4214
    %v4279 = vpack.c.bf16 %v4215, %v4215
    %v4280 = vpack.c.bf16 %v4216, %v4216
    %v4281 = vpack.c.bf16 %v4217, %v4217
    %v4282 = vpack.c.bf16 %v4218, %v4218
    %v4283 = vpack.c.bf16 %v4219, %v4219
    %v4284 = vpack.c.bf16 %v4220, %v4220
    %v4285 = vpack.c.bf16 %v4221, %v4221
    %v4286 = vpack.c.bf16 %v4222, %v4222
    %v4287 = vpack.c.bf16 %v4223, %v4223
    %v4288 = vpack.c.bf16 %v4224, %v4224
    %4289 = vst.msk [vmem:[#allocation3 + $0x8] sm:$0xf] %vm1212, %v4225
    %4290 = vst.msk [vmem:[#allocation3 + $0x14] sm:$0xf] %vm1212, %v4226
    %4291 = vst.msk [vmem:[#allocation3 + $0x20] sm:$0xf] %vm1212, %v4227
    %4292 = vst.msk [vmem:[#allocation3 + $0x2c] sm:$0xf] %vm1212, %v4228
    %4293 = vst.msk [vmem:[#allocation3 + $0x38] sm:$0xf] %vm1212, %v4229
    %4294 = vst.msk [vmem:[#allocation3 + $0x44] sm:$0xf] %vm1212, %v4230
    %4295 = vst.msk [vmem:[#allocation3 + $0x50] sm:$0xf] %vm1212, %v4231
    %4296 = vst.msk [vmem:[#allocation3 + $0x5c] sm:$0xf] %vm1212, %v4232
    %4297 = vst.msk [vmem:[#allocation3 + $0x68] sm:$0xf] %vm1212, %v4233
    %4298 = vst.msk [vmem:[#allocation3 + $0x74] sm:$0xf] %vm1212, %v4234
    %4299 = vst.msk [vmem:[#allocation3 + $0x80] sm:$0xf] %vm1212, %v4235
    %4300 = vst.msk [vmem:[#allocation3 + $0x8c] sm:$0xf] %vm1212, %v4236
    %4301 = vst.msk [vmem:[#allocation3 + $0x98] sm:$0xf] %vm1212, %v4237
    %4302 = vst.msk [vmem:[#allocation3 + $0xa4] sm:$0xf] %vm1212, %v4238
    %4303 = vst.msk [vmem:[#allocation3 + $0xb0] sm:$0xf] %vm1212, %v4239
    %4304 = vst.msk [vmem:[#allocation3 + $0xbc] sm:$0xf] %vm1212, %v4240
    %4305 = vst.msk [vmem:[#allocation3 + $0xc8] sm:$0xf] %vm1212, %v4241
    %4306 = vst.msk [vmem:[#allocation3 + $0xd4] sm:$0xf] %vm1212, %v4242
    %4307 = vst.msk [vmem:[#allocation3 + $0xe0] sm:$0xf] %vm1212, %v4243
    %4308 = vst.msk [vmem:[#allocation3 + $0xec] sm:$0xf] %vm1212, %v4244
    %4309 = vst.msk [vmem:[#allocation3 + $0xf8] sm:$0xf] %vm1212, %v4245
    %4310 = vst.msk [vmem:[#allocation3 + $0x104] sm:$0xf] %vm1212, %v4246
    %4311 = vst.msk [vmem:[#allocation3 + $0x110] sm:$0xf] %vm1212, %v4247
    %4312 = vst.msk [vmem:[#allocation3 + $0x11c] sm:$0xf] %vm1212, %v4248
    %4313 = vst.msk [vmem:[#allocation3 + $0x128] sm:$0xf] %vm1212, %v4249
    %4314 = vst.msk [vmem:[#allocation3 + $0x134] sm:$0xf] %vm1212, %v4250
    %4315 = vst.msk [vmem:[#allocation3 + $0x140] sm:$0xf] %vm1212, %v4251
    %4316 = vst.msk [vmem:[#allocation3 + $0x14c] sm:$0xf] %vm1212, %v4252
    %4317 = vst.msk [vmem:[#allocation3 + $0x158] sm:$0xf] %vm1212, %v4253
    %4318 = vst.msk [vmem:[#allocation3 + $0x164] sm:$0xf] %vm1212, %v4254
    %4319 = vst.msk [vmem:[#allocation3 + $0x170] sm:$0xf] %vm1212, %v4255
    %4320 = vst.msk [vmem:[#allocation3 + $0x17c] sm:$0xf] %vm1212, %v4256
    %4321 = vst.msk [vmem:[#allocation3 + $0x188] sm:$0xf] %vm1212, %v4257
    %4322 = vst.msk [vmem:[#allocation3 + $0x194] sm:$0xf] %vm1212, %v4258
    %4323 = vst.msk [vmem:[#allocation3 + $0x1a0] sm:$0xf] %vm1212, %v4259
    %4324 = vst.msk [vmem:[#allocation3 + $0x1ac] sm:$0xf] %vm1212, %v4260
    %4325 = vst.msk [vmem:[#allocation3 + $0x1b8] sm:$0xf] %vm1212, %v4261
    %4326 = vst.msk [vmem:[#allocation3 + $0x1c4] sm:$0xf] %vm1212, %v4262
    %4327 = vst.msk [vmem:[#allocation3 + $0x1d0] sm:$0xf] %vm1212, %v4263
    %4328 = vst.msk [vmem:[#allocation3 + $0x1dc] sm:$0xf] %vm1212, %v4264
    %4329 = vst.msk [vmem:[#allocation3 + $0x1e8] sm:$0xf] %vm1212, %v4265
    %4330 = vst.msk [vmem:[#allocation3 + $0x1f4] sm:$0xf] %vm1212, %v4266
    %4331 = vst.msk [vmem:[#allocation3 + $0x200] sm:$0xf] %vm1212, %v4267
    %4332 = vst.msk [vmem:[#allocation3 + $0x20c] sm:$0xf] %vm1212, %v4268
    %4333 = vst.msk [vmem:[#allocation3 + $0x218] sm:$0xf] %vm1212, %v4269
    %4334 = vst.msk [vmem:[#allocation3 + $0x224] sm:$0xf] %vm1212, %v4270
    %4335 = vst.msk [vmem:[#allocation3 + $0x230] sm:$0xf] %vm1212, %v4271
    %4336 = vst.msk [vmem:[#allocation3 + $0x23c] sm:$0xf] %vm1212, %v4272
    %4337 = vst.msk [vmem:[#allocation3 + $0x248] sm:$0xf] %vm1212, %v4273
    %4338 = vst.msk [vmem:[#allocation3 + $0x254] sm:$0xf] %vm1212, %v4274
    %4339 = vst.msk [vmem:[#allocation3 + $0x260] sm:$0xf] %vm1212, %v4275
    %4340 = vst.msk [vmem:[#allocation3 + $0x26c] sm:$0xf] %vm1212, %v4276
    %4341 = vst.msk [vmem:[#allocation3 + $0x278] sm:$0xf] %vm1212, %v4277
    %4342 = vst.msk [vmem:[#allocation3 + $0x284] sm:$0xf] %vm1212, %v4278
    %4343 = vst.msk [vmem:[#allocation3 + $0x290] sm:$0xf] %vm1212, %v4279
    %4344 = vst.msk [vmem:[#allocation3 + $0x29c] sm:$0xf] %vm1212, %v4280
    %4345 = vst.msk [vmem:[#allocation3 + $0x2a8] sm:$0xf] %vm1212, %v4281
    %4346 = vst.msk [vmem:[#allocation3 + $0x2b4] sm:$0xf] %vm1212, %v4282
    %4347 = vst.msk [vmem:[#allocation3 + $0x2c0] sm:$0xf] %vm1212, %v4283
    %4348 = vst.msk [vmem:[#allocation3 + $0x2cc] sm:$0xf] %vm1212, %v4284
    %4349 = vst.msk [vmem:[#allocation3 + $0x2d8] sm:$0xf] %vm1212, %v4285
    %4350 = vst.msk [vmem:[#allocation3 + $0x2e4] sm:$0xf] %vm1212, %v4286
    %4351 = vst.msk [vmem:[#allocation3 + $0x2f0] sm:$0xf] %vm1212, %v4287
    %4352 = vst.msk [vmem:[#allocation3 + $0x2fc] sm:$0xf] %vm1212, %v4288
    %v4353 = vld [vmem:[#allocation3] sm:$0xff]
    %v4354 = vld [vmem:[#allocation3 + $0x8] sm:$0xf]
    %v4355 = vld [vmem:[#allocation3 + $0xc] sm:$0xff]
    %v4356 = vld [vmem:[#allocation3 + $0x14] sm:$0xf]
    %v4357 = vld [vmem:[#allocation3 + $0x18] sm:$0xff]
    %v4358 = vld [vmem:[#allocation3 + $0x20] sm:$0xf]
    %v4359 = vld [vmem:[#allocation3 + $0x24] sm:$0xff]
    %v4360 = vld [vmem:[#allocation3 + $0x2c] sm:$0xf]
    %v4361 = vld [vmem:[#allocation3 + $0x30] sm:$0xff]
    %v4362 = vld [vmem:[#allocation3 + $0x38] sm:$0xf]
    %v4363 = vld [vmem:[#allocation3 + $0x3c] sm:$0xff]
    %v4364 = vld [vmem:[#allocation3 + $0x44] sm:$0xf]
    %v4365 = vld [vmem:[#allocation3 + $0x48] sm:$0xff]
    %v4366 = vld [vmem:[#allocation3 + $0x50] sm:$0xf]
    %v4367 = vld [vmem:[#allocation3 + $0x54] sm:$0xff]
    %v4368 = vld [vmem:[#allocation3 + $0x5c] sm:$0xf]
    %v4369 = vld [vmem:[#allocation3 + $0x60] sm:$0xff]
    %v4370 = vld [vmem:[#allocation3 + $0x68] sm:$0xf]
    %v4371 = vld [vmem:[#allocation3 + $0x6c] sm:$0xff]
    %v4372 = vld [vmem:[#allocation3 + $0x74] sm:$0xf]
    %v4373 = vld [vmem:[#allocation3 + $0x78] sm:$0xff]
    %v4374 = vld [vmem:[#allocation3 + $0x80] sm:$0xf]
    %v4375 = vld [vmem:[#allocation3 + $0x84] sm:$0xff]
    %v4376 = vld [vmem:[#allocation3 + $0x8c] sm:$0xf]
    %v4377 = vld [vmem:[#allocation3 + $0x90] sm:$0xff]
    %v4378 = vld [vmem:[#allocation3 + $0x98] sm:$0xf]
    %v4379 = vld [vmem:[#allocation3 + $0x9c] sm:$0xff]
    %v4380 = vld [vmem:[#allocation3 + $0xa4] sm:$0xf]
    %v4381 = vld [vmem:[#allocation3 + $0xa8] sm:$0xff]
    %v4382 = vld [vmem:[#allocation3 + $0xb0] sm:$0xf]
    %v4383 = vld [vmem:[#allocation3 + $0xb4] sm:$0xff]
    %v4384 = vld [vmem:[#allocation3 + $0xbc] sm:$0xf]
    %v4385 = vld [vmem:[#allocation3 + $0xc0] sm:$0xff]
    %v4386 = vld [vmem:[#allocation3 + $0xc8] sm:$0xf]
    %v4387 = vld [vmem:[#allocation3 + $0xcc] sm:$0xff]
    %v4388 = vld [vmem:[#allocation3 + $0xd4] sm:$0xf]
    %v4389 = vld [vmem:[#allocation3 + $0xd8] sm:$0xff]
    %v4390 = vld [vmem:[#allocation3 + $0xe0] sm:$0xf]
    %v4391 = vld [vmem:[#allocation3 + $0xe4] sm:$0xff]
    %v4392 = vld [vmem:[#allocation3 + $0xec] sm:$0xf]
    %v4393 = vld [vmem:[#allocation3 + $0xf0] sm:$0xff]
    %v4394 = vld [vmem:[#allocation3 + $0xf8] sm:$0xf]
    %v4395 = vld [vmem:[#allocation3 + $0xfc] sm:$0xff]
    %v4396 = vld [vmem:[#allocation3 + $0x104] sm:$0xf]
    %v4397 = vld [vmem:[#allocation3 + $0x108] sm:$0xff]
    %v4398 = vld [vmem:[#allocation3 + $0x110] sm:$0xf]
    %v4399 = vld [vmem:[#allocation3 + $0x114] sm:$0xff]
    %v4400 = vld [vmem:[#allocation3 + $0x11c] sm:$0xf]
    %v4401 = vld [vmem:[#allocation3 + $0x120] sm:$0xff]
    %v4402 = vld [vmem:[#allocation3 + $0x128] sm:$0xf]
    %v4403 = vld [vmem:[#allocation3 + $0x12c] sm:$0xff]
    %v4404 = vld [vmem:[#allocation3 + $0x134] sm:$0xf]
    %v4405 = vld [vmem:[#allocation3 + $0x138] sm:$0xff]
    %v4406 = vld [vmem:[#allocation3 + $0x140] sm:$0xf]
    %v4407 = vld [vmem:[#allocation3 + $0x144] sm:$0xff]
    %v4408 = vld [vmem:[#allocation3 + $0x14c] sm:$0xf]
    %v4409 = vld [vmem:[#allocation3 + $0x150] sm:$0xff]
    %v4410 = vld [vmem:[#allocation3 + $0x158] sm:$0xf]
    %v4411 = vld [vmem:[#allocation3 + $0x15c] sm:$0xff]
    %v4412 = vld [vmem:[#allocation3 + $0x164] sm:$0xf]
    %v4413 = vld [vmem:[#allocation3 + $0x168] sm:$0xff]
    %v4414 = vld [vmem:[#allocation3 + $0x170] sm:$0xf]
    %v4415 = vld [vmem:[#allocation3 + $0x174] sm:$0xff]
    %v4416 = vld [vmem:[#allocation3 + $0x17c] sm:$0xf]
    %v4417 = vld [vmem:[#allocation3 + $0x180] sm:$0xff]
    %v4418 = vld [vmem:[#allocation3 + $0x188] sm:$0xf]
    %v4419 = vld [vmem:[#allocation3 + $0x18c] sm:$0xff]
    %v4420 = vld [vmem:[#allocation3 + $0x194] sm:$0xf]
    %v4421 = vld [vmem:[#allocation3 + $0x198] sm:$0xff]
    %v4422 = vld [vmem:[#allocation3 + $0x1a0] sm:$0xf]
    %v4423 = vld [vmem:[#allocation3 + $0x1a4] sm:$0xff]
    %v4424 = vld [vmem:[#allocation3 + $0x1ac] sm:$0xf]
    %v4425 = vld [vmem:[#allocation3 + $0x1b0] sm:$0xff]
    %v4426 = vld [vmem:[#allocation3 + $0x1b8] sm:$0xf]
    %v4427 = vld [vmem:[#allocation3 + $0x1bc] sm:$0xff]
    %v4428 = vld [vmem:[#allocation3 + $0x1c4] sm:$0xf]
    %v4429 = vld [vmem:[#allocation3 + $0x1c8] sm:$0xff]
    %v4430 = vld [vmem:[#allocation3 + $0x1d0] sm:$0xf]
    %v4431 = vld [vmem:[#allocation3 + $0x1d4] sm:$0xff]
    %v4432 = vld [vmem:[#allocation3 + $0x1dc] sm:$0xf]
    %v4433 = vld [vmem:[#allocation3 + $0x1e0] sm:$0xff]
    %v4434 = vld [vmem:[#allocation3 + $0x1e8] sm:$0xf]
    %v4435 = vld [vmem:[#allocation3 + $0x1ec] sm:$0xff]
    %v4436 = vld [vmem:[#allocation3 + $0x1f4] sm:$0xf]
    %v4437 = vld [vmem:[#allocation3 + $0x1f8] sm:$0xff]
    %v4438 = vld [vmem:[#allocation3 + $0x200] sm:$0xf]
    %v4439 = vld [vmem:[#allocation3 + $0x204] sm:$0xff]
    %v4440 = vld [vmem:[#allocation3 + $0x20c] sm:$0xf]
    %v4441 = vld [vmem:[#allocation3 + $0x210] sm:$0xff]
    %v4442 = vld [vmem:[#allocation3 + $0x218] sm:$0xf]
    %v4443 = vld [vmem:[#allocation3 + $0x21c] sm:$0xff]
    %v4444 = vld [vmem:[#allocation3 + $0x224] sm:$0xf]
    %v4445 = vld [vmem:[#allocation3 + $0x228] sm:$0xff]
    %v4446 = vld [vmem:[#allocation3 + $0x230] sm:$0xf]
    %v4447 = vld [vmem:[#allocation3 + $0x234] sm:$0xff]
    %v4448 = vld [vmem:[#allocation3 + $0x23c] sm:$0xf]
    %v4449 = vld [vmem:[#allocation3 + $0x240] sm:$0xff]
    %v4450 = vld [vmem:[#allocation3 + $0x248] sm:$0xf]
    %v4451 = vld [vmem:[#allocation3 + $0x24c] sm:$0xff]
    %v4452 = vld [vmem:[#allocation3 + $0x254] sm:$0xf]
    %v4453 = vld [vmem:[#allocation3 + $0x258] sm:$0xff]
    %v4454 = vld [vmem:[#allocation3 + $0x260] sm:$0xf]
    %v4455 = vld [vmem:[#allocation3 + $0x264] sm:$0xff]
    %v4456 = vld [vmem:[#allocation3 + $0x26c] sm:$0xf]
    %v4457 = vld [vmem:[#allocation3 + $0x270] sm:$0xff]
    %v4458 = vld [vmem:[#allocation3 + $0x278] sm:$0xf]
    %v4459 = vld [vmem:[#allocation3 + $0x27c] sm:$0xff]
    %v4460 = vld [vmem:[#allocation3 + $0x284] sm:$0xf]
    %v4461 = vld [vmem:[#allocation3 + $0x288] sm:$0xff]
    %v4462 = vld [vmem:[#allocation3 + $0x290] sm:$0xf]
    %v4463 = vld [vmem:[#allocation3 + $0x294] sm:$0xff]
    %v4464 = vld [vmem:[#allocation3 + $0x29c] sm:$0xf]
    %v4465 = vld [vmem:[#allocation3 + $0x2a0] sm:$0xff]
    %v4466 = vld [vmem:[#allocation3 + $0x2a8] sm:$0xf]
    %v4467 = vld [vmem:[#allocation3 + $0x2ac] sm:$0xff]
    %v4468 = vld [vmem:[#allocation3 + $0x2b4] sm:$0xf]
    %v4469 = vld [vmem:[#allocation3 + $0x2b8] sm:$0xff]
    %v4470 = vld [vmem:[#allocation3 + $0x2c0] sm:$0xf]
    %v4471 = vld [vmem:[#allocation3 + $0x2c4] sm:$0xff]
    %v4472 = vld [vmem:[#allocation3 + $0x2cc] sm:$0xf]
    %v4473 = vld [vmem:[#allocation3 + $0x2d0] sm:$0xff]
    %v4474 = vld [vmem:[#allocation3 + $0x2d8] sm:$0xf]
    %v4475 = vld [vmem:[#allocation3 + $0x2dc] sm:$0xff]
    %v4476 = vld [vmem:[#allocation3 + $0x2e4] sm:$0xf]
    %v4477 = vld [vmem:[#allocation3 + $0x2e8] sm:$0xff]
    %v4478 = vld [vmem:[#allocation3 + $0x2f0] sm:$0xf]
    %v4479 = vld [vmem:[#allocation3 + $0x2f4] sm:$0xff]
    %v4480 = vld [vmem:[#allocation3 + $0x2fc] sm:$0xf]
    %v4481 = vld [vmem:[%s4] sm:$0xf]
    %v4482 = vld [vmem:[%s4 + $0x4] sm:$0xf]
    %v4483 = vld [vmem:[%s4 + $0x8] sm:$0xf]
    %v4484 = vld [vmem:[%s4 + $0xc] sm:$0xf]
    %v4485 = vld [vmem:[%s4 + $0x10] sm:$0xf]
    %v4486 = vld [vmem:[%s4 + $0x14] sm:$0xf]
    %v4487 = vld [vmem:[%s4 + $0x18] sm:$0xf]
    %v4488 = vld [vmem:[%s4 + $0x1c] sm:$0xf]
    %v4489 = vld [vmem:[%s4 + $0x20] sm:$0xf]
    %v4490 = vld [vmem:[%s4 + $0x24] sm:$0xf]
    %v4491 = vld [vmem:[%s4 + $0x28] sm:$0xf]
    %v4492 = vld [vmem:[%s4 + $0x2c] sm:$0xf]
    %v4493 = vld [vmem:[%s4 + $0x30] sm:$0xf]
    %v4494 = vld [vmem:[%s4 + $0x34] sm:$0xf]
    %v4495 = vld [vmem:[%s4 + $0x38] sm:$0xf]
    %v4496 = vld [vmem:[%s4 + $0x3c] sm:$0xf]
    %v4497 = vld [vmem:[%s4 + $0x40] sm:$0xf]
    %v4498 = vld [vmem:[%s4 + $0x44] sm:$0xf]
    %v4499 = vld [vmem:[%s4 + $0x48] sm:$0xf]
    %v4500 = vld [vmem:[%s4 + $0x4c] sm:$0xf]
    %v4501 = vld [vmem:[%s4 + $0x50] sm:$0xf]
    %v4502 = vld [vmem:[%s4 + $0x54] sm:$0xf]
    %v4503 = vld [vmem:[%s4 + $0x58] sm:$0xf]
    %v4504 = vld [vmem:[%s4 + $0x5c] sm:$0xf]
    %v4505 = vld [vmem:[%s4 + $0x60] sm:$0xf]
    %v4506 = vld [vmem:[%s4 + $0x64] sm:$0xf]
    %v4507 = vld [vmem:[%s4 + $0x68] sm:$0xf]
    %v4508 = vld [vmem:[%s4 + $0x6c] sm:$0xf]
    %v4509 = vld [vmem:[%s4 + $0x70] sm:$0xf]
    %v4510 = vld [vmem:[%s4 + $0x74] sm:$0xf]
    %v4511 = vld [vmem:[%s4 + $0x78] sm:$0xf]
    %v4512 = vld [vmem:[%s4 + $0x7c] sm:$0xf]
    %v4513 = vld [vmem:[%s4 + $0x80] sm:$0xf]
    %v4514 = vld [vmem:[%s4 + $0x84] sm:$0xf]
    %v4515 = vld [vmem:[%s4 + $0x88] sm:$0xf]
    %v4516 = vld [vmem:[%s4 + $0x8c] sm:$0xf]
    %v4645 = vunpack.c.l.b16 %v4353
    %v4646 = vunpack.c.h.b16 %v4353
    %v4647 = vunpack.c.l.b16 %v4354
    %v4648 = vunpack.c.l.b16 %v4355
    %v4649 = vunpack.c.h.b16 %v4355
    %v4650 = vunpack.c.l.b16 %v4356
    %v4651 = vunpack.c.l.b16 %v4357
    %v4652 = vunpack.c.h.b16 %v4357
    %v4653 = vunpack.c.l.b16 %v4358
    %v4654 = vunpack.c.l.b16 %v4359
    %v4655 = vunpack.c.h.b16 %v4359
    %v4656 = vunpack.c.l.b16 %v4360
    %v4657 = vunpack.c.l.b16 %v4361
    %v4658 = vunpack.c.h.b16 %v4361
    %v4659 = vunpack.c.l.b16 %v4362
    %v4660 = vunpack.c.l.b16 %v4363
    %v4661 = vunpack.c.h.b16 %v4363
    %v4662 = vunpack.c.l.b16 %v4364
    %v4663 = vunpack.c.l.b16 %v4365
    %v4664 = vunpack.c.h.b16 %v4365
    %v4665 = vunpack.c.l.b16 %v4366
    %v4666 = vunpack.c.l.b16 %v4367
    %v4667 = vunpack.c.h.b16 %v4367
    %v4668 = vunpack.c.l.b16 %v4368
    %v4669 = vunpack.c.l.b16 %v4369
    %v4670 = vunpack.c.h.b16 %v4369
    %v4671 = vunpack.c.l.b16 %v4370
    %v4672 = vunpack.c.l.b16 %v4371
    %v4673 = vunpack.c.h.b16 %v4371
    %v4674 = vunpack.c.l.b16 %v4372
    %v4675 = vunpack.c.l.b16 %v4373
    %v4676 = vunpack.c.h.b16 %v4373
    %v4677 = vunpack.c.l.b16 %v4374
    %v4678 = vunpack.c.l.b16 %v4375
    %v4679 = vunpack.c.h.b16 %v4375
    %v4680 = vunpack.c.l.b16 %v4376
    %v4681 = vunpack.c.l.b16 %v4377
    %v4682 = vunpack.c.h.b16 %v4377
    %v4683 = vunpack.c.l.b16 %v4378
    %v4684 = vunpack.c.l.b16 %v4379
    %v4685 = vunpack.c.h.b16 %v4379
    %v4686 = vunpack.c.l.b16 %v4380
    %v4687 = vunpack.c.l.b16 %v4381
    %v4688 = vunpack.c.h.b16 %v4381
    %v4689 = vunpack.c.l.b16 %v4382
    %v4690 = vunpack.c.l.b16 %v4383
    %v4691 = vunpack.c.h.b16 %v4383
    %v4692 = vunpack.c.l.b16 %v4384
    %v4693 = vunpack.c.l.b16 %v4385
    %v4694 = vunpack.c.h.b16 %v4385
    %v4695 = vunpack.c.l.b16 %v4386
    %v4696 = vunpack.c.l.b16 %v4387
    %v4697 = vunpack.c.h.b16 %v4387
    %v4698 = vunpack.c.l.b16 %v4388
    %v4699 = vunpack.c.l.b16 %v4389
    %v4700 = vunpack.c.h.b16 %v4389
    %v4701 = vunpack.c.l.b16 %v4390
    %v4702 = vunpack.c.l.b16 %v4391
    %v4703 = vunpack.c.h.b16 %v4391
    %v4704 = vunpack.c.l.b16 %v4392
    %v4705 = vunpack.c.l.b16 %v4393
    %v4706 = vunpack.c.h.b16 %v4393
    %v4707 = vunpack.c.l.b16 %v4394
    %v4708 = vunpack.c.l.b16 %v4395
    %v4709 = vunpack.c.h.b16 %v4395
    %v4710 = vunpack.c.l.b16 %v4396
    %v4711 = vunpack.c.l.b16 %v4397
    %v4712 = vunpack.c.h.b16 %v4397
    %v4713 = vunpack.c.l.b16 %v4398
    %v4714 = vunpack.c.l.b16 %v4399
    %v4715 = vunpack.c.h.b16 %v4399
    %v4716 = vunpack.c.l.b16 %v4400
    %v4717 = vunpack.c.l.b16 %v4401
    %v4718 = vunpack.c.h.b16 %v4401
    %v4719 = vunpack.c.l.b16 %v4402
    %v4720 = vunpack.c.l.b16 %v4403
    %v4721 = vunpack.c.h.b16 %v4403
    %v4722 = vunpack.c.l.b16 %v4404
    %v4723 = vunpack.c.l.b16 %v4405
    %v4724 = vunpack.c.h.b16 %v4405
    %v4725 = vunpack.c.l.b16 %v4406
    %v4726 = vunpack.c.l.b16 %v4407
    %v4727 = vunpack.c.h.b16 %v4407
    %v4728 = vunpack.c.l.b16 %v4408
    %v4729 = vunpack.c.l.b16 %v4409
    %v4730 = vunpack.c.h.b16 %v4409
    %v4731 = vunpack.c.l.b16 %v4410
    %v4732 = vunpack.c.l.b16 %v4411
    %v4733 = vunpack.c.h.b16 %v4411
    %v4734 = vunpack.c.l.b16 %v4412
    %v4735 = vunpack.c.l.b16 %v4413
    %v4736 = vunpack.c.h.b16 %v4413
    %v4737 = vunpack.c.l.b16 %v4414
    %v4738 = vunpack.c.l.b16 %v4415
    %v4739 = vunpack.c.h.b16 %v4415
    %v4740 = vunpack.c.l.b16 %v4416
    %v4741 = vunpack.c.l.b16 %v4417
    %v4742 = vunpack.c.h.b16 %v4417
    %v4743 = vunpack.c.l.b16 %v4418
    %v4744 = vunpack.c.l.b16 %v4419
    %v4745 = vunpack.c.h.b16 %v4419
    %v4746 = vunpack.c.l.b16 %v4420
    %v4747 = vunpack.c.l.b16 %v4421
    %v4748 = vunpack.c.h.b16 %v4421
    %v4749 = vunpack.c.l.b16 %v4422
    %v4750 = vunpack.c.l.b16 %v4423
    %v4751 = vunpack.c.h.b16 %v4423
    %v4752 = vunpack.c.l.b16 %v4424
    %v4753 = vunpack.c.l.b16 %v4425
    %v4754 = vunpack.c.h.b16 %v4425
    %v4755 = vunpack.c.l.b16 %v4426
    %v4756 = vunpack.c.l.b16 %v4427
    %v4757 = vunpack.c.h.b16 %v4427
    %v4758 = vunpack.c.l.b16 %v4428
    %v4759 = vunpack.c.l.b16 %v4429
    %v4760 = vunpack.c.h.b16 %v4429
    %v4761 = vunpack.c.l.b16 %v4430
    %v4762 = vunpack.c.l.b16 %v4431
    %v4763 = vunpack.c.h.b16 %v4431
    %v4764 = vunpack.c.l.b16 %v4432
    %v4765 = vunpack.c.l.b16 %v4433
    %v4766 = vunpack.c.h.b16 %v4433
    %v4767 = vunpack.c.l.b16 %v4434
    %v4768 = vunpack.c.l.b16 %v4435
    %v4769 = vunpack.c.h.b16 %v4435
    %v4770 = vunpack.c.l.b16 %v4436
    %v4771 = vunpack.c.l.b16 %v4437
    %v4772 = vunpack.c.h.b16 %v4437
    %v4773 = vunpack.c.l.b16 %v4438
    %v4774 = vunpack.c.l.b16 %v4439
    %v4775 = vunpack.c.h.b16 %v4439
    %v4776 = vunpack.c.l.b16 %v4440
    %v4777 = vunpack.c.l.b16 %v4441
    %v4778 = vunpack.c.h.b16 %v4441
    %v4779 = vunpack.c.l.b16 %v4442
    %v4780 = vunpack.c.l.b16 %v4443
    %v4781 = vunpack.c.h.b16 %v4443
    %v4782 = vunpack.c.l.b16 %v4444
    %v4783 = vunpack.c.l.b16 %v4445
    %v4784 = vunpack.c.h.b16 %v4445
    %v4785 = vunpack.c.l.b16 %v4446
    %v4786 = vunpack.c.l.b16 %v4447
    %v4787 = vunpack.c.h.b16 %v4447
    %v4788 = vunpack.c.l.b16 %v4448
    %v4789 = vunpack.c.l.b16 %v4449
    %v4790 = vunpack.c.h.b16 %v4449
    %v4791 = vunpack.c.l.b16 %v4450
    %v4792 = vunpack.c.l.b16 %v4451
    %v4793 = vunpack.c.h.b16 %v4451
    %v4794 = vunpack.c.l.b16 %v4452
    %v4795 = vunpack.c.l.b16 %v4453
    %v4796 = vunpack.c.h.b16 %v4453
    %v4797 = vunpack.c.l.b16 %v4454
    %v4798 = vunpack.c.l.b16 %v4455
    %v4799 = vunpack.c.h.b16 %v4455
    %v4800 = vunpack.c.l.b16 %v4456
    %v4801 = vunpack.c.l.b16 %v4457
    %v4802 = vunpack.c.h.b16 %v4457
    %v4803 = vunpack.c.l.b16 %v4458
    %v4804 = vunpack.c.l.b16 %v4459
    %v4805 = vunpack.c.h.b16 %v4459
    %v4806 = vunpack.c.l.b16 %v4460
    %v4807 = vunpack.c.l.b16 %v4461
    %v4808 = vunpack.c.h.b16 %v4461
    %v4809 = vunpack.c.l.b16 %v4462
    %v4810 = vunpack.c.l.b16 %v4463
    %v4811 = vunpack.c.h.b16 %v4463
    %v4812 = vunpack.c.l.b16 %v4464
    %v4813 = vunpack.c.l.b16 %v4465
    %v4814 = vunpack.c.h.b16 %v4465
    %v4815 = vunpack.c.l.b16 %v4466
    %v4816 = vunpack.c.l.b16 %v4467
    %v4817 = vunpack.c.h.b16 %v4467
    %v4818 = vunpack.c.l.b16 %v4468
    %v4819 = vunpack.c.l.b16 %v4469
    %v4820 = vunpack.c.h.b16 %v4469
    %v4821 = vunpack.c.l.b16 %v4470
    %v4822 = vunpack.c.l.b16 %v4471
    %v4823 = vunpack.c.h.b16 %v4471
    %v4824 = vunpack.c.l.b16 %v4472
    %v4825 = vunpack.c.l.b16 %v4473
    %v4826 = vunpack.c.h.b16 %v4473
    %v4827 = vunpack.c.l.b16 %v4474
    %v4828 = vunpack.c.l.b16 %v4475
    %v4829 = vunpack.c.h.b16 %v4475
    %v4830 = vunpack.c.l.b16 %v4476
    %v4831 = vunpack.c.l.b16 %v4477
    %v4832 = vunpack.c.h.b16 %v4477
    %v4833 = vunpack.c.l.b16 %v4478
    %v4834 = vunpack.c.l.b16 %v4479
    %v4835 = vunpack.c.h.b16 %v4479
    %v4836 = vunpack.c.l.b16 %v4480
    %v4837 = vpack.c.b16 %v4648, %v4645
    %v4838 = vpack.c.b16 %v4649, %v4646
    %v4839 = vpack.c.b16 %v4650, %v4647
    %v4840 = vpack.c.b16 %v4654, %v4651
    %v4841 = vpack.c.b16 %v4655, %v4652
    %v4842 = vpack.c.b16 %v4656, %v4653
    %v4843 = vpack.c.b16 %v4660, %v4657
    %v4844 = vpack.c.b16 %v4661, %v4658
    %v4845 = vpack.c.b16 %v4662, %v4659
    %v4846 = vpack.c.b16 %v4666, %v4663
    %v4847 = vpack.c.b16 %v4667, %v4664
    %v4848 = vpack.c.b16 %v4668, %v4665
    %v4849 = vpack.c.b16 %v4672, %v4669
    %v4850 = vpack.c.b16 %v4673, %v4670
    %v4851 = vpack.c.b16 %v4674, %v4671
    %v4852 = vpack.c.b16 %v4678, %v4675
    %v4853 = vpack.c.b16 %v4679, %v4676
    %v4854 = vpack.c.b16 %v4680, %v4677
    %v4855 = vpack.c.b16 %v4684, %v4681
    %v4856 = vpack.c.b16 %v4685, %v4682
    %v4857 = vpack.c.b16 %v4686, %v4683
    %v4858 = vpack.c.b16 %v4690, %v4687
    %v4859 = vpack.c.b16 %v4691, %v4688
    %v4860 = vpack.c.b16 %v4692, %v4689
    %v4861 = vpack.c.b16 %v4696, %v4693
    %v4862 = vpack.c.b16 %v4697, %v4694
    %v4863 = vpack.c.b16 %v4698, %v4695
    %v4864 = vpack.c.b16 %v4702, %v4699
    %v4865 = vpack.c.b16 %v4703, %v4700
    %v4866 = vpack.c.b16 %v4704, %v4701
    %v4867 = vpack.c.b16 %v4708, %v4705
    %v4868 = vpack.c.b16 %v4709, %v4706
    %v4869 = vpack.c.b16 %v4710, %v4707
    %v4870 = vpack.c.b16 %v4714, %v4711
    %v4871 = vpack.c.b16 %v4715, %v4712
    %v4872 = vpack.c.b16 %v4716, %v4713
    %v4873 = vpack.c.b16 %v4720, %v4717
    %v4874 = vpack.c.b16 %v4721, %v4718
    %v4875 = vpack.c.b16 %v4722, %v4719
    %v4876 = vpack.c.b16 %v4726, %v4723
    %v4877 = vpack.c.b16 %v4727, %v4724
    %v4878 = vpack.c.b16 %v4728, %v4725
    %v4879 = vpack.c.b16 %v4732, %v4729
    %v4880 = vpack.c.b16 %v4733, %v4730
    %v4881 = vpack.c.b16 %v4734, %v4731
    %v4882 = vpack.c.b16 %v4738, %v4735
    %v4883 = vpack.c.b16 %v4739, %v4736
    %v4884 = vpack.c.b16 %v4740, %v4737
    %v4885 = vpack.c.b16 %v4744, %v4741
    %v4886 = vpack.c.b16 %v4745, %v4742
    %v4887 = vpack.c.b16 %v4746, %v4743
    %v4888 = vpack.c.b16 %v4750, %v4747
    %v4889 = vpack.c.b16 %v4751, %v4748
    %v4890 = vpack.c.b16 %v4752, %v4749
    %v4891 = vpack.c.b16 %v4756, %v4753
    %v4892 = vpack.c.b16 %v4757, %v4754
    %v4893 = vpack.c.b16 %v4758, %v4755
    %v4894 = vpack.c.b16 %v4762, %v4759
    %v4895 = vpack.c.b16 %v4763, %v4760
    %v4896 = vpack.c.b16 %v4764, %v4761
    %v4897 = vpack.c.b16 %v4768, %v4765
    %v4898 = vpack.c.b16 %v4769, %v4766
    %v4899 = vpack.c.b16 %v4770, %v4767
    %v4900 = vpack.c.b16 %v4774, %v4771
    %v4901 = vpack.c.b16 %v4775, %v4772
    %v4902 = vpack.c.b16 %v4776, %v4773
    %v4903 = vpack.c.b16 %v4780, %v4777
    %v4904 = vpack.c.b16 %v4781, %v4778
    %v4905 = vpack.c.b16 %v4782, %v4779
    %v4906 = vpack.c.b16 %v4786, %v4783
    %v4907 = vpack.c.b16 %v4787, %v4784
    %v4908 = vpack.c.b16 %v4788, %v4785
    %v4909 = vpack.c.b16 %v4792, %v4789
    %v4910 = vpack.c.b16 %v4793, %v4790
    %v4911 = vpack.c.b16 %v4794, %v4791
    %v4912 = vpack.c.b16 %v4798, %v4795
    %v4913 = vpack.c.b16 %v4799, %v4796
    %v4914 = vpack.c.b16 %v4800, %v4797
    %v4915 = vpack.c.b16 %v4804, %v4801
    %v4916 = vpack.c.b16 %v4805, %v4802
    %v4917 = vpack.c.b16 %v4806, %v4803
    %v4918 = vpack.c.b16 %v4810, %v4807
    %v4919 = vpack.c.b16 %v4811, %v4808
    %v4920 = vpack.c.b16 %v4812, %v4809
    %v4921 = vpack.c.b16 %v4816, %v4813
    %v4922 = vpack.c.b16 %v4817, %v4814
    %v4923 = vpack.c.b16 %v4818, %v4815
    %v4924 = vpack.c.b16 %v4822, %v4819
    %v4925 = vpack.c.b16 %v4823, %v4820
    %v4926 = vpack.c.b16 %v4824, %v4821
    %v4927 = vpack.c.b16 %v4828, %v4825
    %v4928 = vpack.c.b16 %v4829, %v4826
    %v4929 = vpack.c.b16 %v4830, %v4827
    %v4930 = vpack.c.b16 %v4834, %v4831
    %v4931 = vpack.c.b16 %v4835, %v4832
    %v4932 = vpack.c.b16 %v4836, %v4833
    %v5033 = vunpack.c.l.b16 %v4481
    %v5034 = vunpack.c.l.b16 %v4482
    %v5035 = vunpack.c.l.b16 %v4483
    %v5036 = vunpack.c.l.b16 %v4484
    %v5037 = vunpack.c.l.b16 %v4485
    %v5038 = vunpack.c.l.b16 %v4486
    %v5039 = vunpack.c.l.b16 %v4487
    %v5040 = vunpack.c.l.b16 %v4488
    %v5041 = vunpack.c.l.b16 %v4489
    %v5042 = vunpack.c.l.b16 %v4490
    %v5043 = vunpack.c.l.b16 %v4491
    %v5044 = vunpack.c.l.b16 %v4492
    %v5045 = vunpack.c.l.b16 %v4493
    %v5046 = vunpack.c.l.b16 %v4494
    %v5047 = vunpack.c.l.b16 %v4495
    %v5048 = vunpack.c.l.b16 %v4496
    %v5049 = vunpack.c.l.b16 %v4497
    %v5050 = vunpack.c.l.b16 %v4498
    %v5051 = vunpack.c.l.b16 %v4499
    %v5052 = vunpack.c.l.b16 %v4500
    %v5053 = vunpack.c.l.b16 %v4501
    %v5054 = vunpack.c.l.b16 %v4502
    %v5055 = vunpack.c.l.b16 %v4503
    %v5056 = vunpack.c.l.b16 %v4504
    %v5057 = vunpack.c.l.b16 %v4505
    %v5058 = vunpack.c.l.b16 %v4506
    %v5059 = vunpack.c.l.b16 %v4507
    %v5060 = vunpack.c.l.b16 %v4508
    %v5061 = vunpack.c.l.b16 %v4509
    %v5062 = vunpack.c.l.b16 %v4510
    %v5063 = vunpack.c.l.b16 %v4511
    %v5064 = vunpack.c.l.b16 %v4512
    %v5065 = vunpack.c.l.b16 %v4513
    %v5066 = vunpack.c.l.b16 %v4514
    %v5067 = vunpack.c.l.b16 %v4515
    %v5068 = vunpack.c.l.b16 %v4516
    %v5069 = vpack.c.b16 %v5034, %v5033
    %v5070 = vpack.c.b16 %v5036, %v5035
    %v5071 = vpack.c.b16 %v5038, %v5037
    %v5072 = vpack.c.b16 %v5040, %v5039
    %v5073 = vpack.c.b16 %v5042, %v5041
    %v5074 = vpack.c.b16 %v5044, %v5043
    %v5075 = vpack.c.b16 %v5046, %v5045
    %v5076 = vpack.c.b16 %v5048, %v5047
    %v5077 = vpack.c.b16 %v5050, %v5049
    %v5078 = vpack.c.b16 %v5052, %v5051
    %v5079 = vpack.c.b16 %v5054, %v5053
    %v5080 = vpack.c.b16 %v5056, %v5055
    %v5081 = vpack.c.b16 %v5058, %v5057
    %v5082 = vpack.c.b16 %v5060, %v5059
    %v5083 = vpack.c.b16 %v5062, %v5061
    %v5084 = vpack.c.b16 %v5064, %v5063
    %v5085 = vpack.c.b16 %v5066, %v5065
    %v5086 = vpack.c.b16 %v5068, %v5067
    %v5106 = vsel %vm382, %v4839, 0
    %v5109 = vsel %vm382, %v4842, 0
    %v5112 = vsel %vm382, %v4845, 0
    %v5115 = vsel %vm382, %v4848, 0
    %v5118 = vsel %vm382, %v4851, 0
    %v5121 = vsel %vm382, %v4854, 0
    %v5124 = vsel %vm382, %v4857, 0
    %v5127 = vsel %vm382, %v4860, 0
    %v5130 = vsel %vm382, %v4863, 0
    %v5133 = vsel %vm382, %v4866, 0
    %v5136 = vsel %vm382, %v4869, 0
    %v5139 = vsel %vm382, %v4872, 0
    %v5142 = vsel %vm382, %v4875, 0
    %v5145 = vsel %vm382, %v4878, 0
    %v5148 = vsel %vm382, %v4881, 0
    %v5151 = vsel %vm382, %v4884, 0
    %v5154 = vsel %vm382, %v4887, 0
    %v5157 = vsel %vm382, %v4890, 0
    %v5160 = vsel %vm382, %v4893, 0
    %v5163 = vsel %vm382, %v4896, 0
    %v5166 = vsel %vm382, %v4899, 0
    %v5169 = vsel %vm382, %v4902, 0
    %v5172 = vsel %vm382, %v4905, 0
    %v5175 = vsel %vm382, %v4908, 0
    %v5178 = vsel %vm382, %v4911, 0
    %v5181 = vsel %vm382, %v4914, 0
    %v5184 = vsel %vm382, %v4917, 0
    %v5187 = vsel %vm382, %v4920, 0
    %v5190 = vsel %vm382, %v4923, 0
    %v5193 = vsel %vm382, %v4926, 0
    %v5196 = vsel %vm382, %v4929, 0
    %v5199 = vsel %vm382, %v4932, 0
    %5201 = vmatpush.bf16.msra.mxu0 %v5076
    %5202 = vmatpush.bf16.msra.mxu0 %v5075
    %5203 = vmatpush.bf16.msra.mxu0 %v5074
    %5204 = vmatpush.bf16.msra.mxu0 %v5073
    %5205 = vmatpush.bf16.msra.mxu0 %v5072
    %5206 = vmatpush.bf16.msra.mxu0 %v5071
    %5207 = vmatpush.bf16.msra.mxu0 %v5070
    %5208 = vmatpush.bf16.msra.mxu0 %v5069
    %5209 = vmatmul.bf16.gmra.mxu0 %v4837
    %v5210 = vpop.f32.mrf.mxu0
    %v5211 = vadd.f32 0.0, %v5210
    %v5212 = vpop.f32.mrf.mxu0
    %v5213 = vadd.f32 0.0, %v5212
    %5214 = vmatmul.bf16.gmra.mxu0 %v4840
    %v5215 = vpop.f32.mrf.mxu0
    %v5216 = vadd.f32 0.0, %v5215
    %v5217 = vpop.f32.mrf.mxu0
    %v5218 = vadd.f32 0.0, %v5217
    %5219 = vmatmul.bf16.gmra.mxu0 %v4843
    %v5220 = vpop.f32.mrf.mxu0
    %v5221 = vadd.f32 0.0, %v5220
    %v5222 = vpop.f32.mrf.mxu0
    %v5223 = vadd.f32 0.0, %v5222
    %5224 = vmatmul.bf16.gmra.mxu0 %v4846
    %v5225 = vpop.f32.mrf.mxu0
    %v5226 = vadd.f32 0.0, %v5225
    %v5227 = vpop.f32.mrf.mxu0
    %v5228 = vadd.f32 0.0, %v5227
    %5229 = vmatmul.bf16.gmra.mxu0 %v4849
    %v5230 = vpop.f32.mrf.mxu0
    %v5231 = vadd.f32 0.0, %v5230
    %v5232 = vpop.f32.mrf.mxu0
    %v5233 = vadd.f32 0.0, %v5232
    %5234 = vmatmul.bf16.gmra.mxu0 %v4852
    %v5235 = vpop.f32.mrf.mxu0
    %v5236 = vadd.f32 0.0, %v5235
    %v5237 = vpop.f32.mrf.mxu0
    %v5238 = vadd.f32 0.0, %v5237
    %5239 = vmatmul.bf16.gmra.mxu0 %v4855
    %v5240 = vpop.f32.mrf.mxu0
    %v5241 = vadd.f32 0.0, %v5240
    %v5242 = vpop.f32.mrf.mxu0
    %v5243 = vadd.f32 0.0, %v5242
    %5244 = vmatmul.bf16.gmra.mxu0 %v4858
    %v5245 = vpop.f32.mrf.mxu0
    %v5246 = vadd.f32 0.0, %v5245
    %v5247 = vpop.f32.mrf.mxu0
    %v5248 = vadd.f32 0.0, %v5247
    %5249 = vmatmul.bf16.gmra.mxu0 %v4861
    %v5250 = vpop.f32.mrf.mxu0
    %v5251 = vadd.f32 0.0, %v5250
    %v5252 = vpop.f32.mrf.mxu0
    %v5253 = vadd.f32 0.0, %v5252
    %5254 = vmatmul.bf16.gmra.mxu0 %v4864
    %v5255 = vpop.f32.mrf.mxu0
    %v5256 = vadd.f32 0.0, %v5255
    %v5257 = vpop.f32.mrf.mxu0
    %v5258 = vadd.f32 0.0, %v5257
    %5259 = vmatmul.bf16.gmra.mxu0 %v4867
    %v5260 = vpop.f32.mrf.mxu0
    %v5261 = vadd.f32 0.0, %v5260
    %v5262 = vpop.f32.mrf.mxu0
    %v5263 = vadd.f32 0.0, %v5262
    %5264 = vmatmul.bf16.gmra.mxu0 %v4870
    %v5265 = vpop.f32.mrf.mxu0
    %v5266 = vadd.f32 0.0, %v5265
    %v5267 = vpop.f32.mrf.mxu0
    %v5268 = vadd.f32 0.0, %v5267
    %5269 = vmatmul.bf16.gmra.mxu0 %v4873
    %v5270 = vpop.f32.mrf.mxu0
    %v5271 = vadd.f32 0.0, %v5270
    %v5272 = vpop.f32.mrf.mxu0
    %v5273 = vadd.f32 0.0, %v5272
    %5274 = vmatmul.bf16.gmra.mxu0 %v4876
    %v5275 = vpop.f32.mrf.mxu0
    %v5276 = vadd.f32 0.0, %v5275
    %v5277 = vpop.f32.mrf.mxu0
    %v5278 = vadd.f32 0.0, %v5277
    %5279 = vmatmul.bf16.gmra.mxu0 %v4879
    %v5280 = vpop.f32.mrf.mxu0
    %v5281 = vadd.f32 0.0, %v5280
    %v5282 = vpop.f32.mrf.mxu0
    %v5283 = vadd.f32 0.0, %v5282
    %5284 = vmatmul.bf16.gmra.mxu0 %v4882
    %v5285 = vpop.f32.mrf.mxu0
    %v5286 = vadd.f32 0.0, %v5285
    %v5287 = vpop.f32.mrf.mxu0
    %v5288 = vadd.f32 0.0, %v5287
    %5289 = vmatmul.bf16.gmra.mxu0 %v4885
    %v5290 = vpop.f32.mrf.mxu0
    %v5291 = vadd.f32 0.0, %v5290
    %v5292 = vpop.f32.mrf.mxu0
    %v5293 = vadd.f32 0.0, %v5292
    %5294 = vmatmul.bf16.gmra.mxu0 %v4888
    %v5295 = vpop.f32.mrf.mxu0
    %v5296 = vadd.f32 0.0, %v5295
    %v5297 = vpop.f32.mrf.mxu0
    %v5298 = vadd.f32 0.0, %v5297
    %5299 = vmatmul.bf16.gmra.mxu0 %v4891
    %v5300 = vpop.f32.mrf.mxu0
    %v5301 = vadd.f32 0.0, %v5300
    %v5302 = vpop.f32.mrf.mxu0
    %v5303 = vadd.f32 0.0, %v5302
    %5304 = vmatmul.bf16.gmra.mxu0 %v4894
    %v5305 = vpop.f32.mrf.mxu0
    %v5306 = vadd.f32 0.0, %v5305
    %v5307 = vpop.f32.mrf.mxu0
    %v5308 = vadd.f32 0.0, %v5307
    %5309 = vmatmul.bf16.gmra.mxu0 %v4897
    %v5310 = vpop.f32.mrf.mxu0
    %v5311 = vadd.f32 0.0, %v5310
    %v5312 = vpop.f32.mrf.mxu0
    %v5313 = vadd.f32 0.0, %v5312
    %5314 = vmatmul.bf16.gmra.mxu0 %v4900
    %v5315 = vpop.f32.mrf.mxu0
    %v5316 = vadd.f32 0.0, %v5315
    %v5317 = vpop.f32.mrf.mxu0
    %v5318 = vadd.f32 0.0, %v5317
    %5319 = vmatmul.bf16.gmra.mxu0 %v4903
    %v5320 = vpop.f32.mrf.mxu0
    %v5321 = vadd.f32 0.0, %v5320
    %v5322 = vpop.f32.mrf.mxu0
    %v5323 = vadd.f32 0.0, %v5322
    %5324 = vmatmul.bf16.gmra.mxu0 %v4906
    %v5325 = vpop.f32.mrf.mxu0
    %v5326 = vadd.f32 0.0, %v5325
    %v5327 = vpop.f32.mrf.mxu0
    %v5328 = vadd.f32 0.0, %v5327
    %5329 = vmatmul.bf16.gmra.mxu0 %v4909
    %v5330 = vpop.f32.mrf.mxu0
    %v5331 = vadd.f32 0.0, %v5330
    %v5332 = vpop.f32.mrf.mxu0
    %v5333 = vadd.f32 0.0, %v5332
    %5334 = vmatmul.bf16.gmra.mxu0 %v4912
    %v5335 = vpop.f32.mrf.mxu0
    %v5336 = vadd.f32 0.0, %v5335
    %v5337 = vpop.f32.mrf.mxu0
    %v5338 = vadd.f32 0.0, %v5337
    %5339 = vmatmul.bf16.gmra.mxu0 %v4915
    %v5340 = vpop.f32.mrf.mxu0
    %v5341 = vadd.f32 0.0, %v5340
    %v5342 = vpop.f32.mrf.mxu0
    %v5343 = vadd.f32 0.0, %v5342
    %5344 = vmatmul.bf16.gmra.mxu0 %v4918
    %v5345 = vpop.f32.mrf.mxu0
    %v5346 = vadd.f32 0.0, %v5345
    %v5347 = vpop.f32.mrf.mxu0
    %v5348 = vadd.f32 0.0, %v5347
    %5349 = vmatmul.bf16.gmra.mxu0 %v4921
    %v5350 = vpop.f32.mrf.mxu0
    %v5351 = vadd.f32 0.0, %v5350
    %v5352 = vpop.f32.mrf.mxu0
    %v5353 = vadd.f32 0.0, %v5352
    %5354 = vmatmul.bf16.gmra.mxu0 %v4924
    %v5355 = vpop.f32.mrf.mxu0
    %v5356 = vadd.f32 0.0, %v5355
    %v5357 = vpop.f32.mrf.mxu0
    %v5358 = vadd.f32 0.0, %v5357
    %5359 = vmatmul.bf16.gmra.mxu0 %v4927
    %v5360 = vpop.f32.mrf.mxu0
    %v5361 = vadd.f32 0.0, %v5360
    %v5362 = vpop.f32.mrf.mxu0
    %v5363 = vadd.f32 0.0, %v5362
    %5364 = vmatmul.bf16.gmra.mxu0 %v4930
    %v5365 = vpop.f32.mrf.mxu0
    %v5366 = vadd.f32 0.0, %v5365
    %v5367 = vpop.f32.mrf.mxu0
    %v5368 = vadd.f32 0.0, %v5367
    %5369 = vdwg.mxu0
    %5370 = vmatpush.bf16.msra.mxu0 %v5084
    %5371 = vmatpush.bf16.msra.mxu0 %v5083
    %5372 = vmatpush.bf16.msra.mxu0 %v5082
    %5373 = vmatpush.bf16.msra.mxu0 %v5081
    %5374 = vmatpush.bf16.msra.mxu0 %v5080
    %5375 = vmatpush.bf16.msra.mxu0 %v5079
    %5376 = vmatpush.bf16.msra.mxu0 %v5078
    %5377 = vmatpush.bf16.msra.mxu0 %v5077
    %5378 = vmatmul.bf16.gmra.mxu0 %v4838
    %v5379 = vpop.f32.mrf.mxu0
    %v5380 = vadd.f32 %v5211, %v5379
    %v5381 = vpop.f32.mrf.mxu0
    %v5382 = vadd.f32 %v5213, %v5381
    %5383 = vmatmul.bf16.gmra.mxu0 %v4841
    %v5384 = vpop.f32.mrf.mxu0
    %v5385 = vadd.f32 %v5216, %v5384
    %v5386 = vpop.f32.mrf.mxu0
    %v5387 = vadd.f32 %v5218, %v5386
    %5388 = vmatmul.bf16.gmra.mxu0 %v4844
    %v5389 = vpop.f32.mrf.mxu0
    %v5390 = vadd.f32 %v5221, %v5389
    %v5391 = vpop.f32.mrf.mxu0
    %v5392 = vadd.f32 %v5223, %v5391
    %5393 = vmatmul.bf16.gmra.mxu0 %v4847
    %v5394 = vpop.f32.mrf.mxu0
    %v5395 = vadd.f32 %v5226, %v5394
    %v5396 = vpop.f32.mrf.mxu0
    %v5397 = vadd.f32 %v5228, %v5396
    %5398 = vmatmul.bf16.gmra.mxu0 %v4850
    %v5399 = vpop.f32.mrf.mxu0
    %v5400 = vadd.f32 %v5231, %v5399
    %v5401 = vpop.f32.mrf.mxu0
    %v5402 = vadd.f32 %v5233, %v5401
    %5403 = vmatmul.bf16.gmra.mxu0 %v4853
    %v5404 = vpop.f32.mrf.mxu0
    %v5405 = vadd.f32 %v5236, %v5404
    %v5406 = vpop.f32.mrf.mxu0
    %v5407 = vadd.f32 %v5238, %v5406
    %5408 = vmatmul.bf16.gmra.mxu0 %v4856
    %v5409 = vpop.f32.mrf.mxu0
    %v5410 = vadd.f32 %v5241, %v5409
    %v5411 = vpop.f32.mrf.mxu0
    %v5412 = vadd.f32 %v5243, %v5411
    %5413 = vmatmul.bf16.gmra.mxu0 %v4859
    %v5414 = vpop.f32.mrf.mxu0
    %v5415 = vadd.f32 %v5246, %v5414
    %v5416 = vpop.f32.mrf.mxu0
    %v5417 = vadd.f32 %v5248, %v5416
    %5418 = vmatmul.bf16.gmra.mxu0 %v4862
    %v5419 = vpop.f32.mrf.mxu0
    %v5420 = vadd.f32 %v5251, %v5419
    %v5421 = vpop.f32.mrf.mxu0
    %v5422 = vadd.f32 %v5253, %v5421
    %5423 = vmatmul.bf16.gmra.mxu0 %v4865
    %v5424 = vpop.f32.mrf.mxu0
    %v5425 = vadd.f32 %v5256, %v5424
    %v5426 = vpop.f32.mrf.mxu0
    %v5427 = vadd.f32 %v5258, %v5426
    %5428 = vmatmul.bf16.gmra.mxu0 %v4868
    %v5429 = vpop.f32.mrf.mxu0
    %v5430 = vadd.f32 %v5261, %v5429
    %v5431 = vpop.f32.mrf.mxu0
    %v5432 = vadd.f32 %v5263, %v5431
    %5433 = vmatmul.bf16.gmra.mxu0 %v4871
    %v5434 = vpop.f32.mrf.mxu0
    %v5435 = vadd.f32 %v5266, %v5434
    %v5436 = vpop.f32.mrf.mxu0
    %v5437 = vadd.f32 %v5268, %v5436
    %5438 = vmatmul.bf16.gmra.mxu0 %v4874
    %v5439 = vpop.f32.mrf.mxu0
    %v5440 = vadd.f32 %v5271, %v5439
    %v5441 = vpop.f32.mrf.mxu0
    %v5442 = vadd.f32 %v5273, %v5441
    %5443 = vmatmul.bf16.gmra.mxu0 %v4877
    %v5444 = vpop.f32.mrf.mxu0
    %v5445 = vadd.f32 %v5276, %v5444
    %v5446 = vpop.f32.mrf.mxu0
    %v5447 = vadd.f32 %v5278, %v5446
    %5448 = vmatmul.bf16.gmra.mxu0 %v4880
    %v5449 = vpop.f32.mrf.mxu0
    %v5450 = vadd.f32 %v5281, %v5449
    %v5451 = vpop.f32.mrf.mxu0
    %v5452 = vadd.f32 %v5283, %v5451
    %5453 = vmatmul.bf16.gmra.mxu0 %v4883
    %v5454 = vpop.f32.mrf.mxu0
    %v5455 = vadd.f32 %v5286, %v5454
    %v5456 = vpop.f32.mrf.mxu0
    %v5457 = vadd.f32 %v5288, %v5456
    %5458 = vmatmul.bf16.gmra.mxu0 %v4886
    %v5459 = vpop.f32.mrf.mxu0
    %v5460 = vadd.f32 %v5291, %v5459
    %v5461 = vpop.f32.mrf.mxu0
    %v5462 = vadd.f32 %v5293, %v5461
    %5463 = vmatmul.bf16.gmra.mxu0 %v4889
    %v5464 = vpop.f32.mrf.mxu0
    %v5465 = vadd.f32 %v5296, %v5464
    %v5466 = vpop.f32.mrf.mxu0
    %v5467 = vadd.f32 %v5298, %v5466
    %5468 = vmatmul.bf16.gmra.mxu0 %v4892
    %v5469 = vpop.f32.mrf.mxu0
    %v5470 = vadd.f32 %v5301, %v5469
    %v5471 = vpop.f32.mrf.mxu0
    %v5472 = vadd.f32 %v5303, %v5471
    %5473 = vmatmul.bf16.gmra.mxu0 %v4895
    %v5474 = vpop.f32.mrf.mxu0
    %v5475 = vadd.f32 %v5306, %v5474
    %v5476 = vpop.f32.mrf.mxu0
    %v5477 = vadd.f32 %v5308, %v5476
    %5478 = vmatmul.bf16.gmra.mxu0 %v4898
    %v5479 = vpop.f32.mrf.mxu0
    %v5480 = vadd.f32 %v5311, %v5479
    %v5481 = vpop.f32.mrf.mxu0
    %v5482 = vadd.f32 %v5313, %v5481
    %5483 = vmatmul.bf16.gmra.mxu0 %v4901
    %v5484 = vpop.f32.mrf.mxu0
    %v5485 = vadd.f32 %v5316, %v5484
    %v5486 = vpop.f32.mrf.mxu0
    %v5487 = vadd.f32 %v5318, %v5486
    %5488 = vmatmul.bf16.gmra.mxu0 %v4904
    %v5489 = vpop.f32.mrf.mxu0
    %v5490 = vadd.f32 %v5321, %v5489
    %v5491 = vpop.f32.mrf.mxu0
    %v5492 = vadd.f32 %v5323, %v5491
    %5493 = vmatmul.bf16.gmra.mxu0 %v4907
    %v5494 = vpop.f32.mrf.mxu0
    %v5495 = vadd.f32 %v5326, %v5494
    %v5496 = vpop.f32.mrf.mxu0
    %v5497 = vadd.f32 %v5328, %v5496
    %5498 = vmatmul.bf16.gmra.mxu0 %v4910
    %v5499 = vpop.f32.mrf.mxu0
    %v5500 = vadd.f32 %v5331, %v5499
    %v5501 = vpop.f32.mrf.mxu0
    %v5502 = vadd.f32 %v5333, %v5501
    %5503 = vmatmul.bf16.gmra.mxu0 %v4913
    %v5504 = vpop.f32.mrf.mxu0
    %v5505 = vadd.f32 %v5336, %v5504
    %v5506 = vpop.f32.mrf.mxu0
    %v5507 = vadd.f32 %v5338, %v5506
    %5508 = vmatmul.bf16.gmra.mxu0 %v4916
    %v5509 = vpop.f32.mrf.mxu0
    %v5510 = vadd.f32 %v5341, %v5509
    %v5511 = vpop.f32.mrf.mxu0
    %v5512 = vadd.f32 %v5343, %v5511
    %5513 = vmatmul.bf16.gmra.mxu0 %v4919
    %v5514 = vpop.f32.mrf.mxu0
    %v5515 = vadd.f32 %v5346, %v5514
    %v5516 = vpop.f32.mrf.mxu0
    %v5517 = vadd.f32 %v5348, %v5516
    %5518 = vmatmul.bf16.gmra.mxu0 %v4922
    %v5519 = vpop.f32.mrf.mxu0
    %v5520 = vadd.f32 %v5351, %v5519
    %v5521 = vpop.f32.mrf.mxu0
    %v5522 = vadd.f32 %v5353, %v5521
    %5523 = vmatmul.bf16.gmra.mxu0 %v4925
    %v5524 = vpop.f32.mrf.mxu0
    %v5525 = vadd.f32 %v5356, %v5524
    %v5526 = vpop.f32.mrf.mxu0
    %v5527 = vadd.f32 %v5358, %v5526
    %5528 = vmatmul.bf16.gmra.mxu0 %v4928
    %v5529 = vpop.f32.mrf.mxu0
    %v5530 = vadd.f32 %v5361, %v5529
    %v5531 = vpop.f32.mrf.mxu0
    %v5532 = vadd.f32 %v5363, %v5531
    %5533 = vmatmul.bf16.gmra.mxu0 %v4931
    %v5534 = vpop.f32.mrf.mxu0
    %v5535 = vadd.f32 %v5366, %v5534
    %v5536 = vpop.f32.mrf.mxu0
    %v5537 = vadd.f32 %v5368, %v5536
    %5538 = vdwg.mxu0
    %5539 = vmatpush.bf16.msra.mxu0 0
    %5540 = vmatpush.bf16.msra.mxu0 0
    %5541 = vmatpush.bf16.msra.mxu0 0
    %5542 = vmatpush.bf16.msra.mxu0 0
    %5543 = vmatpush.bf16.msra.mxu0 0
    %5544 = vmatpush.bf16.msra.mxu0 0
    %5545 = vmatpush.bf16.msra.mxu0 %v5086
    %5546 = vmatpush.bf16.msra.mxu0 %v5085
    %5547 = vmatmul.bf16.gmra.mxu0 %v5106
    %v5548 = vpop.f32.mrf.mxu0
    %v5549 = vadd.f32 %v5380, %v5548
    %v5550 = vpop.f32.mrf.mxu0
    %v5551 = vadd.f32 %v5382, %v5550
    %5552 = vmatmul.bf16.gmra.mxu0 %v5109
    %v5553 = vpop.f32.mrf.mxu0
    %v5554 = vadd.f32 %v5385, %v5553
    %v5555 = vpop.f32.mrf.mxu0
    %v5556 = vadd.f32 %v5387, %v5555
    %5557 = vmatmul.bf16.gmra.mxu0 %v5112
    %v5558 = vpop.f32.mrf.mxu0
    %v5559 = vadd.f32 %v5390, %v5558
    %v5560 = vpop.f32.mrf.mxu0
    %v5561 = vadd.f32 %v5392, %v5560
    %5562 = vmatmul.bf16.gmra.mxu0 %v5115
    %v5563 = vpop.f32.mrf.mxu0
    %v5564 = vadd.f32 %v5395, %v5563
    %v5565 = vpop.f32.mrf.mxu0
    %v5566 = vadd.f32 %v5397, %v5565
    %5567 = vmatmul.bf16.gmra.mxu0 %v5118
    %v5568 = vpop.f32.mrf.mxu0
    %v5569 = vadd.f32 %v5400, %v5568
    %v5570 = vpop.f32.mrf.mxu0
    %v5571 = vadd.f32 %v5402, %v5570
    %5572 = vmatmul.bf16.gmra.mxu0 %v5121
    %v5573 = vpop.f32.mrf.mxu0
    %v5574 = vadd.f32 %v5405, %v5573
    %v5575 = vpop.f32.mrf.mxu0
    %v5576 = vadd.f32 %v5407, %v5575
    %5577 = vmatmul.bf16.gmra.mxu0 %v5124
    %v5578 = vpop.f32.mrf.mxu0
    %v5579 = vadd.f32 %v5410, %v5578
    %v5580 = vpop.f32.mrf.mxu0
    %v5581 = vadd.f32 %v5412, %v5580
    %5582 = vmatmul.bf16.gmra.mxu0 %v5127
    %v5583 = vpop.f32.mrf.mxu0
    %v5584 = vadd.f32 %v5415, %v5583
    %v5585 = vpop.f32.mrf.mxu0
    %v5586 = vadd.f32 %v5417, %v5585
    %5587 = vmatmul.bf16.gmra.mxu0 %v5130
    %v5588 = vpop.f32.mrf.mxu0
    %v5589 = vadd.f32 %v5420, %v5588
    %v5590 = vpop.f32.mrf.mxu0
    %v5591 = vadd.f32 %v5422, %v5590
    %5592 = vmatmul.bf16.gmra.mxu0 %v5133
    %v5593 = vpop.f32.mrf.mxu0
    %v5594 = vadd.f32 %v5425, %v5593
    %v5595 = vpop.f32.mrf.mxu0
    %v5596 = vadd.f32 %v5427, %v5595
    %5597 = vmatmul.bf16.gmra.mxu0 %v5136
    %v5598 = vpop.f32.mrf.mxu0
    %v5599 = vadd.f32 %v5430, %v5598
    %v5600 = vpop.f32.mrf.mxu0
    %v5601 = vadd.f32 %v5432, %v5600
    %5602 = vmatmul.bf16.gmra.mxu0 %v5139
    %v5603 = vpop.f32.mrf.mxu0
    %v5604 = vadd.f32 %v5435, %v5603
    %v5605 = vpop.f32.mrf.mxu0
    %v5606 = vadd.f32 %v5437, %v5605
    %5607 = vmatmul.bf16.gmra.mxu0 %v5142
    %v5608 = vpop.f32.mrf.mxu0
    %v5609 = vadd.f32 %v5440, %v5608
    %v5610 = vpop.f32.mrf.mxu0
    %v5611 = vadd.f32 %v5442, %v5610
    %5612 = vmatmul.bf16.gmra.mxu0 %v5145
    %v5613 = vpop.f32.mrf.mxu0
    %v5614 = vadd.f32 %v5445, %v5613
    %v5615 = vpop.f32.mrf.mxu0
    %v5616 = vadd.f32 %v5447, %v5615
    %5617 = vmatmul.bf16.gmra.mxu0 %v5148
    %v5618 = vpop.f32.mrf.mxu0
    %v5619 = vadd.f32 %v5450, %v5618
    %v5620 = vpop.f32.mrf.mxu0
    %v5621 = vadd.f32 %v5452, %v5620
    %5622 = vmatmul.bf16.gmra.mxu0 %v5151
    %v5623 = vpop.f32.mrf.mxu0
    %v5624 = vadd.f32 %v5455, %v5623
    %v5625 = vpop.f32.mrf.mxu0
    %v5626 = vadd.f32 %v5457, %v5625
    %5627 = vmatmul.bf16.gmra.mxu0 %v5154
    %v5628 = vpop.f32.mrf.mxu0
    %v5629 = vadd.f32 %v5460, %v5628
    %v5630 = vpop.f32.mrf.mxu0
    %v5631 = vadd.f32 %v5462, %v5630
    %5632 = vmatmul.bf16.gmra.mxu0 %v5157
    %v5633 = vpop.f32.mrf.mxu0
    %v5634 = vadd.f32 %v5465, %v5633
    %v5635 = vpop.f32.mrf.mxu0
    %v5636 = vadd.f32 %v5467, %v5635
    %5637 = vmatmul.bf16.gmra.mxu0 %v5160
    %v5638 = vpop.f32.mrf.mxu0
    %v5639 = vadd.f32 %v5470, %v5638
    %v5640 = vpop.f32.mrf.mxu0
    %v5641 = vadd.f32 %v5472, %v5640
    %5642 = vmatmul.bf16.gmra.mxu0 %v5163
    %v5643 = vpop.f32.mrf.mxu0
    %v5644 = vadd.f32 %v5475, %v5643
    %v5645 = vpop.f32.mrf.mxu0
    %v5646 = vadd.f32 %v5477, %v5645
    %5647 = vmatmul.bf16.gmra.mxu0 %v5166
    %v5648 = vpop.f32.mrf.mxu0
    %v5649 = vadd.f32 %v5480, %v5648
    %v5650 = vpop.f32.mrf.mxu0
    %v5651 = vadd.f32 %v5482, %v5650
    %5652 = vmatmul.bf16.gmra.mxu0 %v5169
    %v5653 = vpop.f32.mrf.mxu0
    %v5654 = vadd.f32 %v5485, %v5653
    %v5655 = vpop.f32.mrf.mxu0
    %v5656 = vadd.f32 %v5487, %v5655
    %5657 = vmatmul.bf16.gmra.mxu0 %v5172
    %v5658 = vpop.f32.mrf.mxu0
    %v5659 = vadd.f32 %v5490, %v5658
    %v5660 = vpop.f32.mrf.mxu0
    %v5661 = vadd.f32 %v5492, %v5660
    %5662 = vmatmul.bf16.gmra.mxu0 %v5175
    %v5663 = vpop.f32.mrf.mxu0
    %v5664 = vadd.f32 %v5495, %v5663
    %v5665 = vpop.f32.mrf.mxu0
    %v5666 = vadd.f32 %v5497, %v5665
    %5667 = vmatmul.bf16.gmra.mxu0 %v5178
    %v5668 = vpop.f32.mrf.mxu0
    %v5669 = vadd.f32 %v5500, %v5668
    %v5670 = vpop.f32.mrf.mxu0
    %v5671 = vadd.f32 %v5502, %v5670
    %5672 = vmatmul.bf16.gmra.mxu0 %v5181
    %v5673 = vpop.f32.mrf.mxu0
    %v5674 = vadd.f32 %v5505, %v5673
    %v5675 = vpop.f32.mrf.mxu0
    %v5676 = vadd.f32 %v5507, %v5675
    %5677 = vmatmul.bf16.gmra.mxu0 %v5184
    %v5678 = vpop.f32.mrf.mxu0
    %v5679 = vadd.f32 %v5510, %v5678
    %v5680 = vpop.f32.mrf.mxu0
    %v5681 = vadd.f32 %v5512, %v5680
    %5682 = vmatmul.bf16.gmra.mxu0 %v5187
    %v5683 = vpop.f32.mrf.mxu0
    %v5684 = vadd.f32 %v5515, %v5683
    %v5685 = vpop.f32.mrf.mxu0
    %v5686 = vadd.f32 %v5517, %v5685
    %5687 = vmatmul.bf16.gmra.mxu0 %v5190
    %v5688 = vpop.f32.mrf.mxu0
    %v5689 = vadd.f32 %v5520, %v5688
    %v5690 = vpop.f32.mrf.mxu0
    %v5691 = vadd.f32 %v5522, %v5690
    %5692 = vmatmul.bf16.gmra.mxu0 %v5193
    %v5693 = vpop.f32.mrf.mxu0
    %v5694 = vadd.f32 %v5525, %v5693
    %v5695 = vpop.f32.mrf.mxu0
    %v5696 = vadd.f32 %v5527, %v5695
    %5697 = vmatmul.bf16.gmra.mxu0 %v5196
    %v5698 = vpop.f32.mrf.mxu0
    %v5699 = vadd.f32 %v5530, %v5698
    %v5700 = vpop.f32.mrf.mxu0
    %v5701 = vadd.f32 %v5532, %v5700
    %5702 = vmatmul.bf16.gmra.mxu0 %v5199
    %v5703 = vpop.f32.mrf.mxu0
    %v5704 = vadd.f32 %v5535, %v5703
    %v5705 = vpop.f32.mrf.mxu0
    %v5706 = vadd.f32 %v5537, %v5705
    %5707 = vdwg.mxu0
    %v5708 = vsel %vm382, %v5549, 0.0
    %v5709 = vsel %vm382, %v5551, 0.0
    %v5710 = vadd.f32 %v5708, %v5709
    %v5711 = vsel %vm382, %v5554, 0.0
    %v5712 = vadd.f32 %v5710, %v5711
    %v5713 = vsel %vm382, %v5556, 0.0
    %v5714 = vadd.f32 %v5712, %v5713
    %v5715 = vsel %vm382, %v5559, 0.0
    %v5716 = vadd.f32 %v5714, %v5715
    %v5717 = vsel %vm382, %v5561, 0.0
    %v5718 = vadd.f32 %v5716, %v5717
    %v5719 = vsel %vm382, %v5564, 0.0
    %v5720 = vadd.f32 %v5718, %v5719
    %v5721 = vsel %vm382, %v5566, 0.0
    %v5722 = vadd.f32 %v5720, %v5721
    %v5723 = vsel %vm382, %v5569, 0.0
    %v5724 = vadd.f32 %v5722, %v5723
    %v5725 = vsel %vm382, %v5571, 0.0
    %v5726 = vadd.f32 %v5724, %v5725
    %v5727 = vsel %vm382, %v5574, 0.0
    %v5728 = vadd.f32 %v5726, %v5727
    %v5729 = vsel %vm382, %v5576, 0.0
    %v5730 = vadd.f32 %v5728, %v5729
    %v5731 = vsel %vm382, %v5579, 0.0
    %v5732 = vadd.f32 %v5730, %v5731
    %v5733 = vsel %vm382, %v5581, 0.0
    %v5734 = vadd.f32 %v5732, %v5733
    %v5735 = vsel %vm382, %v5584, 0.0
    %v5736 = vadd.f32 %v5734, %v5735
    %v5737 = vsel %vm382, %v5586, 0.0
    %v5738 = vadd.f32 %v5736, %v5737
    %v5739 = vsel %vm382, %v5589, 0.0
    %v5740 = vadd.f32 %v5738, %v5739
    %v5741 = vsel %vm382, %v5591, 0.0
    %v5742 = vadd.f32 %v5740, %v5741
    %v5743 = vsel %vm382, %v5594, 0.0
    %v5744 = vadd.f32 %v5742, %v5743
    %v5745 = vsel %vm382, %v5596, 0.0
    %v5746 = vadd.f32 %v5744, %v5745
    %v5747 = vsel %vm382, %v5599, 0.0
    %v5748 = vadd.f32 %v5746, %v5747
    %v5749 = vsel %vm382, %v5601, 0.0
    %v5750 = vadd.f32 %v5748, %v5749
    %v5751 = vsel %vm382, %v5604, 0.0
    %v5752 = vadd.f32 %v5750, %v5751
    %v5753 = vsel %vm382, %v5606, 0.0
    %v5754 = vadd.f32 %v5752, %v5753
    %v5755 = vsel %vm382, %v5609, 0.0
    %v5756 = vadd.f32 %v5754, %v5755
    %v5757 = vsel %vm382, %v5611, 0.0
    %v5758 = vadd.f32 %v5756, %v5757
    %v5759 = vsel %vm382, %v5614, 0.0
    %v5760 = vadd.f32 %v5758, %v5759
    %v5761 = vsel %vm382, %v5616, 0.0
    %v5762 = vadd.f32 %v5760, %v5761
    %v5763 = vsel %vm382, %v5619, 0.0
    %v5764 = vadd.f32 %v5762, %v5763
    %v5765 = vsel %vm382, %v5621, 0.0
    %v5766 = vadd.f32 %v5764, %v5765
    %v5767 = vsel %vm382, %v5624, 0.0
    %v5768 = vadd.f32 %v5766, %v5767
    %v5769 = vsel %vm382, %v5626, 0.0
    %v5770 = vadd.f32 %v5768, %v5769
    %v5771 = vsel %vm382, %v5629, 0.0
    %v5772 = vadd.f32 %v5770, %v5771
    %v5773 = vsel %vm382, %v5631, 0.0
    %v5774 = vadd.f32 %v5772, %v5773
    %v5775 = vsel %vm382, %v5634, 0.0
    %v5776 = vadd.f32 %v5774, %v5775
    %v5777 = vsel %vm382, %v5636, 0.0
    %v5778 = vadd.f32 %v5776, %v5777
    %v5779 = vsel %vm382, %v5639, 0.0
    %v5780 = vadd.f32 %v5778, %v5779
    %v5781 = vsel %vm382, %v5641, 0.0
    %v5782 = vadd.f32 %v5780, %v5781
    %v5783 = vsel %vm382, %v5644, 0.0
    %v5784 = vadd.f32 %v5782, %v5783
    %v5785 = vsel %vm382, %v5646, 0.0
    %v5786 = vadd.f32 %v5784, %v5785
    %v5787 = vsel %vm382, %v5649, 0.0
    %v5788 = vadd.f32 %v5786, %v5787
    %v5789 = vsel %vm382, %v5651, 0.0
    %v5790 = vadd.f32 %v5788, %v5789
    %v5791 = vsel %vm382, %v5654, 0.0
    %v5792 = vadd.f32 %v5790, %v5791
    %v5793 = vsel %vm382, %v5656, 0.0
    %v5794 = vadd.f32 %v5792, %v5793
    %v5795 = vsel %vm382, %v5659, 0.0
    %v5796 = vadd.f32 %v5794, %v5795
    %v5797 = vsel %vm382, %v5661, 0.0
    %v5798 = vadd.f32 %v5796, %v5797
    %v5799 = vsel %vm382, %v5664, 0.0
    %v5800 = vadd.f32 %v5798, %v5799
    %v5801 = vsel %vm382, %v5666, 0.0
    %v5802 = vadd.f32 %v5800, %v5801
    %v5803 = vsel %vm382, %v5669, 0.0
    %v5804 = vadd.f32 %v5802, %v5803
    %v5805 = vsel %vm382, %v5671, 0.0
    %v5806 = vadd.f32 %v5804, %v5805
    %v5807 = vsel %vm382, %v5674, 0.0
    %v5808 = vadd.f32 %v5806, %v5807
    %v5809 = vsel %vm382, %v5676, 0.0
    %v5810 = vadd.f32 %v5808, %v5809
    %v5811 = vsel %vm382, %v5679, 0.0
    %v5812 = vadd.f32 %v5810, %v5811
    %v5813 = vsel %vm382, %v5681, 0.0
    %v5814 = vadd.f32 %v5812, %v5813
    %v5815 = vsel %vm382, %v5684, 0.0
    %v5816 = vadd.f32 %v5814, %v5815
    %v5817 = vsel %vm382, %v5686, 0.0
    %v5818 = vadd.f32 %v5816, %v5817
    %v5819 = vsel %vm382, %v5689, 0.0
    %v5820 = vadd.f32 %v5818, %v5819
    %v5821 = vsel %vm382, %v5691, 0.0
    %v5822 = vadd.f32 %v5820, %v5821
    %v5823 = vsel %vm382, %v5694, 0.0
    %v5824 = vadd.f32 %v5822, %v5823
    %v5825 = vsel %vm382, %v5696, 0.0
    %v5826 = vadd.f32 %v5824, %v5825
    %v5827 = vsel %vm382, %v5699, 0.0
    %v5828 = vadd.f32 %v5826, %v5827
    %v5829 = vsel %vm382, %v5701, 0.0
    %v5830 = vadd.f32 %v5828, %v5829
    %v5831 = vsel %vm382, %v5704, 0.0
    %v5832 = vadd.f32 %v5830, %v5831
    %v5833 = vsel %vm382, %v5706, 0.0
    %v5834 = vadd.f32 %v5832, %v5833
    %v5835 = vrot.slane %v5834, 4
    %v5836 = vadd.f32 %v5834, %v5835
    %v5837 = vrot.slane %v5836, 2
    %v5838 = vadd.f32 %v5836, %v5837
    %v5839 = vrot.slane %v5838, 1
    %v5840 = vadd.f32 %v5838, %v5839
    %v5841 = vmul.f32 %v5549, %v5549
    %v5842 = vmul.f32 %v5551, %v5551
    %v5843 = vmul.f32 %v5554, %v5554
    %v5844 = vmul.f32 %v5556, %v5556
    %v5845 = vmul.f32 %v5559, %v5559
    %v5846 = vmul.f32 %v5561, %v5561
    %v5847 = vmul.f32 %v5564, %v5564
    %v5848 = vmul.f32 %v5566, %v5566
    %v5849 = vmul.f32 %v5569, %v5569
    %v5850 = vmul.f32 %v5571, %v5571
    %v5851 = vmul.f32 %v5574, %v5574
    %v5852 = vmul.f32 %v5576, %v5576
    %v5853 = vmul.f32 %v5579, %v5579
    %v5854 = vmul.f32 %v5581, %v5581
    %v5855 = vmul.f32 %v5584, %v5584
    %v5856 = vmul.f32 %v5586, %v5586
    %v5857 = vmul.f32 %v5589, %v5589
    %v5858 = vmul.f32 %v5591, %v5591
    %v5859 = vmul.f32 %v5594, %v5594
    %v5860 = vmul.f32 %v5596, %v5596
    %v5861 = vmul.f32 %v5599, %v5599
    %v5862 = vmul.f32 %v5601, %v5601
    %v5863 = vmul.f32 %v5604, %v5604
    %v5864 = vmul.f32 %v5606, %v5606
    %v5865 = vmul.f32 %v5609, %v5609
    %v5866 = vmul.f32 %v5611, %v5611
    %v5867 = vmul.f32 %v5614, %v5614
    %v5868 = vmul.f32 %v5616, %v5616
    %v5869 = vmul.f32 %v5619, %v5619
    %v5870 = vmul.f32 %v5621, %v5621
    %v5871 = vmul.f32 %v5624, %v5624
    %v5872 = vmul.f32 %v5626, %v5626
    %v5873 = vmul.f32 %v5629, %v5629
    %v5874 = vmul.f32 %v5631, %v5631
    %v5875 = vmul.f32 %v5634, %v5634
    %v5876 = vmul.f32 %v5636, %v5636
    %v5877 = vmul.f32 %v5639, %v5639
    %v5878 = vmul.f32 %v5641, %v5641
    %v5879 = vmul.f32 %v5644, %v5644
    %v5880 = vmul.f32 %v5646, %v5646
    %v5881 = vmul.f32 %v5649, %v5649
    %v5882 = vmul.f32 %v5651, %v5651
    %v5883 = vmul.f32 %v5654, %v5654
    %v5884 = vmul.f32 %v5656, %v5656
    %v5885 = vmul.f32 %v5659, %v5659
    %v5886 = vmul.f32 %v5661, %v5661
    %v5887 = vmul.f32 %v5664, %v5664
    %v5888 = vmul.f32 %v5666, %v5666
    %v5889 = vmul.f32 %v5669, %v5669
    %v5890 = vmul.f32 %v5671, %v5671
    %v5891 = vmul.f32 %v5674, %v5674
    %v5892 = vmul.f32 %v5676, %v5676
    %v5893 = vmul.f32 %v5679, %v5679
    %v5894 = vmul.f32 %v5681, %v5681
    %v5895 = vmul.f32 %v5684, %v5684
    %v5896 = vmul.f32 %v5686, %v5686
    %v5897 = vmul.f32 %v5689, %v5689
    %v5898 = vmul.f32 %v5691, %v5691
    %v5899 = vmul.f32 %v5694, %v5694
    %v5900 = vmul.f32 %v5696, %v5696
    %v5901 = vmul.f32 %v5699, %v5699
    %v5902 = vmul.f32 %v5701, %v5701
    %v5903 = vmul.f32 %v5704, %v5704
    %v5904 = vmul.f32 %v5706, %v5706
    %v5905 = vsel %vm382, %v5841, 0.0
    %v5906 = vsel %vm382, %v5842, 0.0
    %v5907 = vadd.f32 %v5905, %v5906
    %v5908 = vsel %vm382, %v5843, 0.0
    %v5909 = vadd.f32 %v5907, %v5908
    %v5910 = vsel %vm382, %v5844, 0.0
    %v5911 = vadd.f32 %v5909, %v5910
    %v5912 = vsel %vm382, %v5845, 0.0
    %v5913 = vadd.f32 %v5911, %v5912
    %v5914 = vsel %vm382, %v5846, 0.0
    %v5915 = vadd.f32 %v5913, %v5914
    %v5916 = vsel %vm382, %v5847, 0.0
    %v5917 = vadd.f32 %v5915, %v5916
    %v5918 = vsel %vm382, %v5848, 0.0
    %v5919 = vadd.f32 %v5917, %v5918
    %v5920 = vsel %vm382, %v5849, 0.0
    %v5921 = vadd.f32 %v5919, %v5920
    %v5922 = vsel %vm382, %v5850, 0.0
    %v5923 = vadd.f32 %v5921, %v5922
    %v5924 = vsel %vm382, %v5851, 0.0
    %v5925 = vadd.f32 %v5923, %v5924
    %v5926 = vsel %vm382, %v5852, 0.0
    %v5927 = vadd.f32 %v5925, %v5926
    %v5928 = vsel %vm382, %v5853, 0.0
    %v5929 = vadd.f32 %v5927, %v5928
    %v5930 = vsel %vm382, %v5854, 0.0
    %v5931 = vadd.f32 %v5929, %v5930
    %v5932 = vsel %vm382, %v5855, 0.0
    %v5933 = vadd.f32 %v5931, %v5932
    %v5934 = vsel %vm382, %v5856, 0.0
    %v5935 = vadd.f32 %v5933, %v5934
    %v5936 = vsel %vm382, %v5857, 0.0
    %v5937 = vadd.f32 %v5935, %v5936
    %v5938 = vsel %vm382, %v5858, 0.0
    %v5939 = vadd.f32 %v5937, %v5938
    %v5940 = vsel %vm382, %v5859, 0.0
    %v5941 = vadd.f32 %v5939, %v5940
    %v5942 = vsel %vm382, %v5860, 0.0
    %v5943 = vadd.f32 %v5941, %v5942
    %v5944 = vsel %vm382, %v5861, 0.0
    %v5945 = vadd.f32 %v5943, %v5944
    %v5946 = vsel %vm382, %v5862, 0.0
    %v5947 = vadd.f32 %v5945, %v5946
    %v5948 = vsel %vm382, %v5863, 0.0
    %v5949 = vadd.f32 %v5947, %v5948
    %v5950 = vsel %vm382, %v5864, 0.0
    %v5951 = vadd.f32 %v5949, %v5950
    %v5952 = vsel %vm382, %v5865, 0.0
    %v5953 = vadd.f32 %v5951, %v5952
    %v5954 = vsel %vm382, %v5866, 0.0
    %v5955 = vadd.f32 %v5953, %v5954
    %v5956 = vsel %vm382, %v5867, 0.0
    %v5957 = vadd.f32 %v5955, %v5956
    %v5958 = vsel %vm382, %v5868, 0.0
    %v5959 = vadd.f32 %v5957, %v5958
    %v5960 = vsel %vm382, %v5869, 0.0
    %v5961 = vadd.f32 %v5959, %v5960
    %v5962 = vsel %vm382, %v5870, 0.0
    %v5963 = vadd.f32 %v5961, %v5962
    %v5964 = vsel %vm382, %v5871, 0.0
    %v5965 = vadd.f32 %v5963, %v5964
    %v5966 = vsel %vm382, %v5872, 0.0
    %v5967 = vadd.f32 %v5965, %v5966
    %v5968 = vsel %vm382, %v5873, 0.0
    %v5969 = vadd.f32 %v5967, %v5968
    %v5970 = vsel %vm382, %v5874, 0.0
    %v5971 = vadd.f32 %v5969, %v5970
    %v5972 = vsel %vm382, %v5875, 0.0
    %v5973 = vadd.f32 %v5971, %v5972
    %v5974 = vsel %vm382, %v5876, 0.0
    %v5975 = vadd.f32 %v5973, %v5974
    %v5976 = vsel %vm382, %v5877, 0.0
    %v5977 = vadd.f32 %v5975, %v5976
    %v5978 = vsel %vm382, %v5878, 0.0
    %v5979 = vadd.f32 %v5977, %v5978
    %v5980 = vsel %vm382, %v5879, 0.0
    %v5981 = vadd.f32 %v5979, %v5980
    %v5982 = vsel %vm382, %v5880, 0.0
    %v5983 = vadd.f32 %v5981, %v5982
    %v5984 = vsel %vm382, %v5881, 0.0
    %v5985 = vadd.f32 %v5983, %v5984
    %v5986 = vsel %vm382, %v5882, 0.0
    %v5987 = vadd.f32 %v5985, %v5986
    %v5988 = vsel %vm382, %v5883, 0.0
    %v5989 = vadd.f32 %v5987, %v5988
    %v5990 = vsel %vm382, %v5884, 0.0
    %v5991 = vadd.f32 %v5989, %v5990
    %v5992 = vsel %vm382, %v5885, 0.0
    %v5993 = vadd.f32 %v5991, %v5992
    %v5994 = vsel %vm382, %v5886, 0.0
    %v5995 = vadd.f32 %v5993, %v5994
    %v5996 = vsel %vm382, %v5887, 0.0
    %v5997 = vadd.f32 %v5995, %v5996
    %v5998 = vsel %vm382, %v5888, 0.0
    %v5999 = vadd.f32 %v5997, %v5998
    %v6000 = vsel %vm382, %v5889, 0.0
    %v6001 = vadd.f32 %v5999, %v6000
    %v6002 = vsel %vm382, %v5890, 0.0
    %v6003 = vadd.f32 %v6001, %v6002
    %v6004 = vsel %vm382, %v5891, 0.0
    %v6005 = vadd.f32 %v6003, %v6004
    %v6006 = vsel %vm382, %v5892, 0.0
    %v6007 = vadd.f32 %v6005, %v6006
    %v6008 = vsel %vm382, %v5893, 0.0
    %v6009 = vadd.f32 %v6007, %v6008
    %v6010 = vsel %vm382, %v5894, 0.0
    %v6011 = vadd.f32 %v6009, %v6010
    %v6012 = vsel %vm382, %v5895, 0.0
    %v6013 = vadd.f32 %v6011, %v6012
    %v6014 = vsel %vm382, %v5896, 0.0
    %v6015 = vadd.f32 %v6013, %v6014
    %v6016 = vsel %vm382, %v5897, 0.0
    %v6017 = vadd.f32 %v6015, %v6016
    %v6018 = vsel %vm382, %v5898, 0.0
    %v6019 = vadd.f32 %v6017, %v6018
    %v6020 = vsel %vm382, %v5899, 0.0
    %v6021 = vadd.f32 %v6019, %v6020
    %v6022 = vsel %vm382, %v5900, 0.0
    %v6023 = vadd.f32 %v6021, %v6022
    %v6024 = vsel %vm382, %v5901, 0.0
    %v6025 = vadd.f32 %v6023, %v6024
    %v6026 = vsel %vm382, %v5902, 0.0
    %v6027 = vadd.f32 %v6025, %v6026
    %v6028 = vsel %vm382, %v5903, 0.0
    %v6029 = vadd.f32 %v6027, %v6028
    %v6030 = vsel %vm382, %v5904, 0.0
    %v6031 = vadd.f32 %v6029, %v6030
    %v6032 = vrot.slane %v6031, 4
    %v6033 = vadd.f32 %v6031, %v6032
    %v6034 = vrot.slane %v6033, 2
    %v6035 = vadd.f32 %v6033, %v6034
    %v6036 = vrot.slane %v6035, 1
    %v6037 = vadd.f32 %v6035, %v6036
    %v6038 = vmul.f32 %v5840, 0.001953125
    %v6039 = vmul.f32 %v6037, 0.001953125
    %v6040 = vmul.f32 %v6038, %v6038
    %v6041 = vsub.f32 %v6039, %v6040
    %v6042 = vmax.f32 %v6041, 0.0
    %v6043 = vld [vmem:[%s5] sm:$0x1]
    %v6044 = vadd.f32 %v6042, 1e-05
    %v6045 = vrsqrt.pop %v6044
    %v6046 = vmul.f32 %v6045, %v6044
    %v6047 = vmul.f32 %v6046, %v6045
    %v6048 = vmul.f32 0.5, %v6047
    %v6049 = vsub.f32 1.5, %v6048
    %v6050 = vmul.f32 %v6045, %v6049
    %vm6051 = vweird.f32 %v6044
    %vm6052 = vweird.f32 %v6045
    %vm6053 = vmor %vm6051, %vm6052
    %v6054 = vsel %vm6053, %v6045, %v6050
    %v6055 = vmul.f32 %v6043, %v6054
    %v6056 = vld [vmem:[%s6] sm:$0x1]
    %v6057 = vmul.f32 %v6038, %v6055
    %v6058 = vsub.f32 %v6056, %v6057
    %v6060 = vperm.slane %v6055, 0
    %v6062 = vmul.f32 %v5549, %v6060
    %v6063 = vmul.f32 %v5551, %v6060
    %v6064 = vmul.f32 %v5554, %v6060
    %v6065 = vmul.f32 %v5556, %v6060
    %v6066 = vmul.f32 %v5559, %v6060
    %v6067 = vmul.f32 %v5561, %v6060
    %v6068 = vmul.f32 %v5564, %v6060
    %v6069 = vmul.f32 %v5566, %v6060
    %v6070 = vmul.f32 %v5569, %v6060
    %v6071 = vmul.f32 %v5571, %v6060
    %v6072 = vmul.f32 %v5574, %v6060
    %v6073 = vmul.f32 %v5576, %v6060
    %v6074 = vmul.f32 %v5579, %v6060
    %v6075 = vmul.f32 %v5581, %v6060
    %v6076 = vmul.f32 %v5584, %v6060
    %v6077 = vmul.f32 %v5586, %v6060
    %v6078 = vmul.f32 %v5589, %v6060
    %v6079 = vmul.f32 %v5591, %v6060
    %v6080 = vmul.f32 %v5594, %v6060
    %v6081 = vmul.f32 %v5596, %v6060
    %v6082 = vmul.f32 %v5599, %v6060
    %v6083 = vmul.f32 %v5601, %v6060
    %v6084 = vmul.f32 %v5604, %v6060
    %v6085 = vmul.f32 %v5606, %v6060
    %v6086 = vmul.f32 %v5609, %v6060
    %v6087 = vmul.f32 %v5611, %v6060
    %v6088 = vmul.f32 %v5614, %v6060
    %v6089 = vmul.f32 %v5616, %v6060
    %v6090 = vmul.f32 %v5619, %v6060
    %v6091 = vmul.f32 %v5621, %v6060
    %v6092 = vmul.f32 %v5624, %v6060
    %v6093 = vmul.f32 %v5626, %v6060
    %v6094 = vmul.f32 %v5629, %v6060
    %v6095 = vmul.f32 %v5631, %v6060
    %v6096 = vmul.f32 %v5634, %v6060
    %v6097 = vmul.f32 %v5636, %v6060
    %v6098 = vmul.f32 %v5639, %v6060
    %v6099 = vmul.f32 %v5641, %v6060
    %v6100 = vmul.f32 %v5644, %v6060
    %v6101 = vmul.f32 %v5646, %v6060
    %v6102 = vmul.f32 %v5649, %v6060
    %v6103 = vmul.f32 %v5651, %v6060
    %v6104 = vmul.f32 %v5654, %v6060
    %v6105 = vmul.f32 %v5656, %v6060
    %v6106 = vmul.f32 %v5659, %v6060
    %v6107 = vmul.f32 %v5661, %v6060
    %v6108 = vmul.f32 %v5664, %v6060
    %v6109 = vmul.f32 %v5666, %v6060
    %v6110 = vmul.f32 %v5669, %v6060
    %v6111 = vmul.f32 %v5671, %v6060
    %v6112 = vmul.f32 %v5674, %v6060
    %v6113 = vmul.f32 %v5676, %v6060
    %v6114 = vmul.f32 %v5679, %v6060
    %v6115 = vmul.f32 %v5681, %v6060
    %v6116 = vmul.f32 %v5684, %v6060
    %v6117 = vmul.f32 %v5686, %v6060
    %v6118 = vmul.f32 %v5689, %v6060
    %v6119 = vmul.f32 %v5691, %v6060
    %v6120 = vmul.f32 %v5694, %v6060
    %v6121 = vmul.f32 %v5696, %v6060
    %v6122 = vmul.f32 %v5699, %v6060
    %v6123 = vmul.f32 %v5701, %v6060
    %v6124 = vmul.f32 %v5704, %v6060
    %v6125 = vmul.f32 %v5706, %v6060
    %v6127 = vperm.slane %v6058, 0
    %v6129 = vadd.f32 %v6062, %v6127
    %v6130 = vadd.f32 %v6063, %v6127
    %v6131 = vadd.f32 %v6064, %v6127
    %v6132 = vadd.f32 %v6065, %v6127
    %v6133 = vadd.f32 %v6066, %v6127
    %v6134 = vadd.f32 %v6067, %v6127
    %v6135 = vadd.f32 %v6068, %v6127
    %v6136 = vadd.f32 %v6069, %v6127
    %v6137 = vadd.f32 %v6070, %v6127
    %v6138 = vadd.f32 %v6071, %v6127
    %v6139 = vadd.f32 %v6072, %v6127
    %v6140 = vadd.f32 %v6073, %v6127
    %v6141 = vadd.f32 %v6074, %v6127
    %v6142 = vadd.f32 %v6075, %v6127
    %v6143 = vadd.f32 %v6076, %v6127
    %v6144 = vadd.f32 %v6077, %v6127
    %v6145 = vadd.f32 %v6078, %v6127
    %v6146 = vadd.f32 %v6079, %v6127
    %v6147 = vadd.f32 %v6080, %v6127
    %v6148 = vadd.f32 %v6081, %v6127
    %v6149 = vadd.f32 %v6082, %v6127
    %v6150 = vadd.f32 %v6083, %v6127
    %v6151 = vadd.f32 %v6084, %v6127
    %v6152 = vadd.f32 %v6085, %v6127
    %v6153 = vadd.f32 %v6086, %v6127
    %v6154 = vadd.f32 %v6087, %v6127
    %v6155 = vadd.f32 %v6088, %v6127
    %v6156 = vadd.f32 %v6089, %v6127
    %v6157 = vadd.f32 %v6090, %v6127
    %v6158 = vadd.f32 %v6091, %v6127
    %v6159 = vadd.f32 %v6092, %v6127
    %v6160 = vadd.f32 %v6093, %v6127
    %v6161 = vadd.f32 %v6094, %v6127
    %v6162 = vadd.f32 %v6095, %v6127
    %v6163 = vadd.f32 %v6096, %v6127
    %v6164 = vadd.f32 %v6097, %v6127
    %v6165 = vadd.f32 %v6098, %v6127
    %v6166 = vadd.f32 %v6099, %v6127
    %v6167 = vadd.f32 %v6100, %v6127
    %v6168 = vadd.f32 %v6101, %v6127
    %v6169 = vadd.f32 %v6102, %v6127
    %v6170 = vadd.f32 %v6103, %v6127
    %v6171 = vadd.f32 %v6104, %v6127
    %v6172 = vadd.f32 %v6105, %v6127
    %v6173 = vadd.f32 %v6106, %v6127
    %v6174 = vadd.f32 %v6107, %v6127
    %v6175 = vadd.f32 %v6108, %v6127
    %v6176 = vadd.f32 %v6109, %v6127
    %v6177 = vadd.f32 %v6110, %v6127
    %v6178 = vadd.f32 %v6111, %v6127
    %v6179 = vadd.f32 %v6112, %v6127
    %v6180 = vadd.f32 %v6113, %v6127
    %v6181 = vadd.f32 %v6114, %v6127
    %v6182 = vadd.f32 %v6115, %v6127
    %v6183 = vadd.f32 %v6116, %v6127
    %v6184 = vadd.f32 %v6117, %v6127
    %v6185 = vadd.f32 %v6118, %v6127
    %v6186 = vadd.f32 %v6119, %v6127
    %v6187 = vadd.f32 %v6120, %v6127
    %v6188 = vadd.f32 %v6121, %v6127
    %v6189 = vadd.f32 %v6122, %v6127
    %v6190 = vadd.f32 %v6123, %v6127
    %v6191 = vadd.f32 %v6124, %v6127
    %v6192 = vadd.f32 %v6125, %v6127
    %v6193 = vmax.f32 %v6129, 0.0
    %v6194 = vmax.f32 %v6130, 0.0
    %v6195 = vmax.f32 %v6131, 0.0
    %v6196 = vmax.f32 %v6132, 0.0
    %v6197 = vmax.f32 %v6133, 0.0
    %v6198 = vmax.f32 %v6134, 0.0
    %v6199 = vmax.f32 %v6135, 0.0
    %v6200 = vmax.f32 %v6136, 0.0
    %v6201 = vmax.f32 %v6137, 0.0
    %v6202 = vmax.f32 %v6138, 0.0
    %v6203 = vmax.f32 %v6139, 0.0
    %v6204 = vmax.f32 %v6140, 0.0
    %v6205 = vmax.f32 %v6141, 0.0
    %v6206 = vmax.f32 %v6142, 0.0
    %v6207 = vmax.f32 %v6143, 0.0
    %v6208 = vmax.f32 %v6144, 0.0
    %v6209 = vmax.f32 %v6145, 0.0
    %v6210 = vmax.f32 %v6146, 0.0
    %v6211 = vmax.f32 %v6147, 0.0
    %v6212 = vmax.f32 %v6148, 0.0
    %v6213 = vmax.f32 %v6149, 0.0
    %v6214 = vmax.f32 %v6150, 0.0
    %v6215 = vmax.f32 %v6151, 0.0
    %v6216 = vmax.f32 %v6152, 0.0
    %v6217 = vmax.f32 %v6153, 0.0
    %v6218 = vmax.f32 %v6154, 0.0
    %v6219 = vmax.f32 %v6155, 0.0
    %v6220 = vmax.f32 %v6156, 0.0
    %v6221 = vmax.f32 %v6157, 0.0
    %v6222 = vmax.f32 %v6158, 0.0
    %v6223 = vmax.f32 %v6159, 0.0
    %v6224 = vmax.f32 %v6160, 0.0
    %v6225 = vmax.f32 %v6161, 0.0
    %v6226 = vmax.f32 %v6162, 0.0
    %v6227 = vmax.f32 %v6163, 0.0
    %v6228 = vmax.f32 %v6164, 0.0
    %v6229 = vmax.f32 %v6165, 0.0
    %v6230 = vmax.f32 %v6166, 0.0
    %v6231 = vmax.f32 %v6167, 0.0
    %v6232 = vmax.f32 %v6168, 0.0
    %v6233 = vmax.f32 %v6169, 0.0
    %v6234 = vmax.f32 %v6170, 0.0
    %v6235 = vmax.f32 %v6171, 0.0
    %v6236 = vmax.f32 %v6172, 0.0
    %v6237 = vmax.f32 %v6173, 0.0
    %v6238 = vmax.f32 %v6174, 0.0
    %v6239 = vmax.f32 %v6175, 0.0
    %v6240 = vmax.f32 %v6176, 0.0
    %v6241 = vmax.f32 %v6177, 0.0
    %v6242 = vmax.f32 %v6178, 0.0
    %v6243 = vmax.f32 %v6179, 0.0
    %v6244 = vmax.f32 %v6180, 0.0
    %v6245 = vmax.f32 %v6181, 0.0
    %v6246 = vmax.f32 %v6182, 0.0
    %v6247 = vmax.f32 %v6183, 0.0
    %v6248 = vmax.f32 %v6184, 0.0
    %v6249 = vmax.f32 %v6185, 0.0
    %v6250 = vmax.f32 %v6186, 0.0
    %v6251 = vmax.f32 %v6187, 0.0
    %v6252 = vmax.f32 %v6188, 0.0
    %v6253 = vmax.f32 %v6189, 0.0
    %v6254 = vmax.f32 %v6190, 0.0
    %v6255 = vmax.f32 %v6191, 0.0
    %v6256 = vmax.f32 %v6192, 0.0
    %v6257 = vpack.c.bf16 %v6194, %v6193
    %v6258 = vpack.c.bf16 %v6196, %v6195
    %v6259 = vpack.c.bf16 %v6198, %v6197
    %v6260 = vpack.c.bf16 %v6200, %v6199
    %v6261 = vpack.c.bf16 %v6202, %v6201
    %v6262 = vpack.c.bf16 %v6204, %v6203
    %v6263 = vpack.c.bf16 %v6206, %v6205
    %v6264 = vpack.c.bf16 %v6208, %v6207
    %v6265 = vpack.c.bf16 %v6210, %v6209
    %v6266 = vpack.c.bf16 %v6212, %v6211
    %v6267 = vpack.c.bf16 %v6214, %v6213
    %v6268 = vpack.c.bf16 %v6216, %v6215
    %v6269 = vpack.c.bf16 %v6218, %v6217
    %v6270 = vpack.c.bf16 %v6220, %v6219
    %v6271 = vpack.c.bf16 %v6222, %v6221
    %v6272 = vpack.c.bf16 %v6224, %v6223
    %v6273 = vpack.c.bf16 %v6226, %v6225
    %v6274 = vpack.c.bf16 %v6228, %v6227
    %v6275 = vpack.c.bf16 %v6230, %v6229
    %v6276 = vpack.c.bf16 %v6232, %v6231
    %v6277 = vpack.c.bf16 %v6234, %v6233
    %v6278 = vpack.c.bf16 %v6236, %v6235
    %v6279 = vpack.c.bf16 %v6238, %v6237
    %v6280 = vpack.c.bf16 %v6240, %v6239
    %v6281 = vpack.c.bf16 %v6242, %v6241
    %v6282 = vpack.c.bf16 %v6244, %v6243
    %v6283 = vpack.c.bf16 %v6246, %v6245
    %v6284 = vpack.c.bf16 %v6248, %v6247
    %v6285 = vpack.c.bf16 %v6250, %v6249
    %v6286 = vpack.c.bf16 %v6252, %v6251
    %v6287 = vpack.c.bf16 %v6254, %v6253
    %v6288 = vpack.c.bf16 %v6256, %v6255
    %v6289 = vld [vmem:[%s7] sm:$0xf]
    %v6290 = vld [vmem:[%s7 + $0x4] sm:$0xf]
    %v6291 = vld [vmem:[%s7 + $0x8] sm:$0xf]
    %v6292 = vld [vmem:[%s7 + $0xc] sm:$0xf]
    %v6297 = vunpack.c.l.b16 %v6289
    %v6298 = vunpack.c.l.b16 %v6290
    %v6299 = vunpack.c.l.b16 %v6291
    %v6300 = vunpack.c.l.b16 %v6292
    %v6301 = vpack.c.b16 %v6298, %v6297
    %v6302 = vpack.c.b16 %v6300, %v6299
    %v6306 = vsel %vm382, %v6257, 0
    %v6309 = vsel %vm382, %v6258, 0
    %v6312 = vsel %vm382, %v6259, 0
    %v6315 = vsel %vm382, %v6260, 0
    %v6318 = vsel %vm382, %v6261, 0
    %v6321 = vsel %vm382, %v6262, 0
    %v6324 = vsel %vm382, %v6263, 0
    %v6327 = vsel %vm382, %v6264, 0
    %v6330 = vsel %vm382, %v6265, 0
    %v6333 = vsel %vm382, %v6266, 0
    %v6336 = vsel %vm382, %v6267, 0
    %v6339 = vsel %vm382, %v6268, 0
    %v6342 = vsel %vm382, %v6269, 0
    %v6345 = vsel %vm382, %v6270, 0
    %v6348 = vsel %vm382, %v6271, 0
    %v6351 = vsel %vm382, %v6272, 0
    %v6354 = vsel %vm382, %v6273, 0
    %v6357 = vsel %vm382, %v6274, 0
    %v6360 = vsel %vm382, %v6275, 0
    %v6363 = vsel %vm382, %v6276, 0
    %v6366 = vsel %vm382, %v6277, 0
    %v6369 = vsel %vm382, %v6278, 0
    %v6372 = vsel %vm382, %v6279, 0
    %v6375 = vsel %vm382, %v6280, 0
    %v6378 = vsel %vm382, %v6281, 0
    %v6381 = vsel %vm382, %v6282, 0
    %v6384 = vsel %vm382, %v6283, 0
    %v6387 = vsel %vm382, %v6284, 0
    %v6390 = vsel %vm382, %v6285, 0
    %v6393 = vsel %vm382, %v6286, 0
    %v6396 = vsel %vm382, %v6287, 0
    %v6399 = vsel %vm382, %v6288, 0
    %6401 = vmatpush.bf16.msra.mxu0 0
    %6402 = vmatpush.bf16.msra.mxu0 0
    %6403 = vmatpush.bf16.msra.mxu0 0
    %6404 = vmatpush.bf16.msra.mxu0 0
    %6405 = vmatpush.bf16.msra.mxu0 0
    %6406 = vmatpush.bf16.msra.mxu0 0
    %6407 = vmatpush.bf16.msra.mxu0 %v6302
    %6408 = vmatpush.bf16.msra.mxu0 %v6301
    %6409 = vmatmul.bf16.gmra.mxu0 %v6306
    %v6410 = vpop.f32.mrf.mxu0
    %v6411 = vadd.f32 0.0, %v6410
    %v6412 = vpop.f32.mrf.mxu0
    %v6413 = vadd.f32 0.0, %v6412
    %6414 = vmatmul.bf16.gmra.mxu0 %v6309
    %v6415 = vpop.f32.mrf.mxu0
    %v6416 = vadd.f32 0.0, %v6415
    %v6417 = vpop.f32.mrf.mxu0
    %v6418 = vadd.f32 0.0, %v6417
    %6419 = vmatmul.bf16.gmra.mxu0 %v6312
    %v6420 = vpop.f32.mrf.mxu0
    %v6421 = vadd.f32 0.0, %v6420
    %v6422 = vpop.f32.mrf.mxu0
    %v6423 = vadd.f32 0.0, %v6422
    %6424 = vmatmul.bf16.gmra.mxu0 %v6315
    %v6425 = vpop.f32.mrf.mxu0
    %v6426 = vadd.f32 0.0, %v6425
    %v6427 = vpop.f32.mrf.mxu0
    %v6428 = vadd.f32 0.0, %v6427
    %6429 = vmatmul.bf16.gmra.mxu0 %v6318
    %v6430 = vpop.f32.mrf.mxu0
    %v6431 = vadd.f32 0.0, %v6430
    %v6432 = vpop.f32.mrf.mxu0
    %v6433 = vadd.f32 0.0, %v6432
    %6434 = vmatmul.bf16.gmra.mxu0 %v6321
    %v6435 = vpop.f32.mrf.mxu0
    %v6436 = vadd.f32 0.0, %v6435
    %v6437 = vpop.f32.mrf.mxu0
    %v6438 = vadd.f32 0.0, %v6437
    %6439 = vmatmul.bf16.gmra.mxu0 %v6324
    %v6440 = vpop.f32.mrf.mxu0
    %v6441 = vadd.f32 0.0, %v6440
    %v6442 = vpop.f32.mrf.mxu0
    %v6443 = vadd.f32 0.0, %v6442
    %6444 = vmatmul.bf16.gmra.mxu0 %v6327
    %v6445 = vpop.f32.mrf.mxu0
    %v6446 = vadd.f32 0.0, %v6445
    %v6447 = vpop.f32.mrf.mxu0
    %v6448 = vadd.f32 0.0, %v6447
    %6449 = vmatmul.bf16.gmra.mxu0 %v6330
    %v6450 = vpop.f32.mrf.mxu0
    %v6451 = vadd.f32 0.0, %v6450
    %v6452 = vpop.f32.mrf.mxu0
    %v6453 = vadd.f32 0.0, %v6452
    %6454 = vmatmul.bf16.gmra.mxu0 %v6333
    %v6455 = vpop.f32.mrf.mxu0
    %v6456 = vadd.f32 0.0, %v6455
    %v6457 = vpop.f32.mrf.mxu0
    %v6458 = vadd.f32 0.0, %v6457
    %6459 = vmatmul.bf16.gmra.mxu0 %v6336
    %v6460 = vpop.f32.mrf.mxu0
    %v6461 = vadd.f32 0.0, %v6460
    %v6462 = vpop.f32.mrf.mxu0
    %v6463 = vadd.f32 0.0, %v6462
    %6464 = vmatmul.bf16.gmra.mxu0 %v6339
    %v6465 = vpop.f32.mrf.mxu0
    %v6466 = vadd.f32 0.0, %v6465
    %v6467 = vpop.f32.mrf.mxu0
    %v6468 = vadd.f32 0.0, %v6467
    %6469 = vmatmul.bf16.gmra.mxu0 %v6342
    %v6470 = vpop.f32.mrf.mxu0
    %v6471 = vadd.f32 0.0, %v6470
    %v6472 = vpop.f32.mrf.mxu0
    %v6473 = vadd.f32 0.0, %v6472
    %6474 = vmatmul.bf16.gmra.mxu0 %v6345
    %v6475 = vpop.f32.mrf.mxu0
    %v6476 = vadd.f32 0.0, %v6475
    %v6477 = vpop.f32.mrf.mxu0
    %v6478 = vadd.f32 0.0, %v6477
    %6479 = vmatmul.bf16.gmra.mxu0 %v6348
    %v6480 = vpop.f32.mrf.mxu0
    %v6481 = vadd.f32 0.0, %v6480
    %v6482 = vpop.f32.mrf.mxu0
    %v6483 = vadd.f32 0.0, %v6482
    %6484 = vmatmul.bf16.gmra.mxu0 %v6351
    %v6485 = vpop.f32.mrf.mxu0
    %v6486 = vadd.f32 0.0, %v6485
    %v6487 = vpop.f32.mrf.mxu0
    %v6488 = vadd.f32 0.0, %v6487
    %6489 = vmatmul.bf16.gmra.mxu0 %v6354
    %v6490 = vpop.f32.mrf.mxu0
    %v6491 = vadd.f32 0.0, %v6490
    %v6492 = vpop.f32.mrf.mxu0
    %v6493 = vadd.f32 0.0, %v6492
    %6494 = vmatmul.bf16.gmra.mxu0 %v6357
    %v6495 = vpop.f32.mrf.mxu0
    %v6496 = vadd.f32 0.0, %v6495
    %v6497 = vpop.f32.mrf.mxu0
    %v6498 = vadd.f32 0.0, %v6497
    %6499 = vmatmul.bf16.gmra.mxu0 %v6360
    %v6500 = vpop.f32.mrf.mxu0
    %v6501 = vadd.f32 0.0, %v6500
    %v6502 = vpop.f32.mrf.mxu0
    %v6503 = vadd.f32 0.0, %v6502
    %6504 = vmatmul.bf16.gmra.mxu0 %v6363
    %v6505 = vpop.f32.mrf.mxu0
    %v6506 = vadd.f32 0.0, %v6505
    %v6507 = vpop.f32.mrf.mxu0
    %v6508 = vadd.f32 0.0, %v6507
    %6509 = vmatmul.bf16.gmra.mxu0 %v6366
    %v6510 = vpop.f32.mrf.mxu0
    %v6511 = vadd.f32 0.0, %v6510
    %v6512 = vpop.f32.mrf.mxu0
    %v6513 = vadd.f32 0.0, %v6512
    %6514 = vmatmul.bf16.gmra.mxu0 %v6369
    %v6515 = vpop.f32.mrf.mxu0
    %v6516 = vadd.f32 0.0, %v6515
    %v6517 = vpop.f32.mrf.mxu0
    %v6518 = vadd.f32 0.0, %v6517
    %6519 = vmatmul.bf16.gmra.mxu0 %v6372
    %v6520 = vpop.f32.mrf.mxu0
    %v6521 = vadd.f32 0.0, %v6520
    %v6522 = vpop.f32.mrf.mxu0
    %v6523 = vadd.f32 0.0, %v6522
    %6524 = vmatmul.bf16.gmra.mxu0 %v6375
    %v6525 = vpop.f32.mrf.mxu0
    %v6526 = vadd.f32 0.0, %v6525
    %v6527 = vpop.f32.mrf.mxu0
    %v6528 = vadd.f32 0.0, %v6527
    %6529 = vmatmul.bf16.gmra.mxu0 %v6378
    %v6530 = vpop.f32.mrf.mxu0
    %v6531 = vadd.f32 0.0, %v6530
    %v6532 = vpop.f32.mrf.mxu0
    %v6533 = vadd.f32 0.0, %v6532
    %6534 = vmatmul.bf16.gmra.mxu0 %v6381
    %v6535 = vpop.f32.mrf.mxu0
    %v6536 = vadd.f32 0.0, %v6535
    %v6537 = vpop.f32.mrf.mxu0
    %v6538 = vadd.f32 0.0, %v6537
    %6539 = vmatmul.bf16.gmra.mxu0 %v6384
    %v6540 = vpop.f32.mrf.mxu0
    %v6541 = vadd.f32 0.0, %v6540
    %v6542 = vpop.f32.mrf.mxu0
    %v6543 = vadd.f32 0.0, %v6542
    %6544 = vmatmul.bf16.gmra.mxu0 %v6387
    %v6545 = vpop.f32.mrf.mxu0
    %v6546 = vadd.f32 0.0, %v6545
    %v6547 = vpop.f32.mrf.mxu0
    %v6548 = vadd.f32 0.0, %v6547
    %6549 = vmatmul.bf16.gmra.mxu0 %v6390
    %v6550 = vpop.f32.mrf.mxu0
    %v6551 = vadd.f32 0.0, %v6550
    %v6552 = vpop.f32.mrf.mxu0
    %v6553 = vadd.f32 0.0, %v6552
    %6554 = vmatmul.bf16.gmra.mxu0 %v6393
    %v6555 = vpop.f32.mrf.mxu0
    %v6556 = vadd.f32 0.0, %v6555
    %v6557 = vpop.f32.mrf.mxu0
    %v6558 = vadd.f32 0.0, %v6557
    %6559 = vmatmul.bf16.gmra.mxu0 %v6396
    %v6560 = vpop.f32.mrf.mxu0
    %v6561 = vadd.f32 0.0, %v6560
    %v6562 = vpop.f32.mrf.mxu0
    %v6563 = vadd.f32 0.0, %v6562
    %6564 = vmatmul.bf16.gmra.mxu0 %v6399
    %v6565 = vpop.f32.mrf.mxu0
    %v6566 = vadd.f32 0.0, %v6565
    %v6567 = vpop.f32.mrf.mxu0
    %v6568 = vadd.f32 0.0, %v6567
    %6569 = vdwg.mxu0
    %v6570 = vadd.f32 %v6411, %v6413
    %v6571 = vadd.f32 %v6570, %v6416
    %v6572 = vadd.f32 %v6571, %v6418
    %v6573 = vadd.f32 %v6572, %v6421
    %v6574 = vadd.f32 %v6573, %v6423
    %v6575 = vadd.f32 %v6574, %v6426
    %v6576 = vadd.f32 %v6575, %v6428
    %v6577 = vadd.f32 %v6576, %v6431
    %v6578 = vadd.f32 %v6577, %v6433
    %v6579 = vadd.f32 %v6578, %v6436
    %v6580 = vadd.f32 %v6579, %v6438
    %v6581 = vadd.f32 %v6580, %v6441
    %v6582 = vadd.f32 %v6581, %v6443
    %v6583 = vadd.f32 %v6582, %v6446
    %v6584 = vadd.f32 %v6583, %v6448
    %v6585 = vadd.f32 %v6584, %v6451
    %v6586 = vadd.f32 %v6585, %v6453
    %v6587 = vadd.f32 %v6586, %v6456
    %v6588 = vadd.f32 %v6587, %v6458
    %v6589 = vadd.f32 %v6588, %v6461
    %v6590 = vadd.f32 %v6589, %v6463
    %v6591 = vadd.f32 %v6590, %v6466
    %v6592 = vadd.f32 %v6591, %v6468
    %v6593 = vadd.f32 %v6592, %v6471
    %v6594 = vadd.f32 %v6593, %v6473
    %v6595 = vadd.f32 %v6594, %v6476
    %v6596 = vadd.f32 %v6595, %v6478
    %v6597 = vadd.f32 %v6596, %v6481
    %v6598 = vadd.f32 %v6597, %v6483
    %v6599 = vadd.f32 %v6598, %v6486
    %v6600 = vadd.f32 %v6599, %v6488
    %v6601 = vadd.f32 %v6600, %v6491
    %v6602 = vadd.f32 %v6601, %v6493
    %v6603 = vadd.f32 %v6602, %v6496
    %v6604 = vadd.f32 %v6603, %v6498
    %v6605 = vadd.f32 %v6604, %v6501
    %v6606 = vadd.f32 %v6605, %v6503
    %v6607 = vadd.f32 %v6606, %v6506
    %v6608 = vadd.f32 %v6607, %v6508
    %v6609 = vadd.f32 %v6608, %v6511
    %v6610 = vadd.f32 %v6609, %v6513
    %v6611 = vadd.f32 %v6610, %v6516
    %v6612 = vadd.f32 %v6611, %v6518
    %v6613 = vadd.f32 %v6612, %v6521
    %v6614 = vadd.f32 %v6613, %v6523
    %v6615 = vadd.f32 %v6614, %v6526
    %v6616 = vadd.f32 %v6615, %v6528
    %v6617 = vadd.f32 %v6616, %v6531
    %v6618 = vadd.f32 %v6617, %v6533
    %v6619 = vadd.f32 %v6618, %v6536
    %v6620 = vadd.f32 %v6619, %v6538
    %v6621 = vadd.f32 %v6620, %v6541
    %v6622 = vadd.f32 %v6621, %v6543
    %v6623 = vadd.f32 %v6622, %v6546
    %v6624 = vadd.f32 %v6623, %v6548
    %v6625 = vadd.f32 %v6624, %v6551
    %v6626 = vadd.f32 %v6625, %v6553
    %v6627 = vadd.f32 %v6626, %v6556
    %v6628 = vadd.f32 %v6627, %v6558
    %v6629 = vadd.f32 %v6628, %v6561
    %v6630 = vadd.f32 %v6629, %v6563
    %v6631 = vadd.f32 %v6630, %v6566
    %v6632 = vadd.f32 %v6631, %v6568
    %v6633 = vrot.slane %v6632, 4
    %v6634 = vadd.f32 %v6632, %v6633
    %v6635 = vrot.slane %v6634, 2
    %v6636 = vadd.f32 %v6634, %v6635
    %v6637 = vrot.slane %v6636, 1
    %v6638 = vadd.f32 %v6636, %v6637
    %v6639 = vmul.f32 %v6411, %v6411
    %v6640 = vmul.f32 %v6413, %v6413
    %v6641 = vmul.f32 %v6416, %v6416
    %v6642 = vmul.f32 %v6418, %v6418
    %v6643 = vmul.f32 %v6421, %v6421
    %v6644 = vmul.f32 %v6423, %v6423
    %v6645 = vmul.f32 %v6426, %v6426
    %v6646 = vmul.f32 %v6428, %v6428
    %v6647 = vmul.f32 %v6431, %v6431
    %v6648 = vmul.f32 %v6433, %v6433
    %v6649 = vmul.f32 %v6436, %v6436
    %v6650 = vmul.f32 %v6438, %v6438
    %v6651 = vmul.f32 %v6441, %v6441
    %v6652 = vmul.f32 %v6443, %v6443
    %v6653 = vmul.f32 %v6446, %v6446
    %v6654 = vmul.f32 %v6448, %v6448
    %v6655 = vmul.f32 %v6451, %v6451
    %v6656 = vmul.f32 %v6453, %v6453
    %v6657 = vmul.f32 %v6456, %v6456
    %v6658 = vmul.f32 %v6458, %v6458
    %v6659 = vmul.f32 %v6461, %v6461
    %v6660 = vmul.f32 %v6463, %v6463
    %v6661 = vmul.f32 %v6466, %v6466
    %v6662 = vmul.f32 %v6468, %v6468
    %v6663 = vmul.f32 %v6471, %v6471
    %v6664 = vmul.f32 %v6473, %v6473
    %v6665 = vmul.f32 %v6476, %v6476
    %v6666 = vmul.f32 %v6478, %v6478
    %v6667 = vmul.f32 %v6481, %v6481
    %v6668 = vmul.f32 %v6483, %v6483
    %v6669 = vmul.f32 %v6486, %v6486
    %v6670 = vmul.f32 %v6488, %v6488
    %v6671 = vmul.f32 %v6491, %v6491
    %v6672 = vmul.f32 %v6493, %v6493
    %v6673 = vmul.f32 %v6496, %v6496
    %v6674 = vmul.f32 %v6498, %v6498
    %v6675 = vmul.f32 %v6501, %v6501
    %v6676 = vmul.f32 %v6503, %v6503
    %v6677 = vmul.f32 %v6506, %v6506
    %v6678 = vmul.f32 %v6508, %v6508
    %v6679 = vmul.f32 %v6511, %v6511
    %v6680 = vmul.f32 %v6513, %v6513
    %v6681 = vmul.f32 %v6516, %v6516
    %v6682 = vmul.f32 %v6518, %v6518
    %v6683 = vmul.f32 %v6521, %v6521
    %v6684 = vmul.f32 %v6523, %v6523
    %v6685 = vmul.f32 %v6526, %v6526
    %v6686 = vmul.f32 %v6528, %v6528
    %v6687 = vmul.f32 %v6531, %v6531
    %v6688 = vmul.f32 %v6533, %v6533
    %v6689 = vmul.f32 %v6536, %v6536
    %v6690 = vmul.f32 %v6538, %v6538
    %v6691 = vmul.f32 %v6541, %v6541
    %v6692 = vmul.f32 %v6543, %v6543
    %v6693 = vmul.f32 %v6546, %v6546
    %v6694 = vmul.f32 %v6548, %v6548
    %v6695 = vmul.f32 %v6551, %v6551
    %v6696 = vmul.f32 %v6553, %v6553
    %v6697 = vmul.f32 %v6556, %v6556
    %v6698 = vmul.f32 %v6558, %v6558
    %v6699 = vmul.f32 %v6561, %v6561
    %v6700 = vmul.f32 %v6563, %v6563
    %v6701 = vmul.f32 %v6566, %v6566
    %v6702 = vmul.f32 %v6568, %v6568
    %v6703 = vadd.f32 %v6639, %v6640
    %v6704 = vadd.f32 %v6703, %v6641
    %v6705 = vadd.f32 %v6704, %v6642
    %v6706 = vadd.f32 %v6705, %v6643
    %v6707 = vadd.f32 %v6706, %v6644
    %v6708 = vadd.f32 %v6707, %v6645
    %v6709 = vadd.f32 %v6708, %v6646
    %v6710 = vadd.f32 %v6709, %v6647
    %v6711 = vadd.f32 %v6710, %v6648
    %v6712 = vadd.f32 %v6711, %v6649
    %v6713 = vadd.f32 %v6712, %v6650
    %v6714 = vadd.f32 %v6713, %v6651
    %v6715 = vadd.f32 %v6714, %v6652
    %v6716 = vadd.f32 %v6715, %v6653
    %v6717 = vadd.f32 %v6716, %v6654
    %v6718 = vadd.f32 %v6717, %v6655
    %v6719 = vadd.f32 %v6718, %v6656
    %v6720 = vadd.f32 %v6719, %v6657
    %v6721 = vadd.f32 %v6720, %v6658
    %v6722 = vadd.f32 %v6721, %v6659
    %v6723 = vadd.f32 %v6722, %v6660
    %v6724 = vadd.f32 %v6723, %v6661
    %v6725 = vadd.f32 %v6724, %v6662
    %v6726 = vadd.f32 %v6725, %v6663
    %v6727 = vadd.f32 %v6726, %v6664
    %v6728 = vadd.f32 %v6727, %v6665
    %v6729 = vadd.f32 %v6728, %v6666
    %v6730 = vadd.f32 %v6729, %v6667
    %v6731 = vadd.f32 %v6730, %v6668
    %v6732 = vadd.f32 %v6731, %v6669
    %v6733 = vadd.f32 %v6732, %v6670
    %v6734 = vadd.f32 %v6733, %v6671
    %v6735 = vadd.f32 %v6734, %v6672
    %v6736 = vadd.f32 %v6735, %v6673
    %v6737 = vadd.f32 %v6736, %v6674
    %v6738 = vadd.f32 %v6737, %v6675
    %v6739 = vadd.f32 %v6738, %v6676
    %v6740 = vadd.f32 %v6739, %v6677
    %v6741 = vadd.f32 %v6740, %v6678
    %v6742 = vadd.f32 %v6741, %v6679
    %v6743 = vadd.f32 %v6742, %v6680
    %v6744 = vadd.f32 %v6743, %v6681
    %v6745 = vadd.f32 %v6744, %v6682
    %v6746 = vadd.f32 %v6745, %v6683
    %v6747 = vadd.f32 %v6746, %v6684
    %v6748 = vadd.f32 %v6747, %v6685
    %v6749 = vadd.f32 %v6748, %v6686
    %v6750 = vadd.f32 %v6749, %v6687
    %v6751 = vadd.f32 %v6750, %v6688
    %v6752 = vadd.f32 %v6751, %v6689
    %v6753 = vadd.f32 %v6752, %v6690
    %v6754 = vadd.f32 %v6753, %v6691
    %v6755 = vadd.f32 %v6754, %v6692
    %v6756 = vadd.f32 %v6755, %v6693
    %v6757 = vadd.f32 %v6756, %v6694
    %v6758 = vadd.f32 %v6757, %v6695
    %v6759 = vadd.f32 %v6758, %v6696
    %v6760 = vadd.f32 %v6759, %v6697
    %v6761 = vadd.f32 %v6760, %v6698
    %v6762 = vadd.f32 %v6761, %v6699
    %v6763 = vadd.f32 %v6762, %v6700
    %v6764 = vadd.f32 %v6763, %v6701
    %v6765 = vadd.f32 %v6764, %v6702
    %v6766 = vrot.slane %v6765, 4
    %v6767 = vadd.f32 %v6765, %v6766
    %v6768 = vrot.slane %v6767, 2
    %v6769 = vadd.f32 %v6767, %v6768
    %v6770 = vrot.slane %v6769, 1
    %v6771 = vadd.f32 %v6769, %v6770
    %v6772 = vmul.f32 %v6638, 0.001953125
    %v6773 = vmul.f32 %v6771, 0.001953125
    %v6774 = vmul.f32 %v6772, %v6772
    %v6775 = vsub.f32 %v6773, %v6774
    %v6776 = vmax.f32 %v6775, 0.0
    %v6777 = vld [vmem:[%s8] sm:$0x1]
    %v6778 = vadd.f32 %v6776, 1e-05
    %v6779 = vrsqrt.pop %v6778
    %v6780 = vmul.f32 %v6779, %v6778
    %v6781 = vmul.f32 %v6780, %v6779
    %v6782 = vmul.f32 0.5, %v6781
    %v6783 = vsub.f32 1.5, %v6782
    %v6784 = vmul.f32 %v6779, %v6783
    %vm6785 = vweird.f32 %v6778
    %vm6786 = vweird.f32 %v6779
    %vm6787 = vmor %vm6785, %vm6786
    %v6788 = vsel %vm6787, %v6779, %v6784
    %v6789 = vmul.f32 %v6777, %v6788
    %v6790 = vld [vmem:[%s9] sm:$0x1]
    %v6791 = vmul.f32 %v6772, %v6789
    %v6792 = vsub.f32 %v6790, %v6791
    %v6794 = vperm.slane %v6789, 0
    %v6796 = vmul.f32 %v6411, %v6794
    %v6797 = vmul.f32 %v6413, %v6794
    %v6798 = vmul.f32 %v6416, %v6794
    %v6799 = vmul.f32 %v6418, %v6794
    %v6800 = vmul.f32 %v6421, %v6794
    %v6801 = vmul.f32 %v6423, %v6794
    %v6802 = vmul.f32 %v6426, %v6794
    %v6803 = vmul.f32 %v6428, %v6794
    %v6804 = vmul.f32 %v6431, %v6794
    %v6805 = vmul.f32 %v6433, %v6794
    %v6806 = vmul.f32 %v6436, %v6794
    %v6807 = vmul.f32 %v6438, %v6794
    %v6808 = vmul.f32 %v6441, %v6794
    %v6809 = vmul.f32 %v6443, %v6794
    %v6810 = vmul.f32 %v6446, %v6794
    %v6811 = vmul.f32 %v6448, %v6794
    %v6812 = vmul.f32 %v6451, %v6794
    %v6813 = vmul.f32 %v6453, %v6794
    %v6814 = vmul.f32 %v6456, %v6794
    %v6815 = vmul.f32 %v6458, %v6794
    %v6816 = vmul.f32 %v6461, %v6794
    %v6817 = vmul.f32 %v6463, %v6794
    %v6818 = vmul.f32 %v6466, %v6794
    %v6819 = vmul.f32 %v6468, %v6794
    %v6820 = vmul.f32 %v6471, %v6794
    %v6821 = vmul.f32 %v6473, %v6794
    %v6822 = vmul.f32 %v6476, %v6794
    %v6823 = vmul.f32 %v6478, %v6794
    %v6824 = vmul.f32 %v6481, %v6794
    %v6825 = vmul.f32 %v6483, %v6794
    %v6826 = vmul.f32 %v6486, %v6794
    %v6827 = vmul.f32 %v6488, %v6794
    %v6828 = vmul.f32 %v6491, %v6794
    %v6829 = vmul.f32 %v6493, %v6794
    %v6830 = vmul.f32 %v6496, %v6794
    %v6831 = vmul.f32 %v6498, %v6794
    %v6832 = vmul.f32 %v6501, %v6794
    %v6833 = vmul.f32 %v6503, %v6794
    %v6834 = vmul.f32 %v6506, %v6794
    %v6835 = vmul.f32 %v6508, %v6794
    %v6836 = vmul.f32 %v6511, %v6794
    %v6837 = vmul.f32 %v6513, %v6794
    %v6838 = vmul.f32 %v6516, %v6794
    %v6839 = vmul.f32 %v6518, %v6794
    %v6840 = vmul.f32 %v6521, %v6794
    %v6841 = vmul.f32 %v6523, %v6794
    %v6842 = vmul.f32 %v6526, %v6794
    %v6843 = vmul.f32 %v6528, %v6794
    %v6844 = vmul.f32 %v6531, %v6794
    %v6845 = vmul.f32 %v6533, %v6794
    %v6846 = vmul.f32 %v6536, %v6794
    %v6847 = vmul.f32 %v6538, %v6794
    %v6848 = vmul.f32 %v6541, %v6794
    %v6849 = vmul.f32 %v6543, %v6794
    %v6850 = vmul.f32 %v6546, %v6794
    %v6851 = vmul.f32 %v6548, %v6794
    %v6852 = vmul.f32 %v6551, %v6794
    %v6853 = vmul.f32 %v6553, %v6794
    %v6854 = vmul.f32 %v6556, %v6794
    %v6855 = vmul.f32 %v6558, %v6794
    %v6856 = vmul.f32 %v6561, %v6794
    %v6857 = vmul.f32 %v6563, %v6794
    %v6858 = vmul.f32 %v6566, %v6794
    %v6859 = vmul.f32 %v6568, %v6794
    %v6861 = vperm.slane %v6792, 0
    %v6863 = vadd.f32 %v6796, %v6861
    %v6864 = vadd.f32 %v6797, %v6861
    %v6865 = vadd.f32 %v6798, %v6861
    %v6866 = vadd.f32 %v6799, %v6861
    %v6867 = vadd.f32 %v6800, %v6861
    %v6868 = vadd.f32 %v6801, %v6861
    %v6869 = vadd.f32 %v6802, %v6861
    %v6870 = vadd.f32 %v6803, %v6861
    %v6871 = vadd.f32 %v6804, %v6861
    %v6872 = vadd.f32 %v6805, %v6861
    %v6873 = vadd.f32 %v6806, %v6861
    %v6874 = vadd.f32 %v6807, %v6861
    %v6875 = vadd.f32 %v6808, %v6861
    %v6876 = vadd.f32 %v6809, %v6861
    %v6877 = vadd.f32 %v6810, %v6861
    %v6878 = vadd.f32 %v6811, %v6861
    %v6879 = vadd.f32 %v6812, %v6861
    %v6880 = vadd.f32 %v6813, %v6861
    %v6881 = vadd.f32 %v6814, %v6861
    %v6882 = vadd.f32 %v6815, %v6861
    %v6883 = vadd.f32 %v6816, %v6861
    %v6884 = vadd.f32 %v6817, %v6861
    %v6885 = vadd.f32 %v6818, %v6861
    %v6886 = vadd.f32 %v6819, %v6861
    %v6887 = vadd.f32 %v6820, %v6861
    %v6888 = vadd.f32 %v6821, %v6861
    %v6889 = vadd.f32 %v6822, %v6861
    %v6890 = vadd.f32 %v6823, %v6861
    %v6891 = vadd.f32 %v6824, %v6861
    %v6892 = vadd.f32 %v6825, %v6861
    %v6893 = vadd.f32 %v6826, %v6861
    %v6894 = vadd.f32 %v6827, %v6861
    %v6895 = vadd.f32 %v6828, %v6861
    %v6896 = vadd.f32 %v6829, %v6861
    %v6897 = vadd.f32 %v6830, %v6861
    %v6898 = vadd.f32 %v6831, %v6861
    %v6899 = vadd.f32 %v6832, %v6861
    %v6900 = vadd.f32 %v6833, %v6861
    %v6901 = vadd.f32 %v6834, %v6861
    %v6902 = vadd.f32 %v6835, %v6861
    %v6903 = vadd.f32 %v6836, %v6861
    %v6904 = vadd.f32 %v6837, %v6861
    %v6905 = vadd.f32 %v6838, %v6861
    %v6906 = vadd.f32 %v6839, %v6861
    %v6907 = vadd.f32 %v6840, %v6861
    %v6908 = vadd.f32 %v6841, %v6861
    %v6909 = vadd.f32 %v6842, %v6861
    %v6910 = vadd.f32 %v6843, %v6861
    %v6911 = vadd.f32 %v6844, %v6861
    %v6912 = vadd.f32 %v6845, %v6861
    %v6913 = vadd.f32 %v6846, %v6861
    %v6914 = vadd.f32 %v6847, %v6861
    %v6915 = vadd.f32 %v6848, %v6861
    %v6916 = vadd.f32 %v6849, %v6861
    %v6917 = vadd.f32 %v6850, %v6861
    %v6918 = vadd.f32 %v6851, %v6861
    %v6919 = vadd.f32 %v6852, %v6861
    %v6920 = vadd.f32 %v6853, %v6861
    %v6921 = vadd.f32 %v6854, %v6861
    %v6922 = vadd.f32 %v6855, %v6861
    %v6923 = vadd.f32 %v6856, %v6861
    %v6924 = vadd.f32 %v6857, %v6861
    %v6925 = vadd.f32 %v6858, %v6861
    %v6926 = vadd.f32 %v6859, %v6861
    %v6927 = vadd.f32 %v6863, %v53
    %v6928 = vadd.f32 %v6864, %v54
    %v6929 = vadd.f32 %v6865, %v55
    %v6930 = vadd.f32 %v6866, %v56
    %v6931 = vadd.f32 %v6867, %v57
    %v6932 = vadd.f32 %v6868, %v58
    %v6933 = vadd.f32 %v6869, %v59
    %v6934 = vadd.f32 %v6870, %v60
    %v6935 = vadd.f32 %v6871, %v61
    %v6936 = vadd.f32 %v6872, %v62
    %v6937 = vadd.f32 %v6873, %v63
    %v6938 = vadd.f32 %v6874, %v64
    %v6939 = vadd.f32 %v6875, %v65
    %v6940 = vadd.f32 %v6876, %v66
    %v6941 = vadd.f32 %v6877, %v67
    %v6942 = vadd.f32 %v6878, %v68
    %v6943 = vadd.f32 %v6879, %v69
    %v6944 = vadd.f32 %v6880, %v70
    %v6945 = vadd.f32 %v6881, %v71
    %v6946 = vadd.f32 %v6882, %v72
    %v6947 = vadd.f32 %v6883, %v73
    %v6948 = vadd.f32 %v6884, %v74
    %v6949 = vadd.f32 %v6885, %v75
    %v6950 = vadd.f32 %v6886, %v76
    %v6951 = vadd.f32 %v6887, %v77
    %v6952 = vadd.f32 %v6888, %v78
    %v6953 = vadd.f32 %v6889, %v79
    %v6954 = vadd.f32 %v6890, %v80
    %v6955 = vadd.f32 %v6891, %v81
    %v6956 = vadd.f32 %v6892, %v82
    %v6957 = vadd.f32 %v6893, %v83
    %v6958 = vadd.f32 %v6894, %v84
    %v6959 = vadd.f32 %v6895, %v85
    %v6960 = vadd.f32 %v6896, %v86
    %v6961 = vadd.f32 %v6897, %v87
    %v6962 = vadd.f32 %v6898, %v88
    %v6963 = vadd.f32 %v6899, %v89
    %v6964 = vadd.f32 %v6900, %v90
    %v6965 = vadd.f32 %v6901, %v91
    %v6966 = vadd.f32 %v6902, %v92
    %v6967 = vadd.f32 %v6903, %v93
    %v6968 = vadd.f32 %v6904, %v94
    %v6969 = vadd.f32 %v6905, %v95
    %v6970 = vadd.f32 %v6906, %v96
    %v6971 = vadd.f32 %v6907, %v97
    %v6972 = vadd.f32 %v6908, %v98
    %v6973 = vadd.f32 %v6909, %v99
    %v6974 = vadd.f32 %v6910, %v100
    %v6975 = vadd.f32 %v6911, %v101
    %v6976 = vadd.f32 %v6912, %v102
    %v6977 = vadd.f32 %v6913, %v103
    %v6978 = vadd.f32 %v6914, %v104
    %v6979 = vadd.f32 %v6915, %v105
    %v6980 = vadd.f32 %v6916, %v106
    %v6981 = vadd.f32 %v6917, %v107
    %v6982 = vadd.f32 %v6918, %v108
    %v6983 = vadd.f32 %v6919, %v109
    %v6984 = vadd.f32 %v6920, %v110
    %v6985 = vadd.f32 %v6921, %v111
    %v6986 = vadd.f32 %v6922, %v112
    %v6987 = vadd.f32 %v6923, %v113
    %v6988 = vadd.f32 %v6924, %v114
    %v6989 = vadd.f32 %v6925, %v115
    %v6990 = vadd.f32 %v6926, %v116
    %v6991 = vmax.f32 %v6927, 0.0
    %v6992 = vmax.f32 %v6928, 0.0
    %v6993 = vmax.f32 %v6929, 0.0
    %v6994 = vmax.f32 %v6930, 0.0
    %v6995 = vmax.f32 %v6931, 0.0
    %v6996 = vmax.f32 %v6932, 0.0
    %v6997 = vmax.f32 %v6933, 0.0
    %v6998 = vmax.f32 %v6934, 0.0
    %v6999 = vmax.f32 %v6935, 0.0
    %v7000 = vmax.f32 %v6936, 0.0
    %v7001 = vmax.f32 %v6937, 0.0
    %v7002 = vmax.f32 %v6938, 0.0
    %v7003 = vmax.f32 %v6939, 0.0
    %v7004 = vmax.f32 %v6940, 0.0
    %v7005 = vmax.f32 %v6941, 0.0
    %v7006 = vmax.f32 %v6942, 0.0
    %v7007 = vmax.f32 %v6943, 0.0
    %v7008 = vmax.f32 %v6944, 0.0
    %v7009 = vmax.f32 %v6945, 0.0
    %v7010 = vmax.f32 %v6946, 0.0
    %v7011 = vmax.f32 %v6947, 0.0
    %v7012 = vmax.f32 %v6948, 0.0
    %v7013 = vmax.f32 %v6949, 0.0
    %v7014 = vmax.f32 %v6950, 0.0
    %v7015 = vmax.f32 %v6951, 0.0
    %v7016 = vmax.f32 %v6952, 0.0
    %v7017 = vmax.f32 %v6953, 0.0
    %v7018 = vmax.f32 %v6954, 0.0
    %v7019 = vmax.f32 %v6955, 0.0
    %v7020 = vmax.f32 %v6956, 0.0
    %v7021 = vmax.f32 %v6957, 0.0
    %v7022 = vmax.f32 %v6958, 0.0
    %v7023 = vmax.f32 %v6959, 0.0
    %v7024 = vmax.f32 %v6960, 0.0
    %v7025 = vmax.f32 %v6961, 0.0
    %v7026 = vmax.f32 %v6962, 0.0
    %v7027 = vmax.f32 %v6963, 0.0
    %v7028 = vmax.f32 %v6964, 0.0
    %v7029 = vmax.f32 %v6965, 0.0
    %v7030 = vmax.f32 %v6966, 0.0
    %v7031 = vmax.f32 %v6967, 0.0
    %v7032 = vmax.f32 %v6968, 0.0
    %v7033 = vmax.f32 %v6969, 0.0
    %v7034 = vmax.f32 %v6970, 0.0
    %v7035 = vmax.f32 %v6971, 0.0
    %v7036 = vmax.f32 %v6972, 0.0
    %v7037 = vmax.f32 %v6973, 0.0
    %v7038 = vmax.f32 %v6974, 0.0
    %v7039 = vmax.f32 %v6975, 0.0
    %v7040 = vmax.f32 %v6976, 0.0
    %v7041 = vmax.f32 %v6977, 0.0
    %v7042 = vmax.f32 %v6978, 0.0
    %v7043 = vmax.f32 %v6979, 0.0
    %v7044 = vmax.f32 %v6980, 0.0
    %v7045 = vmax.f32 %v6981, 0.0
    %v7046 = vmax.f32 %v6982, 0.0
    %v7047 = vmax.f32 %v6983, 0.0
    %v7048 = vmax.f32 %v6984, 0.0
    %v7049 = vmax.f32 %v6985, 0.0
    %v7050 = vmax.f32 %v6986, 0.0
    %v7051 = vmax.f32 %v6987, 0.0
    %v7052 = vmax.f32 %v6988, 0.0
    %v7053 = vmax.f32 %v6989, 0.0
    %v7054 = vmax.f32 %v6990, 0.0
    %7055 = vst [vmem:[#allocation7] sm:$0xff] %v6991
    %7056 = vst [vmem:[#allocation7 + $0x8] sm:$0xff] %v6992
    %7057 = vst [vmem:[#allocation7 + $0x10] sm:$0xff] %v6993
    %7058 = vst [vmem:[#allocation7 + $0x18] sm:$0xff] %v6994
    %7059 = vst [vmem:[#allocation7 + $0x20] sm:$0xff] %v6995
    %7060 = vst [vmem:[#allocation7 + $0x28] sm:$0xff] %v6996
    %7061 = vst [vmem:[#allocation7 + $0x30] sm:$0xff] %v6997
    %7062 = vst [vmem:[#allocation7 + $0x38] sm:$0xff] %v6998
    %7063 = vst [vmem:[#allocation7 + $0x40] sm:$0xff] %v6999
    %7064 = vst [vmem:[#allocation7 + $0x48] sm:$0xff] %v7000
    %7065 = vst [vmem:[#allocation7 + $0x50] sm:$0xff] %v7001
    %7066 = vst [vmem:[#allocation7 + $0x58] sm:$0xff] %v7002
    %7067 = vst [vmem:[#allocation7 + $0x60] sm:$0xff] %v7003
    %7068 = vst [vmem:[#allocation7 + $0x68] sm:$0xff] %v7004
    %7069 = vst [vmem:[#allocation7 + $0x70] sm:$0xff] %v7005
    %7070 = vst [vmem:[#allocation7 + $0x78] sm:$0xff] %v7006
    %7071 = vst [vmem:[#allocation7 + $0x80] sm:$0xff] %v7007
    %7072 = vst [vmem:[#allocation7 + $0x88] sm:$0xff] %v7008
    %7073 = vst [vmem:[#allocation7 + $0x90] sm:$0xff] %v7009
    %7074 = vst [vmem:[#allocation7 + $0x98] sm:$0xff] %v7010
    %7075 = vst [vmem:[#allocation7 + $0xa0] sm:$0xff] %v7011
    %7076 = vst [vmem:[#allocation7 + $0xa8] sm:$0xff] %v7012
    %7077 = vst [vmem:[#allocation7 + $0xb0] sm:$0xff] %v7013
    %7078 = vst [vmem:[#allocation7 + $0xb8] sm:$0xff] %v7014
    %7079 = vst [vmem:[#allocation7 + $0xc0] sm:$0xff] %v7015
    %7080 = vst [vmem:[#allocation7 + $0xc8] sm:$0xff] %v7016
    %7081 = vst [vmem:[#allocation7 + $0xd0] sm:$0xff] %v7017
    %7082 = vst [vmem:[#allocation7 + $0xd8] sm:$0xff] %v7018
    %7083 = vst [vmem:[#allocation7 + $0xe0] sm:$0xff] %v7019
    %7084 = vst [vmem:[#allocation7 + $0xe8] sm:$0xff] %v7020
    %7085 = vst [vmem:[#allocation7 + $0xf0] sm:$0xff] %v7021
    %7086 = vst [vmem:[#allocation7 + $0xf8] sm:$0xff] %v7022
    %7087 = vst [vmem:[#allocation7 + $0x100] sm:$0xff] %v7023
    %7088 = vst [vmem:[#allocation7 + $0x108] sm:$0xff] %v7024
    %7089 = vst [vmem:[#allocation7 + $0x110] sm:$0xff] %v7025
    %7090 = vst [vmem:[#allocation7 + $0x118] sm:$0xff] %v7026
    %7091 = vst [vmem:[#allocation7 + $0x120] sm:$0xff] %v7027
    %7092 = vst [vmem:[#allocation7 + $0x128] sm:$0xff] %v7028
    %7093 = vst [vmem:[#allocation7 + $0x130] sm:$0xff] %v7029
    %7094 = vst [vmem:[#allocation7 + $0x138] sm:$0xff] %v7030
    %7095 = vst [vmem:[#allocation7 + $0x140] sm:$0xff] %v7031
    %7096 = vst [vmem:[#allocation7 + $0x148] sm:$0xff] %v7032
    %7097 = vst [vmem:[#allocation7 + $0x150] sm:$0xff] %v7033
    %7098 = vst [vmem:[#allocation7 + $0x158] sm:$0xff] %v7034
    %7099 = vst [vmem:[#allocation7 + $0x160] sm:$0xff] %v7035
    %7100 = vst [vmem:[#allocation7 + $0x168] sm:$0xff] %v7036
    %7101 = vst [vmem:[#allocation7 + $0x170] sm:$0xff] %v7037
    %7102 = vst [vmem:[#allocation7 + $0x178] sm:$0xff] %v7038
    %7103 = vst [vmem:[#allocation7 + $0x180] sm:$0xff] %v7039
    %7104 = vst [vmem:[#allocation7 + $0x188] sm:$0xff] %v7040
    %7105 = vst [vmem:[#allocation7 + $0x190] sm:$0xff] %v7041
    %7106 = vst [vmem:[#allocation7 + $0x198] sm:$0xff] %v7042
    %7107 = vst [vmem:[#allocation7 + $0x1a0] sm:$0xff] %v7043
    %7108 = vst [vmem:[#allocation7 + $0x1a8] sm:$0xff] %v7044
    %7109 = vst [vmem:[#allocation7 + $0x1b0] sm:$0xff] %v7045
    %7110 = vst [vmem:[#allocation7 + $0x1b8] sm:$0xff] %v7046
    %7111 = vst [vmem:[#allocation7 + $0x1c0] sm:$0xff] %v7047
    %7112 = vst [vmem:[#allocation7 + $0x1c8] sm:$0xff] %v7048
    %7113 = vst [vmem:[#allocation7 + $0x1d0] sm:$0xff] %v7049
    %7114 = vst [vmem:[#allocation7 + $0x1d8] sm:$0xff] %v7050
    %7115 = vst [vmem:[#allocation7 + $0x1e0] sm:$0xff] %v7051
    %7116 = vst [vmem:[#allocation7 + $0x1e8] sm:$0xff] %v7052
    %7117 = vst [vmem:[#allocation7 + $0x1f0] sm:$0xff] %v7053
    %7118 = vst [vmem:[#allocation7 + $0x1f8] sm:$0xff] %v7054
    // Predicated region
    $region46: #{tpu_custom_call.1} parent=1 // pred_check
      _
    $region47: #{tpu_custom_call.1} parent=1 // pred_check_branch
      %7120 = sbr.rel (0) target = $region49
    $region48: #{tpu_custom_call.1} parent=1 // pred_region
      %7122 = vsyncadd [#allocation6], 0
      %s7123 = sshll.u32 [#allocation7], 4
      %s7124 = int_to_ptr.vmem [resolvable:$true] %s7123
      %s7125 = sshll.u32 %s10, 4
      %s7126 = int_to_ptr.hbm [resolvable:$true] %s7125
      %7131 = dma.vmem_to_hbm [thread:$0]  %s7124, 8192, %s7126, [#allocation6], 128, 128, 8
    $region49: #{tpu_custom_call.1} parent=1 // pred_fallthru
      _
    // Predicated region
    $region50: #{tpu_custom_call.1} parent=1 // pred_check
      _
    $region51: #{tpu_custom_call.1} parent=1 // pred_check_branch
      %7133 = sbr.rel (0) target = $region53
    $region52: #{tpu_custom_call.1} parent=1 // pred_region
      %7135 = dma.done [#allocation6], 8192
    $region53: #{tpu_custom_call.1} parent=1 // pred_fallthru
      _
    %7136 = vsyncpa [#allocation5], 1
    %7137 = vsyncpa [#allocation6], 1

</llo_original>
